<compile_context>
chip_gen: v7x
topology: tpu7x:2x2x1
jax: 0.10.0
libtpu: 0.0.40
codegen_flags: <defaults>
</compile_context>

<pallas_src>
import jax
import jax.numpy as jnp
from jax.experimental import pallas as pl
from jax.experimental.pallas import tpu as pltpu


def _round_up(x, m):
    return (x + m - 1) // m * m


def _stacked_conv_relu_kernel(x_ref, w_ref, b_ref, o_ref, buf_ref):
    """Fused L-layer (KxK same-padding conv + ReLU) stack for one batch element.

    x_ref:   (Hp, Wp, C)      bf16  spatially- and channel-padded input image
    w_ref:   (L, K, K, C, C)  bf16  all layer weights (grid-invariant, resident)
    b_ref:   (L, C)           f32   all layer biases  (grid-invariant, resident)
    o_ref:   (H, W, C)        f32   output of the last layer (lane-dense, C%128==0)
    buf_ref: (Hp, Wp, C)      bf16  VMEM buffer holding the padded activation
                                    between layers; halo region stays zero.
    """
    L, K = w_ref.shape[0], w_ref.shape[1]
    Hp, Wp, C = buf_ref.shape
    pad = K // 2
    H, W = Hp - 2 * pad, Wp - 2 * pad

    if L > 1:
        # Zero once; only the interior is overwritten each layer, so the halo
        # provides the zero "same" padding for every subsequent layer.
        buf_ref[...] = jnp.zeros_like(buf_ref)

    b_all = b_ref[...]  # (L, C) f32, tiny

    for l in range(L):                      # static unroll over layers
        src = x_ref if l == 0 else buf_ref  # read shifted windows straight from VMEM
        acc = jnp.zeros((H * W, C), jnp.float32)
        for kh in range(K):                 # static unroll over the K*K offsets
            for kw in range(K):
                patch = src[kh:kh + H, kw:kw + W, :].reshape(H * W, C)
                acc = acc + jnp.dot(patch, w_ref[l, kh, kw],
                                    preferred_element_type=jnp.float32)
        y = jnp.maximum(acc + b_all[l:l + 1, :], 0.0)   # bias + ReLU in f32
        if l + 1 < L:
            buf_ref[pad:pad + H, pad:pad + W, :] = (
                y.reshape(H, W, C).astype(buf_ref.dtype))
        else:
            o_ref[...] = y.reshape(H, W, C).astype(o_ref.dtype)


def densepose_convx_forward(features_nchw, weights, biases):
    """Fused forward of the whole conv head.

    features_nchw: (N, Cin, H, W) f32
    weights: list of (K, K, Cin_l, Cout_l) f32 (HWIO);  biases: list of (Cout_l,) f32
    returns (N, Cout_last, H, W) f32
    """
    N, Cin, H, W = features_nchw.shape
    L = len(weights)
    K = weights[0].shape[0]
    pad = K // 2
    n_out = weights[-1].shape[-1]

    # Uniform, lane-dense channel count for every layer (multiple of 128).
    C = _round_up(max([Cin] + [w.shape[-1] for w in weights]), 128)
    Hp, Wp = H + 2 * pad, W + 2 * pad

    # NCHW -> NHWC, zero-pad channels to C and spatial dims by the conv halo;
    # bf16 activations halve input HBM traffic (matmul accumulates in f32).
    x = jnp.transpose(features_nchw, (0, 2, 3, 1))
    x = jnp.pad(x, ((0, 0), (pad, pad), (pad, pad), (0, C - Cin)))
    x = x.astype(jnp.bfloat16)

    # Stack all layer weights / biases into single grid-invariant arrays.
    w_stack = jnp.stack([
        jnp.pad(w, ((0, 0), (0, 0), (0, C - w.shape[2]), (0, C - w.shape[3])))
        for w in weights]).astype(jnp.bfloat16)                 # (L, K, K, C, C)
    b_stack = jnp.stack([
        jnp.pad(b, (0, C - b.shape[0])) for b in biases
    ]).astype(jnp.float32)                                       # (L, C)

    out = pl.pallas_call(
        _stacked_conv_relu_kernel,
        out_shape=jax.ShapeDtypeStruct((N, H, W, C), jnp.float32),
        grid_spec=pltpu.PrefetchScalarGridSpec(
            num_scalar_prefetch=0,
            grid=(N,),
            in_specs=[
                pl.BlockSpec((None, Hp, Wp, C), lambda n: (n, 0, 0, 0)),
                pl.BlockSpec((L, K, K, C, C), lambda n: (0, 0, 0, 0, 0)),
                pl.BlockSpec((L, C), lambda n: (0, 0)),
            ],
            out_specs=pl.BlockSpec((None, H, W, C), lambda n: (n, 0, 0, 0)),
            scratch_shapes=[pltpu.VMEM((Hp, Wp, C), jnp.bfloat16)],
        ),
        compiler_params=pltpu.CompilerParams(
            dimension_semantics=("parallel",)),
    )(x, w_stack, b_stack)

    # Drop channel padding, back to the PyTorch NCHW convention.
    return jnp.transpose(out[..., :n_out], (0, 3, 1, 2))


class DensePoseV1ConvXHeadPallas:
    """JAX/Pallas port of DensePoseV1ConvXHead: n_stacked_convs x (Conv2d -> ReLU)."""

    def __init__(self, input_channels, hidden_dim, kernel_size, n_stacked_convs, key):
        self.kernel_size = kernel_size
        self.params = []
        n_channels = input_channels
        for _ in range(n_stacked_convs):
            key, wk, bk = jax.random.split(key, 3)
            fan_in = n_channels * kernel_size * kernel_size
            w = jax.random.normal(
                wk, (kernel_size, kernel_size, n_channels, hidden_dim),
                jnp.float32) * (2.0 / fan_in) ** 0.5
            b = jax.random.normal(bk, (hidden_dim,), jnp.float32) * 0.01
            self.params.append((w, b))
            n_channels = hidden_dim
        self.n_out_channels = n_channels

    def __call__(self, features_nchw):
        weights = [w for w, _ in self.params]
        biases = [b for _, b in self.params]
        return densepose_convx_forward(features_nchw, weights, biases)


def reference_forward(head, features_nchw):
    """Pure-JAX f32 reference (lax conv) matching the PyTorch module semantics."""
    x = jnp.transpose(features_nchw, (0, 2, 3, 1))
    for w, b in head.params:
        x = jax.lax.conv_general_dilated(
            x, w, window_strides=(1, 1), padding="SAME",
            dimension_numbers=("NHWC", "HWIO", "NHWC"))
        x = jnp.maximum(x + b, 0.0)
    return jnp.transpose(x, (0, 3, 1, 2))


if __name__ == "__main__":
    key = jax.random.PRNGKey(0)
    key, fkey, pkey = jax.random.split(key, 3)

    # features: (N, C, H, W); CONV_HEAD_DIM=32, CONV_HEAD_KERNEL=3, NUM_STACKED_CONVS=2
    N, Cin, H, W = 2, 4, 16, 16
    hidden_dim, kernel_size, n_stacked = 32, 3, 2

    features = jax.random.normal(fkey, (N, Cin, H, W), jnp.float32)
    head = DensePoseV1ConvXHeadPallas(Cin, hidden_dim, kernel_size, n_stacked, pkey)

    out = jax.block_until_ready(head(features))
    ref = jax.block_until_ready(reference_forward(head, features))

    assert out.shape == (N, hidden_dim, H, W), out.shape
    # bf16 MXU matmuls (f32 accumulation) vs f32 lax reference -> looser tolerance.
    assert jnp.allclose(out, ref, atol=5e-2, rtol=5e-2), \
        float(jnp.max(jnp.abs(out - ref)))
    print("KERNEL_OK")
</pallas_src>

<mosaic_0001>
module attributes {stable_mosaic.version = 11 : i64} {
  func.func @_stacked_conv_relu_kernel(%arg0: i32, %arg1: memref<1x18x18x128xbf16, #tpu.memory_space<vmem>>, %arg2: memref<2x3x3x128x128xbf16, #tpu.memory_space<vmem>>, %arg3: memref<2x128xf32, #tpu.memory_space<vmem>>, %arg4: memref<1x16x16x128xf32, #tpu.memory_space<vmem>>, %arg5: memref<18x18x128xbf16, #tpu.memory_space<vmem>>) attributes {dimension_semantics = [#tpu.dimension_semantics<parallel>], iteration_bounds = array<i64: 2>, scalar_prefetch = 0 : i64, scratch_operands = 1 : i64, tpu.core_type = #tpu.core_type<tc>, window_params = [{transform_indices = @transform_0, window_bounds = array<i64: 1, 18, 18, 128>}, {pipeline_mode = #tpu.pipeline_mode<synchronous>, transform_indices = @transform_1, window_bounds = array<i64: 2, 3, 3, 128, 128>}, {pipeline_mode = #tpu.pipeline_mode<synchronous>, transform_indices = @transform_2, window_bounds = array<i64: 2, 128>}, {transform_indices = @transform_3, window_bounds = array<i64: 1, 16, 16, 128>}]} {
    %cst = arith.constant 0.000000e+00 : bf16
    %0 = vector.broadcast %cst : bf16 to vector<18x18x128xbf16>
    %c0 = arith.constant 0 : index
    %c0_0 = arith.constant 0 : index
    %c0_1 = arith.constant 0 : index
    %1 = vector.load %arg5[%c0, %c0_0, %c0_1] : memref<18x18x128xbf16, #tpu.memory_space<vmem>>, vector<18x18x128xbf16>
    tpu.vector_store %arg5[%c0, %c0_0, %c0_1], %0 {strides = array<i32>} : memref<18x18x128xbf16, #tpu.memory_space<vmem>>, vector<18x18x128xbf16>,
    %c0_2 = arith.constant 0 : index
    %c0_3 = arith.constant 0 : index
    %2 = vector.load %arg3[%c0_2, %c0_3] : memref<2x128xf32, #tpu.memory_space<vmem>>, vector<2x128xf32>
    %cst_4 = arith.constant 0.000000e+00 : f32
    %3 = vector.broadcast %cst_4 : f32 to vector<256x128xf32>
    %c0_5 = arith.constant 0 : index
    %c0_6 = arith.constant 0 : index
    %c0_7 = arith.constant 0 : index
    %c0_8 = arith.constant 0 : index
    %4 = vector.load %arg1[%c0_5, %c0_6, %c0_7, %c0_8] : memref<1x18x18x128xbf16, #tpu.memory_space<vmem>>, vector<1x16x16x128xbf16>
    %5 = vector.shape_cast %4 : vector<1x16x16x128xbf16> to vector<16x16x128xbf16>
    %6 = vector.shape_cast %5 : vector<16x16x128xbf16> to vector<256x128xbf16>
    %c0_9 = arith.constant 0 : index
    %c0_10 = arith.constant 0 : index
    %c0_11 = arith.constant 0 : index
    %c0_12 = arith.constant 0 : index
    %c0_13 = arith.constant 0 : index
    %7 = vector.load %arg2[%c0_9, %c0_10, %c0_11, %c0_12, %c0_13] : memref<2x3x3x128x128xbf16, #tpu.memory_space<vmem>>, vector<1x1x1x128x128xbf16>
    %8 = vector.shape_cast %7 : vector<1x1x1x128x128xbf16> to vector<128x128xbf16>
    %cst_14 = arith.constant dense<0.000000e+00> : vector<256x128xf32>
    %9 = tpu.matmul %6, %8, %cst_14 {dimension_numbers = #tpu.dot_dimension_numbers<[1], [0], [0], [1], [0, 0, 1, 1], [], []>} : vector<256x128xbf16>, vector<128x128xbf16>, vector<256x128xf32> -> vector<256x128xf32>
    %10 = arith.addf %3, %9 : vector<256x128xf32>
    %c0_15 = arith.constant 0 : index
    %c0_16 = arith.constant 0 : index
    %c1 = arith.constant 1 : index
    %c0_17 = arith.constant 0 : index
    %11 = vector.load %arg1[%c0_15, %c0_16, %c1, %c0_17] : memref<1x18x18x128xbf16, #tpu.memory_space<vmem>>, vector<1x16x16x128xbf16>
    %12 = vector.shape_cast %11 : vector<1x16x16x128xbf16> to vector<16x16x128xbf16>
    %13 = vector.shape_cast %12 : vector<16x16x128xbf16> to vector<256x128xbf16>
    %c0_18 = arith.constant 0 : index
    %c0_19 = arith.constant 0 : index
    %c1_20 = arith.constant 1 : index
    %c0_21 = arith.constant 0 : index
    %c0_22 = arith.constant 0 : index
    %14 = vector.load %arg2[%c0_18, %c0_19, %c1_20, %c0_21, %c0_22] : memref<2x3x3x128x128xbf16, #tpu.memory_space<vmem>>, vector<1x1x1x128x128xbf16>
    %15 = vector.shape_cast %14 : vector<1x1x1x128x128xbf16> to vector<128x128xbf16>
    %cst_23 = arith.constant dense<0.000000e+00> : vector<256x128xf32>
    %16 = tpu.matmul %13, %15, %cst_23 {dimension_numbers = #tpu.dot_dimension_numbers<[1], [0], [0], [1], [0, 0, 1, 1], [], []>} : vector<256x128xbf16>, vector<128x128xbf16>, vector<256x128xf32> -> vector<256x128xf32>
    %17 = arith.addf %10, %16 : vector<256x128xf32>
    %c0_24 = arith.constant 0 : index
    %c0_25 = arith.constant 0 : index
    %c2 = arith.constant 2 : index
    %c0_26 = arith.constant 0 : index
    %18 = vector.load %arg1[%c0_24, %c0_25, %c2, %c0_26] : memref<1x18x18x128xbf16, #tpu.memory_space<vmem>>, vector<1x16x16x128xbf16>
    %19 = vector.shape_cast %18 : vector<1x16x16x128xbf16> to vector<16x16x128xbf16>
    %20 = vector.shape_cast %19 : vector<16x16x128xbf16> to vector<256x128xbf16>
    %c0_27 = arith.constant 0 : index
    %c0_28 = arith.constant 0 : index
    %c2_29 = arith.constant 2 : index
    %c0_30 = arith.constant 0 : index
    %c0_31 = arith.constant 0 : index
    %21 = vector.load %arg2[%c0_27, %c0_28, %c2_29, %c0_30, %c0_31] : memref<2x3x3x128x128xbf16, #tpu.memory_space<vmem>>, vector<1x1x1x128x128xbf16>
    %22 = vector.shape_cast %21 : vector<1x1x1x128x128xbf16> to vector<128x128xbf16>
    %cst_32 = arith.constant dense<0.000000e+00> : vector<256x128xf32>
    %23 = tpu.matmul %20, %22, %cst_32 {dimension_numbers = #tpu.dot_dimension_numbers<[1], [0], [0], [1], [0, 0, 1, 1], [], []>} : vector<256x128xbf16>, vector<128x128xbf16>, vector<256x128xf32> -> vector<256x128xf32>
    %24 = arith.addf %17, %23 : vector<256x128xf32>
    %c0_33 = arith.constant 0 : index
    %c1_34 = arith.constant 1 : index
    %c0_35 = arith.constant 0 : index
    %c0_36 = arith.constant 0 : index
    %25 = vector.load %arg1[%c0_33, %c1_34, %c0_35, %c0_36] : memref<1x18x18x128xbf16, #tpu.memory_space<vmem>>, vector<1x16x16x128xbf16>
    %26 = vector.shape_cast %25 : vector<1x16x16x128xbf16> to vector<16x16x128xbf16>
    %27 = vector.shape_cast %26 : vector<16x16x128xbf16> to vector<256x128xbf16>
    %c0_37 = arith.constant 0 : index
    %c1_38 = arith.constant 1 : index
    %c0_39 = arith.constant 0 : index
    %c0_40 = arith.constant 0 : index
    %c0_41 = arith.constant 0 : index
    %28 = vector.load %arg2[%c0_37, %c1_38, %c0_39, %c0_40, %c0_41] : memref<2x3x3x128x128xbf16, #tpu.memory_space<vmem>>, vector<1x1x1x128x128xbf16>
    %29 = vector.shape_cast %28 : vector<1x1x1x128x128xbf16> to vector<128x128xbf16>
    %cst_42 = arith.constant dense<0.000000e+00> : vector<256x128xf32>
    %30 = tpu.matmul %27, %29, %cst_42 {dimension_numbers = #tpu.dot_dimension_numbers<[1], [0], [0], [1], [0, 0, 1, 1], [], []>} : vector<256x128xbf16>, vector<128x128xbf16>, vector<256x128xf32> -> vector<256x128xf32>
    %31 = arith.addf %24, %30 : vector<256x128xf32>
    %c0_43 = arith.constant 0 : index
    %c1_44 = arith.constant 1 : index
    %c1_45 = arith.constant 1 : index
    %c0_46 = arith.constant 0 : index
    %32 = vector.load %arg1[%c0_43, %c1_44, %c1_45, %c0_46] : memref<1x18x18x128xbf16, #tpu.memory_space<vmem>>, vector<1x16x16x128xbf16>
    %33 = vector.shape_cast %32 : vector<1x16x16x128xbf16> to vector<16x16x128xbf16>
    %34 = vector.shape_cast %33 : vector<16x16x128xbf16> to vector<256x128xbf16>
    %c0_47 = arith.constant 0 : index
    %c1_48 = arith.constant 1 : index
    %c1_49 = arith.constant 1 : index
    %c0_50 = arith.constant 0 : index
    %c0_51 = arith.constant 0 : index
    %35 = vector.load %arg2[%c0_47, %c1_48, %c1_49, %c0_50, %c0_51] : memref<2x3x3x128x128xbf16, #tpu.memory_space<vmem>>, vector<1x1x1x128x128xbf16>
    %36 = vector.shape_cast %35 : vector<1x1x1x128x128xbf16> to vector<128x128xbf16>
    %cst_52 = arith.constant dense<0.000000e+00> : vector<256x128xf32>
    %37 = tpu.matmul %34, %36, %cst_52 {dimension_numbers = #tpu.dot_dimension_numbers<[1], [0], [0], [1], [0, 0, 1, 1], [], []>} : vector<256x128xbf16>, vector<128x128xbf16>, vector<256x128xf32> -> vector<256x128xf32>
    %38 = arith.addf %31, %37 : vector<256x128xf32>
    %c0_53 = arith.constant 0 : index
    %c1_54 = arith.constant 1 : index
    %c2_55 = arith.constant 2 : index
    %c0_56 = arith.constant 0 : index
    %39 = vector.load %arg1[%c0_53, %c1_54, %c2_55, %c0_56] : memref<1x18x18x128xbf16, #tpu.memory_space<vmem>>, vector<1x16x16x128xbf16>
    %40 = vector.shape_cast %39 : vector<1x16x16x128xbf16> to vector<16x16x128xbf16>
    %41 = vector.shape_cast %40 : vector<16x16x128xbf16> to vector<256x128xbf16>
    %c0_57 = arith.constant 0 : index
    %c1_58 = arith.constant 1 : index
    %c2_59 = arith.constant 2 : index
    %c0_60 = arith.constant 0 : index
    %c0_61 = arith.constant 0 : index
    %42 = vector.load %arg2[%c0_57, %c1_58, %c2_59, %c0_60, %c0_61] : memref<2x3x3x128x128xbf16, #tpu.memory_space<vmem>>, vector<1x1x1x128x128xbf16>
    %43 = vector.shape_cast %42 : vector<1x1x1x128x128xbf16> to vector<128x128xbf16>
    %cst_62 = arith.constant dense<0.000000e+00> : vector<256x128xf32>
    %44 = tpu.matmul %41, %43, %cst_62 {dimension_numbers = #tpu.dot_dimension_numbers<[1], [0], [0], [1], [0, 0, 1, 1], [], []>} : vector<256x128xbf16>, vector<128x128xbf16>, vector<256x128xf32> -> vector<256x128xf32>
    %45 = arith.addf %38, %44 : vector<256x128xf32>
    %c0_63 = arith.constant 0 : index
    %c2_64 = arith.constant 2 : index
    %c0_65 = arith.constant 0 : index
    %c0_66 = arith.constant 0 : index
    %46 = vector.load %arg1[%c0_63, %c2_64, %c0_65, %c0_66] : memref<1x18x18x128xbf16, #tpu.memory_space<vmem>>, vector<1x16x16x128xbf16>
    %47 = vector.shape_cast %46 : vector<1x16x16x128xbf16> to vector<16x16x128xbf16>
    %48 = vector.shape_cast %47 : vector<16x16x128xbf16> to vector<256x128xbf16>
    %c0_67 = arith.constant 0 : index
    %c2_68 = arith.constant 2 : index
    %c0_69 = arith.constant 0 : index
    %c0_70 = arith.constant 0 : index
    %c0_71 = arith.constant 0 : index
    %49 = vector.load %arg2[%c0_67, %c2_68, %c0_69, %c0_70, %c0_71] : memref<2x3x3x128x128xbf16, #tpu.memory_space<vmem>>, vector<1x1x1x128x128xbf16>
    %50 = vector.shape_cast %49 : vector<1x1x1x128x128xbf16> to vector<128x128xbf16>
    %cst_72 = arith.constant dense<0.000000e+00> : vector<256x128xf32>
    %51 = tpu.matmul %48, %50, %cst_72 {dimension_numbers = #tpu.dot_dimension_numbers<[1], [0], [0], [1], [0, 0, 1, 1], [], []>} : vector<256x128xbf16>, vector<128x128xbf16>, vector<256x128xf32> -> vector<256x128xf32>
    %52 = arith.addf %45, %51 : vector<256x128xf32>
    %c0_73 = arith.constant 0 : index
    %c2_74 = arith.constant 2 : index
    %c1_75 = arith.constant 1 : index
    %c0_76 = arith.constant 0 : index
    %53 = vector.load %arg1[%c0_73, %c2_74, %c1_75, %c0_76] : memref<1x18x18x128xbf16, #tpu.memory_space<vmem>>, vector<1x16x16x128xbf16>
    %54 = vector.shape_cast %53 : vector<1x16x16x128xbf16> to vector<16x16x128xbf16>
    %55 = vector.shape_cast %54 : vector<16x16x128xbf16> to vector<256x128xbf16>
    %c0_77 = arith.constant 0 : index
    %c2_78 = arith.constant 2 : index
    %c1_79 = arith.constant 1 : index
    %c0_80 = arith.constant 0 : index
    %c0_81 = arith.constant 0 : index
    %56 = vector.load %arg2[%c0_77, %c2_78, %c1_79, %c0_80, %c0_81] : memref<2x3x3x128x128xbf16, #tpu.memory_space<vmem>>, vector<1x1x1x128x128xbf16>
    %57 = vector.shape_cast %56 : vector<1x1x1x128x128xbf16> to vector<128x128xbf16>
    %cst_82 = arith.constant dense<0.000000e+00> : vector<256x128xf32>
    %58 = tpu.matmul %55, %57, %cst_82 {dimension_numbers = #tpu.dot_dimension_numbers<[1], [0], [0], [1], [0, 0, 1, 1], [], []>} : vector<256x128xbf16>, vector<128x128xbf16>, vector<256x128xf32> -> vector<256x128xf32>
    %59 = arith.addf %52, %58 : vector<256x128xf32>
    %c0_83 = arith.constant 0 : index
    %c2_84 = arith.constant 2 : index
    %c2_85 = arith.constant 2 : index
    %c0_86 = arith.constant 0 : index
    %60 = vector.load %arg1[%c0_83, %c2_84, %c2_85, %c0_86] : memref<1x18x18x128xbf16, #tpu.memory_space<vmem>>, vector<1x16x16x128xbf16>
    %61 = vector.shape_cast %60 : vector<1x16x16x128xbf16> to vector<16x16x128xbf16>
    %62 = vector.shape_cast %61 : vector<16x16x128xbf16> to vector<256x128xbf16>
    %c0_87 = arith.constant 0 : index
    %c2_88 = arith.constant 2 : index
    %c2_89 = arith.constant 2 : index
    %c0_90 = arith.constant 0 : index
    %c0_91 = arith.constant 0 : index
    %63 = vector.load %arg2[%c0_87, %c2_88, %c2_89, %c0_90, %c0_91] : memref<2x3x3x128x128xbf16, #tpu.memory_space<vmem>>, vector<1x1x1x128x128xbf16>
    %64 = vector.shape_cast %63 : vector<1x1x1x128x128xbf16> to vector<128x128xbf16>
    %cst_92 = arith.constant dense<0.000000e+00> : vector<256x128xf32>
    %65 = tpu.matmul %62, %64, %cst_92 {dimension_numbers = #tpu.dot_dimension_numbers<[1], [0], [0], [1], [0, 0, 1, 1], [], []>} : vector<256x128xbf16>, vector<128x128xbf16>, vector<256x128xf32> -> vector<256x128xf32>
    %66 = arith.addf %59, %65 : vector<256x128xf32>
    %67 = vector.extract_strided_slice %2 {offsets = [0, 0], sizes = [1, 128], strides = [1, 1]} : vector<2x128xf32> to vector<1x128xf32>
    %68 = vector.broadcast %67 : vector<1x128xf32> to vector<256x128xf32>
    %69 = arith.addf %66, %68 : vector<256x128xf32>
    %cst_93 = arith.constant 0.000000e+00 : f32
    %70 = vector.broadcast %cst_93 : f32 to vector<256x128xf32>
    %71 = arith.maximumf %69, %70 : vector<256x128xf32>
    %72 = vector.shape_cast %71 : vector<256x128xf32> to vector<16x16x128xf32>
    %73 = arith.truncf %72 : vector<16x16x128xf32> to vector<16x16x128xbf16>
    %c1_94 = arith.constant 1 : index
    %c1_95 = arith.constant 1 : index
    %c0_96 = arith.constant 0 : index
    %74 = vector.load %arg5[%c1_94, %c1_95, %c0_96] : memref<18x18x128xbf16, #tpu.memory_space<vmem>>, vector<16x16x128xbf16>
    tpu.vector_store %arg5[%c1_94, %c1_95, %c0_96], %73 {strides = array<i32>} : memref<18x18x128xbf16, #tpu.memory_space<vmem>>, vector<16x16x128xbf16>,
    %cst_97 = arith.constant 0.000000e+00 : f32
    %75 = vector.broadcast %cst_97 : f32 to vector<256x128xf32>
    %c0_98 = arith.constant 0 : index
    %c0_99 = arith.constant 0 : index
    %c0_100 = arith.constant 0 : index
    %76 = vector.load %arg5[%c0_98, %c0_99, %c0_100] : memref<18x18x128xbf16, #tpu.memory_space<vmem>>, vector<16x16x128xbf16>
    %77 = vector.shape_cast %76 : vector<16x16x128xbf16> to vector<256x128xbf16>
    %c1_101 = arith.constant 1 : index
    %c0_102 = arith.constant 0 : index
    %c0_103 = arith.constant 0 : index
    %c0_104 = arith.constant 0 : index
    %c0_105 = arith.constant 0 : index
    %78 = vector.load %arg2[%c1_101, %c0_102, %c0_103, %c0_104, %c0_105] : memref<2x3x3x128x128xbf16, #tpu.memory_space<vmem>>, vector<1x1x1x128x128xbf16>
    %79 = vector.shape_cast %78 : vector<1x1x1x128x128xbf16> to vector<128x128xbf16>
    %cst_106 = arith.constant dense<0.000000e+00> : vector<256x128xf32>
    %80 = tpu.matmul %77, %79, %cst_106 {dimension_numbers = #tpu.dot_dimension_numbers<[1], [0], [0], [1], [0, 0, 1, 1], [], []>} : vector<256x128xbf16>, vector<128x128xbf16>, vector<256x128xf32> -> vector<256x128xf32>
    %81 = arith.addf %75, %80 : vector<256x128xf32>
    %c0_107 = arith.constant 0 : index
    %c1_108 = arith.constant 1 : index
    %c0_109 = arith.constant 0 : index
    %82 = vector.load %arg5[%c0_107, %c1_108, %c0_109] : memref<18x18x128xbf16, #tpu.memory_space<vmem>>, vector<16x16x128xbf16>
    %83 = vector.shape_cast %82 : vector<16x16x128xbf16> to vector<256x128xbf16>
    %c1_110 = arith.constant 1 : index
    %c0_111 = arith.constant 0 : index
    %c1_112 = arith.constant 1 : index
    %c0_113 = arith.constant 0 : index
    %c0_114 = arith.constant 0 : index
    %84 = vector.load %arg2[%c1_110, %c0_111, %c1_112, %c0_113, %c0_114] : memref<2x3x3x128x128xbf16, #tpu.memory_space<vmem>>, vector<1x1x1x128x128xbf16>
    %85 = vector.shape_cast %84 : vector<1x1x1x128x128xbf16> to vector<128x128xbf16>
    %cst_115 = arith.constant dense<0.000000e+00> : vector<256x128xf32>
    %86 = tpu.matmul %83, %85, %cst_115 {dimension_numbers = #tpu.dot_dimension_numbers<[1], [0], [0], [1], [0, 0, 1, 1], [], []>} : vector<256x128xbf16>, vector<128x128xbf16>, vector<256x128xf32> -> vector<256x128xf32>
    %87 = arith.addf %81, %86 : vector<256x128xf32>
    %c0_116 = arith.constant 0 : index
    %c2_117 = arith.constant 2 : index
    %c0_118 = arith.constant 0 : index
    %88 = vector.load %arg5[%c0_116, %c2_117, %c0_118] : memref<18x18x128xbf16, #tpu.memory_space<vmem>>, vector<16x16x128xbf16>
    %89 = vector.shape_cast %88 : vector<16x16x128xbf16> to vector<256x128xbf16>
    %c1_119 = arith.constant 1 : index
    %c0_120 = arith.constant 0 : index
    %c2_121 = arith.constant 2 : index
    %c0_122 = arith.constant 0 : index
    %c0_123 = arith.constant 0 : index
    %90 = vector.load %arg2[%c1_119, %c0_120, %c2_121, %c0_122, %c0_123] : memref<2x3x3x128x128xbf16, #tpu.memory_space<vmem>>, vector<1x1x1x128x128xbf16>
    %91 = vector.shape_cast %90 : vector<1x1x1x128x128xbf16> to vector<128x128xbf16>
    %cst_124 = arith.constant dense<0.000000e+00> : vector<256x128xf32>
    %92 = tpu.matmul %89, %91, %cst_124 {dimension_numbers = #tpu.dot_dimension_numbers<[1], [0], [0], [1], [0, 0, 1, 1], [], []>} : vector<256x128xbf16>, vector<128x128xbf16>, vector<256x128xf32> -> vector<256x128xf32>
    %93 = arith.addf %87, %92 : vector<256x128xf32>
    %c1_125 = arith.constant 1 : index
    %c0_126 = arith.constant 0 : index
    %c0_127 = arith.constant 0 : index
    %94 = vector.load %arg5[%c1_125, %c0_126, %c0_127] : memref<18x18x128xbf16, #tpu.memory_space<vmem>>, vector<16x16x128xbf16>
    %95 = vector.shape_cast %94 : vector<16x16x128xbf16> to vector<256x128xbf16>
    %c1_128 = arith.constant 1 : index
    %c1_129 = arith.constant 1 : index
    %c0_130 = arith.constant 0 : index
    %c0_131 = arith.constant 0 : index
    %c0_132 = arith.constant 0 : index
    %96 = vector.load %arg2[%c1_128, %c1_129, %c0_130, %c0_131, %c0_132] : memref<2x3x3x128x128xbf16, #tpu.memory_space<vmem>>, vector<1x1x1x128x128xbf16>
    %97 = vector.shape_cast %96 : vector<1x1x1x128x128xbf16> to vector<128x128xbf16>
    %cst_133 = arith.constant dense<0.000000e+00> : vector<256x128xf32>
    %98 = tpu.matmul %95, %97, %cst_133 {dimension_numbers = #tpu.dot_dimension_numbers<[1], [0], [0], [1], [0, 0, 1, 1], [], []>} : vector<256x128xbf16>, vector<128x128xbf16>, vector<256x128xf32> -> vector<256x128xf32>
    %99 = arith.addf %93, %98 : vector<256x128xf32>
    %c1_134 = arith.constant 1 : index
    %c1_135 = arith.constant 1 : index
    %c0_136 = arith.constant 0 : index
    %100 = vector.load %arg5[%c1_134, %c1_135, %c0_136] : memref<18x18x128xbf16, #tpu.memory_space<vmem>>, vector<16x16x128xbf16>
    %101 = vector.shape_cast %100 : vector<16x16x128xbf16> to vector<256x128xbf16>
    %c1_137 = arith.constant 1 : index
    %c1_138 = arith.constant 1 : index
    %c1_139 = arith.constant 1 : index
    %c0_140 = arith.constant 0 : index
    %c0_141 = arith.constant 0 : index
    %102 = vector.load %arg2[%c1_137, %c1_138, %c1_139, %c0_140, %c0_141] : memref<2x3x3x128x128xbf16, #tpu.memory_space<vmem>>, vector<1x1x1x128x128xbf16>
    %103 = vector.shape_cast %102 : vector<1x1x1x128x128xbf16> to vector<128x128xbf16>
    %cst_142 = arith.constant dense<0.000000e+00> : vector<256x128xf32>
    %104 = tpu.matmul %101, %103, %cst_142 {dimension_numbers = #tpu.dot_dimension_numbers<[1], [0], [0], [1], [0, 0, 1, 1], [], []>} : vector<256x128xbf16>, vector<128x128xbf16>, vector<256x128xf32> -> vector<256x128xf32>
    %105 = arith.addf %99, %104 : vector<256x128xf32>
    %c1_143 = arith.constant 1 : index
    %c2_144 = arith.constant 2 : index
    %c0_145 = arith.constant 0 : index
    %106 = vector.load %arg5[%c1_143, %c2_144, %c0_145] : memref<18x18x128xbf16, #tpu.memory_space<vmem>>, vector<16x16x128xbf16>
    %107 = vector.shape_cast %106 : vector<16x16x128xbf16> to vector<256x128xbf16>
    %c1_146 = arith.constant 1 : index
    %c1_147 = arith.constant 1 : index
    %c2_148 = arith.constant 2 : index
    %c0_149 = arith.constant 0 : index
    %c0_150 = arith.constant 0 : index
    %108 = vector.load %arg2[%c1_146, %c1_147, %c2_148, %c0_149, %c0_150] : memref<2x3x3x128x128xbf16, #tpu.memory_space<vmem>>, vector<1x1x1x128x128xbf16>
    %109 = vector.shape_cast %108 : vector<1x1x1x128x128xbf16> to vector<128x128xbf16>
    %cst_151 = arith.constant dense<0.000000e+00> : vector<256x128xf32>
    %110 = tpu.matmul %107, %109, %cst_151 {dimension_numbers = #tpu.dot_dimension_numbers<[1], [0], [0], [1], [0, 0, 1, 1], [], []>} : vector<256x128xbf16>, vector<128x128xbf16>, vector<256x128xf32> -> vector<256x128xf32>
    %111 = arith.addf %105, %110 : vector<256x128xf32>
    %c2_152 = arith.constant 2 : index
    %c0_153 = arith.constant 0 : index
    %c0_154 = arith.constant 0 : index
    %112 = vector.load %arg5[%c2_152, %c0_153, %c0_154] : memref<18x18x128xbf16, #tpu.memory_space<vmem>>, vector<16x16x128xbf16>
    %113 = vector.shape_cast %112 : vector<16x16x128xbf16> to vector<256x128xbf16>
    %c1_155 = arith.constant 1 : index
    %c2_156 = arith.constant 2 : index
    %c0_157 = arith.constant 0 : index
    %c0_158 = arith.constant 0 : index
    %c0_159 = arith.constant 0 : index
    %114 = vector.load %arg2[%c1_155, %c2_156, %c0_157, %c0_158, %c0_159] : memref<2x3x3x128x128xbf16, #tpu.memory_space<vmem>>, vector<1x1x1x128x128xbf16>
    %115 = vector.shape_cast %114 : vector<1x1x1x128x128xbf16> to vector<128x128xbf16>
    %cst_160 = arith.constant dense<0.000000e+00> : vector<256x128xf32>
    %116 = tpu.matmul %113, %115, %cst_160 {dimension_numbers = #tpu.dot_dimension_numbers<[1], [0], [0], [1], [0, 0, 1, 1], [], []>} : vector<256x128xbf16>, vector<128x128xbf16>, vector<256x128xf32> -> vector<256x128xf32>
    %117 = arith.addf %111, %116 : vector<256x128xf32>
    %c2_161 = arith.constant 2 : index
    %c1_162 = arith.constant 1 : index
    %c0_163 = arith.constant 0 : index
    %118 = vector.load %arg5[%c2_161, %c1_162, %c0_163] : memref<18x18x128xbf16, #tpu.memory_space<vmem>>, vector<16x16x128xbf16>
    %119 = vector.shape_cast %118 : vector<16x16x128xbf16> to vector<256x128xbf16>
    %c1_164 = arith.constant 1 : index
    %c2_165 = arith.constant 2 : index
    %c1_166 = arith.constant 1 : index
    %c0_167 = arith.constant 0 : index
    %c0_168 = arith.constant 0 : index
    %120 = vector.load %arg2[%c1_164, %c2_165, %c1_166, %c0_167, %c0_168] : memref<2x3x3x128x128xbf16, #tpu.memory_space<vmem>>, vector<1x1x1x128x128xbf16>
    %121 = vector.shape_cast %120 : vector<1x1x1x128x128xbf16> to vector<128x128xbf16>
    %cst_169 = arith.constant dense<0.000000e+00> : vector<256x128xf32>
    %122 = tpu.matmul %119, %121, %cst_169 {dimension_numbers = #tpu.dot_dimension_numbers<[1], [0], [0], [1], [0, 0, 1, 1], [], []>} : vector<256x128xbf16>, vector<128x128xbf16>, vector<256x128xf32> -> vector<256x128xf32>
    %123 = arith.addf %117, %122 : vector<256x128xf32>
    %c2_170 = arith.constant 2 : index
    %c2_171 = arith.constant 2 : index
    %c0_172 = arith.constant 0 : index
    %124 = vector.load %arg5[%c2_170, %c2_171, %c0_172] : memref<18x18x128xbf16, #tpu.memory_space<vmem>>, vector<16x16x128xbf16>
    %125 = vector.shape_cast %124 : vector<16x16x128xbf16> to vector<256x128xbf16>
    %c1_173 = arith.constant 1 : index
    %c2_174 = arith.constant 2 : index
    %c2_175 = arith.constant 2 : index
    %c0_176 = arith.constant 0 : index
    %c0_177 = arith.constant 0 : index
    %126 = vector.load %arg2[%c1_173, %c2_174, %c2_175, %c0_176, %c0_177] : memref<2x3x3x128x128xbf16, #tpu.memory_space<vmem>>, vector<1x1x1x128x128xbf16>
    %127 = vector.shape_cast %126 : vector<1x1x1x128x128xbf16> to vector<128x128xbf16>
    %cst_178 = arith.constant dense<0.000000e+00> : vector<256x128xf32>
    %128 = tpu.matmul %125, %127, %cst_178 {dimension_numbers = #tpu.dot_dimension_numbers<[1], [0], [0], [1], [0, 0, 1, 1], [], []>} : vector<256x128xbf16>, vector<128x128xbf16>, vector<256x128xf32> -> vector<256x128xf32>
    %129 = arith.addf %123, %128 : vector<256x128xf32>
    %130 = vector.extract_strided_slice %2 {offsets = [1, 0], sizes = [1, 128], strides = [1, 1]} : vector<2x128xf32> to vector<1x128xf32>
    %131 = vector.broadcast %130 : vector<1x128xf32> to vector<256x128xf32>
    %132 = arith.addf %129, %131 : vector<256x128xf32>
    %cst_179 = arith.constant 0.000000e+00 : f32
    %133 = vector.broadcast %cst_179 : f32 to vector<256x128xf32>
    %134 = arith.maximumf %132, %133 : vector<256x128xf32>
    %135 = vector.shape_cast %134 : vector<256x128xf32> to vector<16x16x128xf32>
    %c0_180 = arith.constant 0 : index
    %c0_181 = arith.constant 0 : index
    %c0_182 = arith.constant 0 : index
    %c0_183 = arith.constant 0 : index
    %136 = vector.load %arg4[%c0_180, %c0_181, %c0_182, %c0_183] : memref<1x16x16x128xf32, #tpu.memory_space<vmem>>, vector<1x16x16x128xf32>
    %137 = vector.shape_cast %136 : vector<1x16x16x128xf32> to vector<16x16x128xf32>
    %138 = vector.shape_cast %135 : vector<16x16x128xf32> to vector<1x16x16x128xf32>
    tpu.vector_store %arg4[%c0_180, %c0_181, %c0_182, %c0_183], %138 {strides = array<i32>} : memref<1x16x16x128xf32, #tpu.memory_space<vmem>>, vector<1x16x16x128xf32>,
    return
  }
  func.func @transform_0(%arg0: i32) -> (i32, i32, i32, i32) {
    %c0_i32 = arith.constant 0 : i32
    %c0_i32_0 = arith.constant 0 : i32
    %c0_i32_1 = arith.constant 0 : i32
    %c0_i32_2 = arith.constant 0 : i32
    return %arg0, %c0_i32, %c0_i32_0, %c0_i32_1 : i32, i32, i32, i32
  }
  func.func @transform_1(%arg0: i32) -> (i32, i32, i32, i32, i32) {
    %c0_i32 = arith.constant 0 : i32
    %c0_i32_0 = arith.constant 0 : i32
    %c0_i32_1 = arith.constant 0 : i32
    %c0_i32_2 = arith.constant 0 : i32
    %c0_i32_3 = arith.constant 0 : i32
    %c0_i32_4 = arith.constant 0 : i32
    return %c0_i32, %c0_i32_0, %c0_i32_1, %c0_i32_2, %c0_i32_3 : i32, i32, i32, i32, i32
  }
  func.func @transform_2(%arg0: i32) -> (i32, i32) {
    %c0_i32 = arith.constant 0 : i32
    %c0_i32_0 = arith.constant 0 : i32
    %c0_i32_1 = arith.constant 0 : i32
    return %c0_i32, %c0_i32_0 : i32, i32
  }
  func.func @transform_3(%arg0: i32) -> (i32, i32, i32, i32) {
    %c0_i32 = arith.constant 0 : i32
    %c0_i32_0 = arith.constant 0 : i32
    %c0_i32_1 = arith.constant 0 : i32
    %c0_i32_2 = arith.constant 0 : i32
    return %arg0, %c0_i32, %c0_i32_0, %c0_i32_1 : i32, i32, i32, i32
  }
}

</mosaic_0001>

<llo_original>
// kernel: tpu_custom_call.1
$region0: #{tpu_custom_call.1}
  #allocation0 [shape = 'u32[]', space=smem, size = 0x4, offset = 0x4, fixed_abs, tag = 'smem constant byte address 0x4 - core index']
  #allocation1 [shape = 'u32[144,128]{1,0:T(1,128)}', space=vmem, size = 0x12000, scoped, tag = 'internal scratch']
  #allocation2 [shape = 'bf16[18,18,128]{2,1,0:T(8,128)(2,1)}', space=vmem, size = 0x1b000, scoped, tag = 'scratch operand']
  %s0 = inlined_call_operand.vmem [shape: bf16[2,18,18,128], index: 0, kind: input, shape index: {}]
  %s1 = inlined_call_operand.hbm [shape: bf16[2,3,3,128,128], index: 1, kind: input, shape index: {}]
  %s2 = inlined_call_operand.vmem [shape: f32[2,128], index: 2, kind: input, shape index: {}]
  %s3 = inlined_call_operand.hbm [shape: f32[2,16,16,128], index: 3, kind: output, shape index: {}]
  %s4 = sld [smem:[#allocation0]]
  $region49: #{tpu_custom_call.1} parent=0
    _
  %s6 = ssub.s32 1, %s4
  %s7 = scalar_select 0, %s6, %s4
  $region1: #{tpu_custom_call.1} parent=0
    #allocation3 [shape = 'u8[589824]{0}', space=vmem, size = 0x90000, scoped, tag = 'input window, operand 1, single buffered']
    #allocation4 [shape = 's32[2]{0}', space=sflag, size = 0x8, scoped, tag = 'scoped memory for tpu_custom_call.1']
    #allocation5 [shape = 's32[2]{0}', space=sflag, size = 0x8, scoped, tag = 'scoped memory for tpu_custom_call.1']
    #allocation6 [shape = 'u8[262144]{0}', space=vmem, size = 0x40000, scoped, tag = 'output window, operand 0']
    %8 = vsyncpa [#allocation4], 0
    %9 = vsyncpa [#allocation5], 0
    %s10 = scalar_lea.sflag [#allocation5], 1
    %11 = vsyncpa %s10, 0
    loop: start=0, step=1, limit=4
    $region2: #{tpu_custom_call.1} parent=1 // loop_pre_header
      _
    $region3: #{tpu_custom_call.1} parent=1 // loop_header
      %s13 = sphi 0, %s17
      %p14 = scmp.ge.s32.totalorder %s13, 4
      %s23 = sphi 0, %s25
      %s26 = sphi 0, %s23
      %s27 = sphi 0, %s26
      %s43 = sphi 0, %s27
      %s47 = sphi 0, %s47
      %s49 = sphi 0, %s47
      %s50 = sphi 0, %s49
      %s64 = sphi 0, %s50
      %s68 = sphi 0, %s68
      %s70 = sphi 0, %s68
      %s71 = sphi 0, %s70
      %s85 = sphi 0, %s71
      %s91 = sphi 0, %s93
      %s94 = sphi 0, %s91
      %s95 = sphi 0, %s94
      %s111 = sphi 0, %s95
    $region4: #{tpu_custom_call.1} parent=1 // loop_header_branch
      %16 = sbr.rel (%p14) target = $region8
    $region5: #{tpu_custom_call.1} parent=1 // loop_body
      %s18 = ssub.s32 %s13, 1
      %s19 = ssub.s32 %s13, 2
      %s20 = sadd.s32 %s13, 1
      %s21 = ssub.s32 %s13, %s20
      %p22 = scmp.eq.s32.totalorder %s21, 0
      %s24 = sadd.s32 %s23, 1
      %s25 = scalar_select %p22, %s23, %s24
      %p28 = pneg %p22
      %p29 = scmp.eq.s32.totalorder %s13, 1
      %p30 = por %p28, %p29
      %p31 = scmp.ne.s32.totalorder %s23, %s26
      %p32 = scmp.eq.s32.totalorder %s13, 0
      %p33 = por %p31, %p32
      %p34 = scmp.ne.s32.totalorder %s23, %s26
      %p35 = scmp.eq.s32.totalorder %s18, 1
      %p36 = por %p34, %p35
      %p37 = scmp.ne.s32.totalorder %s26, %s27
      %p38 = scmp.eq.s32.totalorder %s18, 0
      %p39 = por %p37, %p38
      %p40 = scmp.ne.s32.totalorder %s26, %s27
      %p41 = scmp.eq.s32.totalorder %s19, 1
      %p42 = por %p40, %p41
      %p44 = scmp.ne.s32.totalorder %s27, %s43
      %p45 = scmp.eq.s32.totalorder %s19, 0
      %p46 = por %p44, %p45
      %s48 = sadd.s32 %s47, 1
      %p51 = scmp.eq.s32.totalorder %s13, 1
      %p52 = scmp.ne.s32.totalorder %s47, %s49
      %p53 = scmp.eq.s32.totalorder %s13, 0
      %p54 = por %p52, %p53
      %p55 = scmp.ne.s32.totalorder %s47, %s49
      %p56 = scmp.eq.s32.totalorder %s18, 1
      %p57 = por %p55, %p56
      %p58 = scmp.ne.s32.totalorder %s49, %s50
      %p59 = scmp.eq.s32.totalorder %s18, 0
      %p60 = por %p58, %p59
      %p61 = scmp.ne.s32.totalorder %s49, %s50
      %p62 = scmp.eq.s32.totalorder %s19, 1
      %p63 = por %p61, %p62
      %p65 = scmp.ne.s32.totalorder %s50, %s64
      %p66 = scmp.eq.s32.totalorder %s19, 0
      %p67 = por %p65, %p66
      %s69 = sadd.s32 %s68, 1
      %p72 = scmp.eq.s32.totalorder %s13, 1
      %p73 = scmp.ne.s32.totalorder %s68, %s70
      %p74 = scmp.eq.s32.totalorder %s13, 0
      %p75 = por %p73, %p74
      %p76 = scmp.ne.s32.totalorder %s68, %s70
      %p77 = scmp.eq.s32.totalorder %s18, 1
      %p78 = por %p76, %p77
      %p79 = scmp.ne.s32.totalorder %s70, %s71
      %p80 = scmp.eq.s32.totalorder %s18, 0
      %p81 = por %p79, %p80
      %p82 = scmp.ne.s32.totalorder %s70, %s71
      %p83 = scmp.eq.s32.totalorder %s19, 1
      %p84 = por %p82, %p83
      %p86 = scmp.ne.s32.totalorder %s71, %s85
      %p87 = scmp.eq.s32.totalorder %s19, 0
      %p88 = por %p86, %p87
      %s89 = ssub.s32 %s13, %s20
      %p90 = scmp.eq.s32.totalorder %s89, 0
      %s92 = sadd.s32 %s91, 1
      %s93 = scalar_select %p90, %s91, %s92
      %p96 = pneg %p90
      %p97 = scmp.eq.s32.totalorder %s13, 1
      %p98 = por %p96, %p97
      %p99 = scmp.ne.s32.totalorder %s91, %s94
      %p100 = scmp.eq.s32.totalorder %s13, 0
      %p101 = por %p99, %p100
      %p102 = scmp.ne.s32.totalorder %s91, %s94
      %p103 = scmp.eq.s32.totalorder %s18, 1
      %p104 = por %p102, %p103
      %p105 = scmp.ne.s32.totalorder %s94, %s95
      %p106 = scmp.eq.s32.totalorder %s18, 0
      %p107 = por %p105, %p106
      %p108 = scmp.ne.s32.totalorder %s94, %s95
      %p109 = scmp.eq.s32.totalorder %s19, 1
      %p110 = por %p108, %p109
      %p112 = scmp.ne.s32.totalorder %s95, %s111
      %p113 = scmp.eq.s32.totalorder %s19, 0
      %p114 = por %p112, %p113
      %p115 = scmp.le.s32.totalorder 1, %s13
      %p116 = scmp.lt.s32.totalorder %s13, 3
      %p117 = pnand %p115, %p116
      %p118 = pneg %p117
      // Predicated region
      $region9: #{tpu_custom_call.1} parent=5 // pred_check
        _
      $region10: #{tpu_custom_call.1} parent=5 // pred_check_branch
        %120 = sbr.rel (%p117) target = $region12
      $region11: #{tpu_custom_call.1} parent=5 // pred_region
        %s121 = ssub.s32 %s13, 1
        // Predicated region
        $region13: #{tpu_custom_call.1} parent=11 // pred_check
          %p122 = pneg %p60
        $region14: #{tpu_custom_call.1} parent=11 // pred_check_branch
          %124 = sbr.rel (%p122) target = $region16
        $region15: #{tpu_custom_call.1} parent=11 // pred_region
          %s126 = ssub.s32 18432, 18432
          %127 = vsyncadd [#allocation4], %s126
          %s128 = sshll.u32 [#allocation3], 4
          %s129 = int_to_ptr.vmem [resolvable:$true] %s128
          %134 = dma.hbm_to_vmem [thread:$0]  %s1, 18432, %s129, [#allocation4], 64, 64, 4
        $region16: #{tpu_custom_call.1} parent=11 // pred_fallthru
          _
        // Predicated region
        $region17: #{tpu_custom_call.1} parent=11 // pred_check
          %p135 = pneg %p81
        $region18: #{tpu_custom_call.1} parent=11 // pred_check_branch
          %137 = sbr.rel (%p135) target = $region20
        $region19: #{tpu_custom_call.1} parent=11 // pred_region
          _
        $region20: #{tpu_custom_call.1} parent=11 // pred_fallthru
          _
      $region12: #{tpu_custom_call.1} parent=5 // pred_fallthru
        _
      %p138 = scmp.lt.s32.totalorder %s13, 2
      // Predicated region
      $region21: #{tpu_custom_call.1} parent=5 // pred_check
        %p139 = pneg %p138
      $region22: #{tpu_custom_call.1} parent=5 // pred_check_branch
        %141 = sbr.rel (%p139) target = $region24
      $region23: #{tpu_custom_call.1} parent=5 // pred_region
        // Predicated region
        $region25: #{tpu_custom_call.1} parent=23 // pred_check
          %p142 = pneg %p33
        $region26: #{tpu_custom_call.1} parent=23 // pred_check_branch
          %144 = sbr.rel (%p142) target = $region28
        $region27: #{tpu_custom_call.1} parent=23 // pred_region
          %p145 = scmp.lt.s32.totalorder %s13, 1
          %s146 = scalar_select %p145, %s13, 1
          %s147 = smul.addr %s146, 54
          %s148 = smul.addr %s147, 4
          %s149 = scalar_lea.vmem %s0, %s148
        $region28: #{tpu_custom_call.1} parent=23 // pred_fallthru
          _
      $region24: #{tpu_custom_call.1} parent=5 // pred_fallthru
        _
      %p150 = scmp.le.s32.totalorder 1, %s13
      %p151 = scmp.lt.s32.totalorder %s13, 3
      %p152 = pnand %p150, %p151
      %p153 = pneg %p152
      // Predicated region
      $region29: #{tpu_custom_call.1} parent=5 // pred_check
        _
      $region30: #{tpu_custom_call.1} parent=5 // pred_check_branch
        %155 = sbr.rel (%p152) target = $region32
      $region31: #{tpu_custom_call.1} parent=5 // pred_region
        %s156 = ssub.s32 %s13, 1
        // Predicated region
        $region33: #{tpu_custom_call.1} parent=31 // pred_check
          %p157 = pneg %p60
        $region34: #{tpu_custom_call.1} parent=31 // pred_check_branch
          %159 = sbr.rel (%p157) target = $region36
        $region35: #{tpu_custom_call.1} parent=31 // pred_region
          %160 = dma.done [#allocation4], 18432
        $region36: #{tpu_custom_call.1} parent=31 // pred_fallthru
          _
        %p161 = scmp.lt.s32.totalorder %s18, 1
        %s162 = scalar_select %p161, %s18, 1
        %s163 = smul.addr %s162, 54
        %s164 = smul.addr %s163, 4
        %s165 = scalar_lea.vmem %s0, %s164
        %p166 = pneg %p39
        %p167 = pneg %p36
        %p168 = pneg %p60
        %p169 = pneg %p57
        %p170 = pneg %p81
        %p171 = pneg %p78
        %p172 = pneg %p107
        %p173 = pneg %p104
        %s174 = sand.u32 %s94, 1
        %s175 = scalar_lea.sflag [#allocation5], %s174
        %s176 = sand.u32 %s94, 1
        %s177 = smul.addr %s176, 256
        %s178 = scalar_lea.vmem [#allocation6], %s177
        %p179 = scmp.lt.s32.totalorder %s18, 1
        %s180 = scalar_select %p179, %s18, 1
        %s181 = smul.addr %s180, 54
        %s182 = smul.addr %s181, 4
        %s183 = scalar_lea.vmem %s0, %s182
        %185 = vst [vmem:[#allocation2] sm:$0xf] 0
        %186 = vst [vmem:[#allocation2 + $0x4] sm:$0xf] 0
        %187 = vst [vmem:[#allocation2 + $0x8] sm:$0x1] 0
        %188 = vst [vmem:[#allocation2 + $0xc] sm:$0xf] 0
        %189 = vst [vmem:[#allocation2 + $0x10] sm:$0xf] 0
        %190 = vst [vmem:[#allocation2 + $0x14] sm:$0x1] 0
        %191 = vst [vmem:[#allocation2 + $0x18] sm:$0xf] 0
        %192 = vst [vmem:[#allocation2 + $0x1c] sm:$0xf] 0
        %193 = vst [vmem:[#allocation2 + $0x20] sm:$0x1] 0
        %194 = vst [vmem:[#allocation2 + $0x24] sm:$0xf] 0
        %195 = vst [vmem:[#allocation2 + $0x28] sm:$0xf] 0
        %196 = vst [vmem:[#allocation2 + $0x2c] sm:$0x1] 0
        %197 = vst [vmem:[#allocation2 + $0x30] sm:$0xf] 0
        %198 = vst [vmem:[#allocation2 + $0x34] sm:$0xf] 0
        %199 = vst [vmem:[#allocation2 + $0x38] sm:$0x1] 0
        %200 = vst [vmem:[#allocation2 + $0x3c] sm:$0xf] 0
        %201 = vst [vmem:[#allocation2 + $0x40] sm:$0xf] 0
        %202 = vst [vmem:[#allocation2 + $0x44] sm:$0x1] 0
        %203 = vst [vmem:[#allocation2 + $0x48] sm:$0xf] 0
        %204 = vst [vmem:[#allocation2 + $0x4c] sm:$0xf] 0
        %205 = vst [vmem:[#allocation2 + $0x50] sm:$0x1] 0
        %206 = vst [vmem:[#allocation2 + $0x54] sm:$0xf] 0
        %207 = vst [vmem:[#allocation2 + $0x58] sm:$0xf] 0
        %208 = vst [vmem:[#allocation2 + $0x5c] sm:$0x1] 0
        %209 = vst [vmem:[#allocation2 + $0x60] sm:$0xf] 0
        %210 = vst [vmem:[#allocation2 + $0x64] sm:$0xf] 0
        %211 = vst [vmem:[#allocation2 + $0x68] sm:$0x1] 0
        %212 = vst [vmem:[#allocation2 + $0x6c] sm:$0xf] 0
        %213 = vst [vmem:[#allocation2 + $0x70] sm:$0xf] 0
        %214 = vst [vmem:[#allocation2 + $0x74] sm:$0x1] 0
        %215 = vst [vmem:[#allocation2 + $0x78] sm:$0xf] 0
        %216 = vst [vmem:[#allocation2 + $0x7c] sm:$0xf] 0
        %217 = vst [vmem:[#allocation2 + $0x80] sm:$0x1] 0
        %218 = vst [vmem:[#allocation2 + $0x84] sm:$0xf] 0
        %219 = vst [vmem:[#allocation2 + $0x88] sm:$0xf] 0
        %220 = vst [vmem:[#allocation2 + $0x8c] sm:$0x1] 0
        %221 = vst [vmem:[#allocation2 + $0x90] sm:$0xf] 0
        %222 = vst [vmem:[#allocation2 + $0x94] sm:$0xf] 0
        %223 = vst [vmem:[#allocation2 + $0x98] sm:$0x1] 0
        %224 = vst [vmem:[#allocation2 + $0x9c] sm:$0xf] 0
        %225 = vst [vmem:[#allocation2 + $0xa0] sm:$0xf] 0
        %226 = vst [vmem:[#allocation2 + $0xa4] sm:$0x1] 0
        %227 = vst [vmem:[#allocation2 + $0xa8] sm:$0xf] 0
        %228 = vst [vmem:[#allocation2 + $0xac] sm:$0xf] 0
        %229 = vst [vmem:[#allocation2 + $0xb0] sm:$0x1] 0
        %230 = vst [vmem:[#allocation2 + $0xb4] sm:$0xf] 0
        %231 = vst [vmem:[#allocation2 + $0xb8] sm:$0xf] 0
        %232 = vst [vmem:[#allocation2 + $0xbc] sm:$0x1] 0
        %233 = vst [vmem:[#allocation2 + $0xc0] sm:$0xf] 0
        %234 = vst [vmem:[#allocation2 + $0xc4] sm:$0xf] 0
        %235 = vst [vmem:[#allocation2 + $0xc8] sm:$0x1] 0
        %236 = vst [vmem:[#allocation2 + $0xcc] sm:$0xf] 0
        %237 = vst [vmem:[#allocation2 + $0xd0] sm:$0xf] 0
        %238 = vst [vmem:[#allocation2 + $0xd4] sm:$0x1] 0
        %v239 = vld [vmem:[%s2] sm:$0x3]
        %v240 = vld [vmem:[%s183] sm:$0xf]
        %v241 = vld [vmem:[%s183 + $0x4] sm:$0xf]
        %v242 = vld [vmem:[%s183 + $0xc] sm:$0xf]
        %v243 = vld [vmem:[%s183 + $0x10] sm:$0xf]
        %v244 = vld [vmem:[%s183 + $0x18] sm:$0xf]
        %v245 = vld [vmem:[%s183 + $0x1c] sm:$0xf]
        %v246 = vld [vmem:[%s183 + $0x24] sm:$0xf]
        %v247 = vld [vmem:[%s183 + $0x28] sm:$0xf]
        %v248 = vld [vmem:[%s183 + $0x30] sm:$0xf]
        %v249 = vld [vmem:[%s183 + $0x34] sm:$0xf]
        %v250 = vld [vmem:[%s183 + $0x3c] sm:$0xf]
        %v251 = vld [vmem:[%s183 + $0x40] sm:$0xf]
        %v252 = vld [vmem:[%s183 + $0x48] sm:$0xf]
        %v253 = vld [vmem:[%s183 + $0x4c] sm:$0xf]
        %v254 = vld [vmem:[%s183 + $0x54] sm:$0xf]
        %v255 = vld [vmem:[%s183 + $0x58] sm:$0xf]
        %v256 = vld [vmem:[%s183 + $0x60] sm:$0xf]
        %v257 = vld [vmem:[%s183 + $0x64] sm:$0xf]
        %v258 = vld [vmem:[%s183 + $0x6c] sm:$0xf]
        %v259 = vld [vmem:[%s183 + $0x70] sm:$0xf]
        %v260 = vld [vmem:[%s183 + $0x78] sm:$0xf]
        %v261 = vld [vmem:[%s183 + $0x7c] sm:$0xf]
        %v262 = vld [vmem:[%s183 + $0x84] sm:$0xf]
        %v263 = vld [vmem:[%s183 + $0x88] sm:$0xf]
        %v264 = vld [vmem:[%s183 + $0x90] sm:$0xf]
        %v265 = vld [vmem:[%s183 + $0x94] sm:$0xf]
        %v266 = vld [vmem:[%s183 + $0x9c] sm:$0xf]
        %v267 = vld [vmem:[%s183 + $0xa0] sm:$0xf]
        %v268 = vld [vmem:[%s183 + $0xa8] sm:$0xf]
        %v269 = vld [vmem:[%s183 + $0xac] sm:$0xf]
        %v270 = vld [vmem:[%s183 + $0xb4] sm:$0xf]
        %v271 = vld [vmem:[%s183 + $0xb8] sm:$0xf]
        %v272 = vld [vmem:[#allocation3] sm:$0xf]
        %v273 = vld [vmem:[#allocation3 + $0x4] sm:$0xf]
        %v274 = vld [vmem:[#allocation3 + $0x8] sm:$0xf]
        %v275 = vld [vmem:[#allocation3 + $0xc] sm:$0xf]
        %v276 = vld [vmem:[#allocation3 + $0x10] sm:$0xf]
        %v277 = vld [vmem:[#allocation3 + $0x14] sm:$0xf]
        %v278 = vld [vmem:[#allocation3 + $0x18] sm:$0xf]
        %v279 = vld [vmem:[#allocation3 + $0x1c] sm:$0xf]
        %v280 = vld [vmem:[#allocation3 + $0x20] sm:$0xf]
        %v281 = vld [vmem:[#allocation3 + $0x24] sm:$0xf]
        %v282 = vld [vmem:[#allocation3 + $0x28] sm:$0xf]
        %v283 = vld [vmem:[#allocation3 + $0x2c] sm:$0xf]
        %v284 = vld [vmem:[#allocation3 + $0x30] sm:$0xf]
        %v285 = vld [vmem:[#allocation3 + $0x34] sm:$0xf]
        %v286 = vld [vmem:[#allocation3 + $0x38] sm:$0xf]
        %v287 = vld [vmem:[#allocation3 + $0x3c] sm:$0xf]
        %v288 = vld [vmem:[%s183 + $0x8] sm:$0x1]
        %v289 = vld [vmem:[%s183 + $0x14] sm:$0x1]
        %v290 = vld [vmem:[%s183 + $0x20] sm:$0x1]
        %v291 = vld [vmem:[%s183 + $0x2c] sm:$0x1]
        %v292 = vld [vmem:[%s183 + $0x38] sm:$0x1]
        %v293 = vld [vmem:[%s183 + $0x44] sm:$0x1]
        %v294 = vld [vmem:[%s183 + $0x50] sm:$0x1]
        %v295 = vld [vmem:[%s183 + $0x5c] sm:$0x1]
        %v296 = vld [vmem:[%s183 + $0x68] sm:$0x1]
        %v297 = vld [vmem:[%s183 + $0x74] sm:$0x1]
        %v298 = vld [vmem:[%s183 + $0x80] sm:$0x1]
        %v299 = vld [vmem:[%s183 + $0x8c] sm:$0x1]
        %v300 = vld [vmem:[%s183 + $0x98] sm:$0x1]
        %v301 = vld [vmem:[%s183 + $0xa4] sm:$0x1]
        %v302 = vld [vmem:[%s183 + $0xb0] sm:$0x1]
        %v303 = vld [vmem:[%s183 + $0xbc] sm:$0x1]
        %vm304 = vsmask.f32 3328
        %vm305 = vsmask.f32 7440
        %vm306 = vmor %vm304, %vm305
        %v308 = vshrl.u32 %v240, 16
        %v310 = vrot.slane %v308, 4
        %v311 = vshll.u32 %v240, 16
        %v313 = vrot.slane %v311, 5
        %v314 = vor.u32 %v310, %v313
        %v315 = vrot.slane %v314, 4
        %v317 = vshll.u32 %v241, 16
        %v319 = vrot.slane %v317, 5
        %v320 = vsel %vm306, %v315, %v319
        %v321 = vshrl.u32 %v241, 16
        %v323 = vrot.slane %v321, 4
        %v324 = vor.u32 %v323, %v319
        %v325 = vrot.slane %v324, 4
        %v327 = vshll.u32 %v288, 16
        %v329 = vrot.slane %v327, 5
        %v330 = vsel %vm306, %v325, %v329
        %v332 = vshrl.u32 %v242, 16
        %v334 = vrot.slane %v332, 4
        %v335 = vshll.u32 %v242, 16
        %v337 = vrot.slane %v335, 5
        %v338 = vor.u32 %v334, %v337
        %v339 = vrot.slane %v338, 4
        %v341 = vshll.u32 %v243, 16
        %v343 = vrot.slane %v341, 5
        %v344 = vsel %vm306, %v339, %v343
        %v345 = vshrl.u32 %v243, 16
        %v347 = vrot.slane %v345, 4
        %v348 = vor.u32 %v347, %v343
        %v349 = vrot.slane %v348, 4
        %v351 = vshll.u32 %v289, 16
        %v353 = vrot.slane %v351, 5
        %v354 = vsel %vm306, %v349, %v353
        %v356 = vshrl.u32 %v244, 16
        %v358 = vrot.slane %v356, 4
        %v359 = vshll.u32 %v244, 16
        %v361 = vrot.slane %v359, 5
        %v362 = vor.u32 %v358, %v361
        %v363 = vrot.slane %v362, 4
        %v365 = vshll.u32 %v245, 16
        %v367 = vrot.slane %v365, 5
        %v368 = vsel %vm306, %v363, %v367
        %v369 = vshrl.u32 %v245, 16
        %v371 = vrot.slane %v369, 4
        %v372 = vor.u32 %v371, %v367
        %v373 = vrot.slane %v372, 4
        %v375 = vshll.u32 %v290, 16
        %v377 = vrot.slane %v375, 5
        %v378 = vsel %vm306, %v373, %v377
        %v380 = vshrl.u32 %v246, 16
        %v382 = vrot.slane %v380, 4
        %v383 = vshll.u32 %v246, 16
        %v385 = vrot.slane %v383, 5
        %v386 = vor.u32 %v382, %v385
        %v387 = vrot.slane %v386, 4
        %v389 = vshll.u32 %v247, 16
        %v391 = vrot.slane %v389, 5
        %v392 = vsel %vm306, %v387, %v391
        %v393 = vshrl.u32 %v247, 16
        %v395 = vrot.slane %v393, 4
        %v396 = vor.u32 %v395, %v391
        %v397 = vrot.slane %v396, 4
        %v399 = vshll.u32 %v291, 16
        %v401 = vrot.slane %v399, 5
        %v402 = vsel %vm306, %v397, %v401
        %v404 = vshrl.u32 %v248, 16
        %v406 = vrot.slane %v404, 4
        %v407 = vshll.u32 %v248, 16
        %v409 = vrot.slane %v407, 5
        %v410 = vor.u32 %v406, %v409
        %v411 = vrot.slane %v410, 4
        %v413 = vshll.u32 %v249, 16
        %v415 = vrot.slane %v413, 5
        %v416 = vsel %vm306, %v411, %v415
        %v417 = vshrl.u32 %v249, 16
        %v419 = vrot.slane %v417, 4
        %v420 = vor.u32 %v419, %v415
        %v421 = vrot.slane %v420, 4
        %v423 = vshll.u32 %v292, 16
        %v425 = vrot.slane %v423, 5
        %v426 = vsel %vm306, %v421, %v425
        %v428 = vshrl.u32 %v250, 16
        %v430 = vrot.slane %v428, 4
        %v431 = vshll.u32 %v250, 16
        %v433 = vrot.slane %v431, 5
        %v434 = vor.u32 %v430, %v433
        %v435 = vrot.slane %v434, 4
        %v437 = vshll.u32 %v251, 16
        %v439 = vrot.slane %v437, 5
        %v440 = vsel %vm306, %v435, %v439
        %v441 = vshrl.u32 %v251, 16
        %v443 = vrot.slane %v441, 4
        %v444 = vor.u32 %v443, %v439
        %v445 = vrot.slane %v444, 4
        %v447 = vshll.u32 %v293, 16
        %v449 = vrot.slane %v447, 5
        %v450 = vsel %vm306, %v445, %v449
        %v452 = vshrl.u32 %v252, 16
        %v454 = vrot.slane %v452, 4
        %v455 = vshll.u32 %v252, 16
        %v457 = vrot.slane %v455, 5
        %v458 = vor.u32 %v454, %v457
        %v459 = vrot.slane %v458, 4
        %v461 = vshll.u32 %v253, 16
        %v463 = vrot.slane %v461, 5
        %v464 = vsel %vm306, %v459, %v463
        %v465 = vshrl.u32 %v253, 16
        %v467 = vrot.slane %v465, 4
        %v468 = vor.u32 %v467, %v463
        %v469 = vrot.slane %v468, 4
        %v471 = vshll.u32 %v294, 16
        %v473 = vrot.slane %v471, 5
        %v474 = vsel %vm306, %v469, %v473
        %v476 = vshrl.u32 %v254, 16
        %v478 = vrot.slane %v476, 4
        %v479 = vshll.u32 %v254, 16
        %v481 = vrot.slane %v479, 5
        %v482 = vor.u32 %v478, %v481
        %v483 = vrot.slane %v482, 4
        %v485 = vshll.u32 %v255, 16
        %v487 = vrot.slane %v485, 5
        %v488 = vsel %vm306, %v483, %v487
        %v489 = vshrl.u32 %v255, 16
        %v491 = vrot.slane %v489, 4
        %v492 = vor.u32 %v491, %v487
        %v493 = vrot.slane %v492, 4
        %v495 = vshll.u32 %v295, 16
        %v497 = vrot.slane %v495, 5
        %v498 = vsel %vm306, %v493, %v497
        %v500 = vshrl.u32 %v256, 16
        %v502 = vrot.slane %v500, 4
        %v503 = vshll.u32 %v256, 16
        %v505 = vrot.slane %v503, 5
        %v506 = vor.u32 %v502, %v505
        %v507 = vrot.slane %v506, 4
        %v509 = vshll.u32 %v257, 16
        %v511 = vrot.slane %v509, 5
        %v512 = vsel %vm306, %v507, %v511
        %v513 = vshrl.u32 %v257, 16
        %v515 = vrot.slane %v513, 4
        %v516 = vor.u32 %v515, %v511
        %v517 = vrot.slane %v516, 4
        %v519 = vshll.u32 %v296, 16
        %v521 = vrot.slane %v519, 5
        %v522 = vsel %vm306, %v517, %v521
        %v524 = vshrl.u32 %v258, 16
        %v526 = vrot.slane %v524, 4
        %v527 = vshll.u32 %v258, 16
        %v529 = vrot.slane %v527, 5
        %v530 = vor.u32 %v526, %v529
        %v531 = vrot.slane %v530, 4
        %v533 = vshll.u32 %v259, 16
        %v535 = vrot.slane %v533, 5
        %v536 = vsel %vm306, %v531, %v535
        %v537 = vshrl.u32 %v259, 16
        %v539 = vrot.slane %v537, 4
        %v540 = vor.u32 %v539, %v535
        %v541 = vrot.slane %v540, 4
        %v543 = vshll.u32 %v297, 16
        %v545 = vrot.slane %v543, 5
        %v546 = vsel %vm306, %v541, %v545
        %v548 = vshrl.u32 %v260, 16
        %v550 = vrot.slane %v548, 4
        %v551 = vshll.u32 %v260, 16
        %v553 = vrot.slane %v551, 5
        %v554 = vor.u32 %v550, %v553
        %v555 = vrot.slane %v554, 4
        %v557 = vshll.u32 %v261, 16
        %v559 = vrot.slane %v557, 5
        %v560 = vsel %vm306, %v555, %v559
        %v561 = vshrl.u32 %v261, 16
        %v563 = vrot.slane %v561, 4
        %v564 = vor.u32 %v563, %v559
        %v565 = vrot.slane %v564, 4
        %v567 = vshll.u32 %v298, 16
        %v569 = vrot.slane %v567, 5
        %v570 = vsel %vm306, %v565, %v569
        %v572 = vshrl.u32 %v262, 16
        %v574 = vrot.slane %v572, 4
        %v575 = vshll.u32 %v262, 16
        %v577 = vrot.slane %v575, 5
        %v578 = vor.u32 %v574, %v577
        %v579 = vrot.slane %v578, 4
        %v581 = vshll.u32 %v263, 16
        %v583 = vrot.slane %v581, 5
        %v584 = vsel %vm306, %v579, %v583
        %v585 = vshrl.u32 %v263, 16
        %v587 = vrot.slane %v585, 4
        %v588 = vor.u32 %v587, %v583
        %v589 = vrot.slane %v588, 4
        %v591 = vshll.u32 %v299, 16
        %v593 = vrot.slane %v591, 5
        %v594 = vsel %vm306, %v589, %v593
        %v596 = vshrl.u32 %v264, 16
        %v598 = vrot.slane %v596, 4
        %v599 = vshll.u32 %v264, 16
        %v601 = vrot.slane %v599, 5
        %v602 = vor.u32 %v598, %v601
        %v603 = vrot.slane %v602, 4
        %v605 = vshll.u32 %v265, 16
        %v607 = vrot.slane %v605, 5
        %v608 = vsel %vm306, %v603, %v607
        %v609 = vshrl.u32 %v265, 16
        %v611 = vrot.slane %v609, 4
        %v612 = vor.u32 %v611, %v607
        %v613 = vrot.slane %v612, 4
        %v615 = vshll.u32 %v300, 16
        %v617 = vrot.slane %v615, 5
        %v618 = vsel %vm306, %v613, %v617
        %v620 = vshrl.u32 %v266, 16
        %v622 = vrot.slane %v620, 4
        %v623 = vshll.u32 %v266, 16
        %v625 = vrot.slane %v623, 5
        %v626 = vor.u32 %v622, %v625
        %v627 = vrot.slane %v626, 4
        %v629 = vshll.u32 %v267, 16
        %v631 = vrot.slane %v629, 5
        %v632 = vsel %vm306, %v627, %v631
        %v633 = vshrl.u32 %v267, 16
        %v635 = vrot.slane %v633, 4
        %v636 = vor.u32 %v635, %v631
        %v637 = vrot.slane %v636, 4
        %v639 = vshll.u32 %v301, 16
        %v641 = vrot.slane %v639, 5
        %v642 = vsel %vm306, %v637, %v641
        %v644 = vshrl.u32 %v268, 16
        %v646 = vrot.slane %v644, 4
        %v647 = vshll.u32 %v268, 16
        %v649 = vrot.slane %v647, 5
        %v650 = vor.u32 %v646, %v649
        %v651 = vrot.slane %v650, 4
        %v653 = vshll.u32 %v269, 16
        %v655 = vrot.slane %v653, 5
        %v656 = vsel %vm306, %v651, %v655
        %v657 = vshrl.u32 %v269, 16
        %v659 = vrot.slane %v657, 4
        %v660 = vor.u32 %v659, %v655
        %v661 = vrot.slane %v660, 4
        %v663 = vshll.u32 %v302, 16
        %v665 = vrot.slane %v663, 5
        %v666 = vsel %vm306, %v661, %v665
        %v668 = vshrl.u32 %v270, 16
        %v670 = vrot.slane %v668, 4
        %v671 = vshll.u32 %v270, 16
        %v673 = vrot.slane %v671, 5
        %v674 = vor.u32 %v670, %v673
        %v675 = vrot.slane %v674, 4
        %v677 = vshll.u32 %v271, 16
        %v679 = vrot.slane %v677, 5
        %v680 = vsel %vm306, %v675, %v679
        %v681 = vshrl.u32 %v271, 16
        %v683 = vrot.slane %v681, 4
        %v684 = vor.u32 %v683, %v679
        %v685 = vrot.slane %v684, 4
        %v687 = vshll.u32 %v303, 16
        %v689 = vrot.slane %v687, 5
        %v690 = vsel %vm306, %v685, %v689
        %s691 = scalar_lea.vmem [#allocation3], 64
        %v692 = vld [vmem:[%s691] sm:$0xf]
        %v693 = vld [vmem:[%s691 + $0x4] sm:$0xf]
        %v694 = vld [vmem:[%s691 + $0x8] sm:$0xf]
        %v695 = vld [vmem:[%s691 + $0xc] sm:$0xf]
        %v696 = vld [vmem:[%s691 + $0x10] sm:$0xf]
        %v697 = vld [vmem:[%s691 + $0x14] sm:$0xf]
        %v698 = vld [vmem:[%s691 + $0x18] sm:$0xf]
        %v699 = vld [vmem:[%s691 + $0x1c] sm:$0xf]
        %v700 = vld [vmem:[%s691 + $0x20] sm:$0xf]
        %v701 = vld [vmem:[%s691 + $0x24] sm:$0xf]
        %v702 = vld [vmem:[%s691 + $0x28] sm:$0xf]
        %v703 = vld [vmem:[%s691 + $0x2c] sm:$0xf]
        %v704 = vld [vmem:[%s691 + $0x30] sm:$0xf]
        %v705 = vld [vmem:[%s691 + $0x34] sm:$0xf]
        %v706 = vld [vmem:[%s691 + $0x38] sm:$0xf]
        %v707 = vld [vmem:[%s691 + $0x3c] sm:$0xf]
        %v708 = vunpack.c.l.b16 %v320
        %v709 = vunpack.c.l.b16 %v330
        %v710 = vunpack.c.l.b16 %v344
        %v711 = vunpack.c.l.b16 %v354
        %v712 = vunpack.c.l.b16 %v368
        %v713 = vunpack.c.l.b16 %v378
        %v714 = vunpack.c.l.b16 %v392
        %v715 = vunpack.c.l.b16 %v402
        %v716 = vunpack.c.l.b16 %v416
        %v717 = vunpack.c.l.b16 %v426
        %v718 = vunpack.c.l.b16 %v440
        %v719 = vunpack.c.l.b16 %v450
        %v720 = vunpack.c.l.b16 %v464
        %v721 = vunpack.c.l.b16 %v474
        %v722 = vunpack.c.l.b16 %v488
        %v723 = vunpack.c.l.b16 %v498
        %v724 = vunpack.c.l.b16 %v512
        %v725 = vunpack.c.l.b16 %v522
        %v726 = vunpack.c.l.b16 %v536
        %v727 = vunpack.c.l.b16 %v546
        %v728 = vunpack.c.l.b16 %v560
        %v729 = vunpack.c.l.b16 %v570
        %v730 = vunpack.c.l.b16 %v584
        %v731 = vunpack.c.l.b16 %v594
        %v732 = vunpack.c.l.b16 %v608
        %v733 = vunpack.c.l.b16 %v618
        %v734 = vunpack.c.l.b16 %v632
        %v735 = vunpack.c.l.b16 %v642
        %v736 = vunpack.c.l.b16 %v656
        %v737 = vunpack.c.l.b16 %v666
        %v738 = vunpack.c.l.b16 %v680
        %v739 = vunpack.c.l.b16 %v690
        %v740 = vpack.c.b16 %v709, %v708
        %v741 = vpack.c.b16 %v711, %v710
        %v742 = vpack.c.b16 %v713, %v712
        %v743 = vpack.c.b16 %v715, %v714
        %v744 = vpack.c.b16 %v717, %v716
        %v745 = vpack.c.b16 %v719, %v718
        %v746 = vpack.c.b16 %v721, %v720
        %v747 = vpack.c.b16 %v723, %v722
        %v748 = vpack.c.b16 %v725, %v724
        %v749 = vpack.c.b16 %v727, %v726
        %v750 = vpack.c.b16 %v729, %v728
        %v751 = vpack.c.b16 %v731, %v730
        %v752 = vpack.c.b16 %v733, %v732
        %v753 = vpack.c.b16 %v735, %v734
        %v754 = vpack.c.b16 %v737, %v736
        %v755 = vpack.c.b16 %v739, %v738
        %v788 = vunpack.c.l.b16 %v692
        %v789 = vunpack.c.l.b16 %v693
        %v790 = vunpack.c.l.b16 %v694
        %v791 = vunpack.c.l.b16 %v695
        %v792 = vunpack.c.l.b16 %v696
        %v793 = vunpack.c.l.b16 %v697
        %v794 = vunpack.c.l.b16 %v698
        %v795 = vunpack.c.l.b16 %v699
        %v796 = vunpack.c.l.b16 %v700
        %v797 = vunpack.c.l.b16 %v701
        %v798 = vunpack.c.l.b16 %v702
        %v799 = vunpack.c.l.b16 %v703
        %v800 = vunpack.c.l.b16 %v704
        %v801 = vunpack.c.l.b16 %v705
        %v802 = vunpack.c.l.b16 %v706
        %v803 = vunpack.c.l.b16 %v707
        %v804 = vpack.c.b16 %v789, %v788
        %v805 = vpack.c.b16 %v791, %v790
        %v806 = vpack.c.b16 %v793, %v792
        %v807 = vpack.c.b16 %v795, %v794
        %v808 = vpack.c.b16 %v797, %v796
        %v809 = vpack.c.b16 %v799, %v798
        %v810 = vpack.c.b16 %v801, %v800
        %v811 = vpack.c.b16 %v803, %v802
        %820 = vmatprep.subr.bf16.mxu0 0
        %821 = vmatpush1.bf16.msra.mxu0 %v804
        %822 = vmatprep.subr.bf16.mxu0 0
        %823 = vmatpush1.bf16.msra.mxu0 %v805
        %824 = vmatprep.subr.bf16.mxu0 0
        %825 = vmatpush1.bf16.msra.mxu0 %v806
        %826 = vmatprep.subr.bf16.mxu0 0
        %827 = vmatpush1.bf16.msra.mxu0 %v807
        %828 = vmatprep.subr.bf16.mxu0 0
        %829 = vmatpush1.bf16.msra.mxu0 %v808
        %830 = vmatprep.subr.bf16.mxu0 0
        %831 = vmatpush1.bf16.msra.mxu0 %v809
        %832 = vmatprep.subr.bf16.mxu0 0
        %833 = vmatpush1.bf16.msra.mxu0 %v810
        %834 = vmatprep.subr.bf16.mxu0 0
        %835 = vmatpush1.bf16.msra.mxu0 %v811
        %836 = vmatprep.subr.bf16.mxu0 0
        %837 = vmatpush1.bf16.msra.mxu0 0
        %838 = vmatprep.subr.bf16.mxu0 0
        %839 = vmatpush1.bf16.msra.mxu0 0
        %840 = vmatprep.subr.bf16.mxu0 0
        %841 = vmatpush1.bf16.msra.mxu0 0
        %842 = vmatprep.subr.bf16.mxu0 0
        %843 = vmatpush1.bf16.msra.mxu0 0
        %844 = vmatprep.subr.bf16.mxu0 0
        %845 = vmatpush1.bf16.msra.mxu0 0
        %846 = vmatprep.subr.bf16.mxu0 0
        %847 = vmatpush1.bf16.msra.mxu0 0
        %848 = vmatprep.subr.bf16.mxu0 0
        %849 = vmatpush1.bf16.msra.mxu0 0
        %850 = vmatprep.subr.bf16.mxu0 0
        %851 = vmatpush1.bf16.msra.mxu0 0
        %852 = vmatprep.mubr.bf16.mxu0 0
        %853 = vmatmul.mubr.bf16.gmra.mrb[0].mxu0 %v740
        %v854 = vpop.f32.mrb[0].mxu0
        %v855 = vadd.f32 0.0, %v854
        %v856 = vpop.f32.mrb[0].mxu0
        %v857 = vpop.f32.mrb[0].mxu0
        %v858 = vadd.f32 0.0, %v857
        %v859 = vpop.f32.mrb[0].mxu0
        %860 = vmatprep.mubr.bf16.mxu0 0
        %861 = vmatmul.mubr.bf16.gmra.mrb[0].mxu0 %v741
        %v862 = vpop.f32.mrb[0].mxu0
        %v863 = vadd.f32 0.0, %v862
        %v864 = vpop.f32.mrb[0].mxu0
        %v865 = vpop.f32.mrb[0].mxu0
        %v866 = vadd.f32 0.0, %v865
        %v867 = vpop.f32.mrb[0].mxu0
        %868 = vmatprep.mubr.bf16.mxu0 0
        %869 = vmatmul.mubr.bf16.gmra.mrb[0].mxu0 %v742
        %v870 = vpop.f32.mrb[0].mxu0
        %v871 = vadd.f32 0.0, %v870
        %v872 = vpop.f32.mrb[0].mxu0
        %v873 = vpop.f32.mrb[0].mxu0
        %v874 = vadd.f32 0.0, %v873
        %v875 = vpop.f32.mrb[0].mxu0
        %876 = vmatprep.mubr.bf16.mxu0 0
        %877 = vmatmul.mubr.bf16.gmra.mrb[0].mxu0 %v743
        %v878 = vpop.f32.mrb[0].mxu0
        %v879 = vadd.f32 0.0, %v878
        %v880 = vpop.f32.mrb[0].mxu0
        %v881 = vpop.f32.mrb[0].mxu0
        %v882 = vadd.f32 0.0, %v881
        %v883 = vpop.f32.mrb[0].mxu0
        %884 = vmatprep.mubr.bf16.mxu0 0
        %885 = vmatmul.mubr.bf16.gmra.mrb[0].mxu0 %v744
        %v886 = vpop.f32.mrb[0].mxu0
        %v887 = vadd.f32 0.0, %v886
        %v888 = vpop.f32.mrb[0].mxu0
        %v889 = vpop.f32.mrb[0].mxu0
        %v890 = vadd.f32 0.0, %v889
        %v891 = vpop.f32.mrb[0].mxu0
        %892 = vmatprep.mubr.bf16.mxu0 0
        %893 = vmatmul.mubr.bf16.gmra.mrb[0].mxu0 %v745
        %v894 = vpop.f32.mrb[0].mxu0
        %v895 = vadd.f32 0.0, %v894
        %v896 = vpop.f32.mrb[0].mxu0
        %v897 = vpop.f32.mrb[0].mxu0
        %v898 = vadd.f32 0.0, %v897
        %v899 = vpop.f32.mrb[0].mxu0
        %900 = vmatprep.mubr.bf16.mxu0 0
        %901 = vmatmul.mubr.bf16.gmra.mrb[0].mxu0 %v746
        %v902 = vpop.f32.mrb[0].mxu0
        %v903 = vadd.f32 0.0, %v902
        %v904 = vpop.f32.mrb[0].mxu0
        %v905 = vpop.f32.mrb[0].mxu0
        %v906 = vadd.f32 0.0, %v905
        %v907 = vpop.f32.mrb[0].mxu0
        %908 = vmatprep.mubr.bf16.mxu0 0
        %909 = vmatmul.mubr.bf16.gmra.mrb[0].mxu0 %v747
        %v910 = vpop.f32.mrb[0].mxu0
        %v911 = vadd.f32 0.0, %v910
        %v912 = vpop.f32.mrb[0].mxu0
        %v913 = vpop.f32.mrb[0].mxu0
        %v914 = vadd.f32 0.0, %v913
        %v915 = vpop.f32.mrb[0].mxu0
        %916 = vmatprep.mubr.bf16.mxu0 0
        %917 = vmatmul.mubr.bf16.gmra.mrb[0].mxu0 %v748
        %v918 = vpop.f32.mrb[0].mxu0
        %v919 = vadd.f32 0.0, %v918
        %v920 = vpop.f32.mrb[0].mxu0
        %v921 = vpop.f32.mrb[0].mxu0
        %v922 = vadd.f32 0.0, %v921
        %v923 = vpop.f32.mrb[0].mxu0
        %924 = vmatprep.mubr.bf16.mxu0 0
        %925 = vmatmul.mubr.bf16.gmra.mrb[0].mxu0 %v749
        %v926 = vpop.f32.mrb[0].mxu0
        %v927 = vadd.f32 0.0, %v926
        %v928 = vpop.f32.mrb[0].mxu0
        %v929 = vpop.f32.mrb[0].mxu0
        %v930 = vadd.f32 0.0, %v929
        %v931 = vpop.f32.mrb[0].mxu0
        %932 = vmatprep.mubr.bf16.mxu0 0
        %933 = vmatmul.mubr.bf16.gmra.mrb[0].mxu0 %v750
        %v934 = vpop.f32.mrb[0].mxu0
        %v935 = vadd.f32 0.0, %v934
        %v936 = vpop.f32.mrb[0].mxu0
        %v937 = vpop.f32.mrb[0].mxu0
        %v938 = vadd.f32 0.0, %v937
        %v939 = vpop.f32.mrb[0].mxu0
        %940 = vmatprep.mubr.bf16.mxu0 0
        %941 = vmatmul.mubr.bf16.gmra.mrb[0].mxu0 %v751
        %v942 = vpop.f32.mrb[0].mxu0
        %v943 = vadd.f32 0.0, %v942
        %v944 = vpop.f32.mrb[0].mxu0
        %v945 = vpop.f32.mrb[0].mxu0
        %v946 = vadd.f32 0.0, %v945
        %v947 = vpop.f32.mrb[0].mxu0
        %948 = vmatprep.mubr.bf16.mxu0 0
        %949 = vmatmul.mubr.bf16.gmra.mrb[0].mxu0 %v752
        %v950 = vpop.f32.mrb[0].mxu0
        %v951 = vadd.f32 0.0, %v950
        %v952 = vpop.f32.mrb[0].mxu0
        %v953 = vpop.f32.mrb[0].mxu0
        %v954 = vadd.f32 0.0, %v953
        %v955 = vpop.f32.mrb[0].mxu0
        %956 = vmatprep.mubr.bf16.mxu0 0
        %957 = vmatmul.mubr.bf16.gmra.mrb[0].mxu0 %v753
        %v958 = vpop.f32.mrb[0].mxu0
        %v959 = vadd.f32 0.0, %v958
        %v960 = vpop.f32.mrb[0].mxu0
        %v961 = vpop.f32.mrb[0].mxu0
        %v962 = vadd.f32 0.0, %v961
        %v963 = vpop.f32.mrb[0].mxu0
        %964 = vmatprep.mubr.bf16.mxu0 0
        %965 = vmatmul.mubr.bf16.gmra.mrb[0].mxu0 %v754
        %v966 = vpop.f32.mrb[0].mxu0
        %v967 = vadd.f32 0.0, %v966
        %v968 = vpop.f32.mrb[0].mxu0
        %v969 = vpop.f32.mrb[0].mxu0
        %v970 = vadd.f32 0.0, %v969
        %v971 = vpop.f32.mrb[0].mxu0
        %972 = vmatprep.mubr.bf16.mxu0 0
        %973 = vmatmul.mubr.bf16.gmra.mrb[0].mxu0 %v755
        %v974 = vpop.f32.mrb[0].mxu0
        %v975 = vadd.f32 0.0, %v974
        %v976 = vpop.f32.mrb[0].mxu0
        %v977 = vpop.f32.mrb[0].mxu0
        %v978 = vadd.f32 0.0, %v977
        %v979 = vpop.f32.mrb[0].mxu0
        %980 = vdwg.mxu0
        %v1013 = vunpack.c.l.b16 %v240
        %v1014 = vunpack.c.l.b16 %v241
        %v1015 = vunpack.c.l.b16 %v242
        %v1016 = vunpack.c.l.b16 %v243
        %v1017 = vunpack.c.l.b16 %v244
        %v1018 = vunpack.c.l.b16 %v245
        %v1019 = vunpack.c.l.b16 %v246
        %v1020 = vunpack.c.l.b16 %v247
        %v1021 = vunpack.c.l.b16 %v248
        %v1022 = vunpack.c.l.b16 %v249
        %v1023 = vunpack.c.l.b16 %v250
        %v1024 = vunpack.c.l.b16 %v251
        %v1025 = vunpack.c.l.b16 %v252
        %v1026 = vunpack.c.l.b16 %v253
        %v1027 = vunpack.c.l.b16 %v254
        %v1028 = vunpack.c.l.b16 %v255
        %v1029 = vunpack.c.l.b16 %v256
        %v1030 = vunpack.c.l.b16 %v257
        %v1031 = vunpack.c.l.b16 %v258
        %v1032 = vunpack.c.l.b16 %v259
        %v1033 = vunpack.c.l.b16 %v260
        %v1034 = vunpack.c.l.b16 %v261
        %v1035 = vunpack.c.l.b16 %v262
        %v1036 = vunpack.c.l.b16 %v263
        %v1037 = vunpack.c.l.b16 %v264
        %v1038 = vunpack.c.l.b16 %v265
        %v1039 = vunpack.c.l.b16 %v266
        %v1040 = vunpack.c.l.b16 %v267
        %v1041 = vunpack.c.l.b16 %v268
        %v1042 = vunpack.c.l.b16 %v269
        %v1043 = vunpack.c.l.b16 %v270
        %v1044 = vunpack.c.l.b16 %v271
        %v1045 = vpack.c.b16 %v1014, %v1013
        %v1046 = vpack.c.b16 %v1016, %v1015
        %v1047 = vpack.c.b16 %v1018, %v1017
        %v1048 = vpack.c.b16 %v1020, %v1019
        %v1049 = vpack.c.b16 %v1022, %v1021
        %v1050 = vpack.c.b16 %v1024, %v1023
        %v1051 = vpack.c.b16 %v1026, %v1025
        %v1052 = vpack.c.b16 %v1028, %v1027
        %v1053 = vpack.c.b16 %v1030, %v1029
        %v1054 = vpack.c.b16 %v1032, %v1031
        %v1055 = vpack.c.b16 %v1034, %v1033
        %v1056 = vpack.c.b16 %v1036, %v1035
        %v1057 = vpack.c.b16 %v1038, %v1037
        %v1058 = vpack.c.b16 %v1040, %v1039
        %v1059 = vpack.c.b16 %v1042, %v1041
        %v1060 = vpack.c.b16 %v1044, %v1043
        %v1093 = vunpack.c.l.b16 %v272
        %v1094 = vunpack.c.l.b16 %v273
        %v1095 = vunpack.c.l.b16 %v274
        %v1096 = vunpack.c.l.b16 %v275
        %v1097 = vunpack.c.l.b16 %v276
        %v1098 = vunpack.c.l.b16 %v277
        %v1099 = vunpack.c.l.b16 %v278
        %v1100 = vunpack.c.l.b16 %v279
        %v1101 = vunpack.c.l.b16 %v280
        %v1102 = vunpack.c.l.b16 %v281
        %v1103 = vunpack.c.l.b16 %v282
        %v1104 = vunpack.c.l.b16 %v283
        %v1105 = vunpack.c.l.b16 %v284
        %v1106 = vunpack.c.l.b16 %v285
        %v1107 = vunpack.c.l.b16 %v286
        %v1108 = vunpack.c.l.b16 %v287
        %v1109 = vpack.c.b16 %v1094, %v1093
        %v1110 = vpack.c.b16 %v1096, %v1095
        %v1111 = vpack.c.b16 %v1098, %v1097
        %v1112 = vpack.c.b16 %v1100, %v1099
        %v1113 = vpack.c.b16 %v1102, %v1101
        %v1114 = vpack.c.b16 %v1104, %v1103
        %v1115 = vpack.c.b16 %v1106, %v1105
        %v1116 = vpack.c.b16 %v1108, %v1107
        %1125 = vmatprep.subr.bf16.mxu0 0
        %1126 = vmatpush1.bf16.msra.mxu0 %v1109
        %1127 = vmatprep.subr.bf16.mxu0 0
        %1128 = vmatpush1.bf16.msra.mxu0 %v1110
        %1129 = vmatprep.subr.bf16.mxu0 0
        %1130 = vmatpush1.bf16.msra.mxu0 %v1111
        %1131 = vmatprep.subr.bf16.mxu0 0
        %1132 = vmatpush1.bf16.msra.mxu0 %v1112
        %1133 = vmatprep.subr.bf16.mxu0 0
        %1134 = vmatpush1.bf16.msra.mxu0 %v1113
        %1135 = vmatprep.subr.bf16.mxu0 0
        %1136 = vmatpush1.bf16.msra.mxu0 %v1114
        %1137 = vmatprep.subr.bf16.mxu0 0
        %1138 = vmatpush1.bf16.msra.mxu0 %v1115
        %1139 = vmatprep.subr.bf16.mxu0 0
        %1140 = vmatpush1.bf16.msra.mxu0 %v1116
        %1141 = vmatprep.subr.bf16.mxu0 0
        %1142 = vmatpush1.bf16.msra.mxu0 0
        %1143 = vmatprep.subr.bf16.mxu0 0
        %1144 = vmatpush1.bf16.msra.mxu0 0
        %1145 = vmatprep.subr.bf16.mxu0 0
        %1146 = vmatpush1.bf16.msra.mxu0 0
        %1147 = vmatprep.subr.bf16.mxu0 0
        %1148 = vmatpush1.bf16.msra.mxu0 0
        %1149 = vmatprep.subr.bf16.mxu0 0
        %1150 = vmatpush1.bf16.msra.mxu0 0
        %1151 = vmatprep.subr.bf16.mxu0 0
        %1152 = vmatpush1.bf16.msra.mxu0 0
        %1153 = vmatprep.subr.bf16.mxu0 0
        %1154 = vmatpush1.bf16.msra.mxu0 0
        %1155 = vmatprep.subr.bf16.mxu0 0
        %1156 = vmatpush1.bf16.msra.mxu0 0
        %1157 = vmatprep.mubr.bf16.mxu0 0
        %1158 = vmatmul.mubr.bf16.gmra.mrb[0].mxu0 %v1045
        %v1159 = vpop.f32.mrb[0].mxu0
        %v1160 = vadd.f32 %v855, %v1159
        %v1161 = vpop.f32.mrb[0].mxu0
        %v1162 = vpop.f32.mrb[0].mxu0
        %v1163 = vadd.f32 %v858, %v1162
        %v1164 = vpop.f32.mrb[0].mxu0
        %1165 = vmatprep.mubr.bf16.mxu0 0
        %1166 = vmatmul.mubr.bf16.gmra.mrb[0].mxu0 %v1046
        %v1167 = vpop.f32.mrb[0].mxu0
        %v1168 = vadd.f32 %v863, %v1167
        %v1169 = vpop.f32.mrb[0].mxu0
        %v1170 = vpop.f32.mrb[0].mxu0
        %v1171 = vadd.f32 %v866, %v1170
        %v1172 = vpop.f32.mrb[0].mxu0
        %1173 = vmatprep.mubr.bf16.mxu0 0
        %1174 = vmatmul.mubr.bf16.gmra.mrb[0].mxu0 %v1047
        %v1175 = vpop.f32.mrb[0].mxu0
        %v1176 = vadd.f32 %v871, %v1175
        %v1177 = vpop.f32.mrb[0].mxu0
        %v1178 = vpop.f32.mrb[0].mxu0
        %v1179 = vadd.f32 %v874, %v1178
        %v1180 = vpop.f32.mrb[0].mxu0
        %1181 = vmatprep.mubr.bf16.mxu0 0
        %1182 = vmatmul.mubr.bf16.gmra.mrb[0].mxu0 %v1048
        %v1183 = vpop.f32.mrb[0].mxu0
        %v1184 = vadd.f32 %v879, %v1183
        %v1185 = vpop.f32.mrb[0].mxu0
        %v1186 = vpop.f32.mrb[0].mxu0
        %v1187 = vadd.f32 %v882, %v1186
        %v1188 = vpop.f32.mrb[0].mxu0
        %1189 = vmatprep.mubr.bf16.mxu0 0
        %1190 = vmatmul.mubr.bf16.gmra.mrb[0].mxu0 %v1049
        %v1191 = vpop.f32.mrb[0].mxu0
        %v1192 = vadd.f32 %v887, %v1191
        %v1193 = vpop.f32.mrb[0].mxu0
        %v1194 = vpop.f32.mrb[0].mxu0
        %v1195 = vadd.f32 %v890, %v1194
        %v1196 = vpop.f32.mrb[0].mxu0
        %1197 = vmatprep.mubr.bf16.mxu0 0
        %1198 = vmatmul.mubr.bf16.gmra.mrb[0].mxu0 %v1050
        %v1199 = vpop.f32.mrb[0].mxu0
        %v1200 = vadd.f32 %v895, %v1199
        %v1201 = vpop.f32.mrb[0].mxu0
        %v1202 = vpop.f32.mrb[0].mxu0
        %v1203 = vadd.f32 %v898, %v1202
        %v1204 = vpop.f32.mrb[0].mxu0
        %1205 = vmatprep.mubr.bf16.mxu0 0
        %1206 = vmatmul.mubr.bf16.gmra.mrb[0].mxu0 %v1051
        %v1207 = vpop.f32.mrb[0].mxu0
        %v1208 = vadd.f32 %v903, %v1207
        %v1209 = vpop.f32.mrb[0].mxu0
        %v1210 = vpop.f32.mrb[0].mxu0
        %v1211 = vadd.f32 %v906, %v1210
        %v1212 = vpop.f32.mrb[0].mxu0
        %1213 = vmatprep.mubr.bf16.mxu0 0
        %1214 = vmatmul.mubr.bf16.gmra.mrb[0].mxu0 %v1052
        %v1215 = vpop.f32.mrb[0].mxu0
        %v1216 = vadd.f32 %v911, %v1215
        %v1217 = vpop.f32.mrb[0].mxu0
        %v1218 = vpop.f32.mrb[0].mxu0
        %v1219 = vadd.f32 %v914, %v1218
        %v1220 = vpop.f32.mrb[0].mxu0
        %1221 = vmatprep.mubr.bf16.mxu0 0
        %1222 = vmatmul.mubr.bf16.gmra.mrb[0].mxu0 %v1053
        %v1223 = vpop.f32.mrb[0].mxu0
        %v1224 = vadd.f32 %v919, %v1223
        %v1225 = vpop.f32.mrb[0].mxu0
        %v1226 = vpop.f32.mrb[0].mxu0
        %v1227 = vadd.f32 %v922, %v1226
        %v1228 = vpop.f32.mrb[0].mxu0
        %1229 = vmatprep.mubr.bf16.mxu0 0
        %1230 = vmatmul.mubr.bf16.gmra.mrb[0].mxu0 %v1054
        %v1231 = vpop.f32.mrb[0].mxu0
        %v1232 = vadd.f32 %v927, %v1231
        %v1233 = vpop.f32.mrb[0].mxu0
        %v1234 = vpop.f32.mrb[0].mxu0
        %v1235 = vadd.f32 %v930, %v1234
        %v1236 = vpop.f32.mrb[0].mxu0
        %1237 = vmatprep.mubr.bf16.mxu0 0
        %1238 = vmatmul.mubr.bf16.gmra.mrb[0].mxu0 %v1055
        %v1239 = vpop.f32.mrb[0].mxu0
        %v1240 = vadd.f32 %v935, %v1239
        %v1241 = vpop.f32.mrb[0].mxu0
        %v1242 = vpop.f32.mrb[0].mxu0
        %v1243 = vadd.f32 %v938, %v1242
        %v1244 = vpop.f32.mrb[0].mxu0
        %1245 = vmatprep.mubr.bf16.mxu0 0
        %1246 = vmatmul.mubr.bf16.gmra.mrb[0].mxu0 %v1056
        %v1247 = vpop.f32.mrb[0].mxu0
        %v1248 = vadd.f32 %v943, %v1247
        %v1249 = vpop.f32.mrb[0].mxu0
        %v1250 = vpop.f32.mrb[0].mxu0
        %v1251 = vadd.f32 %v946, %v1250
        %v1252 = vpop.f32.mrb[0].mxu0
        %1253 = vmatprep.mubr.bf16.mxu0 0
        %1254 = vmatmul.mubr.bf16.gmra.mrb[0].mxu0 %v1057
        %v1255 = vpop.f32.mrb[0].mxu0
        %v1256 = vadd.f32 %v951, %v1255
        %v1257 = vpop.f32.mrb[0].mxu0
        %v1258 = vpop.f32.mrb[0].mxu0
        %v1259 = vadd.f32 %v954, %v1258
        %v1260 = vpop.f32.mrb[0].mxu0
        %1261 = vmatprep.mubr.bf16.mxu0 0
        %1262 = vmatmul.mubr.bf16.gmra.mrb[0].mxu0 %v1058
        %v1263 = vpop.f32.mrb[0].mxu0
        %v1264 = vadd.f32 %v959, %v1263
        %v1265 = vpop.f32.mrb[0].mxu0
        %v1266 = vpop.f32.mrb[0].mxu0
        %v1267 = vadd.f32 %v962, %v1266
        %v1268 = vpop.f32.mrb[0].mxu0
        %1269 = vmatprep.mubr.bf16.mxu0 0
        %1270 = vmatmul.mubr.bf16.gmra.mrb[0].mxu0 %v1059
        %v1271 = vpop.f32.mrb[0].mxu0
        %v1272 = vadd.f32 %v967, %v1271
        %v1273 = vpop.f32.mrb[0].mxu0
        %v1274 = vpop.f32.mrb[0].mxu0
        %v1275 = vadd.f32 %v970, %v1274
        %v1276 = vpop.f32.mrb[0].mxu0
        %1277 = vmatprep.mubr.bf16.mxu0 0
        %1278 = vmatmul.mubr.bf16.gmra.mrb[0].mxu0 %v1060
        %v1279 = vpop.f32.mrb[0].mxu0
        %v1280 = vadd.f32 %v975, %v1279
        %v1281 = vpop.f32.mrb[0].mxu0
        %v1282 = vpop.f32.mrb[0].mxu0
        %v1283 = vadd.f32 %v978, %v1282
        %v1284 = vpop.f32.mrb[0].mxu0
        %1285 = vdwg.mxu0
        %v1286 = vld [vmem:[%s183] sm:$0xe]
        %v1287 = vld [vmem:[%s183 + $0xc] sm:$0xe]
        %v1288 = vld [vmem:[%s183 + $0x18] sm:$0xe]
        %v1289 = vld [vmem:[%s183 + $0x24] sm:$0xe]
        %v1290 = vld [vmem:[%s183 + $0x30] sm:$0xe]
        %v1291 = vld [vmem:[%s183 + $0x3c] sm:$0xe]
        %v1292 = vld [vmem:[%s183 + $0x48] sm:$0xe]
        %v1293 = vld [vmem:[%s183 + $0x54] sm:$0xe]
        %v1294 = vld [vmem:[%s183 + $0x60] sm:$0xe]
        %v1295 = vld [vmem:[%s183 + $0x6c] sm:$0xe]
        %v1296 = vld [vmem:[%s183 + $0x78] sm:$0xe]
        %v1297 = vld [vmem:[%s183 + $0x84] sm:$0xe]
        %v1298 = vld [vmem:[%s183 + $0x90] sm:$0xe]
        %v1299 = vld [vmem:[%s183 + $0x9c] sm:$0xe]
        %v1300 = vld [vmem:[%s183 + $0xa8] sm:$0xe]
        %v1301 = vld [vmem:[%s183 + $0xb4] sm:$0xe]
        %vm1334 = vcmask 1042432
        %vm1335 = vcmask 1046532
        %vm1336 = vmor %vm1334, %vm1335
        %v1337 = vrot.slane %v1286, 5
        %v1338 = vrot.slane %v1337, 4
        %v1339 = vrot.slane %v241, 5
        %v1340 = vsel %vm1336, %v1338, %v1339
        %v1341 = vrot.slane %v1339, 4
        %v1342 = vrot.slane %v288, 5
        %v1343 = vsel %vm1336, %v1341, %v1342
        %v1344 = vrot.slane %v1287, 5
        %v1345 = vrot.slane %v1344, 4
        %v1346 = vrot.slane %v243, 5
        %v1347 = vsel %vm1336, %v1345, %v1346
        %v1348 = vrot.slane %v1346, 4
        %v1349 = vrot.slane %v289, 5
        %v1350 = vsel %vm1336, %v1348, %v1349
        %v1351 = vrot.slane %v1288, 5
        %v1352 = vrot.slane %v1351, 4
        %v1353 = vrot.slane %v245, 5
        %v1354 = vsel %vm1336, %v1352, %v1353
        %v1355 = vrot.slane %v1353, 4
        %v1356 = vrot.slane %v290, 5
        %v1357 = vsel %vm1336, %v1355, %v1356
        %v1358 = vrot.slane %v1289, 5
        %v1359 = vrot.slane %v1358, 4
        %v1360 = vrot.slane %v247, 5
        %v1361 = vsel %vm1336, %v1359, %v1360
        %v1362 = vrot.slane %v1360, 4
        %v1363 = vrot.slane %v291, 5
        %v1364 = vsel %vm1336, %v1362, %v1363
        %v1365 = vrot.slane %v1290, 5
        %v1366 = vrot.slane %v1365, 4
        %v1367 = vrot.slane %v249, 5
        %v1368 = vsel %vm1336, %v1366, %v1367
        %v1369 = vrot.slane %v1367, 4
        %v1370 = vrot.slane %v292, 5
        %v1371 = vsel %vm1336, %v1369, %v1370
        %v1372 = vrot.slane %v1291, 5
        %v1373 = vrot.slane %v1372, 4
        %v1374 = vrot.slane %v251, 5
        %v1375 = vsel %vm1336, %v1373, %v1374
        %v1376 = vrot.slane %v1374, 4
        %v1377 = vrot.slane %v293, 5
        %v1378 = vsel %vm1336, %v1376, %v1377
        %v1379 = vrot.slane %v1292, 5
        %v1380 = vrot.slane %v1379, 4
        %v1381 = vrot.slane %v253, 5
        %v1382 = vsel %vm1336, %v1380, %v1381
        %v1383 = vrot.slane %v1381, 4
        %v1384 = vrot.slane %v294, 5
        %v1385 = vsel %vm1336, %v1383, %v1384
        %v1386 = vrot.slane %v1293, 5
        %v1387 = vrot.slane %v1386, 4
        %v1388 = vrot.slane %v255, 5
        %v1389 = vsel %vm1336, %v1387, %v1388
        %v1390 = vrot.slane %v1388, 4
        %v1391 = vrot.slane %v295, 5
        %v1392 = vsel %vm1336, %v1390, %v1391
        %v1393 = vrot.slane %v1294, 5
        %v1394 = vrot.slane %v1393, 4
        %v1395 = vrot.slane %v257, 5
        %v1396 = vsel %vm1336, %v1394, %v1395
        %v1397 = vrot.slane %v1395, 4
        %v1398 = vrot.slane %v296, 5
        %v1399 = vsel %vm1336, %v1397, %v1398
        %v1400 = vrot.slane %v1295, 5
        %v1401 = vrot.slane %v1400, 4
        %v1402 = vrot.slane %v259, 5
        %v1403 = vsel %vm1336, %v1401, %v1402
        %v1404 = vrot.slane %v1402, 4
        %v1405 = vrot.slane %v297, 5
        %v1406 = vsel %vm1336, %v1404, %v1405
        %v1407 = vrot.slane %v1296, 5
        %v1408 = vrot.slane %v1407, 4
        %v1409 = vrot.slane %v261, 5
        %v1410 = vsel %vm1336, %v1408, %v1409
        %v1411 = vrot.slane %v1409, 4
        %v1412 = vrot.slane %v298, 5
        %v1413 = vsel %vm1336, %v1411, %v1412
        %v1414 = vrot.slane %v1297, 5
        %v1415 = vrot.slane %v1414, 4
        %v1416 = vrot.slane %v263, 5
        %v1417 = vsel %vm1336, %v1415, %v1416
        %v1418 = vrot.slane %v1416, 4
        %v1419 = vrot.slane %v299, 5
        %v1420 = vsel %vm1336, %v1418, %v1419
        %v1421 = vrot.slane %v1298, 5
        %v1422 = vrot.slane %v1421, 4
        %v1423 = vrot.slane %v265, 5
        %v1424 = vsel %vm1336, %v1422, %v1423
        %v1425 = vrot.slane %v1423, 4
        %v1426 = vrot.slane %v300, 5
        %v1427 = vsel %vm1336, %v1425, %v1426
        %v1428 = vrot.slane %v1299, 5
        %v1429 = vrot.slane %v1428, 4
        %v1430 = vrot.slane %v267, 5
        %v1431 = vsel %vm1336, %v1429, %v1430
        %v1432 = vrot.slane %v1430, 4
        %v1433 = vrot.slane %v301, 5
        %v1434 = vsel %vm1336, %v1432, %v1433
        %v1435 = vrot.slane %v1300, 5
        %v1436 = vrot.slane %v1435, 4
        %v1437 = vrot.slane %v269, 5
        %v1438 = vsel %vm1336, %v1436, %v1437
        %v1439 = vrot.slane %v1437, 4
        %v1440 = vrot.slane %v302, 5
        %v1441 = vsel %vm1336, %v1439, %v1440
        %v1442 = vrot.slane %v1301, 5
        %v1443 = vrot.slane %v1442, 4
        %v1444 = vrot.slane %v271, 5
        %v1445 = vsel %vm1336, %v1443, %v1444
        %v1446 = vrot.slane %v1444, 4
        %v1447 = vrot.slane %v303, 5
        %v1448 = vsel %vm1336, %v1446, %v1447
        %s1449 = scalar_lea.vmem [#allocation3], 128
        %v1450 = vld [vmem:[%s1449] sm:$0xf]
        %v1451 = vld [vmem:[%s1449 + $0x4] sm:$0xf]
        %v1452 = vld [vmem:[%s1449 + $0x8] sm:$0xf]
        %v1453 = vld [vmem:[%s1449 + $0xc] sm:$0xf]
        %v1454 = vld [vmem:[%s1449 + $0x10] sm:$0xf]
        %v1455 = vld [vmem:[%s1449 + $0x14] sm:$0xf]
        %v1456 = vld [vmem:[%s1449 + $0x18] sm:$0xf]
        %v1457 = vld [vmem:[%s1449 + $0x1c] sm:$0xf]
        %v1458 = vld [vmem:[%s1449 + $0x20] sm:$0xf]
        %v1459 = vld [vmem:[%s1449 + $0x24] sm:$0xf]
        %v1460 = vld [vmem:[%s1449 + $0x28] sm:$0xf]
        %v1461 = vld [vmem:[%s1449 + $0x2c] sm:$0xf]
        %v1462 = vld [vmem:[%s1449 + $0x30] sm:$0xf]
        %v1463 = vld [vmem:[%s1449 + $0x34] sm:$0xf]
        %v1464 = vld [vmem:[%s1449 + $0x38] sm:$0xf]
        %v1465 = vld [vmem:[%s1449 + $0x3c] sm:$0xf]
        %v1466 = vunpack.c.l.b16 %v1340
        %v1467 = vunpack.c.l.b16 %v1343
        %v1468 = vunpack.c.l.b16 %v1347
        %v1469 = vunpack.c.l.b16 %v1350
        %v1470 = vunpack.c.l.b16 %v1354
        %v1471 = vunpack.c.l.b16 %v1357
        %v1472 = vunpack.c.l.b16 %v1361
        %v1473 = vunpack.c.l.b16 %v1364
        %v1474 = vunpack.c.l.b16 %v1368
        %v1475 = vunpack.c.l.b16 %v1371
        %v1476 = vunpack.c.l.b16 %v1375
        %v1477 = vunpack.c.l.b16 %v1378
        %v1478 = vunpack.c.l.b16 %v1382
        %v1479 = vunpack.c.l.b16 %v1385
        %v1480 = vunpack.c.l.b16 %v1389
        %v1481 = vunpack.c.l.b16 %v1392
        %v1482 = vunpack.c.l.b16 %v1396
        %v1483 = vunpack.c.l.b16 %v1399
        %v1484 = vunpack.c.l.b16 %v1403
        %v1485 = vunpack.c.l.b16 %v1406
        %v1486 = vunpack.c.l.b16 %v1410
        %v1487 = vunpack.c.l.b16 %v1413
        %v1488 = vunpack.c.l.b16 %v1417
        %v1489 = vunpack.c.l.b16 %v1420
        %v1490 = vunpack.c.l.b16 %v1424
        %v1491 = vunpack.c.l.b16 %v1427
        %v1492 = vunpack.c.l.b16 %v1431
        %v1493 = vunpack.c.l.b16 %v1434
        %v1494 = vunpack.c.l.b16 %v1438
        %v1495 = vunpack.c.l.b16 %v1441
        %v1496 = vunpack.c.l.b16 %v1445
        %v1497 = vunpack.c.l.b16 %v1448
        %v1498 = vpack.c.b16 %v1467, %v1466
        %v1499 = vpack.c.b16 %v1469, %v1468
        %v1500 = vpack.c.b16 %v1471, %v1470
        %v1501 = vpack.c.b16 %v1473, %v1472
        %v1502 = vpack.c.b16 %v1475, %v1474
        %v1503 = vpack.c.b16 %v1477, %v1476
        %v1504 = vpack.c.b16 %v1479, %v1478
        %v1505 = vpack.c.b16 %v1481, %v1480
        %v1506 = vpack.c.b16 %v1483, %v1482
        %v1507 = vpack.c.b16 %v1485, %v1484
        %v1508 = vpack.c.b16 %v1487, %v1486
        %v1509 = vpack.c.b16 %v1489, %v1488
        %v1510 = vpack.c.b16 %v1491, %v1490
        %v1511 = vpack.c.b16 %v1493, %v1492
        %v1512 = vpack.c.b16 %v1495, %v1494
        %v1513 = vpack.c.b16 %v1497, %v1496
        %v1546 = vunpack.c.l.b16 %v1450
        %v1547 = vunpack.c.l.b16 %v1451
        %v1548 = vunpack.c.l.b16 %v1452
        %v1549 = vunpack.c.l.b16 %v1453
        %v1550 = vunpack.c.l.b16 %v1454
        %v1551 = vunpack.c.l.b16 %v1455
        %v1552 = vunpack.c.l.b16 %v1456
        %v1553 = vunpack.c.l.b16 %v1457
        %v1554 = vunpack.c.l.b16 %v1458
        %v1555 = vunpack.c.l.b16 %v1459
        %v1556 = vunpack.c.l.b16 %v1460
        %v1557 = vunpack.c.l.b16 %v1461
        %v1558 = vunpack.c.l.b16 %v1462
        %v1559 = vunpack.c.l.b16 %v1463
        %v1560 = vunpack.c.l.b16 %v1464
        %v1561 = vunpack.c.l.b16 %v1465
        %v1562 = vpack.c.b16 %v1547, %v1546
        %v1563 = vpack.c.b16 %v1549, %v1548
        %v1564 = vpack.c.b16 %v1551, %v1550
        %v1565 = vpack.c.b16 %v1553, %v1552
        %v1566 = vpack.c.b16 %v1555, %v1554
        %v1567 = vpack.c.b16 %v1557, %v1556
        %v1568 = vpack.c.b16 %v1559, %v1558
        %v1569 = vpack.c.b16 %v1561, %v1560
        %1578 = vmatprep.subr.bf16.mxu0 0
        %1579 = vmatpush1.bf16.msra.mxu0 %v1562
        %1580 = vmatprep.subr.bf16.mxu0 0
        %1581 = vmatpush1.bf16.msra.mxu0 %v1563
        %1582 = vmatprep.subr.bf16.mxu0 0
        %1583 = vmatpush1.bf16.msra.mxu0 %v1564
        %1584 = vmatprep.subr.bf16.mxu0 0
        %1585 = vmatpush1.bf16.msra.mxu0 %v1565
        %1586 = vmatprep.subr.bf16.mxu0 0
        %1587 = vmatpush1.bf16.msra.mxu0 %v1566
        %1588 = vmatprep.subr.bf16.mxu0 0
        %1589 = vmatpush1.bf16.msra.mxu0 %v1567
        %1590 = vmatprep.subr.bf16.mxu0 0
        %1591 = vmatpush1.bf16.msra.mxu0 %v1568
        %1592 = vmatprep.subr.bf16.mxu0 0
        %1593 = vmatpush1.bf16.msra.mxu0 %v1569
        %1594 = vmatprep.subr.bf16.mxu0 0
        %1595 = vmatpush1.bf16.msra.mxu0 0
        %1596 = vmatprep.subr.bf16.mxu0 0
        %1597 = vmatpush1.bf16.msra.mxu0 0
        %1598 = vmatprep.subr.bf16.mxu0 0
        %1599 = vmatpush1.bf16.msra.mxu0 0
        %1600 = vmatprep.subr.bf16.mxu0 0
        %1601 = vmatpush1.bf16.msra.mxu0 0
        %1602 = vmatprep.subr.bf16.mxu0 0
        %1603 = vmatpush1.bf16.msra.mxu0 0
        %1604 = vmatprep.subr.bf16.mxu0 0
        %1605 = vmatpush1.bf16.msra.mxu0 0
        %1606 = vmatprep.subr.bf16.mxu0 0
        %1607 = vmatpush1.bf16.msra.mxu0 0
        %1608 = vmatprep.subr.bf16.mxu0 0
        %1609 = vmatpush1.bf16.msra.mxu0 0
        %1610 = vmatprep.mubr.bf16.mxu0 0
        %1611 = vmatmul.mubr.bf16.gmra.mrb[0].mxu0 %v1498
        %v1612 = vpop.f32.mrb[0].mxu0
        %v1613 = vadd.f32 0.0, %v1612
        %v1614 = vpop.f32.mrb[0].mxu0
        %v1615 = vpop.f32.mrb[0].mxu0
        %v1616 = vadd.f32 0.0, %v1615
        %v1617 = vpop.f32.mrb[0].mxu0
        %1618 = vmatprep.mubr.bf16.mxu0 0
        %1619 = vmatmul.mubr.bf16.gmra.mrb[0].mxu0 %v1499
        %v1620 = vpop.f32.mrb[0].mxu0
        %v1621 = vadd.f32 0.0, %v1620
        %v1622 = vpop.f32.mrb[0].mxu0
        %v1623 = vpop.f32.mrb[0].mxu0
        %v1624 = vadd.f32 0.0, %v1623
        %v1625 = vpop.f32.mrb[0].mxu0
        %1626 = vmatprep.mubr.bf16.mxu0 0
        %1627 = vmatmul.mubr.bf16.gmra.mrb[0].mxu0 %v1500
        %v1628 = vpop.f32.mrb[0].mxu0
        %v1629 = vadd.f32 0.0, %v1628
        %v1630 = vpop.f32.mrb[0].mxu0
        %v1631 = vpop.f32.mrb[0].mxu0
        %v1632 = vadd.f32 0.0, %v1631
        %v1633 = vpop.f32.mrb[0].mxu0
        %1634 = vmatprep.mubr.bf16.mxu0 0
        %1635 = vmatmul.mubr.bf16.gmra.mrb[0].mxu0 %v1501
        %v1636 = vpop.f32.mrb[0].mxu0
        %v1637 = vadd.f32 0.0, %v1636
        %v1638 = vpop.f32.mrb[0].mxu0
        %v1639 = vpop.f32.mrb[0].mxu0
        %v1640 = vadd.f32 0.0, %v1639
        %v1641 = vpop.f32.mrb[0].mxu0
        %1642 = vmatprep.mubr.bf16.mxu0 0
        %1643 = vmatmul.mubr.bf16.gmra.mrb[0].mxu0 %v1502
        %v1644 = vpop.f32.mrb[0].mxu0
        %v1645 = vadd.f32 0.0, %v1644
        %v1646 = vpop.f32.mrb[0].mxu0
        %v1647 = vpop.f32.mrb[0].mxu0
        %v1648 = vadd.f32 0.0, %v1647
        %v1649 = vpop.f32.mrb[0].mxu0
        %1650 = vmatprep.mubr.bf16.mxu0 0
        %1651 = vmatmul.mubr.bf16.gmra.mrb[0].mxu0 %v1503
        %v1652 = vpop.f32.mrb[0].mxu0
        %v1653 = vadd.f32 0.0, %v1652
        %v1654 = vpop.f32.mrb[0].mxu0
        %v1655 = vpop.f32.mrb[0].mxu0
        %v1656 = vadd.f32 0.0, %v1655
        %v1657 = vpop.f32.mrb[0].mxu0
        %1658 = vmatprep.mubr.bf16.mxu0 0
        %1659 = vmatmul.mubr.bf16.gmra.mrb[0].mxu0 %v1504
        %v1660 = vpop.f32.mrb[0].mxu0
        %v1661 = vadd.f32 0.0, %v1660
        %v1662 = vpop.f32.mrb[0].mxu0
        %v1663 = vpop.f32.mrb[0].mxu0
        %v1664 = vadd.f32 0.0, %v1663
        %v1665 = vpop.f32.mrb[0].mxu0
        %1666 = vmatprep.mubr.bf16.mxu0 0
        %1667 = vmatmul.mubr.bf16.gmra.mrb[0].mxu0 %v1505
        %v1668 = vpop.f32.mrb[0].mxu0
        %v1669 = vadd.f32 0.0, %v1668
        %v1670 = vpop.f32.mrb[0].mxu0
        %v1671 = vpop.f32.mrb[0].mxu0
        %v1672 = vadd.f32 0.0, %v1671
        %v1673 = vpop.f32.mrb[0].mxu0
        %1674 = vmatprep.mubr.bf16.mxu0 0
        %1675 = vmatmul.mubr.bf16.gmra.mrb[0].mxu0 %v1506
        %v1676 = vpop.f32.mrb[0].mxu0
        %v1677 = vadd.f32 0.0, %v1676
        %v1678 = vpop.f32.mrb[0].mxu0
        %v1679 = vpop.f32.mrb[0].mxu0
        %v1680 = vadd.f32 0.0, %v1679
        %v1681 = vpop.f32.mrb[0].mxu0
        %1682 = vmatprep.mubr.bf16.mxu0 0
        %1683 = vmatmul.mubr.bf16.gmra.mrb[0].mxu0 %v1507
        %v1684 = vpop.f32.mrb[0].mxu0
        %v1685 = vadd.f32 0.0, %v1684
        %v1686 = vpop.f32.mrb[0].mxu0
        %v1687 = vpop.f32.mrb[0].mxu0
        %v1688 = vadd.f32 0.0, %v1687
        %v1689 = vpop.f32.mrb[0].mxu0
        %1690 = vmatprep.mubr.bf16.mxu0 0
        %1691 = vmatmul.mubr.bf16.gmra.mrb[0].mxu0 %v1508
        %v1692 = vpop.f32.mrb[0].mxu0
        %v1693 = vadd.f32 0.0, %v1692
        %v1694 = vpop.f32.mrb[0].mxu0
        %v1695 = vpop.f32.mrb[0].mxu0
        %v1696 = vadd.f32 0.0, %v1695
        %v1697 = vpop.f32.mrb[0].mxu0
        %1698 = vmatprep.mubr.bf16.mxu0 0
        %1699 = vmatmul.mubr.bf16.gmra.mrb[0].mxu0 %v1509
        %v1700 = vpop.f32.mrb[0].mxu0
        %v1701 = vadd.f32 0.0, %v1700
        %v1702 = vpop.f32.mrb[0].mxu0
        %v1703 = vpop.f32.mrb[0].mxu0
        %v1704 = vadd.f32 0.0, %v1703
        %v1705 = vpop.f32.mrb[0].mxu0
        %1706 = vmatprep.mubr.bf16.mxu0 0
        %1707 = vmatmul.mubr.bf16.gmra.mrb[0].mxu0 %v1510
        %v1708 = vpop.f32.mrb[0].mxu0
        %v1709 = vadd.f32 0.0, %v1708
        %v1710 = vpop.f32.mrb[0].mxu0
        %v1711 = vpop.f32.mrb[0].mxu0
        %v1712 = vadd.f32 0.0, %v1711
        %v1713 = vpop.f32.mrb[0].mxu0
        %1714 = vmatprep.mubr.bf16.mxu0 0
        %1715 = vmatmul.mubr.bf16.gmra.mrb[0].mxu0 %v1511
        %v1716 = vpop.f32.mrb[0].mxu0
        %v1717 = vadd.f32 0.0, %v1716
        %v1718 = vpop.f32.mrb[0].mxu0
        %v1719 = vpop.f32.mrb[0].mxu0
        %v1720 = vadd.f32 0.0, %v1719
        %v1721 = vpop.f32.mrb[0].mxu0
        %1722 = vmatprep.mubr.bf16.mxu0 0
        %1723 = vmatmul.mubr.bf16.gmra.mrb[0].mxu0 %v1512
        %v1724 = vpop.f32.mrb[0].mxu0
        %v1725 = vadd.f32 0.0, %v1724
        %v1726 = vpop.f32.mrb[0].mxu0
        %v1727 = vpop.f32.mrb[0].mxu0
        %v1728 = vadd.f32 0.0, %v1727
        %v1729 = vpop.f32.mrb[0].mxu0
        %1730 = vmatprep.mubr.bf16.mxu0 0
        %1731 = vmatmul.mubr.bf16.gmra.mrb[0].mxu0 %v1513
        %v1732 = vpop.f32.mrb[0].mxu0
        %v1733 = vadd.f32 0.0, %v1732
        %v1734 = vpop.f32.mrb[0].mxu0
        %v1735 = vpop.f32.mrb[0].mxu0
        %v1736 = vadd.f32 0.0, %v1735
        %v1737 = vpop.f32.mrb[0].mxu0
        %1738 = vdwg.mxu0
        %v1739 = vadd.f32 %v1160, %v1613
        %v1740 = vadd.f32 %v1163, %v1616
        %v1741 = vadd.f32 %v1168, %v1621
        %v1742 = vadd.f32 %v1171, %v1624
        %v1743 = vadd.f32 %v1176, %v1629
        %v1744 = vadd.f32 %v1179, %v1632
        %v1745 = vadd.f32 %v1184, %v1637
        %v1746 = vadd.f32 %v1187, %v1640
        %v1747 = vadd.f32 %v1192, %v1645
        %v1748 = vadd.f32 %v1195, %v1648
        %v1749 = vadd.f32 %v1200, %v1653
        %v1750 = vadd.f32 %v1203, %v1656
        %v1751 = vadd.f32 %v1208, %v1661
        %v1752 = vadd.f32 %v1211, %v1664
        %v1753 = vadd.f32 %v1216, %v1669
        %v1754 = vadd.f32 %v1219, %v1672
        %v1755 = vadd.f32 %v1224, %v1677
        %v1756 = vadd.f32 %v1227, %v1680
        %v1757 = vadd.f32 %v1232, %v1685
        %v1758 = vadd.f32 %v1235, %v1688
        %v1759 = vadd.f32 %v1240, %v1693
        %v1760 = vadd.f32 %v1243, %v1696
        %v1761 = vadd.f32 %v1248, %v1701
        %v1762 = vadd.f32 %v1251, %v1704
        %v1763 = vadd.f32 %v1256, %v1709
        %v1764 = vadd.f32 %v1259, %v1712
        %v1765 = vadd.f32 %v1264, %v1717
        %v1766 = vadd.f32 %v1267, %v1720
        %v1767 = vadd.f32 %v1272, %v1725
        %v1768 = vadd.f32 %v1275, %v1728
        %v1769 = vadd.f32 %v1280, %v1733
        %v1770 = vadd.f32 %v1283, %v1736
        %s1771 = scalar_lea.vmem %s183, 12
        %v1772 = vld [vmem:[%s1771] sm:$0xf]
        %v1773 = vld [vmem:[%s1771 + $0x4] sm:$0xf]
        %v1774 = vld [vmem:[%s1771 + $0xc] sm:$0xf]
        %v1775 = vld [vmem:[%s1771 + $0x10] sm:$0xf]
        %v1776 = vld [vmem:[%s1771 + $0x18] sm:$0xf]
        %v1777 = vld [vmem:[%s1771 + $0x1c] sm:$0xf]
        %v1778 = vld [vmem:[%s1771 + $0x24] sm:$0xf]
        %v1779 = vld [vmem:[%s1771 + $0x28] sm:$0xf]
        %v1780 = vld [vmem:[%s1771 + $0x30] sm:$0xf]
        %v1781 = vld [vmem:[%s1771 + $0x34] sm:$0xf]
        %v1782 = vld [vmem:[%s1771 + $0x3c] sm:$0xf]
        %v1783 = vld [vmem:[%s1771 + $0x40] sm:$0xf]
        %v1784 = vld [vmem:[%s1771 + $0x48] sm:$0xf]
        %v1785 = vld [vmem:[%s1771 + $0x4c] sm:$0xf]
        %v1786 = vld [vmem:[%s1771 + $0x54] sm:$0xf]
        %v1787 = vld [vmem:[%s1771 + $0x58] sm:$0xf]
        %v1788 = vld [vmem:[%s1771 + $0x60] sm:$0xf]
        %v1789 = vld [vmem:[%s1771 + $0x64] sm:$0xf]
        %v1790 = vld [vmem:[%s1771 + $0x6c] sm:$0xf]
        %v1791 = vld [vmem:[%s1771 + $0x70] sm:$0xf]
        %v1792 = vld [vmem:[%s1771 + $0x78] sm:$0xf]
        %v1793 = vld [vmem:[%s1771 + $0x7c] sm:$0xf]
        %v1794 = vld [vmem:[%s1771 + $0x84] sm:$0xf]
        %v1795 = vld [vmem:[%s1771 + $0x88] sm:$0xf]
        %v1796 = vld [vmem:[%s1771 + $0x90] sm:$0xf]
        %v1797 = vld [vmem:[%s1771 + $0x94] sm:$0xf]
        %v1798 = vld [vmem:[%s1771 + $0x9c] sm:$0xf]
        %v1799 = vld [vmem:[%s1771 + $0xa0] sm:$0xf]
        %v1800 = vld [vmem:[%s1771 + $0xa8] sm:$0xf]
        %v1801 = vld [vmem:[%s1771 + $0xac] sm:$0xf]
        %v1802 = vld [vmem:[%s1771 + $0xb4] sm:$0xf]
        %v1803 = vld [vmem:[%s1771 + $0xb8] sm:$0xf]
        %s1804 = scalar_lea.vmem [#allocation3], 192
        %v1805 = vld [vmem:[%s1804] sm:$0xf]
        %v1806 = vld [vmem:[%s1804 + $0x4] sm:$0xf]
        %v1807 = vld [vmem:[%s1804 + $0x8] sm:$0xf]
        %v1808 = vld [vmem:[%s1804 + $0xc] sm:$0xf]
        %v1809 = vld [vmem:[%s1804 + $0x10] sm:$0xf]
        %v1810 = vld [vmem:[%s1804 + $0x14] sm:$0xf]
        %v1811 = vld [vmem:[%s1804 + $0x18] sm:$0xf]
        %v1812 = vld [vmem:[%s1804 + $0x1c] sm:$0xf]
        %v1813 = vld [vmem:[%s1804 + $0x20] sm:$0xf]
        %v1814 = vld [vmem:[%s1804 + $0x24] sm:$0xf]
        %v1815 = vld [vmem:[%s1804 + $0x28] sm:$0xf]
        %v1816 = vld [vmem:[%s1804 + $0x2c] sm:$0xf]
        %v1817 = vld [vmem:[%s1804 + $0x30] sm:$0xf]
        %v1818 = vld [vmem:[%s1804 + $0x34] sm:$0xf]
        %v1819 = vld [vmem:[%s1804 + $0x38] sm:$0xf]
        %v1820 = vld [vmem:[%s1804 + $0x3c] sm:$0xf]
        %v1853 = vunpack.c.l.b16 %v1772
        %v1854 = vunpack.c.l.b16 %v1773
        %v1855 = vunpack.c.l.b16 %v1774
        %v1856 = vunpack.c.l.b16 %v1775
        %v1857 = vunpack.c.l.b16 %v1776
        %v1858 = vunpack.c.l.b16 %v1777
        %v1859 = vunpack.c.l.b16 %v1778
        %v1860 = vunpack.c.l.b16 %v1779
        %v1861 = vunpack.c.l.b16 %v1780
        %v1862 = vunpack.c.l.b16 %v1781
        %v1863 = vunpack.c.l.b16 %v1782
        %v1864 = vunpack.c.l.b16 %v1783
        %v1865 = vunpack.c.l.b16 %v1784
        %v1866 = vunpack.c.l.b16 %v1785
        %v1867 = vunpack.c.l.b16 %v1786
        %v1868 = vunpack.c.l.b16 %v1787
        %v1869 = vunpack.c.l.b16 %v1788
        %v1870 = vunpack.c.l.b16 %v1789
        %v1871 = vunpack.c.l.b16 %v1790
        %v1872 = vunpack.c.l.b16 %v1791
        %v1873 = vunpack.c.l.b16 %v1792
        %v1874 = vunpack.c.l.b16 %v1793
        %v1875 = vunpack.c.l.b16 %v1794
        %v1876 = vunpack.c.l.b16 %v1795
        %v1877 = vunpack.c.l.b16 %v1796
        %v1878 = vunpack.c.l.b16 %v1797
        %v1879 = vunpack.c.l.b16 %v1798
        %v1880 = vunpack.c.l.b16 %v1799
        %v1881 = vunpack.c.l.b16 %v1800
        %v1882 = vunpack.c.l.b16 %v1801
        %v1883 = vunpack.c.l.b16 %v1802
        %v1884 = vunpack.c.l.b16 %v1803
        %v1885 = vpack.c.b16 %v1854, %v1853
        %v1886 = vpack.c.b16 %v1856, %v1855
        %v1887 = vpack.c.b16 %v1858, %v1857
        %v1888 = vpack.c.b16 %v1860, %v1859
        %v1889 = vpack.c.b16 %v1862, %v1861
        %v1890 = vpack.c.b16 %v1864, %v1863
        %v1891 = vpack.c.b16 %v1866, %v1865
        %v1892 = vpack.c.b16 %v1868, %v1867
        %v1893 = vpack.c.b16 %v1870, %v1869
        %v1894 = vpack.c.b16 %v1872, %v1871
        %v1895 = vpack.c.b16 %v1874, %v1873
        %v1896 = vpack.c.b16 %v1876, %v1875
        %v1897 = vpack.c.b16 %v1878, %v1877
        %v1898 = vpack.c.b16 %v1880, %v1879
        %v1899 = vpack.c.b16 %v1882, %v1881
        %v1900 = vpack.c.b16 %v1884, %v1883
        %v1933 = vunpack.c.l.b16 %v1805
        %v1934 = vunpack.c.l.b16 %v1806
        %v1935 = vunpack.c.l.b16 %v1807
        %v1936 = vunpack.c.l.b16 %v1808
        %v1937 = vunpack.c.l.b16 %v1809
        %v1938 = vunpack.c.l.b16 %v1810
        %v1939 = vunpack.c.l.b16 %v1811
        %v1940 = vunpack.c.l.b16 %v1812
        %v1941 = vunpack.c.l.b16 %v1813
        %v1942 = vunpack.c.l.b16 %v1814
        %v1943 = vunpack.c.l.b16 %v1815
        %v1944 = vunpack.c.l.b16 %v1816
        %v1945 = vunpack.c.l.b16 %v1817
        %v1946 = vunpack.c.l.b16 %v1818
        %v1947 = vunpack.c.l.b16 %v1819
        %v1948 = vunpack.c.l.b16 %v1820
        %v1949 = vpack.c.b16 %v1934, %v1933
        %v1950 = vpack.c.b16 %v1936, %v1935
        %v1951 = vpack.c.b16 %v1938, %v1937
        %v1952 = vpack.c.b16 %v1940, %v1939
        %v1953 = vpack.c.b16 %v1942, %v1941
        %v1954 = vpack.c.b16 %v1944, %v1943
        %v1955 = vpack.c.b16 %v1946, %v1945
        %v1956 = vpack.c.b16 %v1948, %v1947
        %1965 = vmatprep.subr.bf16.mxu0 0
        %1966 = vmatpush1.bf16.msra.mxu0 %v1949
        %1967 = vmatprep.subr.bf16.mxu0 0
        %1968 = vmatpush1.bf16.msra.mxu0 %v1950
        %1969 = vmatprep.subr.bf16.mxu0 0
        %1970 = vmatpush1.bf16.msra.mxu0 %v1951
        %1971 = vmatprep.subr.bf16.mxu0 0
        %1972 = vmatpush1.bf16.msra.mxu0 %v1952
        %1973 = vmatprep.subr.bf16.mxu0 0
        %1974 = vmatpush1.bf16.msra.mxu0 %v1953
        %1975 = vmatprep.subr.bf16.mxu0 0
        %1976 = vmatpush1.bf16.msra.mxu0 %v1954
        %1977 = vmatprep.subr.bf16.mxu0 0
        %1978 = vmatpush1.bf16.msra.mxu0 %v1955
        %1979 = vmatprep.subr.bf16.mxu0 0
        %1980 = vmatpush1.bf16.msra.mxu0 %v1956
        %1981 = vmatprep.subr.bf16.mxu0 0
        %1982 = vmatpush1.bf16.msra.mxu0 0
        %1983 = vmatprep.subr.bf16.mxu0 0
        %1984 = vmatpush1.bf16.msra.mxu0 0
        %1985 = vmatprep.subr.bf16.mxu0 0
        %1986 = vmatpush1.bf16.msra.mxu0 0
        %1987 = vmatprep.subr.bf16.mxu0 0
        %1988 = vmatpush1.bf16.msra.mxu0 0
        %1989 = vmatprep.subr.bf16.mxu0 0
        %1990 = vmatpush1.bf16.msra.mxu0 0
        %1991 = vmatprep.subr.bf16.mxu0 0
        %1992 = vmatpush1.bf16.msra.mxu0 0
        %1993 = vmatprep.subr.bf16.mxu0 0
        %1994 = vmatpush1.bf16.msra.mxu0 0
        %1995 = vmatprep.subr.bf16.mxu0 0
        %1996 = vmatpush1.bf16.msra.mxu0 0
        %1997 = vmatprep.mubr.bf16.mxu0 0
        %1998 = vmatmul.mubr.bf16.gmra.mrb[0].mxu0 %v1885
        %v1999 = vpop.f32.mrb[0].mxu0
        %v2000 = vadd.f32 0.0, %v1999
        %v2001 = vpop.f32.mrb[0].mxu0
        %v2002 = vpop.f32.mrb[0].mxu0
        %v2003 = vadd.f32 0.0, %v2002
        %v2004 = vpop.f32.mrb[0].mxu0
        %2005 = vmatprep.mubr.bf16.mxu0 0
        %2006 = vmatmul.mubr.bf16.gmra.mrb[0].mxu0 %v1886
        %v2007 = vpop.f32.mrb[0].mxu0
        %v2008 = vadd.f32 0.0, %v2007
        %v2009 = vpop.f32.mrb[0].mxu0
        %v2010 = vpop.f32.mrb[0].mxu0
        %v2011 = vadd.f32 0.0, %v2010
        %v2012 = vpop.f32.mrb[0].mxu0
        %2013 = vmatprep.mubr.bf16.mxu0 0
        %2014 = vmatmul.mubr.bf16.gmra.mrb[0].mxu0 %v1887
        %v2015 = vpop.f32.mrb[0].mxu0
        %v2016 = vadd.f32 0.0, %v2015
        %v2017 = vpop.f32.mrb[0].mxu0
        %v2018 = vpop.f32.mrb[0].mxu0
        %v2019 = vadd.f32 0.0, %v2018
        %v2020 = vpop.f32.mrb[0].mxu0
        %2021 = vmatprep.mubr.bf16.mxu0 0
        %2022 = vmatmul.mubr.bf16.gmra.mrb[0].mxu0 %v1888
        %v2023 = vpop.f32.mrb[0].mxu0
        %v2024 = vadd.f32 0.0, %v2023
        %v2025 = vpop.f32.mrb[0].mxu0
        %v2026 = vpop.f32.mrb[0].mxu0
        %v2027 = vadd.f32 0.0, %v2026
        %v2028 = vpop.f32.mrb[0].mxu0
        %2029 = vmatprep.mubr.bf16.mxu0 0
        %2030 = vmatmul.mubr.bf16.gmra.mrb[0].mxu0 %v1889
        %v2031 = vpop.f32.mrb[0].mxu0
        %v2032 = vadd.f32 0.0, %v2031
        %v2033 = vpop.f32.mrb[0].mxu0
        %v2034 = vpop.f32.mrb[0].mxu0
        %v2035 = vadd.f32 0.0, %v2034
        %v2036 = vpop.f32.mrb[0].mxu0
        %2037 = vmatprep.mubr.bf16.mxu0 0
        %2038 = vmatmul.mubr.bf16.gmra.mrb[0].mxu0 %v1890
        %v2039 = vpop.f32.mrb[0].mxu0
        %v2040 = vadd.f32 0.0, %v2039
        %v2041 = vpop.f32.mrb[0].mxu0
        %v2042 = vpop.f32.mrb[0].mxu0
        %v2043 = vadd.f32 0.0, %v2042
        %v2044 = vpop.f32.mrb[0].mxu0
        %2045 = vmatprep.mubr.bf16.mxu0 0
        %2046 = vmatmul.mubr.bf16.gmra.mrb[0].mxu0 %v1891
        %v2047 = vpop.f32.mrb[0].mxu0
        %v2048 = vadd.f32 0.0, %v2047
        %v2049 = vpop.f32.mrb[0].mxu0
        %v2050 = vpop.f32.mrb[0].mxu0
        %v2051 = vadd.f32 0.0, %v2050
        %v2052 = vpop.f32.mrb[0].mxu0
        %2053 = vmatprep.mubr.bf16.mxu0 0
        %2054 = vmatmul.mubr.bf16.gmra.mrb[0].mxu0 %v1892
        %v2055 = vpop.f32.mrb[0].mxu0
        %v2056 = vadd.f32 0.0, %v2055
        %v2057 = vpop.f32.mrb[0].mxu0
        %v2058 = vpop.f32.mrb[0].mxu0
        %v2059 = vadd.f32 0.0, %v2058
        %v2060 = vpop.f32.mrb[0].mxu0
        %2061 = vmatprep.mubr.bf16.mxu0 0
        %2062 = vmatmul.mubr.bf16.gmra.mrb[0].mxu0 %v1893
        %v2063 = vpop.f32.mrb[0].mxu0
        %v2064 = vadd.f32 0.0, %v2063
        %v2065 = vpop.f32.mrb[0].mxu0
        %v2066 = vpop.f32.mrb[0].mxu0
        %v2067 = vadd.f32 0.0, %v2066
        %v2068 = vpop.f32.mrb[0].mxu0
        %2069 = vmatprep.mubr.bf16.mxu0 0
        %2070 = vmatmul.mubr.bf16.gmra.mrb[0].mxu0 %v1894
        %v2071 = vpop.f32.mrb[0].mxu0
        %v2072 = vadd.f32 0.0, %v2071
        %v2073 = vpop.f32.mrb[0].mxu0
        %v2074 = vpop.f32.mrb[0].mxu0
        %v2075 = vadd.f32 0.0, %v2074
        %v2076 = vpop.f32.mrb[0].mxu0
        %2077 = vmatprep.mubr.bf16.mxu0 0
        %2078 = vmatmul.mubr.bf16.gmra.mrb[0].mxu0 %v1895
        %v2079 = vpop.f32.mrb[0].mxu0
        %v2080 = vadd.f32 0.0, %v2079
        %v2081 = vpop.f32.mrb[0].mxu0
        %v2082 = vpop.f32.mrb[0].mxu0
        %v2083 = vadd.f32 0.0, %v2082
        %v2084 = vpop.f32.mrb[0].mxu0
        %2085 = vmatprep.mubr.bf16.mxu0 0
        %2086 = vmatmul.mubr.bf16.gmra.mrb[0].mxu0 %v1896
        %v2087 = vpop.f32.mrb[0].mxu0
        %v2088 = vadd.f32 0.0, %v2087
        %v2089 = vpop.f32.mrb[0].mxu0
        %v2090 = vpop.f32.mrb[0].mxu0
        %v2091 = vadd.f32 0.0, %v2090
        %v2092 = vpop.f32.mrb[0].mxu0
        %2093 = vmatprep.mubr.bf16.mxu0 0
        %2094 = vmatmul.mubr.bf16.gmra.mrb[0].mxu0 %v1897
        %v2095 = vpop.f32.mrb[0].mxu0
        %v2096 = vadd.f32 0.0, %v2095
        %v2097 = vpop.f32.mrb[0].mxu0
        %v2098 = vpop.f32.mrb[0].mxu0
        %v2099 = vadd.f32 0.0, %v2098
        %v2100 = vpop.f32.mrb[0].mxu0
        %2101 = vmatprep.mubr.bf16.mxu0 0
        %2102 = vmatmul.mubr.bf16.gmra.mrb[0].mxu0 %v1898
        %v2103 = vpop.f32.mrb[0].mxu0
        %v2104 = vadd.f32 0.0, %v2103
        %v2105 = vpop.f32.mrb[0].mxu0
        %v2106 = vpop.f32.mrb[0].mxu0
        %v2107 = vadd.f32 0.0, %v2106
        %v2108 = vpop.f32.mrb[0].mxu0
        %2109 = vmatprep.mubr.bf16.mxu0 0
        %2110 = vmatmul.mubr.bf16.gmra.mrb[0].mxu0 %v1899
        %v2111 = vpop.f32.mrb[0].mxu0
        %v2112 = vadd.f32 0.0, %v2111
        %v2113 = vpop.f32.mrb[0].mxu0
        %v2114 = vpop.f32.mrb[0].mxu0
        %v2115 = vadd.f32 0.0, %v2114
        %v2116 = vpop.f32.mrb[0].mxu0
        %2117 = vmatprep.mubr.bf16.mxu0 0
        %2118 = vmatmul.mubr.bf16.gmra.mrb[0].mxu0 %v1900
        %v2119 = vpop.f32.mrb[0].mxu0
        %v2120 = vadd.f32 0.0, %v2119
        %v2121 = vpop.f32.mrb[0].mxu0
        %v2122 = vpop.f32.mrb[0].mxu0
        %v2123 = vadd.f32 0.0, %v2122
        %v2124 = vpop.f32.mrb[0].mxu0
        %2125 = vdwg.mxu0
        %v2126 = vadd.f32 %v1739, %v2000
        %v2127 = vadd.f32 %v1740, %v2003
        %v2128 = vadd.f32 %v1741, %v2008
        %v2129 = vadd.f32 %v1742, %v2011
        %v2130 = vadd.f32 %v1743, %v2016
        %v2131 = vadd.f32 %v1744, %v2019
        %v2132 = vadd.f32 %v1745, %v2024
        %v2133 = vadd.f32 %v1746, %v2027
        %v2134 = vadd.f32 %v1747, %v2032
        %v2135 = vadd.f32 %v1748, %v2035
        %v2136 = vadd.f32 %v1749, %v2040
        %v2137 = vadd.f32 %v1750, %v2043
        %v2138 = vadd.f32 %v1751, %v2048
        %v2139 = vadd.f32 %v1752, %v2051
        %v2140 = vadd.f32 %v1753, %v2056
        %v2141 = vadd.f32 %v1754, %v2059
        %v2142 = vadd.f32 %v1755, %v2064
        %v2143 = vadd.f32 %v1756, %v2067
        %v2144 = vadd.f32 %v1757, %v2072
        %v2145 = vadd.f32 %v1758, %v2075
        %v2146 = vadd.f32 %v1759, %v2080
        %v2147 = vadd.f32 %v1760, %v2083
        %v2148 = vadd.f32 %v1761, %v2088
        %v2149 = vadd.f32 %v1762, %v2091
        %v2150 = vadd.f32 %v1763, %v2096
        %v2151 = vadd.f32 %v1764, %v2099
        %v2152 = vadd.f32 %v1765, %v2104
        %v2153 = vadd.f32 %v1766, %v2107
        %v2154 = vadd.f32 %v1767, %v2112
        %v2155 = vadd.f32 %v1768, %v2115
        %v2156 = vadd.f32 %v1769, %v2120
        %v2157 = vadd.f32 %v1770, %v2123
        %v2158 = vld [vmem:[%s1771] sm:$0xf]
        %v2159 = vld [vmem:[%s1771 + $0x4] sm:$0xf]
        %v2160 = vld [vmem:[%s1771 + $0x8] sm:$0x1]
        %v2161 = vld [vmem:[%s1771 + $0xc] sm:$0xf]
        %v2162 = vld [vmem:[%s1771 + $0x10] sm:$0xf]
        %v2163 = vld [vmem:[%s1771 + $0x14] sm:$0x1]
        %v2164 = vld [vmem:[%s1771 + $0x18] sm:$0xf]
        %v2165 = vld [vmem:[%s1771 + $0x1c] sm:$0xf]
        %v2166 = vld [vmem:[%s1771 + $0x20] sm:$0x1]
        %v2167 = vld [vmem:[%s1771 + $0x24] sm:$0xf]
        %v2168 = vld [vmem:[%s1771 + $0x28] sm:$0xf]
        %v2169 = vld [vmem:[%s1771 + $0x2c] sm:$0x1]
        %v2170 = vld [vmem:[%s1771 + $0x30] sm:$0xf]
        %v2171 = vld [vmem:[%s1771 + $0x34] sm:$0xf]
        %v2172 = vld [vmem:[%s1771 + $0x38] sm:$0x1]
        %v2173 = vld [vmem:[%s1771 + $0x3c] sm:$0xf]
        %v2174 = vld [vmem:[%s1771 + $0x40] sm:$0xf]
        %v2175 = vld [vmem:[%s1771 + $0x44] sm:$0x1]
        %v2176 = vld [vmem:[%s1771 + $0x48] sm:$0xf]
        %v2177 = vld [vmem:[%s1771 + $0x4c] sm:$0xf]
        %v2178 = vld [vmem:[%s1771 + $0x50] sm:$0x1]
        %v2179 = vld [vmem:[%s1771 + $0x54] sm:$0xf]
        %v2180 = vld [vmem:[%s1771 + $0x58] sm:$0xf]
        %v2181 = vld [vmem:[%s1771 + $0x5c] sm:$0x1]
        %v2182 = vld [vmem:[%s1771 + $0x60] sm:$0xf]
        %v2183 = vld [vmem:[%s1771 + $0x64] sm:$0xf]
        %v2184 = vld [vmem:[%s1771 + $0x68] sm:$0x1]
        %v2185 = vld [vmem:[%s1771 + $0x6c] sm:$0xf]
        %v2186 = vld [vmem:[%s1771 + $0x70] sm:$0xf]
        %v2187 = vld [vmem:[%s1771 + $0x74] sm:$0x1]
        %v2188 = vld [vmem:[%s1771 + $0x78] sm:$0xf]
        %v2189 = vld [vmem:[%s1771 + $0x7c] sm:$0xf]
        %v2190 = vld [vmem:[%s1771 + $0x80] sm:$0x1]
        %v2191 = vld [vmem:[%s1771 + $0x84] sm:$0xf]
        %v2192 = vld [vmem:[%s1771 + $0x88] sm:$0xf]
        %v2193 = vld [vmem:[%s1771 + $0x8c] sm:$0x1]
        %v2194 = vld [vmem:[%s1771 + $0x90] sm:$0xf]
        %v2195 = vld [vmem:[%s1771 + $0x94] sm:$0xf]
        %v2196 = vld [vmem:[%s1771 + $0x98] sm:$0x1]
        %v2197 = vld [vmem:[%s1771 + $0x9c] sm:$0xf]
        %v2198 = vld [vmem:[%s1771 + $0xa0] sm:$0xf]
        %v2199 = vld [vmem:[%s1771 + $0xa4] sm:$0x1]
        %v2200 = vld [vmem:[%s1771 + $0xa8] sm:$0xf]
        %v2201 = vld [vmem:[%s1771 + $0xac] sm:$0xf]
        %v2202 = vld [vmem:[%s1771 + $0xb0] sm:$0x1]
        %v2203 = vld [vmem:[%s1771 + $0xb4] sm:$0xf]
        %v2204 = vld [vmem:[%s1771 + $0xb8] sm:$0xf]
        %v2205 = vld [vmem:[%s1771 + $0xbc] sm:$0x1]
        %v2207 = vshrl.u32 %v2158, 16
        %v2209 = vrot.slane %v2207, 4
        %v2210 = vshll.u32 %v2158, 16
        %v2212 = vrot.slane %v2210, 5
        %v2213 = vor.u32 %v2209, %v2212
        %v2214 = vrot.slane %v2213, 4
        %v2216 = vshll.u32 %v2159, 16
        %v2218 = vrot.slane %v2216, 5
        %v2219 = vsel %vm306, %v2214, %v2218
        %v2220 = vshrl.u32 %v2159, 16
        %v2222 = vrot.slane %v2220, 4
        %v2223 = vor.u32 %v2222, %v2218
        %v2224 = vrot.slane %v2223, 4
        %v2226 = vshll.u32 %v2160, 16
        %v2228 = vrot.slane %v2226, 5
        %v2229 = vsel %vm306, %v2224, %v2228
        %v2231 = vshrl.u32 %v2161, 16
        %v2233 = vrot.slane %v2231, 4
        %v2234 = vshll.u32 %v2161, 16
        %v2236 = vrot.slane %v2234, 5
        %v2237 = vor.u32 %v2233, %v2236
        %v2238 = vrot.slane %v2237, 4
        %v2240 = vshll.u32 %v2162, 16
        %v2242 = vrot.slane %v2240, 5
        %v2243 = vsel %vm306, %v2238, %v2242
        %v2244 = vshrl.u32 %v2162, 16
        %v2246 = vrot.slane %v2244, 4
        %v2247 = vor.u32 %v2246, %v2242
        %v2248 = vrot.slane %v2247, 4
        %v2250 = vshll.u32 %v2163, 16
        %v2252 = vrot.slane %v2250, 5
        %v2253 = vsel %vm306, %v2248, %v2252
        %v2255 = vshrl.u32 %v2164, 16
        %v2257 = vrot.slane %v2255, 4
        %v2258 = vshll.u32 %v2164, 16
        %v2260 = vrot.slane %v2258, 5
        %v2261 = vor.u32 %v2257, %v2260
        %v2262 = vrot.slane %v2261, 4
        %v2264 = vshll.u32 %v2165, 16
        %v2266 = vrot.slane %v2264, 5
        %v2267 = vsel %vm306, %v2262, %v2266
        %v2268 = vshrl.u32 %v2165, 16
        %v2270 = vrot.slane %v2268, 4
        %v2271 = vor.u32 %v2270, %v2266
        %v2272 = vrot.slane %v2271, 4
        %v2274 = vshll.u32 %v2166, 16
        %v2276 = vrot.slane %v2274, 5
        %v2277 = vsel %vm306, %v2272, %v2276
        %v2279 = vshrl.u32 %v2167, 16
        %v2281 = vrot.slane %v2279, 4
        %v2282 = vshll.u32 %v2167, 16
        %v2284 = vrot.slane %v2282, 5
        %v2285 = vor.u32 %v2281, %v2284
        %v2286 = vrot.slane %v2285, 4
        %v2288 = vshll.u32 %v2168, 16
        %v2290 = vrot.slane %v2288, 5
        %v2291 = vsel %vm306, %v2286, %v2290
        %v2292 = vshrl.u32 %v2168, 16
        %v2294 = vrot.slane %v2292, 4
        %v2295 = vor.u32 %v2294, %v2290
        %v2296 = vrot.slane %v2295, 4
        %v2298 = vshll.u32 %v2169, 16
        %v2300 = vrot.slane %v2298, 5
        %v2301 = vsel %vm306, %v2296, %v2300
        %v2303 = vshrl.u32 %v2170, 16
        %v2305 = vrot.slane %v2303, 4
        %v2306 = vshll.u32 %v2170, 16
        %v2308 = vrot.slane %v2306, 5
        %v2309 = vor.u32 %v2305, %v2308
        %v2310 = vrot.slane %v2309, 4
        %v2312 = vshll.u32 %v2171, 16
        %v2314 = vrot.slane %v2312, 5
        %v2315 = vsel %vm306, %v2310, %v2314
        %v2316 = vshrl.u32 %v2171, 16
        %v2318 = vrot.slane %v2316, 4
        %v2319 = vor.u32 %v2318, %v2314
        %v2320 = vrot.slane %v2319, 4
        %v2322 = vshll.u32 %v2172, 16
        %v2324 = vrot.slane %v2322, 5
        %v2325 = vsel %vm306, %v2320, %v2324
        %v2327 = vshrl.u32 %v2173, 16
        %v2329 = vrot.slane %v2327, 4
        %v2330 = vshll.u32 %v2173, 16
        %v2332 = vrot.slane %v2330, 5
        %v2333 = vor.u32 %v2329, %v2332
        %v2334 = vrot.slane %v2333, 4
        %v2336 = vshll.u32 %v2174, 16
        %v2338 = vrot.slane %v2336, 5
        %v2339 = vsel %vm306, %v2334, %v2338
        %v2340 = vshrl.u32 %v2174, 16
        %v2342 = vrot.slane %v2340, 4
        %v2343 = vor.u32 %v2342, %v2338
        %v2344 = vrot.slane %v2343, 4
        %v2346 = vshll.u32 %v2175, 16
        %v2348 = vrot.slane %v2346, 5
        %v2349 = vsel %vm306, %v2344, %v2348
        %v2351 = vshrl.u32 %v2176, 16
        %v2353 = vrot.slane %v2351, 4
        %v2354 = vshll.u32 %v2176, 16
        %v2356 = vrot.slane %v2354, 5
        %v2357 = vor.u32 %v2353, %v2356
        %v2358 = vrot.slane %v2357, 4
        %v2360 = vshll.u32 %v2177, 16
        %v2362 = vrot.slane %v2360, 5
        %v2363 = vsel %vm306, %v2358, %v2362
        %v2364 = vshrl.u32 %v2177, 16
        %v2366 = vrot.slane %v2364, 4
        %v2367 = vor.u32 %v2366, %v2362
        %v2368 = vrot.slane %v2367, 4
        %v2370 = vshll.u32 %v2178, 16
        %v2372 = vrot.slane %v2370, 5
        %v2373 = vsel %vm306, %v2368, %v2372
        %v2375 = vshrl.u32 %v2179, 16
        %v2377 = vrot.slane %v2375, 4
        %v2378 = vshll.u32 %v2179, 16
        %v2380 = vrot.slane %v2378, 5
        %v2381 = vor.u32 %v2377, %v2380
        %v2382 = vrot.slane %v2381, 4
        %v2384 = vshll.u32 %v2180, 16
        %v2386 = vrot.slane %v2384, 5
        %v2387 = vsel %vm306, %v2382, %v2386
        %v2388 = vshrl.u32 %v2180, 16
        %v2390 = vrot.slane %v2388, 4
        %v2391 = vor.u32 %v2390, %v2386
        %v2392 = vrot.slane %v2391, 4
        %v2394 = vshll.u32 %v2181, 16
        %v2396 = vrot.slane %v2394, 5
        %v2397 = vsel %vm306, %v2392, %v2396
        %v2399 = vshrl.u32 %v2182, 16
        %v2401 = vrot.slane %v2399, 4
        %v2402 = vshll.u32 %v2182, 16
        %v2404 = vrot.slane %v2402, 5
        %v2405 = vor.u32 %v2401, %v2404
        %v2406 = vrot.slane %v2405, 4
        %v2408 = vshll.u32 %v2183, 16
        %v2410 = vrot.slane %v2408, 5
        %v2411 = vsel %vm306, %v2406, %v2410
        %v2412 = vshrl.u32 %v2183, 16
        %v2414 = vrot.slane %v2412, 4
        %v2415 = vor.u32 %v2414, %v2410
        %v2416 = vrot.slane %v2415, 4
        %v2418 = vshll.u32 %v2184, 16
        %v2420 = vrot.slane %v2418, 5
        %v2421 = vsel %vm306, %v2416, %v2420
        %v2423 = vshrl.u32 %v2185, 16
        %v2425 = vrot.slane %v2423, 4
        %v2426 = vshll.u32 %v2185, 16
        %v2428 = vrot.slane %v2426, 5
        %v2429 = vor.u32 %v2425, %v2428
        %v2430 = vrot.slane %v2429, 4
        %v2432 = vshll.u32 %v2186, 16
        %v2434 = vrot.slane %v2432, 5
        %v2435 = vsel %vm306, %v2430, %v2434
        %v2436 = vshrl.u32 %v2186, 16
        %v2438 = vrot.slane %v2436, 4
        %v2439 = vor.u32 %v2438, %v2434
        %v2440 = vrot.slane %v2439, 4
        %v2442 = vshll.u32 %v2187, 16
        %v2444 = vrot.slane %v2442, 5
        %v2445 = vsel %vm306, %v2440, %v2444
        %v2447 = vshrl.u32 %v2188, 16
        %v2449 = vrot.slane %v2447, 4
        %v2450 = vshll.u32 %v2188, 16
        %v2452 = vrot.slane %v2450, 5
        %v2453 = vor.u32 %v2449, %v2452
        %v2454 = vrot.slane %v2453, 4
        %v2456 = vshll.u32 %v2189, 16
        %v2458 = vrot.slane %v2456, 5
        %v2459 = vsel %vm306, %v2454, %v2458
        %v2460 = vshrl.u32 %v2189, 16
        %v2462 = vrot.slane %v2460, 4
        %v2463 = vor.u32 %v2462, %v2458
        %v2464 = vrot.slane %v2463, 4
        %v2466 = vshll.u32 %v2190, 16
        %v2468 = vrot.slane %v2466, 5
        %v2469 = vsel %vm306, %v2464, %v2468
        %v2471 = vshrl.u32 %v2191, 16
        %v2473 = vrot.slane %v2471, 4
        %v2474 = vshll.u32 %v2191, 16
        %v2476 = vrot.slane %v2474, 5
        %v2477 = vor.u32 %v2473, %v2476
        %v2478 = vrot.slane %v2477, 4
        %v2480 = vshll.u32 %v2192, 16
        %v2482 = vrot.slane %v2480, 5
        %v2483 = vsel %vm306, %v2478, %v2482
        %v2484 = vshrl.u32 %v2192, 16
        %v2486 = vrot.slane %v2484, 4
        %v2487 = vor.u32 %v2486, %v2482
        %v2488 = vrot.slane %v2487, 4
        %v2490 = vshll.u32 %v2193, 16
        %v2492 = vrot.slane %v2490, 5
        %v2493 = vsel %vm306, %v2488, %v2492
        %v2495 = vshrl.u32 %v2194, 16
        %v2497 = vrot.slane %v2495, 4
        %v2498 = vshll.u32 %v2194, 16
        %v2500 = vrot.slane %v2498, 5
        %v2501 = vor.u32 %v2497, %v2500
        %v2502 = vrot.slane %v2501, 4
        %v2504 = vshll.u32 %v2195, 16
        %v2506 = vrot.slane %v2504, 5
        %v2507 = vsel %vm306, %v2502, %v2506
        %v2508 = vshrl.u32 %v2195, 16
        %v2510 = vrot.slane %v2508, 4
        %v2511 = vor.u32 %v2510, %v2506
        %v2512 = vrot.slane %v2511, 4
        %v2514 = vshll.u32 %v2196, 16
        %v2516 = vrot.slane %v2514, 5
        %v2517 = vsel %vm306, %v2512, %v2516
        %v2519 = vshrl.u32 %v2197, 16
        %v2521 = vrot.slane %v2519, 4
        %v2522 = vshll.u32 %v2197, 16
        %v2524 = vrot.slane %v2522, 5
        %v2525 = vor.u32 %v2521, %v2524
        %v2526 = vrot.slane %v2525, 4
        %v2528 = vshll.u32 %v2198, 16
        %v2530 = vrot.slane %v2528, 5
        %v2531 = vsel %vm306, %v2526, %v2530
        %v2532 = vshrl.u32 %v2198, 16
        %v2534 = vrot.slane %v2532, 4
        %v2535 = vor.u32 %v2534, %v2530
        %v2536 = vrot.slane %v2535, 4
        %v2538 = vshll.u32 %v2199, 16
        %v2540 = vrot.slane %v2538, 5
        %v2541 = vsel %vm306, %v2536, %v2540
        %v2543 = vshrl.u32 %v2200, 16
        %v2545 = vrot.slane %v2543, 4
        %v2546 = vshll.u32 %v2200, 16
        %v2548 = vrot.slane %v2546, 5
        %v2549 = vor.u32 %v2545, %v2548
        %v2550 = vrot.slane %v2549, 4
        %v2552 = vshll.u32 %v2201, 16
        %v2554 = vrot.slane %v2552, 5
        %v2555 = vsel %vm306, %v2550, %v2554
        %v2556 = vshrl.u32 %v2201, 16
        %v2558 = vrot.slane %v2556, 4
        %v2559 = vor.u32 %v2558, %v2554
        %v2560 = vrot.slane %v2559, 4
        %v2562 = vshll.u32 %v2202, 16
        %v2564 = vrot.slane %v2562, 5
        %v2565 = vsel %vm306, %v2560, %v2564
        %v2567 = vshrl.u32 %v2203, 16
        %v2569 = vrot.slane %v2567, 4
        %v2570 = vshll.u32 %v2203, 16
        %v2572 = vrot.slane %v2570, 5
        %v2573 = vor.u32 %v2569, %v2572
        %v2574 = vrot.slane %v2573, 4
        %v2576 = vshll.u32 %v2204, 16
        %v2578 = vrot.slane %v2576, 5
        %v2579 = vsel %vm306, %v2574, %v2578
        %v2580 = vshrl.u32 %v2204, 16
        %v2582 = vrot.slane %v2580, 4
        %v2583 = vor.u32 %v2582, %v2578
        %v2584 = vrot.slane %v2583, 4
        %v2586 = vshll.u32 %v2205, 16
        %v2588 = vrot.slane %v2586, 5
        %v2589 = vsel %vm306, %v2584, %v2588
        %s2590 = scalar_lea.vmem [#allocation3], 256
        %v2591 = vld [vmem:[%s2590] sm:$0xf]
        %v2592 = vld [vmem:[%s2590 + $0x4] sm:$0xf]
        %v2593 = vld [vmem:[%s2590 + $0x8] sm:$0xf]
        %v2594 = vld [vmem:[%s2590 + $0xc] sm:$0xf]
        %v2595 = vld [vmem:[%s2590 + $0x10] sm:$0xf]
        %v2596 = vld [vmem:[%s2590 + $0x14] sm:$0xf]
        %v2597 = vld [vmem:[%s2590 + $0x18] sm:$0xf]
        %v2598 = vld [vmem:[%s2590 + $0x1c] sm:$0xf]
        %v2599 = vld [vmem:[%s2590 + $0x20] sm:$0xf]
        %v2600 = vld [vmem:[%s2590 + $0x24] sm:$0xf]
        %v2601 = vld [vmem:[%s2590 + $0x28] sm:$0xf]
        %v2602 = vld [vmem:[%s2590 + $0x2c] sm:$0xf]
        %v2603 = vld [vmem:[%s2590 + $0x30] sm:$0xf]
        %v2604 = vld [vmem:[%s2590 + $0x34] sm:$0xf]
        %v2605 = vld [vmem:[%s2590 + $0x38] sm:$0xf]
        %v2606 = vld [vmem:[%s2590 + $0x3c] sm:$0xf]
        %v2607 = vunpack.c.l.b16 %v2219
        %v2608 = vunpack.c.l.b16 %v2229
        %v2609 = vunpack.c.l.b16 %v2243
        %v2610 = vunpack.c.l.b16 %v2253
        %v2611 = vunpack.c.l.b16 %v2267
        %v2612 = vunpack.c.l.b16 %v2277
        %v2613 = vunpack.c.l.b16 %v2291
        %v2614 = vunpack.c.l.b16 %v2301
        %v2615 = vunpack.c.l.b16 %v2315
        %v2616 = vunpack.c.l.b16 %v2325
        %v2617 = vunpack.c.l.b16 %v2339
        %v2618 = vunpack.c.l.b16 %v2349
        %v2619 = vunpack.c.l.b16 %v2363
        %v2620 = vunpack.c.l.b16 %v2373
        %v2621 = vunpack.c.l.b16 %v2387
        %v2622 = vunpack.c.l.b16 %v2397
        %v2623 = vunpack.c.l.b16 %v2411
        %v2624 = vunpack.c.l.b16 %v2421
        %v2625 = vunpack.c.l.b16 %v2435
        %v2626 = vunpack.c.l.b16 %v2445
        %v2627 = vunpack.c.l.b16 %v2459
        %v2628 = vunpack.c.l.b16 %v2469
        %v2629 = vunpack.c.l.b16 %v2483
        %v2630 = vunpack.c.l.b16 %v2493
        %v2631 = vunpack.c.l.b16 %v2507
        %v2632 = vunpack.c.l.b16 %v2517
        %v2633 = vunpack.c.l.b16 %v2531
        %v2634 = vunpack.c.l.b16 %v2541
        %v2635 = vunpack.c.l.b16 %v2555
        %v2636 = vunpack.c.l.b16 %v2565
        %v2637 = vunpack.c.l.b16 %v2579
        %v2638 = vunpack.c.l.b16 %v2589
        %v2639 = vpack.c.b16 %v2608, %v2607
        %v2640 = vpack.c.b16 %v2610, %v2609
        %v2641 = vpack.c.b16 %v2612, %v2611
        %v2642 = vpack.c.b16 %v2614, %v2613
        %v2643 = vpack.c.b16 %v2616, %v2615
        %v2644 = vpack.c.b16 %v2618, %v2617
        %v2645 = vpack.c.b16 %v2620, %v2619
        %v2646 = vpack.c.b16 %v2622, %v2621
        %v2647 = vpack.c.b16 %v2624, %v2623
        %v2648 = vpack.c.b16 %v2626, %v2625
        %v2649 = vpack.c.b16 %v2628, %v2627
        %v2650 = vpack.c.b16 %v2630, %v2629
        %v2651 = vpack.c.b16 %v2632, %v2631
        %v2652 = vpack.c.b16 %v2634, %v2633
        %v2653 = vpack.c.b16 %v2636, %v2635
        %v2654 = vpack.c.b16 %v2638, %v2637
        %v2687 = vunpack.c.l.b16 %v2591
        %v2688 = vunpack.c.l.b16 %v2592
        %v2689 = vunpack.c.l.b16 %v2593
        %v2690 = vunpack.c.l.b16 %v2594
        %v2691 = vunpack.c.l.b16 %v2595
        %v2692 = vunpack.c.l.b16 %v2596
        %v2693 = vunpack.c.l.b16 %v2597
        %v2694 = vunpack.c.l.b16 %v2598
        %v2695 = vunpack.c.l.b16 %v2599
        %v2696 = vunpack.c.l.b16 %v2600
        %v2697 = vunpack.c.l.b16 %v2601
        %v2698 = vunpack.c.l.b16 %v2602
        %v2699 = vunpack.c.l.b16 %v2603
        %v2700 = vunpack.c.l.b16 %v2604
        %v2701 = vunpack.c.l.b16 %v2605
        %v2702 = vunpack.c.l.b16 %v2606
        %v2703 = vpack.c.b16 %v2688, %v2687
        %v2704 = vpack.c.b16 %v2690, %v2689
        %v2705 = vpack.c.b16 %v2692, %v2691
        %v2706 = vpack.c.b16 %v2694, %v2693
        %v2707 = vpack.c.b16 %v2696, %v2695
        %v2708 = vpack.c.b16 %v2698, %v2697
        %v2709 = vpack.c.b16 %v2700, %v2699
        %v2710 = vpack.c.b16 %v2702, %v2701
        %2719 = vmatprep.subr.bf16.mxu0 0
        %2720 = vmatpush1.bf16.msra.mxu0 %v2703
        %2721 = vmatprep.subr.bf16.mxu0 0
        %2722 = vmatpush1.bf16.msra.mxu0 %v2704
        %2723 = vmatprep.subr.bf16.mxu0 0
        %2724 = vmatpush1.bf16.msra.mxu0 %v2705
        %2725 = vmatprep.subr.bf16.mxu0 0
        %2726 = vmatpush1.bf16.msra.mxu0 %v2706
        %2727 = vmatprep.subr.bf16.mxu0 0
        %2728 = vmatpush1.bf16.msra.mxu0 %v2707
        %2729 = vmatprep.subr.bf16.mxu0 0
        %2730 = vmatpush1.bf16.msra.mxu0 %v2708
        %2731 = vmatprep.subr.bf16.mxu0 0
        %2732 = vmatpush1.bf16.msra.mxu0 %v2709
        %2733 = vmatprep.subr.bf16.mxu0 0
        %2734 = vmatpush1.bf16.msra.mxu0 %v2710
        %2735 = vmatprep.subr.bf16.mxu0 0
        %2736 = vmatpush1.bf16.msra.mxu0 0
        %2737 = vmatprep.subr.bf16.mxu0 0
        %2738 = vmatpush1.bf16.msra.mxu0 0
        %2739 = vmatprep.subr.bf16.mxu0 0
        %2740 = vmatpush1.bf16.msra.mxu0 0
        %2741 = vmatprep.subr.bf16.mxu0 0
        %2742 = vmatpush1.bf16.msra.mxu0 0
        %2743 = vmatprep.subr.bf16.mxu0 0
        %2744 = vmatpush1.bf16.msra.mxu0 0
        %2745 = vmatprep.subr.bf16.mxu0 0
        %2746 = vmatpush1.bf16.msra.mxu0 0
        %2747 = vmatprep.subr.bf16.mxu0 0
        %2748 = vmatpush1.bf16.msra.mxu0 0
        %2749 = vmatprep.subr.bf16.mxu0 0
        %2750 = vmatpush1.bf16.msra.mxu0 0
        %2751 = vmatprep.mubr.bf16.mxu0 0
        %2752 = vmatmul.mubr.bf16.gmra.mrb[0].mxu0 %v2639
        %v2753 = vpop.f32.mrb[0].mxu0
        %v2754 = vadd.f32 0.0, %v2753
        %v2755 = vpop.f32.mrb[0].mxu0
        %v2756 = vpop.f32.mrb[0].mxu0
        %v2757 = vadd.f32 0.0, %v2756
        %v2758 = vpop.f32.mrb[0].mxu0
        %2759 = vmatprep.mubr.bf16.mxu0 0
        %2760 = vmatmul.mubr.bf16.gmra.mrb[0].mxu0 %v2640
        %v2761 = vpop.f32.mrb[0].mxu0
        %v2762 = vadd.f32 0.0, %v2761
        %v2763 = vpop.f32.mrb[0].mxu0
        %v2764 = vpop.f32.mrb[0].mxu0
        %v2765 = vadd.f32 0.0, %v2764
        %v2766 = vpop.f32.mrb[0].mxu0
        %2767 = vmatprep.mubr.bf16.mxu0 0
        %2768 = vmatmul.mubr.bf16.gmra.mrb[0].mxu0 %v2641
        %v2769 = vpop.f32.mrb[0].mxu0
        %v2770 = vadd.f32 0.0, %v2769
        %v2771 = vpop.f32.mrb[0].mxu0
        %v2772 = vpop.f32.mrb[0].mxu0
        %v2773 = vadd.f32 0.0, %v2772
        %v2774 = vpop.f32.mrb[0].mxu0
        %2775 = vmatprep.mubr.bf16.mxu0 0
        %2776 = vmatmul.mubr.bf16.gmra.mrb[0].mxu0 %v2642
        %v2777 = vpop.f32.mrb[0].mxu0
        %v2778 = vadd.f32 0.0, %v2777
        %v2779 = vpop.f32.mrb[0].mxu0
        %v2780 = vpop.f32.mrb[0].mxu0
        %v2781 = vadd.f32 0.0, %v2780
        %v2782 = vpop.f32.mrb[0].mxu0
        %2783 = vmatprep.mubr.bf16.mxu0 0
        %2784 = vmatmul.mubr.bf16.gmra.mrb[0].mxu0 %v2643
        %v2785 = vpop.f32.mrb[0].mxu0
        %v2786 = vadd.f32 0.0, %v2785
        %v2787 = vpop.f32.mrb[0].mxu0
        %v2788 = vpop.f32.mrb[0].mxu0
        %v2789 = vadd.f32 0.0, %v2788
        %v2790 = vpop.f32.mrb[0].mxu0
        %2791 = vmatprep.mubr.bf16.mxu0 0
        %2792 = vmatmul.mubr.bf16.gmra.mrb[0].mxu0 %v2644
        %v2793 = vpop.f32.mrb[0].mxu0
        %v2794 = vadd.f32 0.0, %v2793
        %v2795 = vpop.f32.mrb[0].mxu0
        %v2796 = vpop.f32.mrb[0].mxu0
        %v2797 = vadd.f32 0.0, %v2796
        %v2798 = vpop.f32.mrb[0].mxu0
        %2799 = vmatprep.mubr.bf16.mxu0 0
        %2800 = vmatmul.mubr.bf16.gmra.mrb[0].mxu0 %v2645
        %v2801 = vpop.f32.mrb[0].mxu0
        %v2802 = vadd.f32 0.0, %v2801
        %v2803 = vpop.f32.mrb[0].mxu0
        %v2804 = vpop.f32.mrb[0].mxu0
        %v2805 = vadd.f32 0.0, %v2804
        %v2806 = vpop.f32.mrb[0].mxu0
        %2807 = vmatprep.mubr.bf16.mxu0 0
        %2808 = vmatmul.mubr.bf16.gmra.mrb[0].mxu0 %v2646
        %v2809 = vpop.f32.mrb[0].mxu0
        %v2810 = vadd.f32 0.0, %v2809
        %v2811 = vpop.f32.mrb[0].mxu0
        %v2812 = vpop.f32.mrb[0].mxu0
        %v2813 = vadd.f32 0.0, %v2812
        %v2814 = vpop.f32.mrb[0].mxu0
        %2815 = vmatprep.mubr.bf16.mxu0 0
        %2816 = vmatmul.mubr.bf16.gmra.mrb[0].mxu0 %v2647
        %v2817 = vpop.f32.mrb[0].mxu0
        %v2818 = vadd.f32 0.0, %v2817
        %v2819 = vpop.f32.mrb[0].mxu0
        %v2820 = vpop.f32.mrb[0].mxu0
        %v2821 = vadd.f32 0.0, %v2820
        %v2822 = vpop.f32.mrb[0].mxu0
        %2823 = vmatprep.mubr.bf16.mxu0 0
        %2824 = vmatmul.mubr.bf16.gmra.mrb[0].mxu0 %v2648
        %v2825 = vpop.f32.mrb[0].mxu0
        %v2826 = vadd.f32 0.0, %v2825
        %v2827 = vpop.f32.mrb[0].mxu0
        %v2828 = vpop.f32.mrb[0].mxu0
        %v2829 = vadd.f32 0.0, %v2828
        %v2830 = vpop.f32.mrb[0].mxu0
        %2831 = vmatprep.mubr.bf16.mxu0 0
        %2832 = vmatmul.mubr.bf16.gmra.mrb[0].mxu0 %v2649
        %v2833 = vpop.f32.mrb[0].mxu0
        %v2834 = vadd.f32 0.0, %v2833
        %v2835 = vpop.f32.mrb[0].mxu0
        %v2836 = vpop.f32.mrb[0].mxu0
        %v2837 = vadd.f32 0.0, %v2836
        %v2838 = vpop.f32.mrb[0].mxu0
        %2839 = vmatprep.mubr.bf16.mxu0 0
        %2840 = vmatmul.mubr.bf16.gmra.mrb[0].mxu0 %v2650
        %v2841 = vpop.f32.mrb[0].mxu0
        %v2842 = vadd.f32 0.0, %v2841
        %v2843 = vpop.f32.mrb[0].mxu0
        %v2844 = vpop.f32.mrb[0].mxu0
        %v2845 = vadd.f32 0.0, %v2844
        %v2846 = vpop.f32.mrb[0].mxu0
        %2847 = vmatprep.mubr.bf16.mxu0 0
        %2848 = vmatmul.mubr.bf16.gmra.mrb[0].mxu0 %v2651
        %v2849 = vpop.f32.mrb[0].mxu0
        %v2850 = vadd.f32 0.0, %v2849
        %v2851 = vpop.f32.mrb[0].mxu0
        %v2852 = vpop.f32.mrb[0].mxu0
        %v2853 = vadd.f32 0.0, %v2852
        %v2854 = vpop.f32.mrb[0].mxu0
        %2855 = vmatprep.mubr.bf16.mxu0 0
        %2856 = vmatmul.mubr.bf16.gmra.mrb[0].mxu0 %v2652
        %v2857 = vpop.f32.mrb[0].mxu0
        %v2858 = vadd.f32 0.0, %v2857
        %v2859 = vpop.f32.mrb[0].mxu0
        %v2860 = vpop.f32.mrb[0].mxu0
        %v2861 = vadd.f32 0.0, %v2860
        %v2862 = vpop.f32.mrb[0].mxu0
        %2863 = vmatprep.mubr.bf16.mxu0 0
        %2864 = vmatmul.mubr.bf16.gmra.mrb[0].mxu0 %v2653
        %v2865 = vpop.f32.mrb[0].mxu0
        %v2866 = vadd.f32 0.0, %v2865
        %v2867 = vpop.f32.mrb[0].mxu0
        %v2868 = vpop.f32.mrb[0].mxu0
        %v2869 = vadd.f32 0.0, %v2868
        %v2870 = vpop.f32.mrb[0].mxu0
        %2871 = vmatprep.mubr.bf16.mxu0 0
        %2872 = vmatmul.mubr.bf16.gmra.mrb[0].mxu0 %v2654
        %v2873 = vpop.f32.mrb[0].mxu0
        %v2874 = vadd.f32 0.0, %v2873
        %v2875 = vpop.f32.mrb[0].mxu0
        %v2876 = vpop.f32.mrb[0].mxu0
        %v2877 = vadd.f32 0.0, %v2876
        %v2878 = vpop.f32.mrb[0].mxu0
        %2879 = vdwg.mxu0
        %v2880 = vadd.f32 %v2126, %v2754
        %v2881 = vadd.f32 %v2127, %v2757
        %v2882 = vadd.f32 %v2128, %v2762
        %v2883 = vadd.f32 %v2129, %v2765
        %v2884 = vadd.f32 %v2130, %v2770
        %v2885 = vadd.f32 %v2131, %v2773
        %v2886 = vadd.f32 %v2132, %v2778
        %v2887 = vadd.f32 %v2133, %v2781
        %v2888 = vadd.f32 %v2134, %v2786
        %v2889 = vadd.f32 %v2135, %v2789
        %v2890 = vadd.f32 %v2136, %v2794
        %v2891 = vadd.f32 %v2137, %v2797
        %v2892 = vadd.f32 %v2138, %v2802
        %v2893 = vadd.f32 %v2139, %v2805
        %v2894 = vadd.f32 %v2140, %v2810
        %v2895 = vadd.f32 %v2141, %v2813
        %v2896 = vadd.f32 %v2142, %v2818
        %v2897 = vadd.f32 %v2143, %v2821
        %v2898 = vadd.f32 %v2144, %v2826
        %v2899 = vadd.f32 %v2145, %v2829
        %v2900 = vadd.f32 %v2146, %v2834
        %v2901 = vadd.f32 %v2147, %v2837
        %v2902 = vadd.f32 %v2148, %v2842
        %v2903 = vadd.f32 %v2149, %v2845
        %v2904 = vadd.f32 %v2150, %v2850
        %v2905 = vadd.f32 %v2151, %v2853
        %v2906 = vadd.f32 %v2152, %v2858
        %v2907 = vadd.f32 %v2153, %v2861
        %v2908 = vadd.f32 %v2154, %v2866
        %v2909 = vadd.f32 %v2155, %v2869
        %v2910 = vadd.f32 %v2156, %v2874
        %v2911 = vadd.f32 %v2157, %v2877
        %v2912 = vld [vmem:[%s1771] sm:$0xe]
        %v2913 = vld [vmem:[%s1771 + $0xc] sm:$0xe]
        %v2914 = vld [vmem:[%s1771 + $0x18] sm:$0xe]
        %v2915 = vld [vmem:[%s1771 + $0x24] sm:$0xe]
        %v2916 = vld [vmem:[%s1771 + $0x30] sm:$0xe]
        %v2917 = vld [vmem:[%s1771 + $0x3c] sm:$0xe]
        %v2918 = vld [vmem:[%s1771 + $0x48] sm:$0xe]
        %v2919 = vld [vmem:[%s1771 + $0x54] sm:$0xe]
        %v2920 = vld [vmem:[%s1771 + $0x60] sm:$0xe]
        %v2921 = vld [vmem:[%s1771 + $0x6c] sm:$0xe]
        %v2922 = vld [vmem:[%s1771 + $0x78] sm:$0xe]
        %v2923 = vld [vmem:[%s1771 + $0x84] sm:$0xe]
        %v2924 = vld [vmem:[%s1771 + $0x90] sm:$0xe]
        %v2925 = vld [vmem:[%s1771 + $0x9c] sm:$0xe]
        %v2926 = vld [vmem:[%s1771 + $0xa8] sm:$0xe]
        %v2927 = vld [vmem:[%s1771 + $0xb4] sm:$0xe]
        %v2976 = vrot.slane %v2912, 5
        %v2977 = vrot.slane %v2976, 4
        %v2978 = vrot.slane %v2159, 5
        %v2979 = vsel %vm1336, %v2977, %v2978
        %v2980 = vrot.slane %v2978, 4
        %v2981 = vrot.slane %v2160, 5
        %v2982 = vsel %vm1336, %v2980, %v2981
        %v2983 = vrot.slane %v2913, 5
        %v2984 = vrot.slane %v2983, 4
        %v2985 = vrot.slane %v2162, 5
        %v2986 = vsel %vm1336, %v2984, %v2985
        %v2987 = vrot.slane %v2985, 4
        %v2988 = vrot.slane %v2163, 5
        %v2989 = vsel %vm1336, %v2987, %v2988
        %v2990 = vrot.slane %v2914, 5
        %v2991 = vrot.slane %v2990, 4
        %v2992 = vrot.slane %v2165, 5
        %v2993 = vsel %vm1336, %v2991, %v2992
        %v2994 = vrot.slane %v2992, 4
        %v2995 = vrot.slane %v2166, 5
        %v2996 = vsel %vm1336, %v2994, %v2995
        %v2997 = vrot.slane %v2915, 5
        %v2998 = vrot.slane %v2997, 4
        %v2999 = vrot.slane %v2168, 5
        %v3000 = vsel %vm1336, %v2998, %v2999
        %v3001 = vrot.slane %v2999, 4
        %v3002 = vrot.slane %v2169, 5
        %v3003 = vsel %vm1336, %v3001, %v3002
        %v3004 = vrot.slane %v2916, 5
        %v3005 = vrot.slane %v3004, 4
        %v3006 = vrot.slane %v2171, 5
        %v3007 = vsel %vm1336, %v3005, %v3006
        %v3008 = vrot.slane %v3006, 4
        %v3009 = vrot.slane %v2172, 5
        %v3010 = vsel %vm1336, %v3008, %v3009
        %v3011 = vrot.slane %v2917, 5
        %v3012 = vrot.slane %v3011, 4
        %v3013 = vrot.slane %v2174, 5
        %v3014 = vsel %vm1336, %v3012, %v3013
        %v3015 = vrot.slane %v3013, 4
        %v3016 = vrot.slane %v2175, 5
        %v3017 = vsel %vm1336, %v3015, %v3016
        %v3018 = vrot.slane %v2918, 5
        %v3019 = vrot.slane %v3018, 4
        %v3020 = vrot.slane %v2177, 5
        %v3021 = vsel %vm1336, %v3019, %v3020
        %v3022 = vrot.slane %v3020, 4
        %v3023 = vrot.slane %v2178, 5
        %v3024 = vsel %vm1336, %v3022, %v3023
        %v3025 = vrot.slane %v2919, 5
        %v3026 = vrot.slane %v3025, 4
        %v3027 = vrot.slane %v2180, 5
        %v3028 = vsel %vm1336, %v3026, %v3027
        %v3029 = vrot.slane %v3027, 4
        %v3030 = vrot.slane %v2181, 5
        %v3031 = vsel %vm1336, %v3029, %v3030
        %v3032 = vrot.slane %v2920, 5
        %v3033 = vrot.slane %v3032, 4
        %v3034 = vrot.slane %v2183, 5
        %v3035 = vsel %vm1336, %v3033, %v3034
        %v3036 = vrot.slane %v3034, 4
        %v3037 = vrot.slane %v2184, 5
        %v3038 = vsel %vm1336, %v3036, %v3037
        %v3039 = vrot.slane %v2921, 5
        %v3040 = vrot.slane %v3039, 4
        %v3041 = vrot.slane %v2186, 5
        %v3042 = vsel %vm1336, %v3040, %v3041
        %v3043 = vrot.slane %v3041, 4
        %v3044 = vrot.slane %v2187, 5
        %v3045 = vsel %vm1336, %v3043, %v3044
        %v3046 = vrot.slane %v2922, 5
        %v3047 = vrot.slane %v3046, 4
        %v3048 = vrot.slane %v2189, 5
        %v3049 = vsel %vm1336, %v3047, %v3048
        %v3050 = vrot.slane %v3048, 4
        %v3051 = vrot.slane %v2190, 5
        %v3052 = vsel %vm1336, %v3050, %v3051
        %v3053 = vrot.slane %v2923, 5
        %v3054 = vrot.slane %v3053, 4
        %v3055 = vrot.slane %v2192, 5
        %v3056 = vsel %vm1336, %v3054, %v3055
        %v3057 = vrot.slane %v3055, 4
        %v3058 = vrot.slane %v2193, 5
        %v3059 = vsel %vm1336, %v3057, %v3058
        %v3060 = vrot.slane %v2924, 5
        %v3061 = vrot.slane %v3060, 4
        %v3062 = vrot.slane %v2195, 5
        %v3063 = vsel %vm1336, %v3061, %v3062
        %v3064 = vrot.slane %v3062, 4
        %v3065 = vrot.slane %v2196, 5
        %v3066 = vsel %vm1336, %v3064, %v3065
        %v3067 = vrot.slane %v2925, 5
        %v3068 = vrot.slane %v3067, 4
        %v3069 = vrot.slane %v2198, 5
        %v3070 = vsel %vm1336, %v3068, %v3069
        %v3071 = vrot.slane %v3069, 4
        %v3072 = vrot.slane %v2199, 5
        %v3073 = vsel %vm1336, %v3071, %v3072
        %v3074 = vrot.slane %v2926, 5
        %v3075 = vrot.slane %v3074, 4
        %v3076 = vrot.slane %v2201, 5
        %v3077 = vsel %vm1336, %v3075, %v3076
        %v3078 = vrot.slane %v3076, 4
        %v3079 = vrot.slane %v2202, 5
        %v3080 = vsel %vm1336, %v3078, %v3079
        %v3081 = vrot.slane %v2927, 5
        %v3082 = vrot.slane %v3081, 4
        %v3083 = vrot.slane %v2204, 5
        %v3084 = vsel %vm1336, %v3082, %v3083
        %v3085 = vrot.slane %v3083, 4
        %v3086 = vrot.slane %v2205, 5
        %v3087 = vsel %vm1336, %v3085, %v3086
        %s3088 = scalar_lea.vmem [#allocation3], 320
        %v3089 = vld [vmem:[%s3088] sm:$0xf]
        %v3090 = vld [vmem:[%s3088 + $0x4] sm:$0xf]
        %v3091 = vld [vmem:[%s3088 + $0x8] sm:$0xf]
        %v3092 = vld [vmem:[%s3088 + $0xc] sm:$0xf]
        %v3093 = vld [vmem:[%s3088 + $0x10] sm:$0xf]
        %v3094 = vld [vmem:[%s3088 + $0x14] sm:$0xf]
        %v3095 = vld [vmem:[%s3088 + $0x18] sm:$0xf]
        %v3096 = vld [vmem:[%s3088 + $0x1c] sm:$0xf]
        %v3097 = vld [vmem:[%s3088 + $0x20] sm:$0xf]
        %v3098 = vld [vmem:[%s3088 + $0x24] sm:$0xf]
        %v3099 = vld [vmem:[%s3088 + $0x28] sm:$0xf]
        %v3100 = vld [vmem:[%s3088 + $0x2c] sm:$0xf]
        %v3101 = vld [vmem:[%s3088 + $0x30] sm:$0xf]
        %v3102 = vld [vmem:[%s3088 + $0x34] sm:$0xf]
        %v3103 = vld [vmem:[%s3088 + $0x38] sm:$0xf]
        %v3104 = vld [vmem:[%s3088 + $0x3c] sm:$0xf]
        %v3105 = vunpack.c.l.b16 %v2979
        %v3106 = vunpack.c.l.b16 %v2982
        %v3107 = vunpack.c.l.b16 %v2986
        %v3108 = vunpack.c.l.b16 %v2989
        %v3109 = vunpack.c.l.b16 %v2993
        %v3110 = vunpack.c.l.b16 %v2996
        %v3111 = vunpack.c.l.b16 %v3000
        %v3112 = vunpack.c.l.b16 %v3003
        %v3113 = vunpack.c.l.b16 %v3007
        %v3114 = vunpack.c.l.b16 %v3010
        %v3115 = vunpack.c.l.b16 %v3014
        %v3116 = vunpack.c.l.b16 %v3017
        %v3117 = vunpack.c.l.b16 %v3021
        %v3118 = vunpack.c.l.b16 %v3024
        %v3119 = vunpack.c.l.b16 %v3028
        %v3120 = vunpack.c.l.b16 %v3031
        %v3121 = vunpack.c.l.b16 %v3035
        %v3122 = vunpack.c.l.b16 %v3038
        %v3123 = vunpack.c.l.b16 %v3042
        %v3124 = vunpack.c.l.b16 %v3045
        %v3125 = vunpack.c.l.b16 %v3049
        %v3126 = vunpack.c.l.b16 %v3052
        %v3127 = vunpack.c.l.b16 %v3056
        %v3128 = vunpack.c.l.b16 %v3059
        %v3129 = vunpack.c.l.b16 %v3063
        %v3130 = vunpack.c.l.b16 %v3066
        %v3131 = vunpack.c.l.b16 %v3070
        %v3132 = vunpack.c.l.b16 %v3073
        %v3133 = vunpack.c.l.b16 %v3077
        %v3134 = vunpack.c.l.b16 %v3080
        %v3135 = vunpack.c.l.b16 %v3084
        %v3136 = vunpack.c.l.b16 %v3087
        %v3137 = vpack.c.b16 %v3106, %v3105
        %v3138 = vpack.c.b16 %v3108, %v3107
        %v3139 = vpack.c.b16 %v3110, %v3109
        %v3140 = vpack.c.b16 %v3112, %v3111
        %v3141 = vpack.c.b16 %v3114, %v3113
        %v3142 = vpack.c.b16 %v3116, %v3115
        %v3143 = vpack.c.b16 %v3118, %v3117
        %v3144 = vpack.c.b16 %v3120, %v3119
        %v3145 = vpack.c.b16 %v3122, %v3121
        %v3146 = vpack.c.b16 %v3124, %v3123
        %v3147 = vpack.c.b16 %v3126, %v3125
        %v3148 = vpack.c.b16 %v3128, %v3127
        %v3149 = vpack.c.b16 %v3130, %v3129
        %v3150 = vpack.c.b16 %v3132, %v3131
        %v3151 = vpack.c.b16 %v3134, %v3133
        %v3152 = vpack.c.b16 %v3136, %v3135
        %v3185 = vunpack.c.l.b16 %v3089
        %v3186 = vunpack.c.l.b16 %v3090
        %v3187 = vunpack.c.l.b16 %v3091
        %v3188 = vunpack.c.l.b16 %v3092
        %v3189 = vunpack.c.l.b16 %v3093
        %v3190 = vunpack.c.l.b16 %v3094
        %v3191 = vunpack.c.l.b16 %v3095
        %v3192 = vunpack.c.l.b16 %v3096
        %v3193 = vunpack.c.l.b16 %v3097
        %v3194 = vunpack.c.l.b16 %v3098
        %v3195 = vunpack.c.l.b16 %v3099
        %v3196 = vunpack.c.l.b16 %v3100
        %v3197 = vunpack.c.l.b16 %v3101
        %v3198 = vunpack.c.l.b16 %v3102
        %v3199 = vunpack.c.l.b16 %v3103
        %v3200 = vunpack.c.l.b16 %v3104
        %v3201 = vpack.c.b16 %v3186, %v3185
        %v3202 = vpack.c.b16 %v3188, %v3187
        %v3203 = vpack.c.b16 %v3190, %v3189
        %v3204 = vpack.c.b16 %v3192, %v3191
        %v3205 = vpack.c.b16 %v3194, %v3193
        %v3206 = vpack.c.b16 %v3196, %v3195
        %v3207 = vpack.c.b16 %v3198, %v3197
        %v3208 = vpack.c.b16 %v3200, %v3199
        %3217 = vmatprep.subr.bf16.mxu0 0
        %3218 = vmatpush1.bf16.msra.mxu0 %v3201
        %3219 = vmatprep.subr.bf16.mxu0 0
        %3220 = vmatpush1.bf16.msra.mxu0 %v3202
        %3221 = vmatprep.subr.bf16.mxu0 0
        %3222 = vmatpush1.bf16.msra.mxu0 %v3203
        %3223 = vmatprep.subr.bf16.mxu0 0
        %3224 = vmatpush1.bf16.msra.mxu0 %v3204
        %3225 = vmatprep.subr.bf16.mxu0 0
        %3226 = vmatpush1.bf16.msra.mxu0 %v3205
        %3227 = vmatprep.subr.bf16.mxu0 0
        %3228 = vmatpush1.bf16.msra.mxu0 %v3206
        %3229 = vmatprep.subr.bf16.mxu0 0
        %3230 = vmatpush1.bf16.msra.mxu0 %v3207
        %3231 = vmatprep.subr.bf16.mxu0 0
        %3232 = vmatpush1.bf16.msra.mxu0 %v3208
        %3233 = vmatprep.subr.bf16.mxu0 0
        %3234 = vmatpush1.bf16.msra.mxu0 0
        %3235 = vmatprep.subr.bf16.mxu0 0
        %3236 = vmatpush1.bf16.msra.mxu0 0
        %3237 = vmatprep.subr.bf16.mxu0 0
        %3238 = vmatpush1.bf16.msra.mxu0 0
        %3239 = vmatprep.subr.bf16.mxu0 0
        %3240 = vmatpush1.bf16.msra.mxu0 0
        %3241 = vmatprep.subr.bf16.mxu0 0
        %3242 = vmatpush1.bf16.msra.mxu0 0
        %3243 = vmatprep.subr.bf16.mxu0 0
        %3244 = vmatpush1.bf16.msra.mxu0 0
        %3245 = vmatprep.subr.bf16.mxu0 0
        %3246 = vmatpush1.bf16.msra.mxu0 0
        %3247 = vmatprep.subr.bf16.mxu0 0
        %3248 = vmatpush1.bf16.msra.mxu0 0
        %3249 = vmatprep.mubr.bf16.mxu0 0
        %3250 = vmatmul.mubr.bf16.gmra.mrb[0].mxu0 %v3137
        %v3251 = vpop.f32.mrb[0].mxu0
        %v3252 = vadd.f32 0.0, %v3251
        %v3253 = vpop.f32.mrb[0].mxu0
        %v3254 = vpop.f32.mrb[0].mxu0
        %v3255 = vadd.f32 0.0, %v3254
        %v3256 = vpop.f32.mrb[0].mxu0
        %3257 = vmatprep.mubr.bf16.mxu0 0
        %3258 = vmatmul.mubr.bf16.gmra.mrb[0].mxu0 %v3138
        %v3259 = vpop.f32.mrb[0].mxu0
        %v3260 = vadd.f32 0.0, %v3259
        %v3261 = vpop.f32.mrb[0].mxu0
        %v3262 = vpop.f32.mrb[0].mxu0
        %v3263 = vadd.f32 0.0, %v3262
        %v3264 = vpop.f32.mrb[0].mxu0
        %3265 = vmatprep.mubr.bf16.mxu0 0
        %3266 = vmatmul.mubr.bf16.gmra.mrb[0].mxu0 %v3139
        %v3267 = vpop.f32.mrb[0].mxu0
        %v3268 = vadd.f32 0.0, %v3267
        %v3269 = vpop.f32.mrb[0].mxu0
        %v3270 = vpop.f32.mrb[0].mxu0
        %v3271 = vadd.f32 0.0, %v3270
        %v3272 = vpop.f32.mrb[0].mxu0
        %3273 = vmatprep.mubr.bf16.mxu0 0
        %3274 = vmatmul.mubr.bf16.gmra.mrb[0].mxu0 %v3140
        %v3275 = vpop.f32.mrb[0].mxu0
        %v3276 = vadd.f32 0.0, %v3275
        %v3277 = vpop.f32.mrb[0].mxu0
        %v3278 = vpop.f32.mrb[0].mxu0
        %v3279 = vadd.f32 0.0, %v3278
        %v3280 = vpop.f32.mrb[0].mxu0
        %3281 = vmatprep.mubr.bf16.mxu0 0
        %3282 = vmatmul.mubr.bf16.gmra.mrb[0].mxu0 %v3141
        %v3283 = vpop.f32.mrb[0].mxu0
        %v3284 = vadd.f32 0.0, %v3283
        %v3285 = vpop.f32.mrb[0].mxu0
        %v3286 = vpop.f32.mrb[0].mxu0
        %v3287 = vadd.f32 0.0, %v3286
        %v3288 = vpop.f32.mrb[0].mxu0
        %3289 = vmatprep.mubr.bf16.mxu0 0
        %3290 = vmatmul.mubr.bf16.gmra.mrb[0].mxu0 %v3142
        %v3291 = vpop.f32.mrb[0].mxu0
        %v3292 = vadd.f32 0.0, %v3291
        %v3293 = vpop.f32.mrb[0].mxu0
        %v3294 = vpop.f32.mrb[0].mxu0
        %v3295 = vadd.f32 0.0, %v3294
        %v3296 = vpop.f32.mrb[0].mxu0
        %3297 = vmatprep.mubr.bf16.mxu0 0
        %3298 = vmatmul.mubr.bf16.gmra.mrb[0].mxu0 %v3143
        %v3299 = vpop.f32.mrb[0].mxu0
        %v3300 = vadd.f32 0.0, %v3299
        %v3301 = vpop.f32.mrb[0].mxu0
        %v3302 = vpop.f32.mrb[0].mxu0
        %v3303 = vadd.f32 0.0, %v3302
        %v3304 = vpop.f32.mrb[0].mxu0
        %3305 = vmatprep.mubr.bf16.mxu0 0
        %3306 = vmatmul.mubr.bf16.gmra.mrb[0].mxu0 %v3144
        %v3307 = vpop.f32.mrb[0].mxu0
        %v3308 = vadd.f32 0.0, %v3307
        %v3309 = vpop.f32.mrb[0].mxu0
        %v3310 = vpop.f32.mrb[0].mxu0
        %v3311 = vadd.f32 0.0, %v3310
        %v3312 = vpop.f32.mrb[0].mxu0
        %3313 = vmatprep.mubr.bf16.mxu0 0
        %3314 = vmatmul.mubr.bf16.gmra.mrb[0].mxu0 %v3145
        %v3315 = vpop.f32.mrb[0].mxu0
        %v3316 = vadd.f32 0.0, %v3315
        %v3317 = vpop.f32.mrb[0].mxu0
        %v3318 = vpop.f32.mrb[0].mxu0
        %v3319 = vadd.f32 0.0, %v3318
        %v3320 = vpop.f32.mrb[0].mxu0
        %3321 = vmatprep.mubr.bf16.mxu0 0
        %3322 = vmatmul.mubr.bf16.gmra.mrb[0].mxu0 %v3146
        %v3323 = vpop.f32.mrb[0].mxu0
        %v3324 = vadd.f32 0.0, %v3323
        %v3325 = vpop.f32.mrb[0].mxu0
        %v3326 = vpop.f32.mrb[0].mxu0
        %v3327 = vadd.f32 0.0, %v3326
        %v3328 = vpop.f32.mrb[0].mxu0
        %3329 = vmatprep.mubr.bf16.mxu0 0
        %3330 = vmatmul.mubr.bf16.gmra.mrb[0].mxu0 %v3147
        %v3331 = vpop.f32.mrb[0].mxu0
        %v3332 = vadd.f32 0.0, %v3331
        %v3333 = vpop.f32.mrb[0].mxu0
        %v3334 = vpop.f32.mrb[0].mxu0
        %v3335 = vadd.f32 0.0, %v3334
        %v3336 = vpop.f32.mrb[0].mxu0
        %3337 = vmatprep.mubr.bf16.mxu0 0
        %3338 = vmatmul.mubr.bf16.gmra.mrb[0].mxu0 %v3148
        %v3339 = vpop.f32.mrb[0].mxu0
        %v3340 = vadd.f32 0.0, %v3339
        %v3341 = vpop.f32.mrb[0].mxu0
        %v3342 = vpop.f32.mrb[0].mxu0
        %v3343 = vadd.f32 0.0, %v3342
        %v3344 = vpop.f32.mrb[0].mxu0
        %3345 = vmatprep.mubr.bf16.mxu0 0
        %3346 = vmatmul.mubr.bf16.gmra.mrb[0].mxu0 %v3149
        %v3347 = vpop.f32.mrb[0].mxu0
        %v3348 = vadd.f32 0.0, %v3347
        %v3349 = vpop.f32.mrb[0].mxu0
        %v3350 = vpop.f32.mrb[0].mxu0
        %v3351 = vadd.f32 0.0, %v3350
        %v3352 = vpop.f32.mrb[0].mxu0
        %3353 = vmatprep.mubr.bf16.mxu0 0
        %3354 = vmatmul.mubr.bf16.gmra.mrb[0].mxu0 %v3150
        %v3355 = vpop.f32.mrb[0].mxu0
        %v3356 = vadd.f32 0.0, %v3355
        %v3357 = vpop.f32.mrb[0].mxu0
        %v3358 = vpop.f32.mrb[0].mxu0
        %v3359 = vadd.f32 0.0, %v3358
        %v3360 = vpop.f32.mrb[0].mxu0
        %3361 = vmatprep.mubr.bf16.mxu0 0
        %3362 = vmatmul.mubr.bf16.gmra.mrb[0].mxu0 %v3151
        %v3363 = vpop.f32.mrb[0].mxu0
        %v3364 = vadd.f32 0.0, %v3363
        %v3365 = vpop.f32.mrb[0].mxu0
        %v3366 = vpop.f32.mrb[0].mxu0
        %v3367 = vadd.f32 0.0, %v3366
        %v3368 = vpop.f32.mrb[0].mxu0
        %3369 = vmatprep.mubr.bf16.mxu0 0
        %3370 = vmatmul.mubr.bf16.gmra.mrb[0].mxu0 %v3152
        %v3371 = vpop.f32.mrb[0].mxu0
        %v3372 = vadd.f32 0.0, %v3371
        %v3373 = vpop.f32.mrb[0].mxu0
        %v3374 = vpop.f32.mrb[0].mxu0
        %v3375 = vadd.f32 0.0, %v3374
        %v3376 = vpop.f32.mrb[0].mxu0
        %3377 = vdwg.mxu0
        %v3378 = vadd.f32 %v2880, %v3252
        %v3379 = vadd.f32 %v2881, %v3255
        %v3380 = vadd.f32 %v2882, %v3260
        %v3381 = vadd.f32 %v2883, %v3263
        %v3382 = vadd.f32 %v2884, %v3268
        %v3383 = vadd.f32 %v2885, %v3271
        %v3384 = vadd.f32 %v2886, %v3276
        %v3385 = vadd.f32 %v2887, %v3279
        %v3386 = vadd.f32 %v2888, %v3284
        %v3387 = vadd.f32 %v2889, %v3287
        %v3388 = vadd.f32 %v2890, %v3292
        %v3389 = vadd.f32 %v2891, %v3295
        %v3390 = vadd.f32 %v2892, %v3300
        %v3391 = vadd.f32 %v2893, %v3303
        %v3392 = vadd.f32 %v2894, %v3308
        %v3393 = vadd.f32 %v2895, %v3311
        %v3394 = vadd.f32 %v2896, %v3316
        %v3395 = vadd.f32 %v2897, %v3319
        %v3396 = vadd.f32 %v2898, %v3324
        %v3397 = vadd.f32 %v2899, %v3327
        %v3398 = vadd.f32 %v2900, %v3332
        %v3399 = vadd.f32 %v2901, %v3335
        %v3400 = vadd.f32 %v2902, %v3340
        %v3401 = vadd.f32 %v2903, %v3343
        %v3402 = vadd.f32 %v2904, %v3348
        %v3403 = vadd.f32 %v2905, %v3351
        %v3404 = vadd.f32 %v2906, %v3356
        %v3405 = vadd.f32 %v2907, %v3359
        %v3406 = vadd.f32 %v2908, %v3364
        %v3407 = vadd.f32 %v2909, %v3367
        %v3408 = vadd.f32 %v2910, %v3372
        %v3409 = vadd.f32 %v2911, %v3375
        %s3410 = scalar_lea.vmem %s183, 24
        %v3411 = vld [vmem:[%s3410] sm:$0xf]
        %v3412 = vld [vmem:[%s3410 + $0x4] sm:$0xf]
        %v3413 = vld [vmem:[%s3410 + $0xc] sm:$0xf]
        %v3414 = vld [vmem:[%s3410 + $0x10] sm:$0xf]
        %v3415 = vld [vmem:[%s3410 + $0x18] sm:$0xf]
        %v3416 = vld [vmem:[%s3410 + $0x1c] sm:$0xf]
        %v3417 = vld [vmem:[%s3410 + $0x24] sm:$0xf]
        %v3418 = vld [vmem:[%s3410 + $0x28] sm:$0xf]
        %v3419 = vld [vmem:[%s3410 + $0x30] sm:$0xf]
        %v3420 = vld [vmem:[%s3410 + $0x34] sm:$0xf]
        %v3421 = vld [vmem:[%s3410 + $0x3c] sm:$0xf]
        %v3422 = vld [vmem:[%s3410 + $0x40] sm:$0xf]
        %v3423 = vld [vmem:[%s3410 + $0x48] sm:$0xf]
        %v3424 = vld [vmem:[%s3410 + $0x4c] sm:$0xf]
        %v3425 = vld [vmem:[%s3410 + $0x54] sm:$0xf]
        %v3426 = vld [vmem:[%s3410 + $0x58] sm:$0xf]
        %v3427 = vld [vmem:[%s3410 + $0x60] sm:$0xf]
        %v3428 = vld [vmem:[%s3410 + $0x64] sm:$0xf]
        %v3429 = vld [vmem:[%s3410 + $0x6c] sm:$0xf]
        %v3430 = vld [vmem:[%s3410 + $0x70] sm:$0xf]
        %v3431 = vld [vmem:[%s3410 + $0x78] sm:$0xf]
        %v3432 = vld [vmem:[%s3410 + $0x7c] sm:$0xf]
        %v3433 = vld [vmem:[%s3410 + $0x84] sm:$0xf]
        %v3434 = vld [vmem:[%s3410 + $0x88] sm:$0xf]
        %v3435 = vld [vmem:[%s3410 + $0x90] sm:$0xf]
        %v3436 = vld [vmem:[%s3410 + $0x94] sm:$0xf]
        %v3437 = vld [vmem:[%s3410 + $0x9c] sm:$0xf]
        %v3438 = vld [vmem:[%s3410 + $0xa0] sm:$0xf]
        %v3439 = vld [vmem:[%s3410 + $0xa8] sm:$0xf]
        %v3440 = vld [vmem:[%s3410 + $0xac] sm:$0xf]
        %v3441 = vld [vmem:[%s3410 + $0xb4] sm:$0xf]
        %v3442 = vld [vmem:[%s3410 + $0xb8] sm:$0xf]
        %s3443 = scalar_lea.vmem [#allocation3], 384
        %v3444 = vld [vmem:[%s3443] sm:$0xf]
        %v3445 = vld [vmem:[%s3443 + $0x4] sm:$0xf]
        %v3446 = vld [vmem:[%s3443 + $0x8] sm:$0xf]
        %v3447 = vld [vmem:[%s3443 + $0xc] sm:$0xf]
        %v3448 = vld [vmem:[%s3443 + $0x10] sm:$0xf]
        %v3449 = vld [vmem:[%s3443 + $0x14] sm:$0xf]
        %v3450 = vld [vmem:[%s3443 + $0x18] sm:$0xf]
        %v3451 = vld [vmem:[%s3443 + $0x1c] sm:$0xf]
        %v3452 = vld [vmem:[%s3443 + $0x20] sm:$0xf]
        %v3453 = vld [vmem:[%s3443 + $0x24] sm:$0xf]
        %v3454 = vld [vmem:[%s3443 + $0x28] sm:$0xf]
        %v3455 = vld [vmem:[%s3443 + $0x2c] sm:$0xf]
        %v3456 = vld [vmem:[%s3443 + $0x30] sm:$0xf]
        %v3457 = vld [vmem:[%s3443 + $0x34] sm:$0xf]
        %v3458 = vld [vmem:[%s3443 + $0x38] sm:$0xf]
        %v3459 = vld [vmem:[%s3443 + $0x3c] sm:$0xf]
        %v3492 = vunpack.c.l.b16 %v3411
        %v3493 = vunpack.c.l.b16 %v3412
        %v3494 = vunpack.c.l.b16 %v3413
        %v3495 = vunpack.c.l.b16 %v3414
        %v3496 = vunpack.c.l.b16 %v3415
        %v3497 = vunpack.c.l.b16 %v3416
        %v3498 = vunpack.c.l.b16 %v3417
        %v3499 = vunpack.c.l.b16 %v3418
        %v3500 = vunpack.c.l.b16 %v3419
        %v3501 = vunpack.c.l.b16 %v3420
        %v3502 = vunpack.c.l.b16 %v3421
        %v3503 = vunpack.c.l.b16 %v3422
        %v3504 = vunpack.c.l.b16 %v3423
        %v3505 = vunpack.c.l.b16 %v3424
        %v3506 = vunpack.c.l.b16 %v3425
        %v3507 = vunpack.c.l.b16 %v3426
        %v3508 = vunpack.c.l.b16 %v3427
        %v3509 = vunpack.c.l.b16 %v3428
        %v3510 = vunpack.c.l.b16 %v3429
        %v3511 = vunpack.c.l.b16 %v3430
        %v3512 = vunpack.c.l.b16 %v3431
        %v3513 = vunpack.c.l.b16 %v3432
        %v3514 = vunpack.c.l.b16 %v3433
        %v3515 = vunpack.c.l.b16 %v3434
        %v3516 = vunpack.c.l.b16 %v3435
        %v3517 = vunpack.c.l.b16 %v3436
        %v3518 = vunpack.c.l.b16 %v3437
        %v3519 = vunpack.c.l.b16 %v3438
        %v3520 = vunpack.c.l.b16 %v3439
        %v3521 = vunpack.c.l.b16 %v3440
        %v3522 = vunpack.c.l.b16 %v3441
        %v3523 = vunpack.c.l.b16 %v3442
        %v3524 = vpack.c.b16 %v3493, %v3492
        %v3525 = vpack.c.b16 %v3495, %v3494
        %v3526 = vpack.c.b16 %v3497, %v3496
        %v3527 = vpack.c.b16 %v3499, %v3498
        %v3528 = vpack.c.b16 %v3501, %v3500
        %v3529 = vpack.c.b16 %v3503, %v3502
        %v3530 = vpack.c.b16 %v3505, %v3504
        %v3531 = vpack.c.b16 %v3507, %v3506
        %v3532 = vpack.c.b16 %v3509, %v3508
        %v3533 = vpack.c.b16 %v3511, %v3510
        %v3534 = vpack.c.b16 %v3513, %v3512
        %v3535 = vpack.c.b16 %v3515, %v3514
        %v3536 = vpack.c.b16 %v3517, %v3516
        %v3537 = vpack.c.b16 %v3519, %v3518
        %v3538 = vpack.c.b16 %v3521, %v3520
        %v3539 = vpack.c.b16 %v3523, %v3522
        %v3572 = vunpack.c.l.b16 %v3444
        %v3573 = vunpack.c.l.b16 %v3445
        %v3574 = vunpack.c.l.b16 %v3446
        %v3575 = vunpack.c.l.b16 %v3447
        %v3576 = vunpack.c.l.b16 %v3448
        %v3577 = vunpack.c.l.b16 %v3449
        %v3578 = vunpack.c.l.b16 %v3450
        %v3579 = vunpack.c.l.b16 %v3451
        %v3580 = vunpack.c.l.b16 %v3452
        %v3581 = vunpack.c.l.b16 %v3453
        %v3582 = vunpack.c.l.b16 %v3454
        %v3583 = vunpack.c.l.b16 %v3455
        %v3584 = vunpack.c.l.b16 %v3456
        %v3585 = vunpack.c.l.b16 %v3457
        %v3586 = vunpack.c.l.b16 %v3458
        %v3587 = vunpack.c.l.b16 %v3459
        %v3588 = vpack.c.b16 %v3573, %v3572
        %v3589 = vpack.c.b16 %v3575, %v3574
        %v3590 = vpack.c.b16 %v3577, %v3576
        %v3591 = vpack.c.b16 %v3579, %v3578
        %v3592 = vpack.c.b16 %v3581, %v3580
        %v3593 = vpack.c.b16 %v3583, %v3582
        %v3594 = vpack.c.b16 %v3585, %v3584
        %v3595 = vpack.c.b16 %v3587, %v3586
        %3604 = vmatprep.subr.bf16.mxu0 0
        %3605 = vmatpush1.bf16.msra.mxu0 %v3588
        %3606 = vmatprep.subr.bf16.mxu0 0
        %3607 = vmatpush1.bf16.msra.mxu0 %v3589
        %3608 = vmatprep.subr.bf16.mxu0 0
        %3609 = vmatpush1.bf16.msra.mxu0 %v3590
        %3610 = vmatprep.subr.bf16.mxu0 0
        %3611 = vmatpush1.bf16.msra.mxu0 %v3591
        %3612 = vmatprep.subr.bf16.mxu0 0
        %3613 = vmatpush1.bf16.msra.mxu0 %v3592
        %3614 = vmatprep.subr.bf16.mxu0 0
        %3615 = vmatpush1.bf16.msra.mxu0 %v3593
        %3616 = vmatprep.subr.bf16.mxu0 0
        %3617 = vmatpush1.bf16.msra.mxu0 %v3594
        %3618 = vmatprep.subr.bf16.mxu0 0
        %3619 = vmatpush1.bf16.msra.mxu0 %v3595
        %3620 = vmatprep.subr.bf16.mxu0 0
        %3621 = vmatpush1.bf16.msra.mxu0 0
        %3622 = vmatprep.subr.bf16.mxu0 0
        %3623 = vmatpush1.bf16.msra.mxu0 0
        %3624 = vmatprep.subr.bf16.mxu0 0
        %3625 = vmatpush1.bf16.msra.mxu0 0
        %3626 = vmatprep.subr.bf16.mxu0 0
        %3627 = vmatpush1.bf16.msra.mxu0 0
        %3628 = vmatprep.subr.bf16.mxu0 0
        %3629 = vmatpush1.bf16.msra.mxu0 0
        %3630 = vmatprep.subr.bf16.mxu0 0
        %3631 = vmatpush1.bf16.msra.mxu0 0
        %3632 = vmatprep.subr.bf16.mxu0 0
        %3633 = vmatpush1.bf16.msra.mxu0 0
        %3634 = vmatprep.subr.bf16.mxu0 0
        %3635 = vmatpush1.bf16.msra.mxu0 0
        %3636 = vmatprep.mubr.bf16.mxu0 0
        %3637 = vmatmul.mubr.bf16.gmra.mrb[0].mxu0 %v3524
        %v3638 = vpop.f32.mrb[0].mxu0
        %v3639 = vadd.f32 0.0, %v3638
        %v3640 = vpop.f32.mrb[0].mxu0
        %v3641 = vpop.f32.mrb[0].mxu0
        %v3642 = vadd.f32 0.0, %v3641
        %v3643 = vpop.f32.mrb[0].mxu0
        %3644 = vmatprep.mubr.bf16.mxu0 0
        %3645 = vmatmul.mubr.bf16.gmra.mrb[0].mxu0 %v3525
        %v3646 = vpop.f32.mrb[0].mxu0
        %v3647 = vadd.f32 0.0, %v3646
        %v3648 = vpop.f32.mrb[0].mxu0
        %v3649 = vpop.f32.mrb[0].mxu0
        %v3650 = vadd.f32 0.0, %v3649
        %v3651 = vpop.f32.mrb[0].mxu0
        %3652 = vmatprep.mubr.bf16.mxu0 0
        %3653 = vmatmul.mubr.bf16.gmra.mrb[0].mxu0 %v3526
        %v3654 = vpop.f32.mrb[0].mxu0
        %v3655 = vadd.f32 0.0, %v3654
        %v3656 = vpop.f32.mrb[0].mxu0
        %v3657 = vpop.f32.mrb[0].mxu0
        %v3658 = vadd.f32 0.0, %v3657
        %v3659 = vpop.f32.mrb[0].mxu0
        %3660 = vmatprep.mubr.bf16.mxu0 0
        %3661 = vmatmul.mubr.bf16.gmra.mrb[0].mxu0 %v3527
        %v3662 = vpop.f32.mrb[0].mxu0
        %v3663 = vadd.f32 0.0, %v3662
        %v3664 = vpop.f32.mrb[0].mxu0
        %v3665 = vpop.f32.mrb[0].mxu0
        %v3666 = vadd.f32 0.0, %v3665
        %v3667 = vpop.f32.mrb[0].mxu0
        %3668 = vmatprep.mubr.bf16.mxu0 0
        %3669 = vmatmul.mubr.bf16.gmra.mrb[0].mxu0 %v3528
        %v3670 = vpop.f32.mrb[0].mxu0
        %v3671 = vadd.f32 0.0, %v3670
        %v3672 = vpop.f32.mrb[0].mxu0
        %v3673 = vpop.f32.mrb[0].mxu0
        %v3674 = vadd.f32 0.0, %v3673
        %v3675 = vpop.f32.mrb[0].mxu0
        %3676 = vmatprep.mubr.bf16.mxu0 0
        %3677 = vmatmul.mubr.bf16.gmra.mrb[0].mxu0 %v3529
        %v3678 = vpop.f32.mrb[0].mxu0
        %v3679 = vadd.f32 0.0, %v3678
        %v3680 = vpop.f32.mrb[0].mxu0
        %v3681 = vpop.f32.mrb[0].mxu0
        %v3682 = vadd.f32 0.0, %v3681
        %v3683 = vpop.f32.mrb[0].mxu0
        %3684 = vmatprep.mubr.bf16.mxu0 0
        %3685 = vmatmul.mubr.bf16.gmra.mrb[0].mxu0 %v3530
        %v3686 = vpop.f32.mrb[0].mxu0
        %v3687 = vadd.f32 0.0, %v3686
        %v3688 = vpop.f32.mrb[0].mxu0
        %v3689 = vpop.f32.mrb[0].mxu0
        %v3690 = vadd.f32 0.0, %v3689
        %v3691 = vpop.f32.mrb[0].mxu0
        %3692 = vmatprep.mubr.bf16.mxu0 0
        %3693 = vmatmul.mubr.bf16.gmra.mrb[0].mxu0 %v3531
        %v3694 = vpop.f32.mrb[0].mxu0
        %v3695 = vadd.f32 0.0, %v3694
        %v3696 = vpop.f32.mrb[0].mxu0
        %v3697 = vpop.f32.mrb[0].mxu0
        %v3698 = vadd.f32 0.0, %v3697
        %v3699 = vpop.f32.mrb[0].mxu0
        %3700 = vmatprep.mubr.bf16.mxu0 0
        %3701 = vmatmul.mubr.bf16.gmra.mrb[0].mxu0 %v3532
        %v3702 = vpop.f32.mrb[0].mxu0
        %v3703 = vadd.f32 0.0, %v3702
        %v3704 = vpop.f32.mrb[0].mxu0
        %v3705 = vpop.f32.mrb[0].mxu0
        %v3706 = vadd.f32 0.0, %v3705
        %v3707 = vpop.f32.mrb[0].mxu0
        %3708 = vmatprep.mubr.bf16.mxu0 0
        %3709 = vmatmul.mubr.bf16.gmra.mrb[0].mxu0 %v3533
        %v3710 = vpop.f32.mrb[0].mxu0
        %v3711 = vadd.f32 0.0, %v3710
        %v3712 = vpop.f32.mrb[0].mxu0
        %v3713 = vpop.f32.mrb[0].mxu0
        %v3714 = vadd.f32 0.0, %v3713
        %v3715 = vpop.f32.mrb[0].mxu0
        %3716 = vmatprep.mubr.bf16.mxu0 0
        %3717 = vmatmul.mubr.bf16.gmra.mrb[0].mxu0 %v3534
        %v3718 = vpop.f32.mrb[0].mxu0
        %v3719 = vadd.f32 0.0, %v3718
        %v3720 = vpop.f32.mrb[0].mxu0
        %v3721 = vpop.f32.mrb[0].mxu0
        %v3722 = vadd.f32 0.0, %v3721
        %v3723 = vpop.f32.mrb[0].mxu0
        %3724 = vmatprep.mubr.bf16.mxu0 0
        %3725 = vmatmul.mubr.bf16.gmra.mrb[0].mxu0 %v3535
        %v3726 = vpop.f32.mrb[0].mxu0
        %v3727 = vadd.f32 0.0, %v3726
        %v3728 = vpop.f32.mrb[0].mxu0
        %v3729 = vpop.f32.mrb[0].mxu0
        %v3730 = vadd.f32 0.0, %v3729
        %v3731 = vpop.f32.mrb[0].mxu0
        %3732 = vmatprep.mubr.bf16.mxu0 0
        %3733 = vmatmul.mubr.bf16.gmra.mrb[0].mxu0 %v3536
        %v3734 = vpop.f32.mrb[0].mxu0
        %v3735 = vadd.f32 0.0, %v3734
        %v3736 = vpop.f32.mrb[0].mxu0
        %v3737 = vpop.f32.mrb[0].mxu0
        %v3738 = vadd.f32 0.0, %v3737
        %v3739 = vpop.f32.mrb[0].mxu0
        %3740 = vmatprep.mubr.bf16.mxu0 0
        %3741 = vmatmul.mubr.bf16.gmra.mrb[0].mxu0 %v3537
        %v3742 = vpop.f32.mrb[0].mxu0
        %v3743 = vadd.f32 0.0, %v3742
        %v3744 = vpop.f32.mrb[0].mxu0
        %v3745 = vpop.f32.mrb[0].mxu0
        %v3746 = vadd.f32 0.0, %v3745
        %v3747 = vpop.f32.mrb[0].mxu0
        %3748 = vmatprep.mubr.bf16.mxu0 0
        %3749 = vmatmul.mubr.bf16.gmra.mrb[0].mxu0 %v3538
        %v3750 = vpop.f32.mrb[0].mxu0
        %v3751 = vadd.f32 0.0, %v3750
        %v3752 = vpop.f32.mrb[0].mxu0
        %v3753 = vpop.f32.mrb[0].mxu0
        %v3754 = vadd.f32 0.0, %v3753
        %v3755 = vpop.f32.mrb[0].mxu0
        %3756 = vmatprep.mubr.bf16.mxu0 0
        %3757 = vmatmul.mubr.bf16.gmra.mrb[0].mxu0 %v3539
        %v3758 = vpop.f32.mrb[0].mxu0
        %v3759 = vadd.f32 0.0, %v3758
        %v3760 = vpop.f32.mrb[0].mxu0
        %v3761 = vpop.f32.mrb[0].mxu0
        %v3762 = vadd.f32 0.0, %v3761
        %v3763 = vpop.f32.mrb[0].mxu0
        %3764 = vdwg.mxu0
        %v3765 = vadd.f32 %v3378, %v3639
        %v3766 = vadd.f32 %v3379, %v3642
        %v3767 = vadd.f32 %v3380, %v3647
        %v3768 = vadd.f32 %v3381, %v3650
        %v3769 = vadd.f32 %v3382, %v3655
        %v3770 = vadd.f32 %v3383, %v3658
        %v3771 = vadd.f32 %v3384, %v3663
        %v3772 = vadd.f32 %v3385, %v3666
        %v3773 = vadd.f32 %v3386, %v3671
        %v3774 = vadd.f32 %v3387, %v3674
        %v3775 = vadd.f32 %v3388, %v3679
        %v3776 = vadd.f32 %v3389, %v3682
        %v3777 = vadd.f32 %v3390, %v3687
        %v3778 = vadd.f32 %v3391, %v3690
        %v3779 = vadd.f32 %v3392, %v3695
        %v3780 = vadd.f32 %v3393, %v3698
        %v3781 = vadd.f32 %v3394, %v3703
        %v3782 = vadd.f32 %v3395, %v3706
        %v3783 = vadd.f32 %v3396, %v3711
        %v3784 = vadd.f32 %v3397, %v3714
        %v3785 = vadd.f32 %v3398, %v3719
        %v3786 = vadd.f32 %v3399, %v3722
        %v3787 = vadd.f32 %v3400, %v3727
        %v3788 = vadd.f32 %v3401, %v3730
        %v3789 = vadd.f32 %v3402, %v3735
        %v3790 = vadd.f32 %v3403, %v3738
        %v3791 = vadd.f32 %v3404, %v3743
        %v3792 = vadd.f32 %v3405, %v3746
        %v3793 = vadd.f32 %v3406, %v3751
        %v3794 = vadd.f32 %v3407, %v3754
        %v3795 = vadd.f32 %v3408, %v3759
        %v3796 = vadd.f32 %v3409, %v3762
        %v3797 = vld [vmem:[%s3410] sm:$0xf]
        %v3798 = vld [vmem:[%s3410 + $0x4] sm:$0xf]
        %v3799 = vld [vmem:[%s3410 + $0x8] sm:$0x1]
        %v3800 = vld [vmem:[%s3410 + $0xc] sm:$0xf]
        %v3801 = vld [vmem:[%s3410 + $0x10] sm:$0xf]
        %v3802 = vld [vmem:[%s3410 + $0x14] sm:$0x1]
        %v3803 = vld [vmem:[%s3410 + $0x18] sm:$0xf]
        %v3804 = vld [vmem:[%s3410 + $0x1c] sm:$0xf]
        %v3805 = vld [vmem:[%s3410 + $0x20] sm:$0x1]
        %v3806 = vld [vmem:[%s3410 + $0x24] sm:$0xf]
        %v3807 = vld [vmem:[%s3410 + $0x28] sm:$0xf]
        %v3808 = vld [vmem:[%s3410 + $0x2c] sm:$0x1]
        %v3809 = vld [vmem:[%s3410 + $0x30] sm:$0xf]
        %v3810 = vld [vmem:[%s3410 + $0x34] sm:$0xf]
        %v3811 = vld [vmem:[%s3410 + $0x38] sm:$0x1]
        %v3812 = vld [vmem:[%s3410 + $0x3c] sm:$0xf]
        %v3813 = vld [vmem:[%s3410 + $0x40] sm:$0xf]
        %v3814 = vld [vmem:[%s3410 + $0x44] sm:$0x1]
        %v3815 = vld [vmem:[%s3410 + $0x48] sm:$0xf]
        %v3816 = vld [vmem:[%s3410 + $0x4c] sm:$0xf]
        %v3817 = vld [vmem:[%s3410 + $0x50] sm:$0x1]
        %v3818 = vld [vmem:[%s3410 + $0x54] sm:$0xf]
        %v3819 = vld [vmem:[%s3410 + $0x58] sm:$0xf]
        %v3820 = vld [vmem:[%s3410 + $0x5c] sm:$0x1]
        %v3821 = vld [vmem:[%s3410 + $0x60] sm:$0xf]
        %v3822 = vld [vmem:[%s3410 + $0x64] sm:$0xf]
        %v3823 = vld [vmem:[%s3410 + $0x68] sm:$0x1]
        %v3824 = vld [vmem:[%s3410 + $0x6c] sm:$0xf]
        %v3825 = vld [vmem:[%s3410 + $0x70] sm:$0xf]
        %v3826 = vld [vmem:[%s3410 + $0x74] sm:$0x1]
        %v3827 = vld [vmem:[%s3410 + $0x78] sm:$0xf]
        %v3828 = vld [vmem:[%s3410 + $0x7c] sm:$0xf]
        %v3829 = vld [vmem:[%s3410 + $0x80] sm:$0x1]
        %v3830 = vld [vmem:[%s3410 + $0x84] sm:$0xf]
        %v3831 = vld [vmem:[%s3410 + $0x88] sm:$0xf]
        %v3832 = vld [vmem:[%s3410 + $0x8c] sm:$0x1]
        %v3833 = vld [vmem:[%s3410 + $0x90] sm:$0xf]
        %v3834 = vld [vmem:[%s3410 + $0x94] sm:$0xf]
        %v3835 = vld [vmem:[%s3410 + $0x98] sm:$0x1]
        %v3836 = vld [vmem:[%s3410 + $0x9c] sm:$0xf]
        %v3837 = vld [vmem:[%s3410 + $0xa0] sm:$0xf]
        %v3838 = vld [vmem:[%s3410 + $0xa4] sm:$0x1]
        %v3839 = vld [vmem:[%s3410 + $0xa8] sm:$0xf]
        %v3840 = vld [vmem:[%s3410 + $0xac] sm:$0xf]
        %v3841 = vld [vmem:[%s3410 + $0xb0] sm:$0x1]
        %v3842 = vld [vmem:[%s3410 + $0xb4] sm:$0xf]
        %v3843 = vld [vmem:[%s3410 + $0xb8] sm:$0xf]
        %v3844 = vld [vmem:[%s3410 + $0xbc] sm:$0x1]
        %v3846 = vshrl.u32 %v3797, 16
        %v3848 = vrot.slane %v3846, 4
        %v3849 = vshll.u32 %v3797, 16
        %v3851 = vrot.slane %v3849, 5
        %v3852 = vor.u32 %v3848, %v3851
        %v3853 = vrot.slane %v3852, 4
        %v3855 = vshll.u32 %v3798, 16
        %v3857 = vrot.slane %v3855, 5
        %v3858 = vsel %vm306, %v3853, %v3857
        %v3859 = vshrl.u32 %v3798, 16
        %v3861 = vrot.slane %v3859, 4
        %v3862 = vor.u32 %v3861, %v3857
        %v3863 = vrot.slane %v3862, 4
        %v3865 = vshll.u32 %v3799, 16
        %v3867 = vrot.slane %v3865, 5
        %v3868 = vsel %vm306, %v3863, %v3867
        %v3870 = vshrl.u32 %v3800, 16
        %v3872 = vrot.slane %v3870, 4
        %v3873 = vshll.u32 %v3800, 16
        %v3875 = vrot.slane %v3873, 5
        %v3876 = vor.u32 %v3872, %v3875
        %v3877 = vrot.slane %v3876, 4
        %v3879 = vshll.u32 %v3801, 16
        %v3881 = vrot.slane %v3879, 5
        %v3882 = vsel %vm306, %v3877, %v3881
        %v3883 = vshrl.u32 %v3801, 16
        %v3885 = vrot.slane %v3883, 4
        %v3886 = vor.u32 %v3885, %v3881
        %v3887 = vrot.slane %v3886, 4
        %v3889 = vshll.u32 %v3802, 16
        %v3891 = vrot.slane %v3889, 5
        %v3892 = vsel %vm306, %v3887, %v3891
        %v3894 = vshrl.u32 %v3803, 16
        %v3896 = vrot.slane %v3894, 4
        %v3897 = vshll.u32 %v3803, 16
        %v3899 = vrot.slane %v3897, 5
        %v3900 = vor.u32 %v3896, %v3899
        %v3901 = vrot.slane %v3900, 4
        %v3903 = vshll.u32 %v3804, 16
        %v3905 = vrot.slane %v3903, 5
        %v3906 = vsel %vm306, %v3901, %v3905
        %v3907 = vshrl.u32 %v3804, 16
        %v3909 = vrot.slane %v3907, 4
        %v3910 = vor.u32 %v3909, %v3905
        %v3911 = vrot.slane %v3910, 4
        %v3913 = vshll.u32 %v3805, 16
        %v3915 = vrot.slane %v3913, 5
        %v3916 = vsel %vm306, %v3911, %v3915
        %v3918 = vshrl.u32 %v3806, 16
        %v3920 = vrot.slane %v3918, 4
        %v3921 = vshll.u32 %v3806, 16
        %v3923 = vrot.slane %v3921, 5
        %v3924 = vor.u32 %v3920, %v3923
        %v3925 = vrot.slane %v3924, 4
        %v3927 = vshll.u32 %v3807, 16
        %v3929 = vrot.slane %v3927, 5
        %v3930 = vsel %vm306, %v3925, %v3929
        %v3931 = vshrl.u32 %v3807, 16
        %v3933 = vrot.slane %v3931, 4
        %v3934 = vor.u32 %v3933, %v3929
        %v3935 = vrot.slane %v3934, 4
        %v3937 = vshll.u32 %v3808, 16
        %v3939 = vrot.slane %v3937, 5
        %v3940 = vsel %vm306, %v3935, %v3939
        %v3942 = vshrl.u32 %v3809, 16
        %v3944 = vrot.slane %v3942, 4
        %v3945 = vshll.u32 %v3809, 16
        %v3947 = vrot.slane %v3945, 5
        %v3948 = vor.u32 %v3944, %v3947
        %v3949 = vrot.slane %v3948, 4
        %v3951 = vshll.u32 %v3810, 16
        %v3953 = vrot.slane %v3951, 5
        %v3954 = vsel %vm306, %v3949, %v3953
        %v3955 = vshrl.u32 %v3810, 16
        %v3957 = vrot.slane %v3955, 4
        %v3958 = vor.u32 %v3957, %v3953
        %v3959 = vrot.slane %v3958, 4
        %v3961 = vshll.u32 %v3811, 16
        %v3963 = vrot.slane %v3961, 5
        %v3964 = vsel %vm306, %v3959, %v3963
        %v3966 = vshrl.u32 %v3812, 16
        %v3968 = vrot.slane %v3966, 4
        %v3969 = vshll.u32 %v3812, 16
        %v3971 = vrot.slane %v3969, 5
        %v3972 = vor.u32 %v3968, %v3971
        %v3973 = vrot.slane %v3972, 4
        %v3975 = vshll.u32 %v3813, 16
        %v3977 = vrot.slane %v3975, 5
        %v3978 = vsel %vm306, %v3973, %v3977
        %v3979 = vshrl.u32 %v3813, 16
        %v3981 = vrot.slane %v3979, 4
        %v3982 = vor.u32 %v3981, %v3977
        %v3983 = vrot.slane %v3982, 4
        %v3985 = vshll.u32 %v3814, 16
        %v3987 = vrot.slane %v3985, 5
        %v3988 = vsel %vm306, %v3983, %v3987
        %v3990 = vshrl.u32 %v3815, 16
        %v3992 = vrot.slane %v3990, 4
        %v3993 = vshll.u32 %v3815, 16
        %v3995 = vrot.slane %v3993, 5
        %v3996 = vor.u32 %v3992, %v3995
        %v3997 = vrot.slane %v3996, 4
        %v3999 = vshll.u32 %v3816, 16
        %v4001 = vrot.slane %v3999, 5
        %v4002 = vsel %vm306, %v3997, %v4001
        %v4003 = vshrl.u32 %v3816, 16
        %v4005 = vrot.slane %v4003, 4
        %v4006 = vor.u32 %v4005, %v4001
        %v4007 = vrot.slane %v4006, 4
        %v4009 = vshll.u32 %v3817, 16
        %v4011 = vrot.slane %v4009, 5
        %v4012 = vsel %vm306, %v4007, %v4011
        %v4014 = vshrl.u32 %v3818, 16
        %v4016 = vrot.slane %v4014, 4
        %v4017 = vshll.u32 %v3818, 16
        %v4019 = vrot.slane %v4017, 5
        %v4020 = vor.u32 %v4016, %v4019
        %v4021 = vrot.slane %v4020, 4
        %v4023 = vshll.u32 %v3819, 16
        %v4025 = vrot.slane %v4023, 5
        %v4026 = vsel %vm306, %v4021, %v4025
        %v4027 = vshrl.u32 %v3819, 16
        %v4029 = vrot.slane %v4027, 4
        %v4030 = vor.u32 %v4029, %v4025
        %v4031 = vrot.slane %v4030, 4
        %v4033 = vshll.u32 %v3820, 16
        %v4035 = vrot.slane %v4033, 5
        %v4036 = vsel %vm306, %v4031, %v4035
        %v4038 = vshrl.u32 %v3821, 16
        %v4040 = vrot.slane %v4038, 4
        %v4041 = vshll.u32 %v3821, 16
        %v4043 = vrot.slane %v4041, 5
        %v4044 = vor.u32 %v4040, %v4043
        %v4045 = vrot.slane %v4044, 4
        %v4047 = vshll.u32 %v3822, 16
        %v4049 = vrot.slane %v4047, 5
        %v4050 = vsel %vm306, %v4045, %v4049
        %v4051 = vshrl.u32 %v3822, 16
        %v4053 = vrot.slane %v4051, 4
        %v4054 = vor.u32 %v4053, %v4049
        %v4055 = vrot.slane %v4054, 4
        %v4057 = vshll.u32 %v3823, 16
        %v4059 = vrot.slane %v4057, 5
        %v4060 = vsel %vm306, %v4055, %v4059
        %v4062 = vshrl.u32 %v3824, 16
        %v4064 = vrot.slane %v4062, 4
        %v4065 = vshll.u32 %v3824, 16
        %v4067 = vrot.slane %v4065, 5
        %v4068 = vor.u32 %v4064, %v4067
        %v4069 = vrot.slane %v4068, 4
        %v4071 = vshll.u32 %v3825, 16
        %v4073 = vrot.slane %v4071, 5
        %v4074 = vsel %vm306, %v4069, %v4073
        %v4075 = vshrl.u32 %v3825, 16
        %v4077 = vrot.slane %v4075, 4
        %v4078 = vor.u32 %v4077, %v4073
        %v4079 = vrot.slane %v4078, 4
        %v4081 = vshll.u32 %v3826, 16
        %v4083 = vrot.slane %v4081, 5
        %v4084 = vsel %vm306, %v4079, %v4083
        %v4086 = vshrl.u32 %v3827, 16
        %v4088 = vrot.slane %v4086, 4
        %v4089 = vshll.u32 %v3827, 16
        %v4091 = vrot.slane %v4089, 5
        %v4092 = vor.u32 %v4088, %v4091
        %v4093 = vrot.slane %v4092, 4
        %v4095 = vshll.u32 %v3828, 16
        %v4097 = vrot.slane %v4095, 5
        %v4098 = vsel %vm306, %v4093, %v4097
        %v4099 = vshrl.u32 %v3828, 16
        %v4101 = vrot.slane %v4099, 4
        %v4102 = vor.u32 %v4101, %v4097
        %v4103 = vrot.slane %v4102, 4
        %v4105 = vshll.u32 %v3829, 16
        %v4107 = vrot.slane %v4105, 5
        %v4108 = vsel %vm306, %v4103, %v4107
        %v4110 = vshrl.u32 %v3830, 16
        %v4112 = vrot.slane %v4110, 4
        %v4113 = vshll.u32 %v3830, 16
        %v4115 = vrot.slane %v4113, 5
        %v4116 = vor.u32 %v4112, %v4115
        %v4117 = vrot.slane %v4116, 4
        %v4119 = vshll.u32 %v3831, 16
        %v4121 = vrot.slane %v4119, 5
        %v4122 = vsel %vm306, %v4117, %v4121
        %v4123 = vshrl.u32 %v3831, 16
        %v4125 = vrot.slane %v4123, 4
        %v4126 = vor.u32 %v4125, %v4121
        %v4127 = vrot.slane %v4126, 4
        %v4129 = vshll.u32 %v3832, 16
        %v4131 = vrot.slane %v4129, 5
        %v4132 = vsel %vm306, %v4127, %v4131
        %v4134 = vshrl.u32 %v3833, 16
        %v4136 = vrot.slane %v4134, 4
        %v4137 = vshll.u32 %v3833, 16
        %v4139 = vrot.slane %v4137, 5
        %v4140 = vor.u32 %v4136, %v4139
        %v4141 = vrot.slane %v4140, 4
        %v4143 = vshll.u32 %v3834, 16
        %v4145 = vrot.slane %v4143, 5
        %v4146 = vsel %vm306, %v4141, %v4145
        %v4147 = vshrl.u32 %v3834, 16
        %v4149 = vrot.slane %v4147, 4
        %v4150 = vor.u32 %v4149, %v4145
        %v4151 = vrot.slane %v4150, 4
        %v4153 = vshll.u32 %v3835, 16
        %v4155 = vrot.slane %v4153, 5
        %v4156 = vsel %vm306, %v4151, %v4155
        %v4158 = vshrl.u32 %v3836, 16
        %v4160 = vrot.slane %v4158, 4
        %v4161 = vshll.u32 %v3836, 16
        %v4163 = vrot.slane %v4161, 5
        %v4164 = vor.u32 %v4160, %v4163
        %v4165 = vrot.slane %v4164, 4
        %v4167 = vshll.u32 %v3837, 16
        %v4169 = vrot.slane %v4167, 5
        %v4170 = vsel %vm306, %v4165, %v4169
        %v4171 = vshrl.u32 %v3837, 16
        %v4173 = vrot.slane %v4171, 4
        %v4174 = vor.u32 %v4173, %v4169
        %v4175 = vrot.slane %v4174, 4
        %v4177 = vshll.u32 %v3838, 16
        %v4179 = vrot.slane %v4177, 5
        %v4180 = vsel %vm306, %v4175, %v4179
        %v4182 = vshrl.u32 %v3839, 16
        %v4184 = vrot.slane %v4182, 4
        %v4185 = vshll.u32 %v3839, 16
        %v4187 = vrot.slane %v4185, 5
        %v4188 = vor.u32 %v4184, %v4187
        %v4189 = vrot.slane %v4188, 4
        %v4191 = vshll.u32 %v3840, 16
        %v4193 = vrot.slane %v4191, 5
        %v4194 = vsel %vm306, %v4189, %v4193
        %v4195 = vshrl.u32 %v3840, 16
        %v4197 = vrot.slane %v4195, 4
        %v4198 = vor.u32 %v4197, %v4193
        %v4199 = vrot.slane %v4198, 4
        %v4201 = vshll.u32 %v3841, 16
        %v4203 = vrot.slane %v4201, 5
        %v4204 = vsel %vm306, %v4199, %v4203
        %v4206 = vshrl.u32 %v3842, 16
        %v4208 = vrot.slane %v4206, 4
        %v4209 = vshll.u32 %v3842, 16
        %v4211 = vrot.slane %v4209, 5
        %v4212 = vor.u32 %v4208, %v4211
        %v4213 = vrot.slane %v4212, 4
        %v4215 = vshll.u32 %v3843, 16
        %v4217 = vrot.slane %v4215, 5
        %v4218 = vsel %vm306, %v4213, %v4217
        %v4219 = vshrl.u32 %v3843, 16
        %v4221 = vrot.slane %v4219, 4
        %v4222 = vor.u32 %v4221, %v4217
        %v4223 = vrot.slane %v4222, 4
        %v4225 = vshll.u32 %v3844, 16
        %v4227 = vrot.slane %v4225, 5
        %v4228 = vsel %vm306, %v4223, %v4227
        %s4229 = scalar_lea.vmem [#allocation3], 448
        %v4230 = vld [vmem:[%s4229] sm:$0xf]
        %v4231 = vld [vmem:[%s4229 + $0x4] sm:$0xf]
        %v4232 = vld [vmem:[%s4229 + $0x8] sm:$0xf]
        %v4233 = vld [vmem:[%s4229 + $0xc] sm:$0xf]
        %v4234 = vld [vmem:[%s4229 + $0x10] sm:$0xf]
        %v4235 = vld [vmem:[%s4229 + $0x14] sm:$0xf]
        %v4236 = vld [vmem:[%s4229 + $0x18] sm:$0xf]
        %v4237 = vld [vmem:[%s4229 + $0x1c] sm:$0xf]
        %v4238 = vld [vmem:[%s4229 + $0x20] sm:$0xf]
        %v4239 = vld [vmem:[%s4229 + $0x24] sm:$0xf]
        %v4240 = vld [vmem:[%s4229 + $0x28] sm:$0xf]
        %v4241 = vld [vmem:[%s4229 + $0x2c] sm:$0xf]
        %v4242 = vld [vmem:[%s4229 + $0x30] sm:$0xf]
        %v4243 = vld [vmem:[%s4229 + $0x34] sm:$0xf]
        %v4244 = vld [vmem:[%s4229 + $0x38] sm:$0xf]
        %v4245 = vld [vmem:[%s4229 + $0x3c] sm:$0xf]
        %v4246 = vunpack.c.l.b16 %v3858
        %v4247 = vunpack.c.l.b16 %v3868
        %v4248 = vunpack.c.l.b16 %v3882
        %v4249 = vunpack.c.l.b16 %v3892
        %v4250 = vunpack.c.l.b16 %v3906
        %v4251 = vunpack.c.l.b16 %v3916
        %v4252 = vunpack.c.l.b16 %v3930
        %v4253 = vunpack.c.l.b16 %v3940
        %v4254 = vunpack.c.l.b16 %v3954
        %v4255 = vunpack.c.l.b16 %v3964
        %v4256 = vunpack.c.l.b16 %v3978
        %v4257 = vunpack.c.l.b16 %v3988
        %v4258 = vunpack.c.l.b16 %v4002
        %v4259 = vunpack.c.l.b16 %v4012
        %v4260 = vunpack.c.l.b16 %v4026
        %v4261 = vunpack.c.l.b16 %v4036
        %v4262 = vunpack.c.l.b16 %v4050
        %v4263 = vunpack.c.l.b16 %v4060
        %v4264 = vunpack.c.l.b16 %v4074
        %v4265 = vunpack.c.l.b16 %v4084
        %v4266 = vunpack.c.l.b16 %v4098
        %v4267 = vunpack.c.l.b16 %v4108
        %v4268 = vunpack.c.l.b16 %v4122
        %v4269 = vunpack.c.l.b16 %v4132
        %v4270 = vunpack.c.l.b16 %v4146
        %v4271 = vunpack.c.l.b16 %v4156
        %v4272 = vunpack.c.l.b16 %v4170
        %v4273 = vunpack.c.l.b16 %v4180
        %v4274 = vunpack.c.l.b16 %v4194
        %v4275 = vunpack.c.l.b16 %v4204
        %v4276 = vunpack.c.l.b16 %v4218
        %v4277 = vunpack.c.l.b16 %v4228
        %v4278 = vpack.c.b16 %v4247, %v4246
        %v4279 = vpack.c.b16 %v4249, %v4248
        %v4280 = vpack.c.b16 %v4251, %v4250
        %v4281 = vpack.c.b16 %v4253, %v4252
        %v4282 = vpack.c.b16 %v4255, %v4254
        %v4283 = vpack.c.b16 %v4257, %v4256
        %v4284 = vpack.c.b16 %v4259, %v4258
        %v4285 = vpack.c.b16 %v4261, %v4260
        %v4286 = vpack.c.b16 %v4263, %v4262
        %v4287 = vpack.c.b16 %v4265, %v4264
        %v4288 = vpack.c.b16 %v4267, %v4266
        %v4289 = vpack.c.b16 %v4269, %v4268
        %v4290 = vpack.c.b16 %v4271, %v4270
        %v4291 = vpack.c.b16 %v4273, %v4272
        %v4292 = vpack.c.b16 %v4275, %v4274
        %v4293 = vpack.c.b16 %v4277, %v4276
        %v4326 = vunpack.c.l.b16 %v4230
        %v4327 = vunpack.c.l.b16 %v4231
        %v4328 = vunpack.c.l.b16 %v4232
        %v4329 = vunpack.c.l.b16 %v4233
        %v4330 = vunpack.c.l.b16 %v4234
        %v4331 = vunpack.c.l.b16 %v4235
        %v4332 = vunpack.c.l.b16 %v4236
        %v4333 = vunpack.c.l.b16 %v4237
        %v4334 = vunpack.c.l.b16 %v4238
        %v4335 = vunpack.c.l.b16 %v4239
        %v4336 = vunpack.c.l.b16 %v4240
        %v4337 = vunpack.c.l.b16 %v4241
        %v4338 = vunpack.c.l.b16 %v4242
        %v4339 = vunpack.c.l.b16 %v4243
        %v4340 = vunpack.c.l.b16 %v4244
        %v4341 = vunpack.c.l.b16 %v4245
        %v4342 = vpack.c.b16 %v4327, %v4326
        %v4343 = vpack.c.b16 %v4329, %v4328
        %v4344 = vpack.c.b16 %v4331, %v4330
        %v4345 = vpack.c.b16 %v4333, %v4332
        %v4346 = vpack.c.b16 %v4335, %v4334
        %v4347 = vpack.c.b16 %v4337, %v4336
        %v4348 = vpack.c.b16 %v4339, %v4338
        %v4349 = vpack.c.b16 %v4341, %v4340
        %4358 = vmatprep.subr.bf16.mxu0 0
        %4359 = vmatpush1.bf16.msra.mxu0 %v4342
        %4360 = vmatprep.subr.bf16.mxu0 0
        %4361 = vmatpush1.bf16.msra.mxu0 %v4343
        %4362 = vmatprep.subr.bf16.mxu0 0
        %4363 = vmatpush1.bf16.msra.mxu0 %v4344
        %4364 = vmatprep.subr.bf16.mxu0 0
        %4365 = vmatpush1.bf16.msra.mxu0 %v4345
        %4366 = vmatprep.subr.bf16.mxu0 0
        %4367 = vmatpush1.bf16.msra.mxu0 %v4346
        %4368 = vmatprep.subr.bf16.mxu0 0
        %4369 = vmatpush1.bf16.msra.mxu0 %v4347
        %4370 = vmatprep.subr.bf16.mxu0 0
        %4371 = vmatpush1.bf16.msra.mxu0 %v4348
        %4372 = vmatprep.subr.bf16.mxu0 0
        %4373 = vmatpush1.bf16.msra.mxu0 %v4349
        %4374 = vmatprep.subr.bf16.mxu0 0
        %4375 = vmatpush1.bf16.msra.mxu0 0
        %4376 = vmatprep.subr.bf16.mxu0 0
        %4377 = vmatpush1.bf16.msra.mxu0 0
        %4378 = vmatprep.subr.bf16.mxu0 0
        %4379 = vmatpush1.bf16.msra.mxu0 0
        %4380 = vmatprep.subr.bf16.mxu0 0
        %4381 = vmatpush1.bf16.msra.mxu0 0
        %4382 = vmatprep.subr.bf16.mxu0 0
        %4383 = vmatpush1.bf16.msra.mxu0 0
        %4384 = vmatprep.subr.bf16.mxu0 0
        %4385 = vmatpush1.bf16.msra.mxu0 0
        %4386 = vmatprep.subr.bf16.mxu0 0
        %4387 = vmatpush1.bf16.msra.mxu0 0
        %4388 = vmatprep.subr.bf16.mxu0 0
        %4389 = vmatpush1.bf16.msra.mxu0 0
        %4390 = vmatprep.mubr.bf16.mxu0 0
        %4391 = vmatmul.mubr.bf16.gmra.mrb[0].mxu0 %v4278
        %v4392 = vpop.f32.mrb[0].mxu0
        %v4393 = vadd.f32 0.0, %v4392
        %v4394 = vpop.f32.mrb[0].mxu0
        %v4395 = vpop.f32.mrb[0].mxu0
        %v4396 = vadd.f32 0.0, %v4395
        %v4397 = vpop.f32.mrb[0].mxu0
        %4398 = vmatprep.mubr.bf16.mxu0 0
        %4399 = vmatmul.mubr.bf16.gmra.mrb[0].mxu0 %v4279
        %v4400 = vpop.f32.mrb[0].mxu0
        %v4401 = vadd.f32 0.0, %v4400
        %v4402 = vpop.f32.mrb[0].mxu0
        %v4403 = vpop.f32.mrb[0].mxu0
        %v4404 = vadd.f32 0.0, %v4403
        %v4405 = vpop.f32.mrb[0].mxu0
        %4406 = vmatprep.mubr.bf16.mxu0 0
        %4407 = vmatmul.mubr.bf16.gmra.mrb[0].mxu0 %v4280
        %v4408 = vpop.f32.mrb[0].mxu0
        %v4409 = vadd.f32 0.0, %v4408
        %v4410 = vpop.f32.mrb[0].mxu0
        %v4411 = vpop.f32.mrb[0].mxu0
        %v4412 = vadd.f32 0.0, %v4411
        %v4413 = vpop.f32.mrb[0].mxu0
        %4414 = vmatprep.mubr.bf16.mxu0 0
        %4415 = vmatmul.mubr.bf16.gmra.mrb[0].mxu0 %v4281
        %v4416 = vpop.f32.mrb[0].mxu0
        %v4417 = vadd.f32 0.0, %v4416
        %v4418 = vpop.f32.mrb[0].mxu0
        %v4419 = vpop.f32.mrb[0].mxu0
        %v4420 = vadd.f32 0.0, %v4419
        %v4421 = vpop.f32.mrb[0].mxu0
        %4422 = vmatprep.mubr.bf16.mxu0 0
        %4423 = vmatmul.mubr.bf16.gmra.mrb[0].mxu0 %v4282
        %v4424 = vpop.f32.mrb[0].mxu0
        %v4425 = vadd.f32 0.0, %v4424
        %v4426 = vpop.f32.mrb[0].mxu0
        %v4427 = vpop.f32.mrb[0].mxu0
        %v4428 = vadd.f32 0.0, %v4427
        %v4429 = vpop.f32.mrb[0].mxu0
        %4430 = vmatprep.mubr.bf16.mxu0 0
        %4431 = vmatmul.mubr.bf16.gmra.mrb[0].mxu0 %v4283
        %v4432 = vpop.f32.mrb[0].mxu0
        %v4433 = vadd.f32 0.0, %v4432
        %v4434 = vpop.f32.mrb[0].mxu0
        %v4435 = vpop.f32.mrb[0].mxu0
        %v4436 = vadd.f32 0.0, %v4435
        %v4437 = vpop.f32.mrb[0].mxu0
        %4438 = vmatprep.mubr.bf16.mxu0 0
        %4439 = vmatmul.mubr.bf16.gmra.mrb[0].mxu0 %v4284
        %v4440 = vpop.f32.mrb[0].mxu0
        %v4441 = vadd.f32 0.0, %v4440
        %v4442 = vpop.f32.mrb[0].mxu0
        %v4443 = vpop.f32.mrb[0].mxu0
        %v4444 = vadd.f32 0.0, %v4443
        %v4445 = vpop.f32.mrb[0].mxu0
        %4446 = vmatprep.mubr.bf16.mxu0 0
        %4447 = vmatmul.mubr.bf16.gmra.mrb[0].mxu0 %v4285
        %v4448 = vpop.f32.mrb[0].mxu0
        %v4449 = vadd.f32 0.0, %v4448
        %v4450 = vpop.f32.mrb[0].mxu0
        %v4451 = vpop.f32.mrb[0].mxu0
        %v4452 = vadd.f32 0.0, %v4451
        %v4453 = vpop.f32.mrb[0].mxu0
        %4454 = vmatprep.mubr.bf16.mxu0 0
        %4455 = vmatmul.mubr.bf16.gmra.mrb[0].mxu0 %v4286
        %v4456 = vpop.f32.mrb[0].mxu0
        %v4457 = vadd.f32 0.0, %v4456
        %v4458 = vpop.f32.mrb[0].mxu0
        %v4459 = vpop.f32.mrb[0].mxu0
        %v4460 = vadd.f32 0.0, %v4459
        %v4461 = vpop.f32.mrb[0].mxu0
        %4462 = vmatprep.mubr.bf16.mxu0 0
        %4463 = vmatmul.mubr.bf16.gmra.mrb[0].mxu0 %v4287
        %v4464 = vpop.f32.mrb[0].mxu0
        %v4465 = vadd.f32 0.0, %v4464
        %v4466 = vpop.f32.mrb[0].mxu0
        %v4467 = vpop.f32.mrb[0].mxu0
        %v4468 = vadd.f32 0.0, %v4467
        %v4469 = vpop.f32.mrb[0].mxu0
        %4470 = vmatprep.mubr.bf16.mxu0 0
        %4471 = vmatmul.mubr.bf16.gmra.mrb[0].mxu0 %v4288
        %v4472 = vpop.f32.mrb[0].mxu0
        %v4473 = vadd.f32 0.0, %v4472
        %v4474 = vpop.f32.mrb[0].mxu0
        %v4475 = vpop.f32.mrb[0].mxu0
        %v4476 = vadd.f32 0.0, %v4475
        %v4477 = vpop.f32.mrb[0].mxu0
        %4478 = vmatprep.mubr.bf16.mxu0 0
        %4479 = vmatmul.mubr.bf16.gmra.mrb[0].mxu0 %v4289
        %v4480 = vpop.f32.mrb[0].mxu0
        %v4481 = vadd.f32 0.0, %v4480
        %v4482 = vpop.f32.mrb[0].mxu0
        %v4483 = vpop.f32.mrb[0].mxu0
        %v4484 = vadd.f32 0.0, %v4483
        %v4485 = vpop.f32.mrb[0].mxu0
        %4486 = vmatprep.mubr.bf16.mxu0 0
        %4487 = vmatmul.mubr.bf16.gmra.mrb[0].mxu0 %v4290
        %v4488 = vpop.f32.mrb[0].mxu0
        %v4489 = vadd.f32 0.0, %v4488
        %v4490 = vpop.f32.mrb[0].mxu0
        %v4491 = vpop.f32.mrb[0].mxu0
        %v4492 = vadd.f32 0.0, %v4491
        %v4493 = vpop.f32.mrb[0].mxu0
        %4494 = vmatprep.mubr.bf16.mxu0 0
        %4495 = vmatmul.mubr.bf16.gmra.mrb[0].mxu0 %v4291
        %v4496 = vpop.f32.mrb[0].mxu0
        %v4497 = vadd.f32 0.0, %v4496
        %v4498 = vpop.f32.mrb[0].mxu0
        %v4499 = vpop.f32.mrb[0].mxu0
        %v4500 = vadd.f32 0.0, %v4499
        %v4501 = vpop.f32.mrb[0].mxu0
        %4502 = vmatprep.mubr.bf16.mxu0 0
        %4503 = vmatmul.mubr.bf16.gmra.mrb[0].mxu0 %v4292
        %v4504 = vpop.f32.mrb[0].mxu0
        %v4505 = vadd.f32 0.0, %v4504
        %v4506 = vpop.f32.mrb[0].mxu0
        %v4507 = vpop.f32.mrb[0].mxu0
        %v4508 = vadd.f32 0.0, %v4507
        %v4509 = vpop.f32.mrb[0].mxu0
        %4510 = vmatprep.mubr.bf16.mxu0 0
        %4511 = vmatmul.mubr.bf16.gmra.mrb[0].mxu0 %v4293
        %v4512 = vpop.f32.mrb[0].mxu0
        %v4513 = vadd.f32 0.0, %v4512
        %v4514 = vpop.f32.mrb[0].mxu0
        %v4515 = vpop.f32.mrb[0].mxu0
        %v4516 = vadd.f32 0.0, %v4515
        %v4517 = vpop.f32.mrb[0].mxu0
        %4518 = vdwg.mxu0
        %v4519 = vadd.f32 %v3765, %v4393
        %v4520 = vadd.f32 %v3766, %v4396
        %v4521 = vadd.f32 %v3767, %v4401
        %v4522 = vadd.f32 %v3768, %v4404
        %v4523 = vadd.f32 %v3769, %v4409
        %v4524 = vadd.f32 %v3770, %v4412
        %v4525 = vadd.f32 %v3771, %v4417
        %v4526 = vadd.f32 %v3772, %v4420
        %v4527 = vadd.f32 %v3773, %v4425
        %v4528 = vadd.f32 %v3774, %v4428
        %v4529 = vadd.f32 %v3775, %v4433
        %v4530 = vadd.f32 %v3776, %v4436
        %v4531 = vadd.f32 %v3777, %v4441
        %v4532 = vadd.f32 %v3778, %v4444
        %v4533 = vadd.f32 %v3779, %v4449
        %v4534 = vadd.f32 %v3780, %v4452
        %v4535 = vadd.f32 %v3781, %v4457
        %v4536 = vadd.f32 %v3782, %v4460
        %v4537 = vadd.f32 %v3783, %v4465
        %v4538 = vadd.f32 %v3784, %v4468
        %v4539 = vadd.f32 %v3785, %v4473
        %v4540 = vadd.f32 %v3786, %v4476
        %v4541 = vadd.f32 %v3787, %v4481
        %v4542 = vadd.f32 %v3788, %v4484
        %v4543 = vadd.f32 %v3789, %v4489
        %v4544 = vadd.f32 %v3790, %v4492
        %v4545 = vadd.f32 %v3791, %v4497
        %v4546 = vadd.f32 %v3792, %v4500
        %v4547 = vadd.f32 %v3793, %v4505
        %v4548 = vadd.f32 %v3794, %v4508
        %v4549 = vadd.f32 %v3795, %v4513
        %v4550 = vadd.f32 %v3796, %v4516
        %v4551 = vld [vmem:[%s3410] sm:$0xe]
        %v4552 = vld [vmem:[%s3410 + $0xc] sm:$0xe]
        %v4553 = vld [vmem:[%s3410 + $0x18] sm:$0xe]
        %v4554 = vld [vmem:[%s3410 + $0x24] sm:$0xe]
        %v4555 = vld [vmem:[%s3410 + $0x30] sm:$0xe]
        %v4556 = vld [vmem:[%s3410 + $0x3c] sm:$0xe]
        %v4557 = vld [vmem:[%s3410 + $0x48] sm:$0xe]
        %v4558 = vld [vmem:[%s3410 + $0x54] sm:$0xe]
        %v4559 = vld [vmem:[%s3410 + $0x60] sm:$0xe]
        %v4560 = vld [vmem:[%s3410 + $0x6c] sm:$0xe]
        %v4561 = vld [vmem:[%s3410 + $0x78] sm:$0xe]
        %v4562 = vld [vmem:[%s3410 + $0x84] sm:$0xe]
        %v4563 = vld [vmem:[%s3410 + $0x90] sm:$0xe]
        %v4564 = vld [vmem:[%s3410 + $0x9c] sm:$0xe]
        %v4565 = vld [vmem:[%s3410 + $0xa8] sm:$0xe]
        %v4566 = vld [vmem:[%s3410 + $0xb4] sm:$0xe]
        %v4615 = vrot.slane %v4551, 5
        %v4616 = vrot.slane %v4615, 4
        %v4617 = vrot.slane %v3798, 5
        %v4618 = vsel %vm1336, %v4616, %v4617
        %v4619 = vrot.slane %v4617, 4
        %v4620 = vrot.slane %v3799, 5
        %v4621 = vsel %vm1336, %v4619, %v4620
        %v4622 = vrot.slane %v4552, 5
        %v4623 = vrot.slane %v4622, 4
        %v4624 = vrot.slane %v3801, 5
        %v4625 = vsel %vm1336, %v4623, %v4624
        %v4626 = vrot.slane %v4624, 4
        %v4627 = vrot.slane %v3802, 5
        %v4628 = vsel %vm1336, %v4626, %v4627
        %v4629 = vrot.slane %v4553, 5
        %v4630 = vrot.slane %v4629, 4
        %v4631 = vrot.slane %v3804, 5
        %v4632 = vsel %vm1336, %v4630, %v4631
        %v4633 = vrot.slane %v4631, 4
        %v4634 = vrot.slane %v3805, 5
        %v4635 = vsel %vm1336, %v4633, %v4634
        %v4636 = vrot.slane %v4554, 5
        %v4637 = vrot.slane %v4636, 4
        %v4638 = vrot.slane %v3807, 5
        %v4639 = vsel %vm1336, %v4637, %v4638
        %v4640 = vrot.slane %v4638, 4
        %v4641 = vrot.slane %v3808, 5
        %v4642 = vsel %vm1336, %v4640, %v4641
        %v4643 = vrot.slane %v4555, 5
        %v4644 = vrot.slane %v4643, 4
        %v4645 = vrot.slane %v3810, 5
        %v4646 = vsel %vm1336, %v4644, %v4645
        %v4647 = vrot.slane %v4645, 4
        %v4648 = vrot.slane %v3811, 5
        %v4649 = vsel %vm1336, %v4647, %v4648
        %v4650 = vrot.slane %v4556, 5
        %v4651 = vrot.slane %v4650, 4
        %v4652 = vrot.slane %v3813, 5
        %v4653 = vsel %vm1336, %v4651, %v4652
        %v4654 = vrot.slane %v4652, 4
        %v4655 = vrot.slane %v3814, 5
        %v4656 = vsel %vm1336, %v4654, %v4655
        %v4657 = vrot.slane %v4557, 5
        %v4658 = vrot.slane %v4657, 4
        %v4659 = vrot.slane %v3816, 5
        %v4660 = vsel %vm1336, %v4658, %v4659
        %v4661 = vrot.slane %v4659, 4
        %v4662 = vrot.slane %v3817, 5
        %v4663 = vsel %vm1336, %v4661, %v4662
        %v4664 = vrot.slane %v4558, 5
        %v4665 = vrot.slane %v4664, 4
        %v4666 = vrot.slane %v3819, 5
        %v4667 = vsel %vm1336, %v4665, %v4666
        %v4668 = vrot.slane %v4666, 4
        %v4669 = vrot.slane %v3820, 5
        %v4670 = vsel %vm1336, %v4668, %v4669
        %v4671 = vrot.slane %v4559, 5
        %v4672 = vrot.slane %v4671, 4
        %v4673 = vrot.slane %v3822, 5
        %v4674 = vsel %vm1336, %v4672, %v4673
        %v4675 = vrot.slane %v4673, 4
        %v4676 = vrot.slane %v3823, 5
        %v4677 = vsel %vm1336, %v4675, %v4676
        %v4678 = vrot.slane %v4560, 5
        %v4679 = vrot.slane %v4678, 4
        %v4680 = vrot.slane %v3825, 5
        %v4681 = vsel %vm1336, %v4679, %v4680
        %v4682 = vrot.slane %v4680, 4
        %v4683 = vrot.slane %v3826, 5
        %v4684 = vsel %vm1336, %v4682, %v4683
        %v4685 = vrot.slane %v4561, 5
        %v4686 = vrot.slane %v4685, 4
        %v4687 = vrot.slane %v3828, 5
        %v4688 = vsel %vm1336, %v4686, %v4687
        %v4689 = vrot.slane %v4687, 4
        %v4690 = vrot.slane %v3829, 5
        %v4691 = vsel %vm1336, %v4689, %v4690
        %v4692 = vrot.slane %v4562, 5
        %v4693 = vrot.slane %v4692, 4
        %v4694 = vrot.slane %v3831, 5
        %v4695 = vsel %vm1336, %v4693, %v4694
        %v4696 = vrot.slane %v4694, 4
        %v4697 = vrot.slane %v3832, 5
        %v4698 = vsel %vm1336, %v4696, %v4697
        %v4699 = vrot.slane %v4563, 5
        %v4700 = vrot.slane %v4699, 4
        %v4701 = vrot.slane %v3834, 5
        %v4702 = vsel %vm1336, %v4700, %v4701
        %v4703 = vrot.slane %v4701, 4
        %v4704 = vrot.slane %v3835, 5
        %v4705 = vsel %vm1336, %v4703, %v4704
        %v4706 = vrot.slane %v4564, 5
        %v4707 = vrot.slane %v4706, 4
        %v4708 = vrot.slane %v3837, 5
        %v4709 = vsel %vm1336, %v4707, %v4708
        %v4710 = vrot.slane %v4708, 4
        %v4711 = vrot.slane %v3838, 5
        %v4712 = vsel %vm1336, %v4710, %v4711
        %v4713 = vrot.slane %v4565, 5
        %v4714 = vrot.slane %v4713, 4
        %v4715 = vrot.slane %v3840, 5
        %v4716 = vsel %vm1336, %v4714, %v4715
        %v4717 = vrot.slane %v4715, 4
        %v4718 = vrot.slane %v3841, 5
        %v4719 = vsel %vm1336, %v4717, %v4718
        %v4720 = vrot.slane %v4566, 5
        %v4721 = vrot.slane %v4720, 4
        %v4722 = vrot.slane %v3843, 5
        %v4723 = vsel %vm1336, %v4721, %v4722
        %v4724 = vrot.slane %v4722, 4
        %v4725 = vrot.slane %v3844, 5
        %v4726 = vsel %vm1336, %v4724, %v4725
        %s4727 = scalar_lea.vmem [#allocation3], 512
        %v4728 = vld [vmem:[%s4727] sm:$0xf]
        %v4729 = vld [vmem:[%s4727 + $0x4] sm:$0xf]
        %v4730 = vld [vmem:[%s4727 + $0x8] sm:$0xf]
        %v4731 = vld [vmem:[%s4727 + $0xc] sm:$0xf]
        %v4732 = vld [vmem:[%s4727 + $0x10] sm:$0xf]
        %v4733 = vld [vmem:[%s4727 + $0x14] sm:$0xf]
        %v4734 = vld [vmem:[%s4727 + $0x18] sm:$0xf]
        %v4735 = vld [vmem:[%s4727 + $0x1c] sm:$0xf]
        %v4736 = vld [vmem:[%s4727 + $0x20] sm:$0xf]
        %v4737 = vld [vmem:[%s4727 + $0x24] sm:$0xf]
        %v4738 = vld [vmem:[%s4727 + $0x28] sm:$0xf]
        %v4739 = vld [vmem:[%s4727 + $0x2c] sm:$0xf]
        %v4740 = vld [vmem:[%s4727 + $0x30] sm:$0xf]
        %v4741 = vld [vmem:[%s4727 + $0x34] sm:$0xf]
        %v4742 = vld [vmem:[%s4727 + $0x38] sm:$0xf]
        %v4743 = vld [vmem:[%s4727 + $0x3c] sm:$0xf]
        %v4744 = vunpack.c.l.b16 %v4618
        %v4745 = vunpack.c.l.b16 %v4621
        %v4746 = vunpack.c.l.b16 %v4625
        %v4747 = vunpack.c.l.b16 %v4628
        %v4748 = vunpack.c.l.b16 %v4632
        %v4749 = vunpack.c.l.b16 %v4635
        %v4750 = vunpack.c.l.b16 %v4639
        %v4751 = vunpack.c.l.b16 %v4642
        %v4752 = vunpack.c.l.b16 %v4646
        %v4753 = vunpack.c.l.b16 %v4649
        %v4754 = vunpack.c.l.b16 %v4653
        %v4755 = vunpack.c.l.b16 %v4656
        %v4756 = vunpack.c.l.b16 %v4660
        %v4757 = vunpack.c.l.b16 %v4663
        %v4758 = vunpack.c.l.b16 %v4667
        %v4759 = vunpack.c.l.b16 %v4670
        %v4760 = vunpack.c.l.b16 %v4674
        %v4761 = vunpack.c.l.b16 %v4677
        %v4762 = vunpack.c.l.b16 %v4681
        %v4763 = vunpack.c.l.b16 %v4684
        %v4764 = vunpack.c.l.b16 %v4688
        %v4765 = vunpack.c.l.b16 %v4691
        %v4766 = vunpack.c.l.b16 %v4695
        %v4767 = vunpack.c.l.b16 %v4698
        %v4768 = vunpack.c.l.b16 %v4702
        %v4769 = vunpack.c.l.b16 %v4705
        %v4770 = vunpack.c.l.b16 %v4709
        %v4771 = vunpack.c.l.b16 %v4712
        %v4772 = vunpack.c.l.b16 %v4716
        %v4773 = vunpack.c.l.b16 %v4719
        %v4774 = vunpack.c.l.b16 %v4723
        %v4775 = vunpack.c.l.b16 %v4726
        %v4776 = vpack.c.b16 %v4745, %v4744
        %v4777 = vpack.c.b16 %v4747, %v4746
        %v4778 = vpack.c.b16 %v4749, %v4748
        %v4779 = vpack.c.b16 %v4751, %v4750
        %v4780 = vpack.c.b16 %v4753, %v4752
        %v4781 = vpack.c.b16 %v4755, %v4754
        %v4782 = vpack.c.b16 %v4757, %v4756
        %v4783 = vpack.c.b16 %v4759, %v4758
        %v4784 = vpack.c.b16 %v4761, %v4760
        %v4785 = vpack.c.b16 %v4763, %v4762
        %v4786 = vpack.c.b16 %v4765, %v4764
        %v4787 = vpack.c.b16 %v4767, %v4766
        %v4788 = vpack.c.b16 %v4769, %v4768
        %v4789 = vpack.c.b16 %v4771, %v4770
        %v4790 = vpack.c.b16 %v4773, %v4772
        %v4791 = vpack.c.b16 %v4775, %v4774
        %v4824 = vunpack.c.l.b16 %v4728
        %v4825 = vunpack.c.l.b16 %v4729
        %v4826 = vunpack.c.l.b16 %v4730
        %v4827 = vunpack.c.l.b16 %v4731
        %v4828 = vunpack.c.l.b16 %v4732
        %v4829 = vunpack.c.l.b16 %v4733
        %v4830 = vunpack.c.l.b16 %v4734
        %v4831 = vunpack.c.l.b16 %v4735
        %v4832 = vunpack.c.l.b16 %v4736
        %v4833 = vunpack.c.l.b16 %v4737
        %v4834 = vunpack.c.l.b16 %v4738
        %v4835 = vunpack.c.l.b16 %v4739
        %v4836 = vunpack.c.l.b16 %v4740
        %v4837 = vunpack.c.l.b16 %v4741
        %v4838 = vunpack.c.l.b16 %v4742
        %v4839 = vunpack.c.l.b16 %v4743
        %v4840 = vpack.c.b16 %v4825, %v4824
        %v4841 = vpack.c.b16 %v4827, %v4826
        %v4842 = vpack.c.b16 %v4829, %v4828
        %v4843 = vpack.c.b16 %v4831, %v4830
        %v4844 = vpack.c.b16 %v4833, %v4832
        %v4845 = vpack.c.b16 %v4835, %v4834
        %v4846 = vpack.c.b16 %v4837, %v4836
        %v4847 = vpack.c.b16 %v4839, %v4838
        %4856 = vmatprep.subr.bf16.mxu0 0
        %4857 = vmatpush1.bf16.msra.mxu0 %v4840
        %4858 = vmatprep.subr.bf16.mxu0 0
        %4859 = vmatpush1.bf16.msra.mxu0 %v4841
        %4860 = vmatprep.subr.bf16.mxu0 0
        %4861 = vmatpush1.bf16.msra.mxu0 %v4842
        %4862 = vmatprep.subr.bf16.mxu0 0
        %4863 = vmatpush1.bf16.msra.mxu0 %v4843
        %4864 = vmatprep.subr.bf16.mxu0 0
        %4865 = vmatpush1.bf16.msra.mxu0 %v4844
        %4866 = vmatprep.subr.bf16.mxu0 0
        %4867 = vmatpush1.bf16.msra.mxu0 %v4845
        %4868 = vmatprep.subr.bf16.mxu0 0
        %4869 = vmatpush1.bf16.msra.mxu0 %v4846
        %4870 = vmatprep.subr.bf16.mxu0 0
        %4871 = vmatpush1.bf16.msra.mxu0 %v4847
        %4872 = vmatprep.subr.bf16.mxu0 0
        %4873 = vmatpush1.bf16.msra.mxu0 0
        %4874 = vmatprep.subr.bf16.mxu0 0
        %4875 = vmatpush1.bf16.msra.mxu0 0
        %4876 = vmatprep.subr.bf16.mxu0 0
        %4877 = vmatpush1.bf16.msra.mxu0 0
        %4878 = vmatprep.subr.bf16.mxu0 0
        %4879 = vmatpush1.bf16.msra.mxu0 0
        %4880 = vmatprep.subr.bf16.mxu0 0
        %4881 = vmatpush1.bf16.msra.mxu0 0
        %4882 = vmatprep.subr.bf16.mxu0 0
        %4883 = vmatpush1.bf16.msra.mxu0 0
        %4884 = vmatprep.subr.bf16.mxu0 0
        %4885 = vmatpush1.bf16.msra.mxu0 0
        %4886 = vmatprep.subr.bf16.mxu0 0
        %4887 = vmatpush1.bf16.msra.mxu0 0
        %4888 = vmatprep.mubr.bf16.mxu0 0
        %4889 = vmatmul.mubr.bf16.gmra.mrb[0].mxu0 %v4776
        %v4890 = vpop.f32.mrb[0].mxu0
        %v4891 = vadd.f32 0.0, %v4890
        %v4892 = vpop.f32.mrb[0].mxu0
        %v4893 = vpop.f32.mrb[0].mxu0
        %v4894 = vadd.f32 0.0, %v4893
        %v4895 = vpop.f32.mrb[0].mxu0
        %4896 = vmatprep.mubr.bf16.mxu0 0
        %4897 = vmatmul.mubr.bf16.gmra.mrb[0].mxu0 %v4777
        %v4898 = vpop.f32.mrb[0].mxu0
        %v4899 = vadd.f32 0.0, %v4898
        %v4900 = vpop.f32.mrb[0].mxu0
        %v4901 = vpop.f32.mrb[0].mxu0
        %v4902 = vadd.f32 0.0, %v4901
        %v4903 = vpop.f32.mrb[0].mxu0
        %4904 = vmatprep.mubr.bf16.mxu0 0
        %4905 = vmatmul.mubr.bf16.gmra.mrb[0].mxu0 %v4778
        %v4906 = vpop.f32.mrb[0].mxu0
        %v4907 = vadd.f32 0.0, %v4906
        %v4908 = vpop.f32.mrb[0].mxu0
        %v4909 = vpop.f32.mrb[0].mxu0
        %v4910 = vadd.f32 0.0, %v4909
        %v4911 = vpop.f32.mrb[0].mxu0
        %4912 = vmatprep.mubr.bf16.mxu0 0
        %4913 = vmatmul.mubr.bf16.gmra.mrb[0].mxu0 %v4779
        %v4914 = vpop.f32.mrb[0].mxu0
        %v4915 = vadd.f32 0.0, %v4914
        %v4916 = vpop.f32.mrb[0].mxu0
        %v4917 = vpop.f32.mrb[0].mxu0
        %v4918 = vadd.f32 0.0, %v4917
        %v4919 = vpop.f32.mrb[0].mxu0
        %4920 = vmatprep.mubr.bf16.mxu0 0
        %4921 = vmatmul.mubr.bf16.gmra.mrb[0].mxu0 %v4780
        %v4922 = vpop.f32.mrb[0].mxu0
        %v4923 = vadd.f32 0.0, %v4922
        %v4924 = vpop.f32.mrb[0].mxu0
        %v4925 = vpop.f32.mrb[0].mxu0
        %v4926 = vadd.f32 0.0, %v4925
        %v4927 = vpop.f32.mrb[0].mxu0
        %4928 = vmatprep.mubr.bf16.mxu0 0
        %4929 = vmatmul.mubr.bf16.gmra.mrb[0].mxu0 %v4781
        %v4930 = vpop.f32.mrb[0].mxu0
        %v4931 = vadd.f32 0.0, %v4930
        %v4932 = vpop.f32.mrb[0].mxu0
        %v4933 = vpop.f32.mrb[0].mxu0
        %v4934 = vadd.f32 0.0, %v4933
        %v4935 = vpop.f32.mrb[0].mxu0
        %4936 = vmatprep.mubr.bf16.mxu0 0
        %4937 = vmatmul.mubr.bf16.gmra.mrb[0].mxu0 %v4782
        %v4938 = vpop.f32.mrb[0].mxu0
        %v4939 = vadd.f32 0.0, %v4938
        %v4940 = vpop.f32.mrb[0].mxu0
        %v4941 = vpop.f32.mrb[0].mxu0
        %v4942 = vadd.f32 0.0, %v4941
        %v4943 = vpop.f32.mrb[0].mxu0
        %4944 = vmatprep.mubr.bf16.mxu0 0
        %4945 = vmatmul.mubr.bf16.gmra.mrb[0].mxu0 %v4783
        %v4946 = vpop.f32.mrb[0].mxu0
        %v4947 = vadd.f32 0.0, %v4946
        %v4948 = vpop.f32.mrb[0].mxu0
        %v4949 = vpop.f32.mrb[0].mxu0
        %v4950 = vadd.f32 0.0, %v4949
        %v4951 = vpop.f32.mrb[0].mxu0
        %4952 = vmatprep.mubr.bf16.mxu0 0
        %4953 = vmatmul.mubr.bf16.gmra.mrb[0].mxu0 %v4784
        %v4954 = vpop.f32.mrb[0].mxu0
        %v4955 = vadd.f32 0.0, %v4954
        %v4956 = vpop.f32.mrb[0].mxu0
        %v4957 = vpop.f32.mrb[0].mxu0
        %v4958 = vadd.f32 0.0, %v4957
        %v4959 = vpop.f32.mrb[0].mxu0
        %4960 = vmatprep.mubr.bf16.mxu0 0
        %4961 = vmatmul.mubr.bf16.gmra.mrb[0].mxu0 %v4785
        %v4962 = vpop.f32.mrb[0].mxu0
        %v4963 = vadd.f32 0.0, %v4962
        %v4964 = vpop.f32.mrb[0].mxu0
        %v4965 = vpop.f32.mrb[0].mxu0
        %v4966 = vadd.f32 0.0, %v4965
        %v4967 = vpop.f32.mrb[0].mxu0
        %4968 = vmatprep.mubr.bf16.mxu0 0
        %4969 = vmatmul.mubr.bf16.gmra.mrb[0].mxu0 %v4786
        %v4970 = vpop.f32.mrb[0].mxu0
        %v4971 = vadd.f32 0.0, %v4970
        %v4972 = vpop.f32.mrb[0].mxu0
        %v4973 = vpop.f32.mrb[0].mxu0
        %v4974 = vadd.f32 0.0, %v4973
        %v4975 = vpop.f32.mrb[0].mxu0
        %4976 = vmatprep.mubr.bf16.mxu0 0
        %4977 = vmatmul.mubr.bf16.gmra.mrb[0].mxu0 %v4787
        %v4978 = vpop.f32.mrb[0].mxu0
        %v4979 = vadd.f32 0.0, %v4978
        %v4980 = vpop.f32.mrb[0].mxu0
        %v4981 = vpop.f32.mrb[0].mxu0
        %v4982 = vadd.f32 0.0, %v4981
        %v4983 = vpop.f32.mrb[0].mxu0
        %4984 = vmatprep.mubr.bf16.mxu0 0
        %4985 = vmatmul.mubr.bf16.gmra.mrb[0].mxu0 %v4788
        %v4986 = vpop.f32.mrb[0].mxu0
        %v4987 = vadd.f32 0.0, %v4986
        %v4988 = vpop.f32.mrb[0].mxu0
        %v4989 = vpop.f32.mrb[0].mxu0
        %v4990 = vadd.f32 0.0, %v4989
        %v4991 = vpop.f32.mrb[0].mxu0
        %4992 = vmatprep.mubr.bf16.mxu0 0
        %4993 = vmatmul.mubr.bf16.gmra.mrb[0].mxu0 %v4789
        %v4994 = vpop.f32.mrb[0].mxu0
        %v4995 = vadd.f32 0.0, %v4994
        %v4996 = vpop.f32.mrb[0].mxu0
        %v4997 = vpop.f32.mrb[0].mxu0
        %v4998 = vadd.f32 0.0, %v4997
        %v4999 = vpop.f32.mrb[0].mxu0
        %5000 = vmatprep.mubr.bf16.mxu0 0
        %5001 = vmatmul.mubr.bf16.gmra.mrb[0].mxu0 %v4790
        %v5002 = vpop.f32.mrb[0].mxu0
        %v5003 = vadd.f32 0.0, %v5002
        %v5004 = vpop.f32.mrb[0].mxu0
        %v5005 = vpop.f32.mrb[0].mxu0
        %v5006 = vadd.f32 0.0, %v5005
        %v5007 = vpop.f32.mrb[0].mxu0
        %5008 = vmatprep.mubr.bf16.mxu0 0
        %5009 = vmatmul.mubr.bf16.gmra.mrb[0].mxu0 %v4791
        %v5010 = vpop.f32.mrb[0].mxu0
        %v5011 = vadd.f32 0.0, %v5010
        %v5012 = vpop.f32.mrb[0].mxu0
        %v5013 = vpop.f32.mrb[0].mxu0
        %v5014 = vadd.f32 0.0, %v5013
        %v5015 = vpop.f32.mrb[0].mxu0
        %5016 = vdwg.mxu0
        %v5017 = vadd.f32 %v4519, %v4891
        %v5018 = vadd.f32 %v4520, %v4894
        %v5019 = vadd.f32 %v4521, %v4899
        %v5020 = vadd.f32 %v4522, %v4902
        %v5021 = vadd.f32 %v4523, %v4907
        %v5022 = vadd.f32 %v4524, %v4910
        %v5023 = vadd.f32 %v4525, %v4915
        %v5024 = vadd.f32 %v4526, %v4918
        %v5025 = vadd.f32 %v4527, %v4923
        %v5026 = vadd.f32 %v4528, %v4926
        %v5027 = vadd.f32 %v4529, %v4931
        %v5028 = vadd.f32 %v4530, %v4934
        %v5029 = vadd.f32 %v4531, %v4939
        %v5030 = vadd.f32 %v4532, %v4942
        %v5031 = vadd.f32 %v4533, %v4947
        %v5032 = vadd.f32 %v4534, %v4950
        %v5033 = vadd.f32 %v4535, %v4955
        %v5034 = vadd.f32 %v4536, %v4958
        %v5035 = vadd.f32 %v4537, %v4963
        %v5036 = vadd.f32 %v4538, %v4966
        %v5037 = vadd.f32 %v4539, %v4971
        %v5038 = vadd.f32 %v4540, %v4974
        %v5039 = vadd.f32 %v4541, %v4979
        %v5040 = vadd.f32 %v4542, %v4982
        %v5041 = vadd.f32 %v4543, %v4987
        %v5042 = vadd.f32 %v4544, %v4990
        %v5043 = vadd.f32 %v4545, %v4995
        %v5044 = vadd.f32 %v4546, %v4998
        %v5045 = vadd.f32 %v4547, %v5003
        %v5046 = vadd.f32 %v4548, %v5006
        %v5047 = vadd.f32 %v4549, %v5011
        %v5048 = vadd.f32 %v4550, %v5014
        %v5049 = vlaneseq
        %v5050 = vshrl.u32 %v5049, 7
        %v5051 = vsub.s32 0, %v5050
        %v5052 = vrot.slane %v239, %v5051
        %v5053 = vadd.f32 %v5017, %v5052
        %v5054 = vadd.f32 %v5018, %v5052
        %v5055 = vadd.f32 %v5019, %v5052
        %v5056 = vadd.f32 %v5020, %v5052
        %v5057 = vadd.f32 %v5021, %v5052
        %v5058 = vadd.f32 %v5022, %v5052
        %v5059 = vadd.f32 %v5023, %v5052
        %v5060 = vadd.f32 %v5024, %v5052
        %v5061 = vadd.f32 %v5025, %v5052
        %v5062 = vadd.f32 %v5026, %v5052
        %v5063 = vadd.f32 %v5027, %v5052
        %v5064 = vadd.f32 %v5028, %v5052
        %v5065 = vadd.f32 %v5029, %v5052
        %v5066 = vadd.f32 %v5030, %v5052
        %v5067 = vadd.f32 %v5031, %v5052
        %v5068 = vadd.f32 %v5032, %v5052
        %v5069 = vadd.f32 %v5033, %v5052
        %v5070 = vadd.f32 %v5034, %v5052
        %v5071 = vadd.f32 %v5035, %v5052
        %v5072 = vadd.f32 %v5036, %v5052
        %v5073 = vadd.f32 %v5037, %v5052
        %v5074 = vadd.f32 %v5038, %v5052
        %v5075 = vadd.f32 %v5039, %v5052
        %v5076 = vadd.f32 %v5040, %v5052
        %v5077 = vadd.f32 %v5041, %v5052
        %v5078 = vadd.f32 %v5042, %v5052
        %v5079 = vadd.f32 %v5043, %v5052
        %v5080 = vadd.f32 %v5044, %v5052
        %v5081 = vadd.f32 %v5045, %v5052
        %v5082 = vadd.f32 %v5046, %v5052
        %v5083 = vadd.f32 %v5047, %v5052
        %v5084 = vadd.f32 %v5048, %v5052
        %v5085 = vmax.f32 %v5053, 0.0
        %v5086 = vmax.f32 %v5054, 0.0
        %v5087 = vmax.f32 %v5055, 0.0
        %v5088 = vmax.f32 %v5056, 0.0
        %v5089 = vmax.f32 %v5057, 0.0
        %v5090 = vmax.f32 %v5058, 0.0
        %v5091 = vmax.f32 %v5059, 0.0
        %v5092 = vmax.f32 %v5060, 0.0
        %v5093 = vmax.f32 %v5061, 0.0
        %v5094 = vmax.f32 %v5062, 0.0
        %v5095 = vmax.f32 %v5063, 0.0
        %v5096 = vmax.f32 %v5064, 0.0
        %v5097 = vmax.f32 %v5065, 0.0
        %v5098 = vmax.f32 %v5066, 0.0
        %v5099 = vmax.f32 %v5067, 0.0
        %v5100 = vmax.f32 %v5068, 0.0
        %v5101 = vmax.f32 %v5069, 0.0
        %v5102 = vmax.f32 %v5070, 0.0
        %v5103 = vmax.f32 %v5071, 0.0
        %v5104 = vmax.f32 %v5072, 0.0
        %v5105 = vmax.f32 %v5073, 0.0
        %v5106 = vmax.f32 %v5074, 0.0
        %v5107 = vmax.f32 %v5075, 0.0
        %v5108 = vmax.f32 %v5076, 0.0
        %v5109 = vmax.f32 %v5077, 0.0
        %v5110 = vmax.f32 %v5078, 0.0
        %v5111 = vmax.f32 %v5079, 0.0
        %v5112 = vmax.f32 %v5080, 0.0
        %v5113 = vmax.f32 %v5081, 0.0
        %v5114 = vmax.f32 %v5082, 0.0
        %v5115 = vmax.f32 %v5083, 0.0
        %v5116 = vmax.f32 %v5084, 0.0
        %v5117 = vpack.c.bf16 %v5086, %v5085
        %v5118 = vpack.c.bf16 %v5088, %v5087
        %v5119 = vpack.c.bf16 %v5090, %v5089
        %v5120 = vpack.c.bf16 %v5092, %v5091
        %v5121 = vpack.c.bf16 %v5094, %v5093
        %v5122 = vpack.c.bf16 %v5096, %v5095
        %v5123 = vpack.c.bf16 %v5098, %v5097
        %v5124 = vpack.c.bf16 %v5100, %v5099
        %v5125 = vpack.c.bf16 %v5102, %v5101
        %v5126 = vpack.c.bf16 %v5104, %v5103
        %v5127 = vpack.c.bf16 %v5106, %v5105
        %v5128 = vpack.c.bf16 %v5108, %v5107
        %v5129 = vpack.c.bf16 %v5110, %v5109
        %v5130 = vpack.c.bf16 %v5112, %v5111
        %v5131 = vpack.c.bf16 %v5114, %v5113
        %v5132 = vpack.c.bf16 %v5116, %v5115
        %v5149 = vunpack.c.l.b16 %v5117
        %v5150 = vunpack.c.h.b16 %v5117
        %v5151 = vunpack.c.l.b16 %v5118
        %v5152 = vunpack.c.h.b16 %v5118
        %v5153 = vunpack.c.l.b16 %v5119
        %v5154 = vunpack.c.h.b16 %v5119
        %v5155 = vunpack.c.l.b16 %v5120
        %v5156 = vunpack.c.h.b16 %v5120
        %v5157 = vunpack.c.l.b16 %v5121
        %v5158 = vunpack.c.h.b16 %v5121
        %v5159 = vunpack.c.l.b16 %v5122
        %v5160 = vunpack.c.h.b16 %v5122
        %v5161 = vunpack.c.l.b16 %v5123
        %v5162 = vunpack.c.h.b16 %v5123
        %v5163 = vunpack.c.l.b16 %v5124
        %v5164 = vunpack.c.h.b16 %v5124
        %v5165 = vunpack.c.l.b16 %v5125
        %v5166 = vunpack.c.h.b16 %v5125
        %v5167 = vunpack.c.l.b16 %v5126
        %v5168 = vunpack.c.h.b16 %v5126
        %v5169 = vunpack.c.l.b16 %v5127
        %v5170 = vunpack.c.h.b16 %v5127
        %v5171 = vunpack.c.l.b16 %v5128
        %v5172 = vunpack.c.h.b16 %v5128
        %v5173 = vunpack.c.l.b16 %v5129
        %v5174 = vunpack.c.h.b16 %v5129
        %v5175 = vunpack.c.l.b16 %v5130
        %v5176 = vunpack.c.h.b16 %v5130
        %v5177 = vunpack.c.l.b16 %v5131
        %v5178 = vunpack.c.h.b16 %v5131
        %v5179 = vunpack.c.l.b16 %v5132
        %v5180 = vunpack.c.h.b16 %v5132
        %v5181 = vpack.c.b16 %v5149, %v5149
        %v5182 = vpack.c.b16 %v5150, %v5150
        %v5183 = vpack.c.b16 %v5151, %v5151
        %v5184 = vpack.c.b16 %v5152, %v5152
        %v5185 = vpack.c.b16 %v5153, %v5153
        %v5186 = vpack.c.b16 %v5154, %v5154
        %v5187 = vpack.c.b16 %v5155, %v5155
        %v5188 = vpack.c.b16 %v5156, %v5156
        %v5189 = vpack.c.b16 %v5157, %v5157
        %v5190 = vpack.c.b16 %v5158, %v5158
        %v5191 = vpack.c.b16 %v5159, %v5159
        %v5192 = vpack.c.b16 %v5160, %v5160
        %v5193 = vpack.c.b16 %v5161, %v5161
        %v5194 = vpack.c.b16 %v5162, %v5162
        %v5195 = vpack.c.b16 %v5163, %v5163
        %v5196 = vpack.c.b16 %v5164, %v5164
        %v5197 = vpack.c.b16 %v5165, %v5165
        %v5198 = vpack.c.b16 %v5166, %v5166
        %v5199 = vpack.c.b16 %v5167, %v5167
        %v5200 = vpack.c.b16 %v5168, %v5168
        %v5201 = vpack.c.b16 %v5169, %v5169
        %v5202 = vpack.c.b16 %v5170, %v5170
        %v5203 = vpack.c.b16 %v5171, %v5171
        %v5204 = vpack.c.b16 %v5172, %v5172
        %v5205 = vpack.c.b16 %v5173, %v5173
        %v5206 = vpack.c.b16 %v5174, %v5174
        %v5207 = vpack.c.b16 %v5175, %v5175
        %v5208 = vpack.c.b16 %v5176, %v5176
        %v5209 = vpack.c.b16 %v5177, %v5177
        %v5210 = vpack.c.b16 %v5178, %v5178
        %v5211 = vpack.c.b16 %v5179, %v5179
        %v5212 = vpack.c.b16 %v5180, %v5180
        %vm5213 = vsmask.f32 256
        %vm5214 = vsmask.f32 4368
        %vm5215 = vmor %vm5213, %vm5214
        %v5217 = vshrl.u32 %v5181, 16
        %v5219 = vrot.slane %v5217, 7
        %v5220 = vshll.u32 %v5181, 16
        %v5222 = vor.u32 %v5219, %v5220
        %v5223 = vrot.slane %v5219, 4
        %v5225 = vshrl.u32 %v5182, 16
        %v5227 = vrot.slane %v5225, 7
        %v5228 = vshll.u32 %v5182, 16
        %v5230 = vor.u32 %v5227, %v5228
        %v5231 = vsel %vm5215, %v5223, %v5230
        %v5232 = vrot.slane %v5227, 4
        %v5234 = vshrl.u32 %v5183, 16
        %v5236 = vrot.slane %v5234, 7
        %v5237 = vshll.u32 %v5183, 16
        %v5239 = vor.u32 %v5236, %v5237
        %v5240 = vrot.slane %v5236, 4
        %v5242 = vshrl.u32 %v5184, 16
        %v5244 = vrot.slane %v5242, 7
        %v5245 = vshll.u32 %v5184, 16
        %v5247 = vor.u32 %v5244, %v5245
        %v5248 = vsel %vm5215, %v5240, %v5247
        %v5249 = vrot.slane %v5244, 4
        %v5251 = vshrl.u32 %v5185, 16
        %v5253 = vrot.slane %v5251, 7
        %v5254 = vshll.u32 %v5185, 16
        %v5256 = vor.u32 %v5253, %v5254
        %v5257 = vrot.slane %v5253, 4
        %v5259 = vshrl.u32 %v5186, 16
        %v5261 = vrot.slane %v5259, 7
        %v5262 = vshll.u32 %v5186, 16
        %v5264 = vor.u32 %v5261, %v5262
        %v5265 = vsel %vm5215, %v5257, %v5264
        %v5266 = vrot.slane %v5261, 4
        %v5268 = vshrl.u32 %v5187, 16
        %v5270 = vrot.slane %v5268, 7
        %v5271 = vshll.u32 %v5187, 16
        %v5273 = vor.u32 %v5270, %v5271
        %v5274 = vrot.slane %v5270, 4
        %v5276 = vshrl.u32 %v5188, 16
        %v5278 = vrot.slane %v5276, 7
        %v5279 = vshll.u32 %v5188, 16
        %v5281 = vor.u32 %v5278, %v5279
        %v5282 = vsel %vm5215, %v5274, %v5281
        %v5283 = vrot.slane %v5278, 4
        %v5285 = vshrl.u32 %v5189, 16
        %v5287 = vrot.slane %v5285, 7
        %v5288 = vshll.u32 %v5189, 16
        %v5290 = vor.u32 %v5287, %v5288
        %v5291 = vrot.slane %v5287, 4
        %v5293 = vshrl.u32 %v5190, 16
        %v5295 = vrot.slane %v5293, 7
        %v5296 = vshll.u32 %v5190, 16
        %v5298 = vor.u32 %v5295, %v5296
        %v5299 = vsel %vm5215, %v5291, %v5298
        %v5300 = vrot.slane %v5295, 4
        %v5302 = vshrl.u32 %v5191, 16
        %v5304 = vrot.slane %v5302, 7
        %v5305 = vshll.u32 %v5191, 16
        %v5307 = vor.u32 %v5304, %v5305
        %v5308 = vrot.slane %v5304, 4
        %v5310 = vshrl.u32 %v5192, 16
        %v5312 = vrot.slane %v5310, 7
        %v5313 = vshll.u32 %v5192, 16
        %v5315 = vor.u32 %v5312, %v5313
        %v5316 = vsel %vm5215, %v5308, %v5315
        %v5317 = vrot.slane %v5312, 4
        %v5319 = vshrl.u32 %v5193, 16
        %v5321 = vrot.slane %v5319, 7
        %v5322 = vshll.u32 %v5193, 16
        %v5324 = vor.u32 %v5321, %v5322
        %v5325 = vrot.slane %v5321, 4
        %v5327 = vshrl.u32 %v5194, 16
        %v5329 = vrot.slane %v5327, 7
        %v5330 = vshll.u32 %v5194, 16
        %v5332 = vor.u32 %v5329, %v5330
        %v5333 = vsel %vm5215, %v5325, %v5332
        %v5334 = vrot.slane %v5329, 4
        %v5336 = vshrl.u32 %v5195, 16
        %v5338 = vrot.slane %v5336, 7
        %v5339 = vshll.u32 %v5195, 16
        %v5341 = vor.u32 %v5338, %v5339
        %v5342 = vrot.slane %v5338, 4
        %v5344 = vshrl.u32 %v5196, 16
        %v5346 = vrot.slane %v5344, 7
        %v5347 = vshll.u32 %v5196, 16
        %v5349 = vor.u32 %v5346, %v5347
        %v5350 = vsel %vm5215, %v5342, %v5349
        %v5351 = vrot.slane %v5346, 4
        %v5353 = vshrl.u32 %v5197, 16
        %v5355 = vrot.slane %v5353, 7
        %v5356 = vshll.u32 %v5197, 16
        %v5358 = vor.u32 %v5355, %v5356
        %v5359 = vrot.slane %v5355, 4
        %v5361 = vshrl.u32 %v5198, 16
        %v5363 = vrot.slane %v5361, 7
        %v5364 = vshll.u32 %v5198, 16
        %v5366 = vor.u32 %v5363, %v5364
        %v5367 = vsel %vm5215, %v5359, %v5366
        %v5368 = vrot.slane %v5363, 4
        %v5370 = vshrl.u32 %v5199, 16
        %v5372 = vrot.slane %v5370, 7
        %v5373 = vshll.u32 %v5199, 16
        %v5375 = vor.u32 %v5372, %v5373
        %v5376 = vrot.slane %v5372, 4
        %v5378 = vshrl.u32 %v5200, 16
        %v5380 = vrot.slane %v5378, 7
        %v5381 = vshll.u32 %v5200, 16
        %v5383 = vor.u32 %v5380, %v5381
        %v5384 = vsel %vm5215, %v5376, %v5383
        %v5385 = vrot.slane %v5380, 4
        %v5387 = vshrl.u32 %v5201, 16
        %v5389 = vrot.slane %v5387, 7
        %v5390 = vshll.u32 %v5201, 16
        %v5392 = vor.u32 %v5389, %v5390
        %v5393 = vrot.slane %v5389, 4
        %v5395 = vshrl.u32 %v5202, 16
        %v5397 = vrot.slane %v5395, 7
        %v5398 = vshll.u32 %v5202, 16
        %v5400 = vor.u32 %v5397, %v5398
        %v5401 = vsel %vm5215, %v5393, %v5400
        %v5402 = vrot.slane %v5397, 4
        %v5404 = vshrl.u32 %v5203, 16
        %v5406 = vrot.slane %v5404, 7
        %v5407 = vshll.u32 %v5203, 16
        %v5409 = vor.u32 %v5406, %v5407
        %v5410 = vrot.slane %v5406, 4
        %v5412 = vshrl.u32 %v5204, 16
        %v5414 = vrot.slane %v5412, 7
        %v5415 = vshll.u32 %v5204, 16
        %v5417 = vor.u32 %v5414, %v5415
        %v5418 = vsel %vm5215, %v5410, %v5417
        %v5419 = vrot.slane %v5414, 4
        %v5421 = vshrl.u32 %v5205, 16
        %v5423 = vrot.slane %v5421, 7
        %v5424 = vshll.u32 %v5205, 16
        %v5426 = vor.u32 %v5423, %v5424
        %v5427 = vrot.slane %v5423, 4
        %v5429 = vshrl.u32 %v5206, 16
        %v5431 = vrot.slane %v5429, 7
        %v5432 = vshll.u32 %v5206, 16
        %v5434 = vor.u32 %v5431, %v5432
        %v5435 = vsel %vm5215, %v5427, %v5434
        %v5436 = vrot.slane %v5431, 4
        %v5438 = vshrl.u32 %v5207, 16
        %v5440 = vrot.slane %v5438, 7
        %v5441 = vshll.u32 %v5207, 16
        %v5443 = vor.u32 %v5440, %v5441
        %v5444 = vrot.slane %v5440, 4
        %v5446 = vshrl.u32 %v5208, 16
        %v5448 = vrot.slane %v5446, 7
        %v5449 = vshll.u32 %v5208, 16
        %v5451 = vor.u32 %v5448, %v5449
        %v5452 = vsel %vm5215, %v5444, %v5451
        %v5453 = vrot.slane %v5448, 4
        %v5455 = vshrl.u32 %v5209, 16
        %v5457 = vrot.slane %v5455, 7
        %v5458 = vshll.u32 %v5209, 16
        %v5460 = vor.u32 %v5457, %v5458
        %v5461 = vrot.slane %v5457, 4
        %v5463 = vshrl.u32 %v5210, 16
        %v5465 = vrot.slane %v5463, 7
        %v5466 = vshll.u32 %v5210, 16
        %v5468 = vor.u32 %v5465, %v5466
        %v5469 = vsel %vm5215, %v5461, %v5468
        %v5470 = vrot.slane %v5465, 4
        %v5472 = vshrl.u32 %v5211, 16
        %v5474 = vrot.slane %v5472, 7
        %v5475 = vshll.u32 %v5211, 16
        %v5477 = vor.u32 %v5474, %v5475
        %v5478 = vrot.slane %v5474, 4
        %v5480 = vshrl.u32 %v5212, 16
        %v5482 = vrot.slane %v5480, 7
        %v5483 = vshll.u32 %v5212, 16
        %v5485 = vor.u32 %v5482, %v5483
        %v5486 = vsel %vm5215, %v5478, %v5485
        %v5487 = vrot.slane %v5482, 4
        %s5536 = scalar_lea.vmem [#allocation2], 12
        %vm5537 = vcmask 1043456
        %vm5538 = vsmask.f32 7938
        %vm5539 = vmand %vm5537, %vm5538
        %v5540 = vld [vmem:[%s5536] sm:$0xf]
        %v5541 = vsel %vm5539, %v5222, %v5540
        %5542 = vst [vmem:[%s5536] sm:$0xf] %v5541
        %5543 = vst [vmem:[%s5536 + $0x4] sm:$0xf] %v5231
        %vm5544 = vcmask 1040384
        %vm5545 = vmand %vm5544, %vm5213
        %v5546 = vld [vmem:[%s5536 + $0x8] sm:$0x1]
        %v5547 = vsel %vm5545, %v5232, %v5546
        %5548 = vst [vmem:[%s5536 + $0x8] sm:$0x1] %v5547
        %v5549 = vld [vmem:[%s5536 + $0xc] sm:$0xf]
        %v5550 = vsel %vm5539, %v5239, %v5549
        %5551 = vst [vmem:[%s5536 + $0xc] sm:$0xf] %v5550
        %5552 = vst [vmem:[%s5536 + $0x10] sm:$0xf] %v5248
        %v5553 = vld [vmem:[%s5536 + $0x14] sm:$0x1]
        %v5554 = vsel %vm5545, %v5249, %v5553
        %5555 = vst [vmem:[%s5536 + $0x14] sm:$0x1] %v5554
        %v5556 = vld [vmem:[%s5536 + $0x18] sm:$0xf]
        %v5557 = vsel %vm5539, %v5256, %v5556
        %5558 = vst [vmem:[%s5536 + $0x18] sm:$0xf] %v5557
        %5559 = vst [vmem:[%s5536 + $0x1c] sm:$0xf] %v5265
        %v5560 = vld [vmem:[%s5536 + $0x20] sm:$0x1]
        %v5561 = vsel %vm5545, %v5266, %v5560
        %5562 = vst [vmem:[%s5536 + $0x20] sm:$0x1] %v5561
        %v5563 = vld [vmem:[%s5536 + $0x24] sm:$0xf]
        %v5564 = vsel %vm5539, %v5273, %v5563
        %5565 = vst [vmem:[%s5536 + $0x24] sm:$0xf] %v5564
        %5566 = vst [vmem:[%s5536 + $0x28] sm:$0xf] %v5282
        %v5567 = vld [vmem:[%s5536 + $0x2c] sm:$0x1]
        %v5568 = vsel %vm5545, %v5283, %v5567
        %5569 = vst [vmem:[%s5536 + $0x2c] sm:$0x1] %v5568
        %v5570 = vld [vmem:[%s5536 + $0x30] sm:$0xf]
        %v5571 = vsel %vm5539, %v5290, %v5570
        %5572 = vst [vmem:[%s5536 + $0x30] sm:$0xf] %v5571
        %5573 = vst [vmem:[%s5536 + $0x34] sm:$0xf] %v5299
        %v5574 = vld [vmem:[%s5536 + $0x38] sm:$0x1]
        %v5575 = vsel %vm5545, %v5300, %v5574
        %5576 = vst [vmem:[%s5536 + $0x38] sm:$0x1] %v5575
        %v5577 = vld [vmem:[%s5536 + $0x3c] sm:$0xf]
        %v5578 = vsel %vm5539, %v5307, %v5577
        %5579 = vst [vmem:[%s5536 + $0x3c] sm:$0xf] %v5578
        %5580 = vst [vmem:[%s5536 + $0x40] sm:$0xf] %v5316
        %v5581 = vld [vmem:[%s5536 + $0x44] sm:$0x1]
        %v5582 = vsel %vm5545, %v5317, %v5581
        %5583 = vst [vmem:[%s5536 + $0x44] sm:$0x1] %v5582
        %v5584 = vld [vmem:[%s5536 + $0x48] sm:$0xf]
        %v5585 = vsel %vm5539, %v5324, %v5584
        %5586 = vst [vmem:[%s5536 + $0x48] sm:$0xf] %v5585
        %5587 = vst [vmem:[%s5536 + $0x4c] sm:$0xf] %v5333
        %v5588 = vld [vmem:[%s5536 + $0x50] sm:$0x1]
        %v5589 = vsel %vm5545, %v5334, %v5588
        %5590 = vst [vmem:[%s5536 + $0x50] sm:$0x1] %v5589
        %v5591 = vld [vmem:[%s5536 + $0x54] sm:$0xf]
        %v5592 = vsel %vm5539, %v5341, %v5591
        %5593 = vst [vmem:[%s5536 + $0x54] sm:$0xf] %v5592
        %5594 = vst [vmem:[%s5536 + $0x58] sm:$0xf] %v5350
        %v5595 = vld [vmem:[%s5536 + $0x5c] sm:$0x1]
        %v5596 = vsel %vm5545, %v5351, %v5595
        %5597 = vst [vmem:[%s5536 + $0x5c] sm:$0x1] %v5596
        %v5598 = vld [vmem:[%s5536 + $0x60] sm:$0xf]
        %v5599 = vsel %vm5539, %v5358, %v5598
        %5600 = vst [vmem:[%s5536 + $0x60] sm:$0xf] %v5599
        %5601 = vst [vmem:[%s5536 + $0x64] sm:$0xf] %v5367
        %v5602 = vld [vmem:[%s5536 + $0x68] sm:$0x1]
        %v5603 = vsel %vm5545, %v5368, %v5602
        %5604 = vst [vmem:[%s5536 + $0x68] sm:$0x1] %v5603
        %v5605 = vld [vmem:[%s5536 + $0x6c] sm:$0xf]
        %v5606 = vsel %vm5539, %v5375, %v5605
        %5607 = vst [vmem:[%s5536 + $0x6c] sm:$0xf] %v5606
        %5608 = vst [vmem:[%s5536 + $0x70] sm:$0xf] %v5384
        %v5609 = vld [vmem:[%s5536 + $0x74] sm:$0x1]
        %v5610 = vsel %vm5545, %v5385, %v5609
        %5611 = vst [vmem:[%s5536 + $0x74] sm:$0x1] %v5610
        %v5612 = vld [vmem:[%s5536 + $0x78] sm:$0xf]
        %v5613 = vsel %vm5539, %v5392, %v5612
        %5614 = vst [vmem:[%s5536 + $0x78] sm:$0xf] %v5613
        %5615 = vst [vmem:[%s5536 + $0x7c] sm:$0xf] %v5401
        %v5616 = vld [vmem:[%s5536 + $0x80] sm:$0x1]
        %v5617 = vsel %vm5545, %v5402, %v5616
        %5618 = vst [vmem:[%s5536 + $0x80] sm:$0x1] %v5617
        %v5619 = vld [vmem:[%s5536 + $0x84] sm:$0xf]
        %v5620 = vsel %vm5539, %v5409, %v5619
        %5621 = vst [vmem:[%s5536 + $0x84] sm:$0xf] %v5620
        %5622 = vst [vmem:[%s5536 + $0x88] sm:$0xf] %v5418
        %v5623 = vld [vmem:[%s5536 + $0x8c] sm:$0x1]
        %v5624 = vsel %vm5545, %v5419, %v5623
        %5625 = vst [vmem:[%s5536 + $0x8c] sm:$0x1] %v5624
        %v5626 = vld [vmem:[%s5536 + $0x90] sm:$0xf]
        %v5627 = vsel %vm5539, %v5426, %v5626
        %5628 = vst [vmem:[%s5536 + $0x90] sm:$0xf] %v5627
        %5629 = vst [vmem:[%s5536 + $0x94] sm:$0xf] %v5435
        %v5630 = vld [vmem:[%s5536 + $0x98] sm:$0x1]
        %v5631 = vsel %vm5545, %v5436, %v5630
        %5632 = vst [vmem:[%s5536 + $0x98] sm:$0x1] %v5631
        %v5633 = vld [vmem:[%s5536 + $0x9c] sm:$0xf]
        %v5634 = vsel %vm5539, %v5443, %v5633
        %5635 = vst [vmem:[%s5536 + $0x9c] sm:$0xf] %v5634
        %5636 = vst [vmem:[%s5536 + $0xa0] sm:$0xf] %v5452
        %v5637 = vld [vmem:[%s5536 + $0xa4] sm:$0x1]
        %v5638 = vsel %vm5545, %v5453, %v5637
        %5639 = vst [vmem:[%s5536 + $0xa4] sm:$0x1] %v5638
        %v5640 = vld [vmem:[%s5536 + $0xa8] sm:$0xf]
        %v5641 = vsel %vm5539, %v5460, %v5640
        %5642 = vst [vmem:[%s5536 + $0xa8] sm:$0xf] %v5641
        %5643 = vst [vmem:[%s5536 + $0xac] sm:$0xf] %v5469
        %v5644 = vld [vmem:[%s5536 + $0xb0] sm:$0x1]
        %v5645 = vsel %vm5545, %v5470, %v5644
        %5646 = vst [vmem:[%s5536 + $0xb0] sm:$0x1] %v5645
        %v5647 = vld [vmem:[%s5536 + $0xb4] sm:$0xf]
        %v5648 = vsel %vm5539, %v5477, %v5647
        %5649 = vst [vmem:[%s5536 + $0xb4] sm:$0xf] %v5648
        %5650 = vst [vmem:[%s5536 + $0xb8] sm:$0xf] %v5486
        %v5651 = vld [vmem:[%s5536 + $0xbc] sm:$0x1]
        %v5652 = vsel %vm5545, %v5487, %v5651
        %5653 = vst [vmem:[%s5536 + $0xbc] sm:$0x1] %v5652
        %v5654 = vld [vmem:[#allocation2] sm:$0xf]
        %v5655 = vld [vmem:[#allocation2 + $0x4] sm:$0xf]
        %v5656 = vld [vmem:[#allocation2 + $0xc] sm:$0xf]
        %v5657 = vld [vmem:[#allocation2 + $0x10] sm:$0xf]
        %v5658 = vld [vmem:[#allocation2 + $0x18] sm:$0xf]
        %v5659 = vld [vmem:[#allocation2 + $0x1c] sm:$0xf]
        %v5660 = vld [vmem:[#allocation2 + $0x24] sm:$0xf]
        %v5661 = vld [vmem:[#allocation2 + $0x28] sm:$0xf]
        %v5662 = vld [vmem:[#allocation2 + $0x30] sm:$0xf]
        %v5663 = vld [vmem:[#allocation2 + $0x34] sm:$0xf]
        %v5664 = vld [vmem:[#allocation2 + $0x3c] sm:$0xf]
        %v5665 = vld [vmem:[#allocation2 + $0x40] sm:$0xf]
        %v5666 = vld [vmem:[#allocation2 + $0x48] sm:$0xf]
        %v5667 = vld [vmem:[#allocation2 + $0x4c] sm:$0xf]
        %v5668 = vld [vmem:[#allocation2 + $0x54] sm:$0xf]
        %v5669 = vld [vmem:[#allocation2 + $0x58] sm:$0xf]
        %v5670 = vld [vmem:[#allocation2 + $0x60] sm:$0xf]
        %v5671 = vld [vmem:[#allocation2 + $0x64] sm:$0xf]
        %v5672 = vld [vmem:[#allocation2 + $0x6c] sm:$0xf]
        %v5673 = vld [vmem:[#allocation2 + $0x70] sm:$0xf]
        %v5674 = vld [vmem:[#allocation2 + $0x78] sm:$0xf]
        %v5675 = vld [vmem:[#allocation2 + $0x7c] sm:$0xf]
        %v5676 = vld [vmem:[#allocation2 + $0x84] sm:$0xf]
        %v5677 = vld [vmem:[#allocation2 + $0x88] sm:$0xf]
        %v5678 = vld [vmem:[#allocation2 + $0x90] sm:$0xf]
        %v5679 = vld [vmem:[#allocation2 + $0x94] sm:$0xf]
        %v5680 = vld [vmem:[#allocation2 + $0x9c] sm:$0xf]
        %v5681 = vld [vmem:[#allocation2 + $0xa0] sm:$0xf]
        %v5682 = vld [vmem:[#allocation2 + $0xa8] sm:$0xf]
        %v5683 = vld [vmem:[#allocation2 + $0xac] sm:$0xf]
        %v5684 = vld [vmem:[#allocation2 + $0xb4] sm:$0xf]
        %v5685 = vld [vmem:[#allocation2 + $0xb8] sm:$0xf]
        %s5686 = scalar_lea.vmem [#allocation3], 576
        %v5687 = vld [vmem:[%s5686] sm:$0xf]
        %v5688 = vld [vmem:[%s5686 + $0x4] sm:$0xf]
        %v5689 = vld [vmem:[%s5686 + $0x8] sm:$0xf]
        %v5690 = vld [vmem:[%s5686 + $0xc] sm:$0xf]
        %v5691 = vld [vmem:[%s5686 + $0x10] sm:$0xf]
        %v5692 = vld [vmem:[%s5686 + $0x14] sm:$0xf]
        %v5693 = vld [vmem:[%s5686 + $0x18] sm:$0xf]
        %v5694 = vld [vmem:[%s5686 + $0x1c] sm:$0xf]
        %v5695 = vld [vmem:[%s5686 + $0x20] sm:$0xf]
        %v5696 = vld [vmem:[%s5686 + $0x24] sm:$0xf]
        %v5697 = vld [vmem:[%s5686 + $0x28] sm:$0xf]
        %v5698 = vld [vmem:[%s5686 + $0x2c] sm:$0xf]
        %v5699 = vld [vmem:[%s5686 + $0x30] sm:$0xf]
        %v5700 = vld [vmem:[%s5686 + $0x34] sm:$0xf]
        %v5701 = vld [vmem:[%s5686 + $0x38] sm:$0xf]
        %v5702 = vld [vmem:[%s5686 + $0x3c] sm:$0xf]
        %v5703 = vld [vmem:[#allocation2 + $0x8] sm:$0x1]
        %v5704 = vld [vmem:[#allocation2 + $0x14] sm:$0x1]
        %v5705 = vld [vmem:[#allocation2 + $0x20] sm:$0x1]
        %v5706 = vld [vmem:[#allocation2 + $0x2c] sm:$0x1]
        %v5707 = vld [vmem:[#allocation2 + $0x38] sm:$0x1]
        %v5708 = vld [vmem:[#allocation2 + $0x44] sm:$0x1]
        %v5709 = vld [vmem:[#allocation2 + $0x50] sm:$0x1]
        %v5710 = vld [vmem:[#allocation2 + $0x5c] sm:$0x1]
        %v5711 = vld [vmem:[#allocation2 + $0x68] sm:$0x1]
        %v5712 = vld [vmem:[#allocation2 + $0x74] sm:$0x1]
        %v5713 = vld [vmem:[#allocation2 + $0x80] sm:$0x1]
        %v5714 = vld [vmem:[#allocation2 + $0x8c] sm:$0x1]
        %v5715 = vld [vmem:[#allocation2 + $0x98] sm:$0x1]
        %v5716 = vld [vmem:[#allocation2 + $0xa4] sm:$0x1]
        %v5717 = vld [vmem:[#allocation2 + $0xb0] sm:$0x1]
        %v5718 = vld [vmem:[#allocation2 + $0xbc] sm:$0x1]
        %v5720 = vshrl.u32 %v5654, 16
        %v5722 = vrot.slane %v5720, 4
        %v5723 = vshll.u32 %v5654, 16
        %v5725 = vrot.slane %v5723, 5
        %v5726 = vor.u32 %v5722, %v5725
        %v5727 = vrot.slane %v5726, 4
        %v5729 = vshll.u32 %v5655, 16
        %v5731 = vrot.slane %v5729, 5
        %v5732 = vsel %vm306, %v5727, %v5731
        %v5733 = vshrl.u32 %v5655, 16
        %v5735 = vrot.slane %v5733, 4
        %v5736 = vor.u32 %v5735, %v5731
        %v5737 = vrot.slane %v5736, 4
        %v5739 = vshll.u32 %v5703, 16
        %v5741 = vrot.slane %v5739, 5
        %v5742 = vsel %vm306, %v5737, %v5741
        %v5744 = vshrl.u32 %v5656, 16
        %v5746 = vrot.slane %v5744, 4
        %v5747 = vshll.u32 %v5656, 16
        %v5749 = vrot.slane %v5747, 5
        %v5750 = vor.u32 %v5746, %v5749
        %v5751 = vrot.slane %v5750, 4
        %v5753 = vshll.u32 %v5657, 16
        %v5755 = vrot.slane %v5753, 5
        %v5756 = vsel %vm306, %v5751, %v5755
        %v5757 = vshrl.u32 %v5657, 16
        %v5759 = vrot.slane %v5757, 4
        %v5760 = vor.u32 %v5759, %v5755
        %v5761 = vrot.slane %v5760, 4
        %v5763 = vshll.u32 %v5704, 16
        %v5765 = vrot.slane %v5763, 5
        %v5766 = vsel %vm306, %v5761, %v5765
        %v5768 = vshrl.u32 %v5658, 16
        %v5770 = vrot.slane %v5768, 4
        %v5771 = vshll.u32 %v5658, 16
        %v5773 = vrot.slane %v5771, 5
        %v5774 = vor.u32 %v5770, %v5773
        %v5775 = vrot.slane %v5774, 4
        %v5777 = vshll.u32 %v5659, 16
        %v5779 = vrot.slane %v5777, 5
        %v5780 = vsel %vm306, %v5775, %v5779
        %v5781 = vshrl.u32 %v5659, 16
        %v5783 = vrot.slane %v5781, 4
        %v5784 = vor.u32 %v5783, %v5779
        %v5785 = vrot.slane %v5784, 4
        %v5787 = vshll.u32 %v5705, 16
        %v5789 = vrot.slane %v5787, 5
        %v5790 = vsel %vm306, %v5785, %v5789
        %v5792 = vshrl.u32 %v5660, 16
        %v5794 = vrot.slane %v5792, 4
        %v5795 = vshll.u32 %v5660, 16
        %v5797 = vrot.slane %v5795, 5
        %v5798 = vor.u32 %v5794, %v5797
        %v5799 = vrot.slane %v5798, 4
        %v5801 = vshll.u32 %v5661, 16
        %v5803 = vrot.slane %v5801, 5
        %v5804 = vsel %vm306, %v5799, %v5803
        %v5805 = vshrl.u32 %v5661, 16
        %v5807 = vrot.slane %v5805, 4
        %v5808 = vor.u32 %v5807, %v5803
        %v5809 = vrot.slane %v5808, 4
        %v5811 = vshll.u32 %v5706, 16
        %v5813 = vrot.slane %v5811, 5
        %v5814 = vsel %vm306, %v5809, %v5813
        %v5816 = vshrl.u32 %v5662, 16
        %v5818 = vrot.slane %v5816, 4
        %v5819 = vshll.u32 %v5662, 16
        %v5821 = vrot.slane %v5819, 5
        %v5822 = vor.u32 %v5818, %v5821
        %v5823 = vrot.slane %v5822, 4
        %v5825 = vshll.u32 %v5663, 16
        %v5827 = vrot.slane %v5825, 5
        %v5828 = vsel %vm306, %v5823, %v5827
        %v5829 = vshrl.u32 %v5663, 16
        %v5831 = vrot.slane %v5829, 4
        %v5832 = vor.u32 %v5831, %v5827
        %v5833 = vrot.slane %v5832, 4
        %v5835 = vshll.u32 %v5707, 16
        %v5837 = vrot.slane %v5835, 5
        %v5838 = vsel %vm306, %v5833, %v5837
        %v5840 = vshrl.u32 %v5664, 16
        %v5842 = vrot.slane %v5840, 4
        %v5843 = vshll.u32 %v5664, 16
        %v5845 = vrot.slane %v5843, 5
        %v5846 = vor.u32 %v5842, %v5845
        %v5847 = vrot.slane %v5846, 4
        %v5849 = vshll.u32 %v5665, 16
        %v5851 = vrot.slane %v5849, 5
        %v5852 = vsel %vm306, %v5847, %v5851
        %v5853 = vshrl.u32 %v5665, 16
        %v5855 = vrot.slane %v5853, 4
        %v5856 = vor.u32 %v5855, %v5851
        %v5857 = vrot.slane %v5856, 4
        %v5859 = vshll.u32 %v5708, 16
        %v5861 = vrot.slane %v5859, 5
        %v5862 = vsel %vm306, %v5857, %v5861
        %v5864 = vshrl.u32 %v5666, 16
        %v5866 = vrot.slane %v5864, 4
        %v5867 = vshll.u32 %v5666, 16
        %v5869 = vrot.slane %v5867, 5
        %v5870 = vor.u32 %v5866, %v5869
        %v5871 = vrot.slane %v5870, 4
        %v5873 = vshll.u32 %v5667, 16
        %v5875 = vrot.slane %v5873, 5
        %v5876 = vsel %vm306, %v5871, %v5875
        %v5877 = vshrl.u32 %v5667, 16
        %v5879 = vrot.slane %v5877, 4
        %v5880 = vor.u32 %v5879, %v5875
        %v5881 = vrot.slane %v5880, 4
        %v5883 = vshll.u32 %v5709, 16
        %v5885 = vrot.slane %v5883, 5
        %v5886 = vsel %vm306, %v5881, %v5885
        %v5888 = vshrl.u32 %v5668, 16
        %v5890 = vrot.slane %v5888, 4
        %v5891 = vshll.u32 %v5668, 16
        %v5893 = vrot.slane %v5891, 5
        %v5894 = vor.u32 %v5890, %v5893
        %v5895 = vrot.slane %v5894, 4
        %v5897 = vshll.u32 %v5669, 16
        %v5899 = vrot.slane %v5897, 5
        %v5900 = vsel %vm306, %v5895, %v5899
        %v5901 = vshrl.u32 %v5669, 16
        %v5903 = vrot.slane %v5901, 4
        %v5904 = vor.u32 %v5903, %v5899
        %v5905 = vrot.slane %v5904, 4
        %v5907 = vshll.u32 %v5710, 16
        %v5909 = vrot.slane %v5907, 5
        %v5910 = vsel %vm306, %v5905, %v5909
        %v5912 = vshrl.u32 %v5670, 16
        %v5914 = vrot.slane %v5912, 4
        %v5915 = vshll.u32 %v5670, 16
        %v5917 = vrot.slane %v5915, 5
        %v5918 = vor.u32 %v5914, %v5917
        %v5919 = vrot.slane %v5918, 4
        %v5921 = vshll.u32 %v5671, 16
        %v5923 = vrot.slane %v5921, 5
        %v5924 = vsel %vm306, %v5919, %v5923
        %v5925 = vshrl.u32 %v5671, 16
        %v5927 = vrot.slane %v5925, 4
        %v5928 = vor.u32 %v5927, %v5923
        %v5929 = vrot.slane %v5928, 4
        %v5931 = vshll.u32 %v5711, 16
        %v5933 = vrot.slane %v5931, 5
        %v5934 = vsel %vm306, %v5929, %v5933
        %v5936 = vshrl.u32 %v5672, 16
        %v5938 = vrot.slane %v5936, 4
        %v5939 = vshll.u32 %v5672, 16
        %v5941 = vrot.slane %v5939, 5
        %v5942 = vor.u32 %v5938, %v5941
        %v5943 = vrot.slane %v5942, 4
        %v5945 = vshll.u32 %v5673, 16
        %v5947 = vrot.slane %v5945, 5
        %v5948 = vsel %vm306, %v5943, %v5947
        %v5949 = vshrl.u32 %v5673, 16
        %v5951 = vrot.slane %v5949, 4
        %v5952 = vor.u32 %v5951, %v5947
        %v5953 = vrot.slane %v5952, 4
        %v5955 = vshll.u32 %v5712, 16
        %v5957 = vrot.slane %v5955, 5
        %v5958 = vsel %vm306, %v5953, %v5957
        %v5960 = vshrl.u32 %v5674, 16
        %v5962 = vrot.slane %v5960, 4
        %v5963 = vshll.u32 %v5674, 16
        %v5965 = vrot.slane %v5963, 5
        %v5966 = vor.u32 %v5962, %v5965
        %v5967 = vrot.slane %v5966, 4
        %v5969 = vshll.u32 %v5675, 16
        %v5971 = vrot.slane %v5969, 5
        %v5972 = vsel %vm306, %v5967, %v5971
        %v5973 = vshrl.u32 %v5675, 16
        %v5975 = vrot.slane %v5973, 4
        %v5976 = vor.u32 %v5975, %v5971
        %v5977 = vrot.slane %v5976, 4
        %v5979 = vshll.u32 %v5713, 16
        %v5981 = vrot.slane %v5979, 5
        %v5982 = vsel %vm306, %v5977, %v5981
        %v5984 = vshrl.u32 %v5676, 16
        %v5986 = vrot.slane %v5984, 4
        %v5987 = vshll.u32 %v5676, 16
        %v5989 = vrot.slane %v5987, 5
        %v5990 = vor.u32 %v5986, %v5989
        %v5991 = vrot.slane %v5990, 4
        %v5993 = vshll.u32 %v5677, 16
        %v5995 = vrot.slane %v5993, 5
        %v5996 = vsel %vm306, %v5991, %v5995
        %v5997 = vshrl.u32 %v5677, 16
        %v5999 = vrot.slane %v5997, 4
        %v6000 = vor.u32 %v5999, %v5995
        %v6001 = vrot.slane %v6000, 4
        %v6003 = vshll.u32 %v5714, 16
        %v6005 = vrot.slane %v6003, 5
        %v6006 = vsel %vm306, %v6001, %v6005
        %v6008 = vshrl.u32 %v5678, 16
        %v6010 = vrot.slane %v6008, 4
        %v6011 = vshll.u32 %v5678, 16
        %v6013 = vrot.slane %v6011, 5
        %v6014 = vor.u32 %v6010, %v6013
        %v6015 = vrot.slane %v6014, 4
        %v6017 = vshll.u32 %v5679, 16
        %v6019 = vrot.slane %v6017, 5
        %v6020 = vsel %vm306, %v6015, %v6019
        %v6021 = vshrl.u32 %v5679, 16
        %v6023 = vrot.slane %v6021, 4
        %v6024 = vor.u32 %v6023, %v6019
        %v6025 = vrot.slane %v6024, 4
        %v6027 = vshll.u32 %v5715, 16
        %v6029 = vrot.slane %v6027, 5
        %v6030 = vsel %vm306, %v6025, %v6029
        %v6032 = vshrl.u32 %v5680, 16
        %v6034 = vrot.slane %v6032, 4
        %v6035 = vshll.u32 %v5680, 16
        %v6037 = vrot.slane %v6035, 5
        %v6038 = vor.u32 %v6034, %v6037
        %v6039 = vrot.slane %v6038, 4
        %v6041 = vshll.u32 %v5681, 16
        %v6043 = vrot.slane %v6041, 5
        %v6044 = vsel %vm306, %v6039, %v6043
        %v6045 = vshrl.u32 %v5681, 16
        %v6047 = vrot.slane %v6045, 4
        %v6048 = vor.u32 %v6047, %v6043
        %v6049 = vrot.slane %v6048, 4
        %v6051 = vshll.u32 %v5716, 16
        %v6053 = vrot.slane %v6051, 5
        %v6054 = vsel %vm306, %v6049, %v6053
        %v6056 = vshrl.u32 %v5682, 16
        %v6058 = vrot.slane %v6056, 4
        %v6059 = vshll.u32 %v5682, 16
        %v6061 = vrot.slane %v6059, 5
        %v6062 = vor.u32 %v6058, %v6061
        %v6063 = vrot.slane %v6062, 4
        %v6065 = vshll.u32 %v5683, 16
        %v6067 = vrot.slane %v6065, 5
        %v6068 = vsel %vm306, %v6063, %v6067
        %v6069 = vshrl.u32 %v5683, 16
        %v6071 = vrot.slane %v6069, 4
        %v6072 = vor.u32 %v6071, %v6067
        %v6073 = vrot.slane %v6072, 4
        %v6075 = vshll.u32 %v5717, 16
        %v6077 = vrot.slane %v6075, 5
        %v6078 = vsel %vm306, %v6073, %v6077
        %v6080 = vshrl.u32 %v5684, 16
        %v6082 = vrot.slane %v6080, 4
        %v6083 = vshll.u32 %v5684, 16
        %v6085 = vrot.slane %v6083, 5
        %v6086 = vor.u32 %v6082, %v6085
        %v6087 = vrot.slane %v6086, 4
        %v6089 = vshll.u32 %v5685, 16
        %v6091 = vrot.slane %v6089, 5
        %v6092 = vsel %vm306, %v6087, %v6091
        %v6093 = vshrl.u32 %v5685, 16
        %v6095 = vrot.slane %v6093, 4
        %v6096 = vor.u32 %v6095, %v6091
        %v6097 = vrot.slane %v6096, 4
        %v6099 = vshll.u32 %v5718, 16
        %v6101 = vrot.slane %v6099, 5
        %v6102 = vsel %vm306, %v6097, %v6101
        %s6103 = scalar_lea.vmem [#allocation3], 640
        %v6104 = vld [vmem:[%s6103] sm:$0xf]
        %v6105 = vld [vmem:[%s6103 + $0x4] sm:$0xf]
        %v6106 = vld [vmem:[%s6103 + $0x8] sm:$0xf]
        %v6107 = vld [vmem:[%s6103 + $0xc] sm:$0xf]
        %v6108 = vld [vmem:[%s6103 + $0x10] sm:$0xf]
        %v6109 = vld [vmem:[%s6103 + $0x14] sm:$0xf]
        %v6110 = vld [vmem:[%s6103 + $0x18] sm:$0xf]
        %v6111 = vld [vmem:[%s6103 + $0x1c] sm:$0xf]
        %v6112 = vld [vmem:[%s6103 + $0x20] sm:$0xf]
        %v6113 = vld [vmem:[%s6103 + $0x24] sm:$0xf]
        %v6114 = vld [vmem:[%s6103 + $0x28] sm:$0xf]
        %v6115 = vld [vmem:[%s6103 + $0x2c] sm:$0xf]
        %v6116 = vld [vmem:[%s6103 + $0x30] sm:$0xf]
        %v6117 = vld [vmem:[%s6103 + $0x34] sm:$0xf]
        %v6118 = vld [vmem:[%s6103 + $0x38] sm:$0xf]
        %v6119 = vld [vmem:[%s6103 + $0x3c] sm:$0xf]
        %v6120 = vunpack.c.l.b16 %v5732
        %v6121 = vunpack.c.l.b16 %v5742
        %v6122 = vunpack.c.l.b16 %v5756
        %v6123 = vunpack.c.l.b16 %v5766
        %v6124 = vunpack.c.l.b16 %v5780
        %v6125 = vunpack.c.l.b16 %v5790
        %v6126 = vunpack.c.l.b16 %v5804
        %v6127 = vunpack.c.l.b16 %v5814
        %v6128 = vunpack.c.l.b16 %v5828
        %v6129 = vunpack.c.l.b16 %v5838
        %v6130 = vunpack.c.l.b16 %v5852
        %v6131 = vunpack.c.l.b16 %v5862
        %v6132 = vunpack.c.l.b16 %v5876
        %v6133 = vunpack.c.l.b16 %v5886
        %v6134 = vunpack.c.l.b16 %v5900
        %v6135 = vunpack.c.l.b16 %v5910
        %v6136 = vunpack.c.l.b16 %v5924
        %v6137 = vunpack.c.l.b16 %v5934
        %v6138 = vunpack.c.l.b16 %v5948
        %v6139 = vunpack.c.l.b16 %v5958
        %v6140 = vunpack.c.l.b16 %v5972
        %v6141 = vunpack.c.l.b16 %v5982
        %v6142 = vunpack.c.l.b16 %v5996
        %v6143 = vunpack.c.l.b16 %v6006
        %v6144 = vunpack.c.l.b16 %v6020
        %v6145 = vunpack.c.l.b16 %v6030
        %v6146 = vunpack.c.l.b16 %v6044
        %v6147 = vunpack.c.l.b16 %v6054
        %v6148 = vunpack.c.l.b16 %v6068
        %v6149 = vunpack.c.l.b16 %v6078
        %v6150 = vunpack.c.l.b16 %v6092
        %v6151 = vunpack.c.l.b16 %v6102
        %v6152 = vpack.c.b16 %v6121, %v6120
        %v6153 = vpack.c.b16 %v6123, %v6122
        %v6154 = vpack.c.b16 %v6125, %v6124
        %v6155 = vpack.c.b16 %v6127, %v6126
        %v6156 = vpack.c.b16 %v6129, %v6128
        %v6157 = vpack.c.b16 %v6131, %v6130
        %v6158 = vpack.c.b16 %v6133, %v6132
        %v6159 = vpack.c.b16 %v6135, %v6134
        %v6160 = vpack.c.b16 %v6137, %v6136
        %v6161 = vpack.c.b16 %v6139, %v6138
        %v6162 = vpack.c.b16 %v6141, %v6140
        %v6163 = vpack.c.b16 %v6143, %v6142
        %v6164 = vpack.c.b16 %v6145, %v6144
        %v6165 = vpack.c.b16 %v6147, %v6146
        %v6166 = vpack.c.b16 %v6149, %v6148
        %v6167 = vpack.c.b16 %v6151, %v6150
        %v6200 = vunpack.c.l.b16 %v6104
        %v6201 = vunpack.c.l.b16 %v6105
        %v6202 = vunpack.c.l.b16 %v6106
        %v6203 = vunpack.c.l.b16 %v6107
        %v6204 = vunpack.c.l.b16 %v6108
        %v6205 = vunpack.c.l.b16 %v6109
        %v6206 = vunpack.c.l.b16 %v6110
        %v6207 = vunpack.c.l.b16 %v6111
        %v6208 = vunpack.c.l.b16 %v6112
        %v6209 = vunpack.c.l.b16 %v6113
        %v6210 = vunpack.c.l.b16 %v6114
        %v6211 = vunpack.c.l.b16 %v6115
        %v6212 = vunpack.c.l.b16 %v6116
        %v6213 = vunpack.c.l.b16 %v6117
        %v6214 = vunpack.c.l.b16 %v6118
        %v6215 = vunpack.c.l.b16 %v6119
        %v6216 = vpack.c.b16 %v6201, %v6200
        %v6217 = vpack.c.b16 %v6203, %v6202
        %v6218 = vpack.c.b16 %v6205, %v6204
        %v6219 = vpack.c.b16 %v6207, %v6206
        %v6220 = vpack.c.b16 %v6209, %v6208
        %v6221 = vpack.c.b16 %v6211, %v6210
        %v6222 = vpack.c.b16 %v6213, %v6212
        %v6223 = vpack.c.b16 %v6215, %v6214
        %6232 = vmatprep.subr.bf16.mxu0 0
        %6233 = vmatpush1.bf16.msra.mxu0 %v6216
        %6234 = vmatprep.subr.bf16.mxu0 0
        %6235 = vmatpush1.bf16.msra.mxu0 %v6217
        %6236 = vmatprep.subr.bf16.mxu0 0
        %6237 = vmatpush1.bf16.msra.mxu0 %v6218
        %6238 = vmatprep.subr.bf16.mxu0 0
        %6239 = vmatpush1.bf16.msra.mxu0 %v6219
        %6240 = vmatprep.subr.bf16.mxu0 0
        %6241 = vmatpush1.bf16.msra.mxu0 %v6220
        %6242 = vmatprep.subr.bf16.mxu0 0
        %6243 = vmatpush1.bf16.msra.mxu0 %v6221
        %6244 = vmatprep.subr.bf16.mxu0 0
        %6245 = vmatpush1.bf16.msra.mxu0 %v6222
        %6246 = vmatprep.subr.bf16.mxu0 0
        %6247 = vmatpush1.bf16.msra.mxu0 %v6223
        %6248 = vmatprep.subr.bf16.mxu0 0
        %6249 = vmatpush1.bf16.msra.mxu0 0
        %6250 = vmatprep.subr.bf16.mxu0 0
        %6251 = vmatpush1.bf16.msra.mxu0 0
        %6252 = vmatprep.subr.bf16.mxu0 0
        %6253 = vmatpush1.bf16.msra.mxu0 0
        %6254 = vmatprep.subr.bf16.mxu0 0
        %6255 = vmatpush1.bf16.msra.mxu0 0
        %6256 = vmatprep.subr.bf16.mxu0 0
        %6257 = vmatpush1.bf16.msra.mxu0 0
        %6258 = vmatprep.subr.bf16.mxu0 0
        %6259 = vmatpush1.bf16.msra.mxu0 0
        %6260 = vmatprep.subr.bf16.mxu0 0
        %6261 = vmatpush1.bf16.msra.mxu0 0
        %6262 = vmatprep.subr.bf16.mxu0 0
        %6263 = vmatpush1.bf16.msra.mxu0 0
        %6264 = vmatprep.mubr.bf16.mxu0 0
        %6265 = vmatmul.mubr.bf16.gmra.mrb[0].mxu0 %v6152
        %v6266 = vpop.f32.mrb[0].mxu0
        %v6267 = vadd.f32 0.0, %v6266
        %v6268 = vpop.f32.mrb[0].mxu0
        %v6269 = vpop.f32.mrb[0].mxu0
        %v6270 = vadd.f32 0.0, %v6269
        %v6271 = vpop.f32.mrb[0].mxu0
        %6272 = vmatprep.mubr.bf16.mxu0 0
        %6273 = vmatmul.mubr.bf16.gmra.mrb[0].mxu0 %v6153
        %v6274 = vpop.f32.mrb[0].mxu0
        %v6275 = vadd.f32 0.0, %v6274
        %v6276 = vpop.f32.mrb[0].mxu0
        %v6277 = vpop.f32.mrb[0].mxu0
        %v6278 = vadd.f32 0.0, %v6277
        %v6279 = vpop.f32.mrb[0].mxu0
        %6280 = vmatprep.mubr.bf16.mxu0 0
        %6281 = vmatmul.mubr.bf16.gmra.mrb[0].mxu0 %v6154
        %v6282 = vpop.f32.mrb[0].mxu0
        %v6283 = vadd.f32 0.0, %v6282
        %v6284 = vpop.f32.mrb[0].mxu0
        %v6285 = vpop.f32.mrb[0].mxu0
        %v6286 = vadd.f32 0.0, %v6285
        %v6287 = vpop.f32.mrb[0].mxu0
        %6288 = vmatprep.mubr.bf16.mxu0 0
        %6289 = vmatmul.mubr.bf16.gmra.mrb[0].mxu0 %v6155
        %v6290 = vpop.f32.mrb[0].mxu0
        %v6291 = vadd.f32 0.0, %v6290
        %v6292 = vpop.f32.mrb[0].mxu0
        %v6293 = vpop.f32.mrb[0].mxu0
        %v6294 = vadd.f32 0.0, %v6293
        %v6295 = vpop.f32.mrb[0].mxu0
        %6296 = vmatprep.mubr.bf16.mxu0 0
        %6297 = vmatmul.mubr.bf16.gmra.mrb[0].mxu0 %v6156
        %v6298 = vpop.f32.mrb[0].mxu0
        %v6299 = vadd.f32 0.0, %v6298
        %v6300 = vpop.f32.mrb[0].mxu0
        %v6301 = vpop.f32.mrb[0].mxu0
        %v6302 = vadd.f32 0.0, %v6301
        %v6303 = vpop.f32.mrb[0].mxu0
        %6304 = vmatprep.mubr.bf16.mxu0 0
        %6305 = vmatmul.mubr.bf16.gmra.mrb[0].mxu0 %v6157
        %v6306 = vpop.f32.mrb[0].mxu0
        %v6307 = vadd.f32 0.0, %v6306
        %v6308 = vpop.f32.mrb[0].mxu0
        %v6309 = vpop.f32.mrb[0].mxu0
        %v6310 = vadd.f32 0.0, %v6309
        %v6311 = vpop.f32.mrb[0].mxu0
        %6312 = vmatprep.mubr.bf16.mxu0 0
        %6313 = vmatmul.mubr.bf16.gmra.mrb[0].mxu0 %v6158
        %v6314 = vpop.f32.mrb[0].mxu0
        %v6315 = vadd.f32 0.0, %v6314
        %v6316 = vpop.f32.mrb[0].mxu0
        %v6317 = vpop.f32.mrb[0].mxu0
        %v6318 = vadd.f32 0.0, %v6317
        %v6319 = vpop.f32.mrb[0].mxu0
        %6320 = vmatprep.mubr.bf16.mxu0 0
        %6321 = vmatmul.mubr.bf16.gmra.mrb[0].mxu0 %v6159
        %v6322 = vpop.f32.mrb[0].mxu0
        %v6323 = vadd.f32 0.0, %v6322
        %v6324 = vpop.f32.mrb[0].mxu0
        %v6325 = vpop.f32.mrb[0].mxu0
        %v6326 = vadd.f32 0.0, %v6325
        %v6327 = vpop.f32.mrb[0].mxu0
        %6328 = vmatprep.mubr.bf16.mxu0 0
        %6329 = vmatmul.mubr.bf16.gmra.mrb[0].mxu0 %v6160
        %v6330 = vpop.f32.mrb[0].mxu0
        %v6331 = vadd.f32 0.0, %v6330
        %v6332 = vpop.f32.mrb[0].mxu0
        %v6333 = vpop.f32.mrb[0].mxu0
        %v6334 = vadd.f32 0.0, %v6333
        %v6335 = vpop.f32.mrb[0].mxu0
        %6336 = vmatprep.mubr.bf16.mxu0 0
        %6337 = vmatmul.mubr.bf16.gmra.mrb[0].mxu0 %v6161
        %v6338 = vpop.f32.mrb[0].mxu0
        %v6339 = vadd.f32 0.0, %v6338
        %v6340 = vpop.f32.mrb[0].mxu0
        %v6341 = vpop.f32.mrb[0].mxu0
        %v6342 = vadd.f32 0.0, %v6341
        %v6343 = vpop.f32.mrb[0].mxu0
        %6344 = vmatprep.mubr.bf16.mxu0 0
        %6345 = vmatmul.mubr.bf16.gmra.mrb[0].mxu0 %v6162
        %v6346 = vpop.f32.mrb[0].mxu0
        %v6347 = vadd.f32 0.0, %v6346
        %v6348 = vpop.f32.mrb[0].mxu0
        %v6349 = vpop.f32.mrb[0].mxu0
        %v6350 = vadd.f32 0.0, %v6349
        %v6351 = vpop.f32.mrb[0].mxu0
        %6352 = vmatprep.mubr.bf16.mxu0 0
        %6353 = vmatmul.mubr.bf16.gmra.mrb[0].mxu0 %v6163
        %v6354 = vpop.f32.mrb[0].mxu0
        %v6355 = vadd.f32 0.0, %v6354
        %v6356 = vpop.f32.mrb[0].mxu0
        %v6357 = vpop.f32.mrb[0].mxu0
        %v6358 = vadd.f32 0.0, %v6357
        %v6359 = vpop.f32.mrb[0].mxu0
        %6360 = vmatprep.mubr.bf16.mxu0 0
        %6361 = vmatmul.mubr.bf16.gmra.mrb[0].mxu0 %v6164
        %v6362 = vpop.f32.mrb[0].mxu0
        %v6363 = vadd.f32 0.0, %v6362
        %v6364 = vpop.f32.mrb[0].mxu0
        %v6365 = vpop.f32.mrb[0].mxu0
        %v6366 = vadd.f32 0.0, %v6365
        %v6367 = vpop.f32.mrb[0].mxu0
        %6368 = vmatprep.mubr.bf16.mxu0 0
        %6369 = vmatmul.mubr.bf16.gmra.mrb[0].mxu0 %v6165
        %v6370 = vpop.f32.mrb[0].mxu0
        %v6371 = vadd.f32 0.0, %v6370
        %v6372 = vpop.f32.mrb[0].mxu0
        %v6373 = vpop.f32.mrb[0].mxu0
        %v6374 = vadd.f32 0.0, %v6373
        %v6375 = vpop.f32.mrb[0].mxu0
        %6376 = vmatprep.mubr.bf16.mxu0 0
        %6377 = vmatmul.mubr.bf16.gmra.mrb[0].mxu0 %v6166
        %v6378 = vpop.f32.mrb[0].mxu0
        %v6379 = vadd.f32 0.0, %v6378
        %v6380 = vpop.f32.mrb[0].mxu0
        %v6381 = vpop.f32.mrb[0].mxu0
        %v6382 = vadd.f32 0.0, %v6381
        %v6383 = vpop.f32.mrb[0].mxu0
        %6384 = vmatprep.mubr.bf16.mxu0 0
        %6385 = vmatmul.mubr.bf16.gmra.mrb[0].mxu0 %v6167
        %v6386 = vpop.f32.mrb[0].mxu0
        %v6387 = vadd.f32 0.0, %v6386
        %v6388 = vpop.f32.mrb[0].mxu0
        %v6389 = vpop.f32.mrb[0].mxu0
        %v6390 = vadd.f32 0.0, %v6389
        %v6391 = vpop.f32.mrb[0].mxu0
        %6392 = vdwg.mxu0
        %v6425 = vunpack.c.l.b16 %v5654
        %v6426 = vunpack.c.l.b16 %v5655
        %v6427 = vunpack.c.l.b16 %v5656
        %v6428 = vunpack.c.l.b16 %v5657
        %v6429 = vunpack.c.l.b16 %v5658
        %v6430 = vunpack.c.l.b16 %v5659
        %v6431 = vunpack.c.l.b16 %v5660
        %v6432 = vunpack.c.l.b16 %v5661
        %v6433 = vunpack.c.l.b16 %v5662
        %v6434 = vunpack.c.l.b16 %v5663
        %v6435 = vunpack.c.l.b16 %v5664
        %v6436 = vunpack.c.l.b16 %v5665
        %v6437 = vunpack.c.l.b16 %v5666
        %v6438 = vunpack.c.l.b16 %v5667
        %v6439 = vunpack.c.l.b16 %v5668
        %v6440 = vunpack.c.l.b16 %v5669
        %v6441 = vunpack.c.l.b16 %v5670
        %v6442 = vunpack.c.l.b16 %v5671
        %v6443 = vunpack.c.l.b16 %v5672
        %v6444 = vunpack.c.l.b16 %v5673
        %v6445 = vunpack.c.l.b16 %v5674
        %v6446 = vunpack.c.l.b16 %v5675
        %v6447 = vunpack.c.l.b16 %v5676
        %v6448 = vunpack.c.l.b16 %v5677
        %v6449 = vunpack.c.l.b16 %v5678
        %v6450 = vunpack.c.l.b16 %v5679
        %v6451 = vunpack.c.l.b16 %v5680
        %v6452 = vunpack.c.l.b16 %v5681
        %v6453 = vunpack.c.l.b16 %v5682
        %v6454 = vunpack.c.l.b16 %v5683
        %v6455 = vunpack.c.l.b16 %v5684
        %v6456 = vunpack.c.l.b16 %v5685
        %v6457 = vpack.c.b16 %v6426, %v6425
        %v6458 = vpack.c.b16 %v6428, %v6427
        %v6459 = vpack.c.b16 %v6430, %v6429
        %v6460 = vpack.c.b16 %v6432, %v6431
        %v6461 = vpack.c.b16 %v6434, %v6433
        %v6462 = vpack.c.b16 %v6436, %v6435
        %v6463 = vpack.c.b16 %v6438, %v6437
        %v6464 = vpack.c.b16 %v6440, %v6439
        %v6465 = vpack.c.b16 %v6442, %v6441
        %v6466 = vpack.c.b16 %v6444, %v6443
        %v6467 = vpack.c.b16 %v6446, %v6445
        %v6468 = vpack.c.b16 %v6448, %v6447
        %v6469 = vpack.c.b16 %v6450, %v6449
        %v6470 = vpack.c.b16 %v6452, %v6451
        %v6471 = vpack.c.b16 %v6454, %v6453
        %v6472 = vpack.c.b16 %v6456, %v6455
        %v6505 = vunpack.c.l.b16 %v5687
        %v6506 = vunpack.c.l.b16 %v5688
        %v6507 = vunpack.c.l.b16 %v5689
        %v6508 = vunpack.c.l.b16 %v5690
        %v6509 = vunpack.c.l.b16 %v5691
        %v6510 = vunpack.c.l.b16 %v5692
        %v6511 = vunpack.c.l.b16 %v5693
        %v6512 = vunpack.c.l.b16 %v5694
        %v6513 = vunpack.c.l.b16 %v5695
        %v6514 = vunpack.c.l.b16 %v5696
        %v6515 = vunpack.c.l.b16 %v5697
        %v6516 = vunpack.c.l.b16 %v5698
        %v6517 = vunpack.c.l.b16 %v5699
        %v6518 = vunpack.c.l.b16 %v5700
        %v6519 = vunpack.c.l.b16 %v5701
        %v6520 = vunpack.c.l.b16 %v5702
        %v6521 = vpack.c.b16 %v6506, %v6505
        %v6522 = vpack.c.b16 %v6508, %v6507
        %v6523 = vpack.c.b16 %v6510, %v6509
        %v6524 = vpack.c.b16 %v6512, %v6511
        %v6525 = vpack.c.b16 %v6514, %v6513
        %v6526 = vpack.c.b16 %v6516, %v6515
        %v6527 = vpack.c.b16 %v6518, %v6517
        %v6528 = vpack.c.b16 %v6520, %v6519
        %6537 = vmatprep.subr.bf16.mxu0 0
        %6538 = vmatpush1.bf16.msra.mxu0 %v6521
        %6539 = vmatprep.subr.bf16.mxu0 0
        %6540 = vmatpush1.bf16.msra.mxu0 %v6522
        %6541 = vmatprep.subr.bf16.mxu0 0
        %6542 = vmatpush1.bf16.msra.mxu0 %v6523
        %6543 = vmatprep.subr.bf16.mxu0 0
        %6544 = vmatpush1.bf16.msra.mxu0 %v6524
        %6545 = vmatprep.subr.bf16.mxu0 0
        %6546 = vmatpush1.bf16.msra.mxu0 %v6525
        %6547 = vmatprep.subr.bf16.mxu0 0
        %6548 = vmatpush1.bf16.msra.mxu0 %v6526
        %6549 = vmatprep.subr.bf16.mxu0 0
        %6550 = vmatpush1.bf16.msra.mxu0 %v6527
        %6551 = vmatprep.subr.bf16.mxu0 0
        %6552 = vmatpush1.bf16.msra.mxu0 %v6528
        %6553 = vmatprep.subr.bf16.mxu0 0
        %6554 = vmatpush1.bf16.msra.mxu0 0
        %6555 = vmatprep.subr.bf16.mxu0 0
        %6556 = vmatpush1.bf16.msra.mxu0 0
        %6557 = vmatprep.subr.bf16.mxu0 0
        %6558 = vmatpush1.bf16.msra.mxu0 0
        %6559 = vmatprep.subr.bf16.mxu0 0
        %6560 = vmatpush1.bf16.msra.mxu0 0
        %6561 = vmatprep.subr.bf16.mxu0 0
        %6562 = vmatpush1.bf16.msra.mxu0 0
        %6563 = vmatprep.subr.bf16.mxu0 0
        %6564 = vmatpush1.bf16.msra.mxu0 0
        %6565 = vmatprep.subr.bf16.mxu0 0
        %6566 = vmatpush1.bf16.msra.mxu0 0
        %6567 = vmatprep.subr.bf16.mxu0 0
        %6568 = vmatpush1.bf16.msra.mxu0 0
        %6569 = vmatprep.mubr.bf16.mxu0 0
        %6570 = vmatmul.mubr.bf16.gmra.mrb[0].mxu0 %v6457
        %v6571 = vpop.f32.mrb[0].mxu0
        %v6572 = vadd.f32 %v6267, %v6571
        %v6573 = vpop.f32.mrb[0].mxu0
        %v6574 = vpop.f32.mrb[0].mxu0
        %v6575 = vadd.f32 %v6270, %v6574
        %v6576 = vpop.f32.mrb[0].mxu0
        %6577 = vmatprep.mubr.bf16.mxu0 0
        %6578 = vmatmul.mubr.bf16.gmra.mrb[0].mxu0 %v6458
        %v6579 = vpop.f32.mrb[0].mxu0
        %v6580 = vadd.f32 %v6275, %v6579
        %v6581 = vpop.f32.mrb[0].mxu0
        %v6582 = vpop.f32.mrb[0].mxu0
        %v6583 = vadd.f32 %v6278, %v6582
        %v6584 = vpop.f32.mrb[0].mxu0
        %6585 = vmatprep.mubr.bf16.mxu0 0
        %6586 = vmatmul.mubr.bf16.gmra.mrb[0].mxu0 %v6459
        %v6587 = vpop.f32.mrb[0].mxu0
        %v6588 = vadd.f32 %v6283, %v6587
        %v6589 = vpop.f32.mrb[0].mxu0
        %v6590 = vpop.f32.mrb[0].mxu0
        %v6591 = vadd.f32 %v6286, %v6590
        %v6592 = vpop.f32.mrb[0].mxu0
        %6593 = vmatprep.mubr.bf16.mxu0 0
        %6594 = vmatmul.mubr.bf16.gmra.mrb[0].mxu0 %v6460
        %v6595 = vpop.f32.mrb[0].mxu0
        %v6596 = vadd.f32 %v6291, %v6595
        %v6597 = vpop.f32.mrb[0].mxu0
        %v6598 = vpop.f32.mrb[0].mxu0
        %v6599 = vadd.f32 %v6294, %v6598
        %v6600 = vpop.f32.mrb[0].mxu0
        %6601 = vmatprep.mubr.bf16.mxu0 0
        %6602 = vmatmul.mubr.bf16.gmra.mrb[0].mxu0 %v6461
        %v6603 = vpop.f32.mrb[0].mxu0
        %v6604 = vadd.f32 %v6299, %v6603
        %v6605 = vpop.f32.mrb[0].mxu0
        %v6606 = vpop.f32.mrb[0].mxu0
        %v6607 = vadd.f32 %v6302, %v6606
        %v6608 = vpop.f32.mrb[0].mxu0
        %6609 = vmatprep.mubr.bf16.mxu0 0
        %6610 = vmatmul.mubr.bf16.gmra.mrb[0].mxu0 %v6462
        %v6611 = vpop.f32.mrb[0].mxu0
        %v6612 = vadd.f32 %v6307, %v6611
        %v6613 = vpop.f32.mrb[0].mxu0
        %v6614 = vpop.f32.mrb[0].mxu0
        %v6615 = vadd.f32 %v6310, %v6614
        %v6616 = vpop.f32.mrb[0].mxu0
        %6617 = vmatprep.mubr.bf16.mxu0 0
        %6618 = vmatmul.mubr.bf16.gmra.mrb[0].mxu0 %v6463
        %v6619 = vpop.f32.mrb[0].mxu0
        %v6620 = vadd.f32 %v6315, %v6619
        %v6621 = vpop.f32.mrb[0].mxu0
        %v6622 = vpop.f32.mrb[0].mxu0
        %v6623 = vadd.f32 %v6318, %v6622
        %v6624 = vpop.f32.mrb[0].mxu0
        %6625 = vmatprep.mubr.bf16.mxu0 0
        %6626 = vmatmul.mubr.bf16.gmra.mrb[0].mxu0 %v6464
        %v6627 = vpop.f32.mrb[0].mxu0
        %v6628 = vadd.f32 %v6323, %v6627
        %v6629 = vpop.f32.mrb[0].mxu0
        %v6630 = vpop.f32.mrb[0].mxu0
        %v6631 = vadd.f32 %v6326, %v6630
        %v6632 = vpop.f32.mrb[0].mxu0
        %6633 = vmatprep.mubr.bf16.mxu0 0
        %6634 = vmatmul.mubr.bf16.gmra.mrb[0].mxu0 %v6465
        %v6635 = vpop.f32.mrb[0].mxu0
        %v6636 = vadd.f32 %v6331, %v6635
        %v6637 = vpop.f32.mrb[0].mxu0
        %v6638 = vpop.f32.mrb[0].mxu0
        %v6639 = vadd.f32 %v6334, %v6638
        %v6640 = vpop.f32.mrb[0].mxu0
        %6641 = vmatprep.mubr.bf16.mxu0 0
        %6642 = vmatmul.mubr.bf16.gmra.mrb[0].mxu0 %v6466
        %v6643 = vpop.f32.mrb[0].mxu0
        %v6644 = vadd.f32 %v6339, %v6643
        %v6645 = vpop.f32.mrb[0].mxu0
        %v6646 = vpop.f32.mrb[0].mxu0
        %v6647 = vadd.f32 %v6342, %v6646
        %v6648 = vpop.f32.mrb[0].mxu0
        %6649 = vmatprep.mubr.bf16.mxu0 0
        %6650 = vmatmul.mubr.bf16.gmra.mrb[0].mxu0 %v6467
        %v6651 = vpop.f32.mrb[0].mxu0
        %v6652 = vadd.f32 %v6347, %v6651
        %v6653 = vpop.f32.mrb[0].mxu0
        %v6654 = vpop.f32.mrb[0].mxu0
        %v6655 = vadd.f32 %v6350, %v6654
        %v6656 = vpop.f32.mrb[0].mxu0
        %6657 = vmatprep.mubr.bf16.mxu0 0
        %6658 = vmatmul.mubr.bf16.gmra.mrb[0].mxu0 %v6468
        %v6659 = vpop.f32.mrb[0].mxu0
        %v6660 = vadd.f32 %v6355, %v6659
        %v6661 = vpop.f32.mrb[0].mxu0
        %v6662 = vpop.f32.mrb[0].mxu0
        %v6663 = vadd.f32 %v6358, %v6662
        %v6664 = vpop.f32.mrb[0].mxu0
        %6665 = vmatprep.mubr.bf16.mxu0 0
        %6666 = vmatmul.mubr.bf16.gmra.mrb[0].mxu0 %v6469
        %v6667 = vpop.f32.mrb[0].mxu0
        %v6668 = vadd.f32 %v6363, %v6667
        %v6669 = vpop.f32.mrb[0].mxu0
        %v6670 = vpop.f32.mrb[0].mxu0
        %v6671 = vadd.f32 %v6366, %v6670
        %v6672 = vpop.f32.mrb[0].mxu0
        %6673 = vmatprep.mubr.bf16.mxu0 0
        %6674 = vmatmul.mubr.bf16.gmra.mrb[0].mxu0 %v6470
        %v6675 = vpop.f32.mrb[0].mxu0
        %v6676 = vadd.f32 %v6371, %v6675
        %v6677 = vpop.f32.mrb[0].mxu0
        %v6678 = vpop.f32.mrb[0].mxu0
        %v6679 = vadd.f32 %v6374, %v6678
        %v6680 = vpop.f32.mrb[0].mxu0
        %6681 = vmatprep.mubr.bf16.mxu0 0
        %6682 = vmatmul.mubr.bf16.gmra.mrb[0].mxu0 %v6471
        %v6683 = vpop.f32.mrb[0].mxu0
        %v6684 = vadd.f32 %v6379, %v6683
        %v6685 = vpop.f32.mrb[0].mxu0
        %v6686 = vpop.f32.mrb[0].mxu0
        %v6687 = vadd.f32 %v6382, %v6686
        %v6688 = vpop.f32.mrb[0].mxu0
        %6689 = vmatprep.mubr.bf16.mxu0 0
        %6690 = vmatmul.mubr.bf16.gmra.mrb[0].mxu0 %v6472
        %v6691 = vpop.f32.mrb[0].mxu0
        %v6692 = vadd.f32 %v6387, %v6691
        %v6693 = vpop.f32.mrb[0].mxu0
        %v6694 = vpop.f32.mrb[0].mxu0
        %v6695 = vadd.f32 %v6390, %v6694
        %v6696 = vpop.f32.mrb[0].mxu0
        %6697 = vdwg.mxu0
        %v6698 = vld [vmem:[#allocation2] sm:$0xe]
        %v6699 = vld [vmem:[#allocation2 + $0xc] sm:$0xe]
        %v6700 = vld [vmem:[#allocation2 + $0x18] sm:$0xe]
        %v6701 = vld [vmem:[#allocation2 + $0x24] sm:$0xe]
        %v6702 = vld [vmem:[#allocation2 + $0x30] sm:$0xe]
        %v6703 = vld [vmem:[#allocation2 + $0x3c] sm:$0xe]
        %v6704 = vld [vmem:[#allocation2 + $0x48] sm:$0xe]
        %v6705 = vld [vmem:[#allocation2 + $0x54] sm:$0xe]
        %v6706 = vld [vmem:[#allocation2 + $0x60] sm:$0xe]
        %v6707 = vld [vmem:[#allocation2 + $0x6c] sm:$0xe]
        %v6708 = vld [vmem:[#allocation2 + $0x78] sm:$0xe]
        %v6709 = vld [vmem:[#allocation2 + $0x84] sm:$0xe]
        %v6710 = vld [vmem:[#allocation2 + $0x90] sm:$0xe]
        %v6711 = vld [vmem:[#allocation2 + $0x9c] sm:$0xe]
        %v6712 = vld [vmem:[#allocation2 + $0xa8] sm:$0xe]
        %v6713 = vld [vmem:[#allocation2 + $0xb4] sm:$0xe]
        %v6746 = vrot.slane %v6698, 5
        %v6747 = vrot.slane %v6746, 4
        %v6748 = vrot.slane %v5655, 5
        %v6749 = vsel %vm1336, %v6747, %v6748
        %v6750 = vrot.slane %v6748, 4
        %v6751 = vrot.slane %v5703, 5
        %v6752 = vsel %vm1336, %v6750, %v6751
        %v6753 = vrot.slane %v6699, 5
        %v6754 = vrot.slane %v6753, 4
        %v6755 = vrot.slane %v5657, 5
        %v6756 = vsel %vm1336, %v6754, %v6755
        %v6757 = vrot.slane %v6755, 4
        %v6758 = vrot.slane %v5704, 5
        %v6759 = vsel %vm1336, %v6757, %v6758
        %v6760 = vrot.slane %v6700, 5
        %v6761 = vrot.slane %v6760, 4
        %v6762 = vrot.slane %v5659, 5
        %v6763 = vsel %vm1336, %v6761, %v6762
        %v6764 = vrot.slane %v6762, 4
        %v6765 = vrot.slane %v5705, 5
        %v6766 = vsel %vm1336, %v6764, %v6765
        %v6767 = vrot.slane %v6701, 5
        %v6768 = vrot.slane %v6767, 4
        %v6769 = vrot.slane %v5661, 5
        %v6770 = vsel %vm1336, %v6768, %v6769
        %v6771 = vrot.slane %v6769, 4
        %v6772 = vrot.slane %v5706, 5
        %v6773 = vsel %vm1336, %v6771, %v6772
        %v6774 = vrot.slane %v6702, 5
        %v6775 = vrot.slane %v6774, 4
        %v6776 = vrot.slane %v5663, 5
        %v6777 = vsel %vm1336, %v6775, %v6776
        %v6778 = vrot.slane %v6776, 4
        %v6779 = vrot.slane %v5707, 5
        %v6780 = vsel %vm1336, %v6778, %v6779
        %v6781 = vrot.slane %v6703, 5
        %v6782 = vrot.slane %v6781, 4
        %v6783 = vrot.slane %v5665, 5
        %v6784 = vsel %vm1336, %v6782, %v6783
        %v6785 = vrot.slane %v6783, 4
        %v6786 = vrot.slane %v5708, 5
        %v6787 = vsel %vm1336, %v6785, %v6786
        %v6788 = vrot.slane %v6704, 5
        %v6789 = vrot.slane %v6788, 4
        %v6790 = vrot.slane %v5667, 5
        %v6791 = vsel %vm1336, %v6789, %v6790
        %v6792 = vrot.slane %v6790, 4
        %v6793 = vrot.slane %v5709, 5
        %v6794 = vsel %vm1336, %v6792, %v6793
        %v6795 = vrot.slane %v6705, 5
        %v6796 = vrot.slane %v6795, 4
        %v6797 = vrot.slane %v5669, 5
        %v6798 = vsel %vm1336, %v6796, %v6797
        %v6799 = vrot.slane %v6797, 4
        %v6800 = vrot.slane %v5710, 5
        %v6801 = vsel %vm1336, %v6799, %v6800
        %v6802 = vrot.slane %v6706, 5
        %v6803 = vrot.slane %v6802, 4
        %v6804 = vrot.slane %v5671, 5
        %v6805 = vsel %vm1336, %v6803, %v6804
        %v6806 = vrot.slane %v6804, 4
        %v6807 = vrot.slane %v5711, 5
        %v6808 = vsel %vm1336, %v6806, %v6807
        %v6809 = vrot.slane %v6707, 5
        %v6810 = vrot.slane %v6809, 4
        %v6811 = vrot.slane %v5673, 5
        %v6812 = vsel %vm1336, %v6810, %v6811
        %v6813 = vrot.slane %v6811, 4
        %v6814 = vrot.slane %v5712, 5
        %v6815 = vsel %vm1336, %v6813, %v6814
        %v6816 = vrot.slane %v6708, 5
        %v6817 = vrot.slane %v6816, 4
        %v6818 = vrot.slane %v5675, 5
        %v6819 = vsel %vm1336, %v6817, %v6818
        %v6820 = vrot.slane %v6818, 4
        %v6821 = vrot.slane %v5713, 5
        %v6822 = vsel %vm1336, %v6820, %v6821
        %v6823 = vrot.slane %v6709, 5
        %v6824 = vrot.slane %v6823, 4
        %v6825 = vrot.slane %v5677, 5
        %v6826 = vsel %vm1336, %v6824, %v6825
        %v6827 = vrot.slane %v6825, 4
        %v6828 = vrot.slane %v5714, 5
        %v6829 = vsel %vm1336, %v6827, %v6828
        %v6830 = vrot.slane %v6710, 5
        %v6831 = vrot.slane %v6830, 4
        %v6832 = vrot.slane %v5679, 5
        %v6833 = vsel %vm1336, %v6831, %v6832
        %v6834 = vrot.slane %v6832, 4
        %v6835 = vrot.slane %v5715, 5
        %v6836 = vsel %vm1336, %v6834, %v6835
        %v6837 = vrot.slane %v6711, 5
        %v6838 = vrot.slane %v6837, 4
        %v6839 = vrot.slane %v5681, 5
        %v6840 = vsel %vm1336, %v6838, %v6839
        %v6841 = vrot.slane %v6839, 4
        %v6842 = vrot.slane %v5716, 5
        %v6843 = vsel %vm1336, %v6841, %v6842
        %v6844 = vrot.slane %v6712, 5
        %v6845 = vrot.slane %v6844, 4
        %v6846 = vrot.slane %v5683, 5
        %v6847 = vsel %vm1336, %v6845, %v6846
        %v6848 = vrot.slane %v6846, 4
        %v6849 = vrot.slane %v5717, 5
        %v6850 = vsel %vm1336, %v6848, %v6849
        %v6851 = vrot.slane %v6713, 5
        %v6852 = vrot.slane %v6851, 4
        %v6853 = vrot.slane %v5685, 5
        %v6854 = vsel %vm1336, %v6852, %v6853
        %v6855 = vrot.slane %v6853, 4
        %v6856 = vrot.slane %v5718, 5
        %v6857 = vsel %vm1336, %v6855, %v6856
        %s6858 = scalar_lea.vmem [#allocation3], 704
        %v6859 = vld [vmem:[%s6858] sm:$0xf]
        %v6860 = vld [vmem:[%s6858 + $0x4] sm:$0xf]
        %v6861 = vld [vmem:[%s6858 + $0x8] sm:$0xf]
        %v6862 = vld [vmem:[%s6858 + $0xc] sm:$0xf]
        %v6863 = vld [vmem:[%s6858 + $0x10] sm:$0xf]
        %v6864 = vld [vmem:[%s6858 + $0x14] sm:$0xf]
        %v6865 = vld [vmem:[%s6858 + $0x18] sm:$0xf]
        %v6866 = vld [vmem:[%s6858 + $0x1c] sm:$0xf]
        %v6867 = vld [vmem:[%s6858 + $0x20] sm:$0xf]
        %v6868 = vld [vmem:[%s6858 + $0x24] sm:$0xf]
        %v6869 = vld [vmem:[%s6858 + $0x28] sm:$0xf]
        %v6870 = vld [vmem:[%s6858 + $0x2c] sm:$0xf]
        %v6871 = vld [vmem:[%s6858 + $0x30] sm:$0xf]
        %v6872 = vld [vmem:[%s6858 + $0x34] sm:$0xf]
        %v6873 = vld [vmem:[%s6858 + $0x38] sm:$0xf]
        %v6874 = vld [vmem:[%s6858 + $0x3c] sm:$0xf]
        %v6875 = vunpack.c.l.b16 %v6749
        %v6876 = vunpack.c.l.b16 %v6752
        %v6877 = vunpack.c.l.b16 %v6756
        %v6878 = vunpack.c.l.b16 %v6759
        %v6879 = vunpack.c.l.b16 %v6763
        %v6880 = vunpack.c.l.b16 %v6766
        %v6881 = vunpack.c.l.b16 %v6770
        %v6882 = vunpack.c.l.b16 %v6773
        %v6883 = vunpack.c.l.b16 %v6777
        %v6884 = vunpack.c.l.b16 %v6780
        %v6885 = vunpack.c.l.b16 %v6784
        %v6886 = vunpack.c.l.b16 %v6787
        %v6887 = vunpack.c.l.b16 %v6791
        %v6888 = vunpack.c.l.b16 %v6794
        %v6889 = vunpack.c.l.b16 %v6798
        %v6890 = vunpack.c.l.b16 %v6801
        %v6891 = vunpack.c.l.b16 %v6805
        %v6892 = vunpack.c.l.b16 %v6808
        %v6893 = vunpack.c.l.b16 %v6812
        %v6894 = vunpack.c.l.b16 %v6815
        %v6895 = vunpack.c.l.b16 %v6819
        %v6896 = vunpack.c.l.b16 %v6822
        %v6897 = vunpack.c.l.b16 %v6826
        %v6898 = vunpack.c.l.b16 %v6829
        %v6899 = vunpack.c.l.b16 %v6833
        %v6900 = vunpack.c.l.b16 %v6836
        %v6901 = vunpack.c.l.b16 %v6840
        %v6902 = vunpack.c.l.b16 %v6843
        %v6903 = vunpack.c.l.b16 %v6847
        %v6904 = vunpack.c.l.b16 %v6850
        %v6905 = vunpack.c.l.b16 %v6854
        %v6906 = vunpack.c.l.b16 %v6857
        %v6907 = vpack.c.b16 %v6876, %v6875
        %v6908 = vpack.c.b16 %v6878, %v6877
        %v6909 = vpack.c.b16 %v6880, %v6879
        %v6910 = vpack.c.b16 %v6882, %v6881
        %v6911 = vpack.c.b16 %v6884, %v6883
        %v6912 = vpack.c.b16 %v6886, %v6885
        %v6913 = vpack.c.b16 %v6888, %v6887
        %v6914 = vpack.c.b16 %v6890, %v6889
        %v6915 = vpack.c.b16 %v6892, %v6891
        %v6916 = vpack.c.b16 %v6894, %v6893
        %v6917 = vpack.c.b16 %v6896, %v6895
        %v6918 = vpack.c.b16 %v6898, %v6897
        %v6919 = vpack.c.b16 %v6900, %v6899
        %v6920 = vpack.c.b16 %v6902, %v6901
        %v6921 = vpack.c.b16 %v6904, %v6903
        %v6922 = vpack.c.b16 %v6906, %v6905
        %v6955 = vunpack.c.l.b16 %v6859
        %v6956 = vunpack.c.l.b16 %v6860
        %v6957 = vunpack.c.l.b16 %v6861
        %v6958 = vunpack.c.l.b16 %v6862
        %v6959 = vunpack.c.l.b16 %v6863
        %v6960 = vunpack.c.l.b16 %v6864
        %v6961 = vunpack.c.l.b16 %v6865
        %v6962 = vunpack.c.l.b16 %v6866
        %v6963 = vunpack.c.l.b16 %v6867
        %v6964 = vunpack.c.l.b16 %v6868
        %v6965 = vunpack.c.l.b16 %v6869
        %v6966 = vunpack.c.l.b16 %v6870
        %v6967 = vunpack.c.l.b16 %v6871
        %v6968 = vunpack.c.l.b16 %v6872
        %v6969 = vunpack.c.l.b16 %v6873
        %v6970 = vunpack.c.l.b16 %v6874
        %v6971 = vpack.c.b16 %v6956, %v6955
        %v6972 = vpack.c.b16 %v6958, %v6957
        %v6973 = vpack.c.b16 %v6960, %v6959
        %v6974 = vpack.c.b16 %v6962, %v6961
        %v6975 = vpack.c.b16 %v6964, %v6963
        %v6976 = vpack.c.b16 %v6966, %v6965
        %v6977 = vpack.c.b16 %v6968, %v6967
        %v6978 = vpack.c.b16 %v6970, %v6969
        %6987 = vmatprep.subr.bf16.mxu0 0
        %6988 = vmatpush1.bf16.msra.mxu0 %v6971
        %6989 = vmatprep.subr.bf16.mxu0 0
        %6990 = vmatpush1.bf16.msra.mxu0 %v6972
        %6991 = vmatprep.subr.bf16.mxu0 0
        %6992 = vmatpush1.bf16.msra.mxu0 %v6973
        %6993 = vmatprep.subr.bf16.mxu0 0
        %6994 = vmatpush1.bf16.msra.mxu0 %v6974
        %6995 = vmatprep.subr.bf16.mxu0 0
        %6996 = vmatpush1.bf16.msra.mxu0 %v6975
        %6997 = vmatprep.subr.bf16.mxu0 0
        %6998 = vmatpush1.bf16.msra.mxu0 %v6976
        %6999 = vmatprep.subr.bf16.mxu0 0
        %7000 = vmatpush1.bf16.msra.mxu0 %v6977
        %7001 = vmatprep.subr.bf16.mxu0 0
        %7002 = vmatpush1.bf16.msra.mxu0 %v6978
        %7003 = vmatprep.subr.bf16.mxu0 0
        %7004 = vmatpush1.bf16.msra.mxu0 0
        %7005 = vmatprep.subr.bf16.mxu0 0
        %7006 = vmatpush1.bf16.msra.mxu0 0
        %7007 = vmatprep.subr.bf16.mxu0 0
        %7008 = vmatpush1.bf16.msra.mxu0 0
        %7009 = vmatprep.subr.bf16.mxu0 0
        %7010 = vmatpush1.bf16.msra.mxu0 0
        %7011 = vmatprep.subr.bf16.mxu0 0
        %7012 = vmatpush1.bf16.msra.mxu0 0
        %7013 = vmatprep.subr.bf16.mxu0 0
        %7014 = vmatpush1.bf16.msra.mxu0 0
        %7015 = vmatprep.subr.bf16.mxu0 0
        %7016 = vmatpush1.bf16.msra.mxu0 0
        %7017 = vmatprep.subr.bf16.mxu0 0
        %7018 = vmatpush1.bf16.msra.mxu0 0
        %7019 = vmatprep.mubr.bf16.mxu0 0
        %7020 = vmatmul.mubr.bf16.gmra.mrb[0].mxu0 %v6907
        %v7021 = vpop.f32.mrb[0].mxu0
        %v7022 = vadd.f32 0.0, %v7021
        %v7023 = vpop.f32.mrb[0].mxu0
        %v7024 = vpop.f32.mrb[0].mxu0
        %v7025 = vadd.f32 0.0, %v7024
        %v7026 = vpop.f32.mrb[0].mxu0
        %7027 = vmatprep.mubr.bf16.mxu0 0
        %7028 = vmatmul.mubr.bf16.gmra.mrb[0].mxu0 %v6908
        %v7029 = vpop.f32.mrb[0].mxu0
        %v7030 = vadd.f32 0.0, %v7029
        %v7031 = vpop.f32.mrb[0].mxu0
        %v7032 = vpop.f32.mrb[0].mxu0
        %v7033 = vadd.f32 0.0, %v7032
        %v7034 = vpop.f32.mrb[0].mxu0
        %7035 = vmatprep.mubr.bf16.mxu0 0
        %7036 = vmatmul.mubr.bf16.gmra.mrb[0].mxu0 %v6909
        %v7037 = vpop.f32.mrb[0].mxu0
        %v7038 = vadd.f32 0.0, %v7037
        %v7039 = vpop.f32.mrb[0].mxu0
        %v7040 = vpop.f32.mrb[0].mxu0
        %v7041 = vadd.f32 0.0, %v7040
        %v7042 = vpop.f32.mrb[0].mxu0
        %7043 = vmatprep.mubr.bf16.mxu0 0
        %7044 = vmatmul.mubr.bf16.gmra.mrb[0].mxu0 %v6910
        %v7045 = vpop.f32.mrb[0].mxu0
        %v7046 = vadd.f32 0.0, %v7045
        %v7047 = vpop.f32.mrb[0].mxu0
        %v7048 = vpop.f32.mrb[0].mxu0
        %v7049 = vadd.f32 0.0, %v7048
        %v7050 = vpop.f32.mrb[0].mxu0
        %7051 = vmatprep.mubr.bf16.mxu0 0
        %7052 = vmatmul.mubr.bf16.gmra.mrb[0].mxu0 %v6911
        %v7053 = vpop.f32.mrb[0].mxu0
        %v7054 = vadd.f32 0.0, %v7053
        %v7055 = vpop.f32.mrb[0].mxu0
        %v7056 = vpop.f32.mrb[0].mxu0
        %v7057 = vadd.f32 0.0, %v7056
        %v7058 = vpop.f32.mrb[0].mxu0
        %7059 = vmatprep.mubr.bf16.mxu0 0
        %7060 = vmatmul.mubr.bf16.gmra.mrb[0].mxu0 %v6912
        %v7061 = vpop.f32.mrb[0].mxu0
        %v7062 = vadd.f32 0.0, %v7061
        %v7063 = vpop.f32.mrb[0].mxu0
        %v7064 = vpop.f32.mrb[0].mxu0
        %v7065 = vadd.f32 0.0, %v7064
        %v7066 = vpop.f32.mrb[0].mxu0
        %7067 = vmatprep.mubr.bf16.mxu0 0
        %7068 = vmatmul.mubr.bf16.gmra.mrb[0].mxu0 %v6913
        %v7069 = vpop.f32.mrb[0].mxu0
        %v7070 = vadd.f32 0.0, %v7069
        %v7071 = vpop.f32.mrb[0].mxu0
        %v7072 = vpop.f32.mrb[0].mxu0
        %v7073 = vadd.f32 0.0, %v7072
        %v7074 = vpop.f32.mrb[0].mxu0
        %7075 = vmatprep.mubr.bf16.mxu0 0
        %7076 = vmatmul.mubr.bf16.gmra.mrb[0].mxu0 %v6914
        %v7077 = vpop.f32.mrb[0].mxu0
        %v7078 = vadd.f32 0.0, %v7077
        %v7079 = vpop.f32.mrb[0].mxu0
        %v7080 = vpop.f32.mrb[0].mxu0
        %v7081 = vadd.f32 0.0, %v7080
        %v7082 = vpop.f32.mrb[0].mxu0
        %7083 = vmatprep.mubr.bf16.mxu0 0
        %7084 = vmatmul.mubr.bf16.gmra.mrb[0].mxu0 %v6915
        %v7085 = vpop.f32.mrb[0].mxu0
        %v7086 = vadd.f32 0.0, %v7085
        %v7087 = vpop.f32.mrb[0].mxu0
        %v7088 = vpop.f32.mrb[0].mxu0
        %v7089 = vadd.f32 0.0, %v7088
        %v7090 = vpop.f32.mrb[0].mxu0
        %7091 = vmatprep.mubr.bf16.mxu0 0
        %7092 = vmatmul.mubr.bf16.gmra.mrb[0].mxu0 %v6916
        %v7093 = vpop.f32.mrb[0].mxu0
        %v7094 = vadd.f32 0.0, %v7093
        %v7095 = vpop.f32.mrb[0].mxu0
        %v7096 = vpop.f32.mrb[0].mxu0
        %v7097 = vadd.f32 0.0, %v7096
        %v7098 = vpop.f32.mrb[0].mxu0
        %7099 = vmatprep.mubr.bf16.mxu0 0
        %7100 = vmatmul.mubr.bf16.gmra.mrb[0].mxu0 %v6917
        %v7101 = vpop.f32.mrb[0].mxu0
        %v7102 = vadd.f32 0.0, %v7101
        %v7103 = vpop.f32.mrb[0].mxu0
        %v7104 = vpop.f32.mrb[0].mxu0
        %v7105 = vadd.f32 0.0, %v7104
        %v7106 = vpop.f32.mrb[0].mxu0
        %7107 = vmatprep.mubr.bf16.mxu0 0
        %7108 = vmatmul.mubr.bf16.gmra.mrb[0].mxu0 %v6918
        %v7109 = vpop.f32.mrb[0].mxu0
        %v7110 = vadd.f32 0.0, %v7109
        %v7111 = vpop.f32.mrb[0].mxu0
        %v7112 = vpop.f32.mrb[0].mxu0
        %v7113 = vadd.f32 0.0, %v7112
        %v7114 = vpop.f32.mrb[0].mxu0
        %7115 = vmatprep.mubr.bf16.mxu0 0
        %7116 = vmatmul.mubr.bf16.gmra.mrb[0].mxu0 %v6919
        %v7117 = vpop.f32.mrb[0].mxu0
        %v7118 = vadd.f32 0.0, %v7117
        %v7119 = vpop.f32.mrb[0].mxu0
        %v7120 = vpop.f32.mrb[0].mxu0
        %v7121 = vadd.f32 0.0, %v7120
        %v7122 = vpop.f32.mrb[0].mxu0
        %7123 = vmatprep.mubr.bf16.mxu0 0
        %7124 = vmatmul.mubr.bf16.gmra.mrb[0].mxu0 %v6920
        %v7125 = vpop.f32.mrb[0].mxu0
        %v7126 = vadd.f32 0.0, %v7125
        %v7127 = vpop.f32.mrb[0].mxu0
        %v7128 = vpop.f32.mrb[0].mxu0
        %v7129 = vadd.f32 0.0, %v7128
        %v7130 = vpop.f32.mrb[0].mxu0
        %7131 = vmatprep.mubr.bf16.mxu0 0
        %7132 = vmatmul.mubr.bf16.gmra.mrb[0].mxu0 %v6921
        %v7133 = vpop.f32.mrb[0].mxu0
        %v7134 = vadd.f32 0.0, %v7133
        %v7135 = vpop.f32.mrb[0].mxu0
        %v7136 = vpop.f32.mrb[0].mxu0
        %v7137 = vadd.f32 0.0, %v7136
        %v7138 = vpop.f32.mrb[0].mxu0
        %7139 = vmatprep.mubr.bf16.mxu0 0
        %7140 = vmatmul.mubr.bf16.gmra.mrb[0].mxu0 %v6922
        %v7141 = vpop.f32.mrb[0].mxu0
        %v7142 = vadd.f32 0.0, %v7141
        %v7143 = vpop.f32.mrb[0].mxu0
        %v7144 = vpop.f32.mrb[0].mxu0
        %v7145 = vadd.f32 0.0, %v7144
        %v7146 = vpop.f32.mrb[0].mxu0
        %7147 = vdwg.mxu0
        %v7148 = vadd.f32 %v6572, %v7022
        %v7149 = vadd.f32 %v6575, %v7025
        %v7150 = vadd.f32 %v6580, %v7030
        %v7151 = vadd.f32 %v6583, %v7033
        %v7152 = vadd.f32 %v6588, %v7038
        %v7153 = vadd.f32 %v6591, %v7041
        %v7154 = vadd.f32 %v6596, %v7046
        %v7155 = vadd.f32 %v6599, %v7049
        %v7156 = vadd.f32 %v6604, %v7054
        %v7157 = vadd.f32 %v6607, %v7057
        %v7158 = vadd.f32 %v6612, %v7062
        %v7159 = vadd.f32 %v6615, %v7065
        %v7160 = vadd.f32 %v6620, %v7070
        %v7161 = vadd.f32 %v6623, %v7073
        %v7162 = vadd.f32 %v6628, %v7078
        %v7163 = vadd.f32 %v6631, %v7081
        %v7164 = vadd.f32 %v6636, %v7086
        %v7165 = vadd.f32 %v6639, %v7089
        %v7166 = vadd.f32 %v6644, %v7094
        %v7167 = vadd.f32 %v6647, %v7097
        %v7168 = vadd.f32 %v6652, %v7102
        %v7169 = vadd.f32 %v6655, %v7105
        %v7170 = vadd.f32 %v6660, %v7110
        %v7171 = vadd.f32 %v6663, %v7113
        %v7172 = vadd.f32 %v6668, %v7118
        %v7173 = vadd.f32 %v6671, %v7121
        %v7174 = vadd.f32 %v6676, %v7126
        %v7175 = vadd.f32 %v6679, %v7129
        %v7176 = vadd.f32 %v6684, %v7134
        %v7177 = vadd.f32 %v6687, %v7137
        %v7178 = vadd.f32 %v6692, %v7142
        %v7179 = vadd.f32 %v6695, %v7145
        %v7180 = vld [vmem:[%s5536] sm:$0xf]
        %v7181 = vld [vmem:[%s5536 + $0x4] sm:$0xf]
        %v7182 = vld [vmem:[%s5536 + $0xc] sm:$0xf]
        %v7183 = vld [vmem:[%s5536 + $0x10] sm:$0xf]
        %v7184 = vld [vmem:[%s5536 + $0x18] sm:$0xf]
        %v7185 = vld [vmem:[%s5536 + $0x1c] sm:$0xf]
        %v7186 = vld [vmem:[%s5536 + $0x24] sm:$0xf]
        %v7187 = vld [vmem:[%s5536 + $0x28] sm:$0xf]
        %v7188 = vld [vmem:[%s5536 + $0x30] sm:$0xf]
        %v7189 = vld [vmem:[%s5536 + $0x34] sm:$0xf]
        %v7190 = vld [vmem:[%s5536 + $0x3c] sm:$0xf]
        %v7191 = vld [vmem:[%s5536 + $0x40] sm:$0xf]
        %v7192 = vld [vmem:[%s5536 + $0x48] sm:$0xf]
        %v7193 = vld [vmem:[%s5536 + $0x4c] sm:$0xf]
        %v7194 = vld [vmem:[%s5536 + $0x54] sm:$0xf]
        %v7195 = vld [vmem:[%s5536 + $0x58] sm:$0xf]
        %v7196 = vld [vmem:[%s5536 + $0x60] sm:$0xf]
        %v7197 = vld [vmem:[%s5536 + $0x64] sm:$0xf]
        %v7198 = vld [vmem:[%s5536 + $0x6c] sm:$0xf]
        %v7199 = vld [vmem:[%s5536 + $0x70] sm:$0xf]
        %v7200 = vld [vmem:[%s5536 + $0x78] sm:$0xf]
        %v7201 = vld [vmem:[%s5536 + $0x7c] sm:$0xf]
        %v7202 = vld [vmem:[%s5536 + $0x84] sm:$0xf]
        %v7203 = vld [vmem:[%s5536 + $0x88] sm:$0xf]
        %v7204 = vld [vmem:[%s5536 + $0x90] sm:$0xf]
        %v7205 = vld [vmem:[%s5536 + $0x94] sm:$0xf]
        %v7206 = vld [vmem:[%s5536 + $0x9c] sm:$0xf]
        %v7207 = vld [vmem:[%s5536 + $0xa0] sm:$0xf]
        %v7208 = vld [vmem:[%s5536 + $0xa8] sm:$0xf]
        %v7209 = vld [vmem:[%s5536 + $0xac] sm:$0xf]
        %v7210 = vld [vmem:[%s5536 + $0xb4] sm:$0xf]
        %v7211 = vld [vmem:[%s5536 + $0xb8] sm:$0xf]
        %s7212 = scalar_lea.vmem [#allocation3], 768
        %v7213 = vld [vmem:[%s7212] sm:$0xf]
        %v7214 = vld [vmem:[%s7212 + $0x4] sm:$0xf]
        %v7215 = vld [vmem:[%s7212 + $0x8] sm:$0xf]
        %v7216 = vld [vmem:[%s7212 + $0xc] sm:$0xf]
        %v7217 = vld [vmem:[%s7212 + $0x10] sm:$0xf]
        %v7218 = vld [vmem:[%s7212 + $0x14] sm:$0xf]
        %v7219 = vld [vmem:[%s7212 + $0x18] sm:$0xf]
        %v7220 = vld [vmem:[%s7212 + $0x1c] sm:$0xf]
        %v7221 = vld [vmem:[%s7212 + $0x20] sm:$0xf]
        %v7222 = vld [vmem:[%s7212 + $0x24] sm:$0xf]
        %v7223 = vld [vmem:[%s7212 + $0x28] sm:$0xf]
        %v7224 = vld [vmem:[%s7212 + $0x2c] sm:$0xf]
        %v7225 = vld [vmem:[%s7212 + $0x30] sm:$0xf]
        %v7226 = vld [vmem:[%s7212 + $0x34] sm:$0xf]
        %v7227 = vld [vmem:[%s7212 + $0x38] sm:$0xf]
        %v7228 = vld [vmem:[%s7212 + $0x3c] sm:$0xf]
        %v7261 = vunpack.c.l.b16 %v7180
        %v7262 = vunpack.c.l.b16 %v7181
        %v7263 = vunpack.c.l.b16 %v7182
        %v7264 = vunpack.c.l.b16 %v7183
        %v7265 = vunpack.c.l.b16 %v7184
        %v7266 = vunpack.c.l.b16 %v7185
        %v7267 = vunpack.c.l.b16 %v7186
        %v7268 = vunpack.c.l.b16 %v7187
        %v7269 = vunpack.c.l.b16 %v7188
        %v7270 = vunpack.c.l.b16 %v7189
        %v7271 = vunpack.c.l.b16 %v7190
        %v7272 = vunpack.c.l.b16 %v7191
        %v7273 = vunpack.c.l.b16 %v7192
        %v7274 = vunpack.c.l.b16 %v7193
        %v7275 = vunpack.c.l.b16 %v7194
        %v7276 = vunpack.c.l.b16 %v7195
        %v7277 = vunpack.c.l.b16 %v7196
        %v7278 = vunpack.c.l.b16 %v7197
        %v7279 = vunpack.c.l.b16 %v7198
        %v7280 = vunpack.c.l.b16 %v7199
        %v7281 = vunpack.c.l.b16 %v7200
        %v7282 = vunpack.c.l.b16 %v7201
        %v7283 = vunpack.c.l.b16 %v7202
        %v7284 = vunpack.c.l.b16 %v7203
        %v7285 = vunpack.c.l.b16 %v7204
        %v7286 = vunpack.c.l.b16 %v7205
        %v7287 = vunpack.c.l.b16 %v7206
        %v7288 = vunpack.c.l.b16 %v7207
        %v7289 = vunpack.c.l.b16 %v7208
        %v7290 = vunpack.c.l.b16 %v7209
        %v7291 = vunpack.c.l.b16 %v7210
        %v7292 = vunpack.c.l.b16 %v7211
        %v7293 = vpack.c.b16 %v7262, %v7261
        %v7294 = vpack.c.b16 %v7264, %v7263
        %v7295 = vpack.c.b16 %v7266, %v7265
        %v7296 = vpack.c.b16 %v7268, %v7267
        %v7297 = vpack.c.b16 %v7270, %v7269
        %v7298 = vpack.c.b16 %v7272, %v7271
        %v7299 = vpack.c.b16 %v7274, %v7273
        %v7300 = vpack.c.b16 %v7276, %v7275
        %v7301 = vpack.c.b16 %v7278, %v7277
        %v7302 = vpack.c.b16 %v7280, %v7279
        %v7303 = vpack.c.b16 %v7282, %v7281
        %v7304 = vpack.c.b16 %v7284, %v7283
        %v7305 = vpack.c.b16 %v7286, %v7285
        %v7306 = vpack.c.b16 %v7288, %v7287
        %v7307 = vpack.c.b16 %v7290, %v7289
        %v7308 = vpack.c.b16 %v7292, %v7291
        %v7341 = vunpack.c.l.b16 %v7213
        %v7342 = vunpack.c.l.b16 %v7214
        %v7343 = vunpack.c.l.b16 %v7215
        %v7344 = vunpack.c.l.b16 %v7216
        %v7345 = vunpack.c.l.b16 %v7217
        %v7346 = vunpack.c.l.b16 %v7218
        %v7347 = vunpack.c.l.b16 %v7219
        %v7348 = vunpack.c.l.b16 %v7220
        %v7349 = vunpack.c.l.b16 %v7221
        %v7350 = vunpack.c.l.b16 %v7222
        %v7351 = vunpack.c.l.b16 %v7223
        %v7352 = vunpack.c.l.b16 %v7224
        %v7353 = vunpack.c.l.b16 %v7225
        %v7354 = vunpack.c.l.b16 %v7226
        %v7355 = vunpack.c.l.b16 %v7227
        %v7356 = vunpack.c.l.b16 %v7228
        %v7357 = vpack.c.b16 %v7342, %v7341
        %v7358 = vpack.c.b16 %v7344, %v7343
        %v7359 = vpack.c.b16 %v7346, %v7345
        %v7360 = vpack.c.b16 %v7348, %v7347
        %v7361 = vpack.c.b16 %v7350, %v7349
        %v7362 = vpack.c.b16 %v7352, %v7351
        %v7363 = vpack.c.b16 %v7354, %v7353
        %v7364 = vpack.c.b16 %v7356, %v7355
        %7373 = vmatprep.subr.bf16.mxu0 0
        %7374 = vmatpush1.bf16.msra.mxu0 %v7357
        %7375 = vmatprep.subr.bf16.mxu0 0
        %7376 = vmatpush1.bf16.msra.mxu0 %v7358
        %7377 = vmatprep.subr.bf16.mxu0 0
        %7378 = vmatpush1.bf16.msra.mxu0 %v7359
        %7379 = vmatprep.subr.bf16.mxu0 0
        %7380 = vmatpush1.bf16.msra.mxu0 %v7360
        %7381 = vmatprep.subr.bf16.mxu0 0
        %7382 = vmatpush1.bf16.msra.mxu0 %v7361
        %7383 = vmatprep.subr.bf16.mxu0 0
        %7384 = vmatpush1.bf16.msra.mxu0 %v7362
        %7385 = vmatprep.subr.bf16.mxu0 0
        %7386 = vmatpush1.bf16.msra.mxu0 %v7363
        %7387 = vmatprep.subr.bf16.mxu0 0
        %7388 = vmatpush1.bf16.msra.mxu0 %v7364
        %7389 = vmatprep.subr.bf16.mxu0 0
        %7390 = vmatpush1.bf16.msra.mxu0 0
        %7391 = vmatprep.subr.bf16.mxu0 0
        %7392 = vmatpush1.bf16.msra.mxu0 0
        %7393 = vmatprep.subr.bf16.mxu0 0
        %7394 = vmatpush1.bf16.msra.mxu0 0
        %7395 = vmatprep.subr.bf16.mxu0 0
        %7396 = vmatpush1.bf16.msra.mxu0 0
        %7397 = vmatprep.subr.bf16.mxu0 0
        %7398 = vmatpush1.bf16.msra.mxu0 0
        %7399 = vmatprep.subr.bf16.mxu0 0
        %7400 = vmatpush1.bf16.msra.mxu0 0
        %7401 = vmatprep.subr.bf16.mxu0 0
        %7402 = vmatpush1.bf16.msra.mxu0 0
        %7403 = vmatprep.subr.bf16.mxu0 0
        %7404 = vmatpush1.bf16.msra.mxu0 0
        %7405 = vmatprep.mubr.bf16.mxu0 0
        %7406 = vmatmul.mubr.bf16.gmra.mrb[0].mxu0 %v7293
        %v7407 = vpop.f32.mrb[0].mxu0
        %v7408 = vadd.f32 0.0, %v7407
        %v7409 = vpop.f32.mrb[0].mxu0
        %v7410 = vpop.f32.mrb[0].mxu0
        %v7411 = vadd.f32 0.0, %v7410
        %v7412 = vpop.f32.mrb[0].mxu0
        %7413 = vmatprep.mubr.bf16.mxu0 0
        %7414 = vmatmul.mubr.bf16.gmra.mrb[0].mxu0 %v7294
        %v7415 = vpop.f32.mrb[0].mxu0
        %v7416 = vadd.f32 0.0, %v7415
        %v7417 = vpop.f32.mrb[0].mxu0
        %v7418 = vpop.f32.mrb[0].mxu0
        %v7419 = vadd.f32 0.0, %v7418
        %v7420 = vpop.f32.mrb[0].mxu0
        %7421 = vmatprep.mubr.bf16.mxu0 0
        %7422 = vmatmul.mubr.bf16.gmra.mrb[0].mxu0 %v7295
        %v7423 = vpop.f32.mrb[0].mxu0
        %v7424 = vadd.f32 0.0, %v7423
        %v7425 = vpop.f32.mrb[0].mxu0
        %v7426 = vpop.f32.mrb[0].mxu0
        %v7427 = vadd.f32 0.0, %v7426
        %v7428 = vpop.f32.mrb[0].mxu0
        %7429 = vmatprep.mubr.bf16.mxu0 0
        %7430 = vmatmul.mubr.bf16.gmra.mrb[0].mxu0 %v7296
        %v7431 = vpop.f32.mrb[0].mxu0
        %v7432 = vadd.f32 0.0, %v7431
        %v7433 = vpop.f32.mrb[0].mxu0
        %v7434 = vpop.f32.mrb[0].mxu0
        %v7435 = vadd.f32 0.0, %v7434
        %v7436 = vpop.f32.mrb[0].mxu0
        %7437 = vmatprep.mubr.bf16.mxu0 0
        %7438 = vmatmul.mubr.bf16.gmra.mrb[0].mxu0 %v7297
        %v7439 = vpop.f32.mrb[0].mxu0
        %v7440 = vadd.f32 0.0, %v7439
        %v7441 = vpop.f32.mrb[0].mxu0
        %v7442 = vpop.f32.mrb[0].mxu0
        %v7443 = vadd.f32 0.0, %v7442
        %v7444 = vpop.f32.mrb[0].mxu0
        %7445 = vmatprep.mubr.bf16.mxu0 0
        %7446 = vmatmul.mubr.bf16.gmra.mrb[0].mxu0 %v7298
        %v7447 = vpop.f32.mrb[0].mxu0
        %v7448 = vadd.f32 0.0, %v7447
        %v7449 = vpop.f32.mrb[0].mxu0
        %v7450 = vpop.f32.mrb[0].mxu0
        %v7451 = vadd.f32 0.0, %v7450
        %v7452 = vpop.f32.mrb[0].mxu0
        %7453 = vmatprep.mubr.bf16.mxu0 0
        %7454 = vmatmul.mubr.bf16.gmra.mrb[0].mxu0 %v7299
        %v7455 = vpop.f32.mrb[0].mxu0
        %v7456 = vadd.f32 0.0, %v7455
        %v7457 = vpop.f32.mrb[0].mxu0
        %v7458 = vpop.f32.mrb[0].mxu0
        %v7459 = vadd.f32 0.0, %v7458
        %v7460 = vpop.f32.mrb[0].mxu0
        %7461 = vmatprep.mubr.bf16.mxu0 0
        %7462 = vmatmul.mubr.bf16.gmra.mrb[0].mxu0 %v7300
        %v7463 = vpop.f32.mrb[0].mxu0
        %v7464 = vadd.f32 0.0, %v7463
        %v7465 = vpop.f32.mrb[0].mxu0
        %v7466 = vpop.f32.mrb[0].mxu0
        %v7467 = vadd.f32 0.0, %v7466
        %v7468 = vpop.f32.mrb[0].mxu0
        %7469 = vmatprep.mubr.bf16.mxu0 0
        %7470 = vmatmul.mubr.bf16.gmra.mrb[0].mxu0 %v7301
        %v7471 = vpop.f32.mrb[0].mxu0
        %v7472 = vadd.f32 0.0, %v7471
        %v7473 = vpop.f32.mrb[0].mxu0
        %v7474 = vpop.f32.mrb[0].mxu0
        %v7475 = vadd.f32 0.0, %v7474
        %v7476 = vpop.f32.mrb[0].mxu0
        %7477 = vmatprep.mubr.bf16.mxu0 0
        %7478 = vmatmul.mubr.bf16.gmra.mrb[0].mxu0 %v7302
        %v7479 = vpop.f32.mrb[0].mxu0
        %v7480 = vadd.f32 0.0, %v7479
        %v7481 = vpop.f32.mrb[0].mxu0
        %v7482 = vpop.f32.mrb[0].mxu0
        %v7483 = vadd.f32 0.0, %v7482
        %v7484 = vpop.f32.mrb[0].mxu0
        %7485 = vmatprep.mubr.bf16.mxu0 0
        %7486 = vmatmul.mubr.bf16.gmra.mrb[0].mxu0 %v7303
        %v7487 = vpop.f32.mrb[0].mxu0
        %v7488 = vadd.f32 0.0, %v7487
        %v7489 = vpop.f32.mrb[0].mxu0
        %v7490 = vpop.f32.mrb[0].mxu0
        %v7491 = vadd.f32 0.0, %v7490
        %v7492 = vpop.f32.mrb[0].mxu0
        %7493 = vmatprep.mubr.bf16.mxu0 0
        %7494 = vmatmul.mubr.bf16.gmra.mrb[0].mxu0 %v7304
        %v7495 = vpop.f32.mrb[0].mxu0
        %v7496 = vadd.f32 0.0, %v7495
        %v7497 = vpop.f32.mrb[0].mxu0
        %v7498 = vpop.f32.mrb[0].mxu0
        %v7499 = vadd.f32 0.0, %v7498
        %v7500 = vpop.f32.mrb[0].mxu0
        %7501 = vmatprep.mubr.bf16.mxu0 0
        %7502 = vmatmul.mubr.bf16.gmra.mrb[0].mxu0 %v7305
        %v7503 = vpop.f32.mrb[0].mxu0
        %v7504 = vadd.f32 0.0, %v7503
        %v7505 = vpop.f32.mrb[0].mxu0
        %v7506 = vpop.f32.mrb[0].mxu0
        %v7507 = vadd.f32 0.0, %v7506
        %v7508 = vpop.f32.mrb[0].mxu0
        %7509 = vmatprep.mubr.bf16.mxu0 0
        %7510 = vmatmul.mubr.bf16.gmra.mrb[0].mxu0 %v7306
        %v7511 = vpop.f32.mrb[0].mxu0
        %v7512 = vadd.f32 0.0, %v7511
        %v7513 = vpop.f32.mrb[0].mxu0
        %v7514 = vpop.f32.mrb[0].mxu0
        %v7515 = vadd.f32 0.0, %v7514
        %v7516 = vpop.f32.mrb[0].mxu0
        %7517 = vmatprep.mubr.bf16.mxu0 0
        %7518 = vmatmul.mubr.bf16.gmra.mrb[0].mxu0 %v7307
        %v7519 = vpop.f32.mrb[0].mxu0
        %v7520 = vadd.f32 0.0, %v7519
        %v7521 = vpop.f32.mrb[0].mxu0
        %v7522 = vpop.f32.mrb[0].mxu0
        %v7523 = vadd.f32 0.0, %v7522
        %v7524 = vpop.f32.mrb[0].mxu0
        %7525 = vmatprep.mubr.bf16.mxu0 0
        %7526 = vmatmul.mubr.bf16.gmra.mrb[0].mxu0 %v7308
        %v7527 = vpop.f32.mrb[0].mxu0
        %v7528 = vadd.f32 0.0, %v7527
        %v7529 = vpop.f32.mrb[0].mxu0
        %v7530 = vpop.f32.mrb[0].mxu0
        %v7531 = vadd.f32 0.0, %v7530
        %v7532 = vpop.f32.mrb[0].mxu0
        %7533 = vdwg.mxu0
        %v7534 = vadd.f32 %v7148, %v7408
        %v7535 = vadd.f32 %v7149, %v7411
        %v7536 = vadd.f32 %v7150, %v7416
        %v7537 = vadd.f32 %v7151, %v7419
        %v7538 = vadd.f32 %v7152, %v7424
        %v7539 = vadd.f32 %v7153, %v7427
        %v7540 = vadd.f32 %v7154, %v7432
        %v7541 = vadd.f32 %v7155, %v7435
        %v7542 = vadd.f32 %v7156, %v7440
        %v7543 = vadd.f32 %v7157, %v7443
        %v7544 = vadd.f32 %v7158, %v7448
        %v7545 = vadd.f32 %v7159, %v7451
        %v7546 = vadd.f32 %v7160, %v7456
        %v7547 = vadd.f32 %v7161, %v7459
        %v7548 = vadd.f32 %v7162, %v7464
        %v7549 = vadd.f32 %v7163, %v7467
        %v7550 = vadd.f32 %v7164, %v7472
        %v7551 = vadd.f32 %v7165, %v7475
        %v7552 = vadd.f32 %v7166, %v7480
        %v7553 = vadd.f32 %v7167, %v7483
        %v7554 = vadd.f32 %v7168, %v7488
        %v7555 = vadd.f32 %v7169, %v7491
        %v7556 = vadd.f32 %v7170, %v7496
        %v7557 = vadd.f32 %v7171, %v7499
        %v7558 = vadd.f32 %v7172, %v7504
        %v7559 = vadd.f32 %v7173, %v7507
        %v7560 = vadd.f32 %v7174, %v7512
        %v7561 = vadd.f32 %v7175, %v7515
        %v7562 = vadd.f32 %v7176, %v7520
        %v7563 = vadd.f32 %v7177, %v7523
        %v7564 = vadd.f32 %v7178, %v7528
        %v7565 = vadd.f32 %v7179, %v7531
        %v7566 = vld [vmem:[%s5536] sm:$0xf]
        %v7567 = vld [vmem:[%s5536 + $0x4] sm:$0xf]
        %v7568 = vld [vmem:[%s5536 + $0x8] sm:$0x1]
        %v7569 = vld [vmem:[%s5536 + $0xc] sm:$0xf]
        %v7570 = vld [vmem:[%s5536 + $0x10] sm:$0xf]
        %v7571 = vld [vmem:[%s5536 + $0x14] sm:$0x1]
        %v7572 = vld [vmem:[%s5536 + $0x18] sm:$0xf]
        %v7573 = vld [vmem:[%s5536 + $0x1c] sm:$0xf]
        %v7574 = vld [vmem:[%s5536 + $0x20] sm:$0x1]
        %v7575 = vld [vmem:[%s5536 + $0x24] sm:$0xf]
        %v7576 = vld [vmem:[%s5536 + $0x28] sm:$0xf]
        %v7577 = vld [vmem:[%s5536 + $0x2c] sm:$0x1]
        %v7578 = vld [vmem:[%s5536 + $0x30] sm:$0xf]
        %v7579 = vld [vmem:[%s5536 + $0x34] sm:$0xf]
        %v7580 = vld [vmem:[%s5536 + $0x38] sm:$0x1]
        %v7581 = vld [vmem:[%s5536 + $0x3c] sm:$0xf]
        %v7582 = vld [vmem:[%s5536 + $0x40] sm:$0xf]
        %v7583 = vld [vmem:[%s5536 + $0x44] sm:$0x1]
        %v7584 = vld [vmem:[%s5536 + $0x48] sm:$0xf]
        %v7585 = vld [vmem:[%s5536 + $0x4c] sm:$0xf]
        %v7586 = vld [vmem:[%s5536 + $0x50] sm:$0x1]
        %v7587 = vld [vmem:[%s5536 + $0x54] sm:$0xf]
        %v7588 = vld [vmem:[%s5536 + $0x58] sm:$0xf]
        %v7589 = vld [vmem:[%s5536 + $0x5c] sm:$0x1]
        %v7590 = vld [vmem:[%s5536 + $0x60] sm:$0xf]
        %v7591 = vld [vmem:[%s5536 + $0x64] sm:$0xf]
        %v7592 = vld [vmem:[%s5536 + $0x68] sm:$0x1]
        %v7593 = vld [vmem:[%s5536 + $0x6c] sm:$0xf]
        %v7594 = vld [vmem:[%s5536 + $0x70] sm:$0xf]
        %v7595 = vld [vmem:[%s5536 + $0x74] sm:$0x1]
        %v7596 = vld [vmem:[%s5536 + $0x78] sm:$0xf]
        %v7597 = vld [vmem:[%s5536 + $0x7c] sm:$0xf]
        %v7598 = vld [vmem:[%s5536 + $0x80] sm:$0x1]
        %v7599 = vld [vmem:[%s5536 + $0x84] sm:$0xf]
        %v7600 = vld [vmem:[%s5536 + $0x88] sm:$0xf]
        %v7601 = vld [vmem:[%s5536 + $0x8c] sm:$0x1]
        %v7602 = vld [vmem:[%s5536 + $0x90] sm:$0xf]
        %v7603 = vld [vmem:[%s5536 + $0x94] sm:$0xf]
        %v7604 = vld [vmem:[%s5536 + $0x98] sm:$0x1]
        %v7605 = vld [vmem:[%s5536 + $0x9c] sm:$0xf]
        %v7606 = vld [vmem:[%s5536 + $0xa0] sm:$0xf]
        %v7607 = vld [vmem:[%s5536 + $0xa4] sm:$0x1]
        %v7608 = vld [vmem:[%s5536 + $0xa8] sm:$0xf]
        %v7609 = vld [vmem:[%s5536 + $0xac] sm:$0xf]
        %v7610 = vld [vmem:[%s5536 + $0xb0] sm:$0x1]
        %v7611 = vld [vmem:[%s5536 + $0xb4] sm:$0xf]
        %v7612 = vld [vmem:[%s5536 + $0xb8] sm:$0xf]
        %v7613 = vld [vmem:[%s5536 + $0xbc] sm:$0x1]
        %v7615 = vshrl.u32 %v7566, 16
        %v7617 = vrot.slane %v7615, 4
        %v7618 = vshll.u32 %v7566, 16
        %v7620 = vrot.slane %v7618, 5
        %v7621 = vor.u32 %v7617, %v7620
        %v7622 = vrot.slane %v7621, 4
        %v7624 = vshll.u32 %v7567, 16
        %v7626 = vrot.slane %v7624, 5
        %v7627 = vsel %vm306, %v7622, %v7626
        %v7628 = vshrl.u32 %v7567, 16
        %v7630 = vrot.slane %v7628, 4
        %v7631 = vor.u32 %v7630, %v7626
        %v7632 = vrot.slane %v7631, 4
        %v7634 = vshll.u32 %v7568, 16
        %v7636 = vrot.slane %v7634, 5
        %v7637 = vsel %vm306, %v7632, %v7636
        %v7639 = vshrl.u32 %v7569, 16
        %v7641 = vrot.slane %v7639, 4
        %v7642 = vshll.u32 %v7569, 16
        %v7644 = vrot.slane %v7642, 5
        %v7645 = vor.u32 %v7641, %v7644
        %v7646 = vrot.slane %v7645, 4
        %v7648 = vshll.u32 %v7570, 16
        %v7650 = vrot.slane %v7648, 5
        %v7651 = vsel %vm306, %v7646, %v7650
        %v7652 = vshrl.u32 %v7570, 16
        %v7654 = vrot.slane %v7652, 4
        %v7655 = vor.u32 %v7654, %v7650
        %v7656 = vrot.slane %v7655, 4
        %v7658 = vshll.u32 %v7571, 16
        %v7660 = vrot.slane %v7658, 5
        %v7661 = vsel %vm306, %v7656, %v7660
        %v7663 = vshrl.u32 %v7572, 16
        %v7665 = vrot.slane %v7663, 4
        %v7666 = vshll.u32 %v7572, 16
        %v7668 = vrot.slane %v7666, 5
        %v7669 = vor.u32 %v7665, %v7668
        %v7670 = vrot.slane %v7669, 4
        %v7672 = vshll.u32 %v7573, 16
        %v7674 = vrot.slane %v7672, 5
        %v7675 = vsel %vm306, %v7670, %v7674
        %v7676 = vshrl.u32 %v7573, 16
        %v7678 = vrot.slane %v7676, 4
        %v7679 = vor.u32 %v7678, %v7674
        %v7680 = vrot.slane %v7679, 4
        %v7682 = vshll.u32 %v7574, 16
        %v7684 = vrot.slane %v7682, 5
        %v7685 = vsel %vm306, %v7680, %v7684
        %v7687 = vshrl.u32 %v7575, 16
        %v7689 = vrot.slane %v7687, 4
        %v7690 = vshll.u32 %v7575, 16
        %v7692 = vrot.slane %v7690, 5
        %v7693 = vor.u32 %v7689, %v7692
        %v7694 = vrot.slane %v7693, 4
        %v7696 = vshll.u32 %v7576, 16
        %v7698 = vrot.slane %v7696, 5
        %v7699 = vsel %vm306, %v7694, %v7698
        %v7700 = vshrl.u32 %v7576, 16
        %v7702 = vrot.slane %v7700, 4
        %v7703 = vor.u32 %v7702, %v7698
        %v7704 = vrot.slane %v7703, 4
        %v7706 = vshll.u32 %v7577, 16
        %v7708 = vrot.slane %v7706, 5
        %v7709 = vsel %vm306, %v7704, %v7708
        %v7711 = vshrl.u32 %v7578, 16
        %v7713 = vrot.slane %v7711, 4
        %v7714 = vshll.u32 %v7578, 16
        %v7716 = vrot.slane %v7714, 5
        %v7717 = vor.u32 %v7713, %v7716
        %v7718 = vrot.slane %v7717, 4
        %v7720 = vshll.u32 %v7579, 16
        %v7722 = vrot.slane %v7720, 5
        %v7723 = vsel %vm306, %v7718, %v7722
        %v7724 = vshrl.u32 %v7579, 16
        %v7726 = vrot.slane %v7724, 4
        %v7727 = vor.u32 %v7726, %v7722
        %v7728 = vrot.slane %v7727, 4
        %v7730 = vshll.u32 %v7580, 16
        %v7732 = vrot.slane %v7730, 5
        %v7733 = vsel %vm306, %v7728, %v7732
        %v7735 = vshrl.u32 %v7581, 16
        %v7737 = vrot.slane %v7735, 4
        %v7738 = vshll.u32 %v7581, 16
        %v7740 = vrot.slane %v7738, 5
        %v7741 = vor.u32 %v7737, %v7740
        %v7742 = vrot.slane %v7741, 4
        %v7744 = vshll.u32 %v7582, 16
        %v7746 = vrot.slane %v7744, 5
        %v7747 = vsel %vm306, %v7742, %v7746
        %v7748 = vshrl.u32 %v7582, 16
        %v7750 = vrot.slane %v7748, 4
        %v7751 = vor.u32 %v7750, %v7746
        %v7752 = vrot.slane %v7751, 4
        %v7754 = vshll.u32 %v7583, 16
        %v7756 = vrot.slane %v7754, 5
        %v7757 = vsel %vm306, %v7752, %v7756
        %v7759 = vshrl.u32 %v7584, 16
        %v7761 = vrot.slane %v7759, 4
        %v7762 = vshll.u32 %v7584, 16
        %v7764 = vrot.slane %v7762, 5
        %v7765 = vor.u32 %v7761, %v7764
        %v7766 = vrot.slane %v7765, 4
        %v7768 = vshll.u32 %v7585, 16
        %v7770 = vrot.slane %v7768, 5
        %v7771 = vsel %vm306, %v7766, %v7770
        %v7772 = vshrl.u32 %v7585, 16
        %v7774 = vrot.slane %v7772, 4
        %v7775 = vor.u32 %v7774, %v7770
        %v7776 = vrot.slane %v7775, 4
        %v7778 = vshll.u32 %v7586, 16
        %v7780 = vrot.slane %v7778, 5
        %v7781 = vsel %vm306, %v7776, %v7780
        %v7783 = vshrl.u32 %v7587, 16
        %v7785 = vrot.slane %v7783, 4
        %v7786 = vshll.u32 %v7587, 16
        %v7788 = vrot.slane %v7786, 5
        %v7789 = vor.u32 %v7785, %v7788
        %v7790 = vrot.slane %v7789, 4
        %v7792 = vshll.u32 %v7588, 16
        %v7794 = vrot.slane %v7792, 5
        %v7795 = vsel %vm306, %v7790, %v7794
        %v7796 = vshrl.u32 %v7588, 16
        %v7798 = vrot.slane %v7796, 4
        %v7799 = vor.u32 %v7798, %v7794
        %v7800 = vrot.slane %v7799, 4
        %v7802 = vshll.u32 %v7589, 16
        %v7804 = vrot.slane %v7802, 5
        %v7805 = vsel %vm306, %v7800, %v7804
        %v7807 = vshrl.u32 %v7590, 16
        %v7809 = vrot.slane %v7807, 4
        %v7810 = vshll.u32 %v7590, 16
        %v7812 = vrot.slane %v7810, 5
        %v7813 = vor.u32 %v7809, %v7812
        %v7814 = vrot.slane %v7813, 4
        %v7816 = vshll.u32 %v7591, 16
        %v7818 = vrot.slane %v7816, 5
        %v7819 = vsel %vm306, %v7814, %v7818
        %v7820 = vshrl.u32 %v7591, 16
        %v7822 = vrot.slane %v7820, 4
        %v7823 = vor.u32 %v7822, %v7818
        %v7824 = vrot.slane %v7823, 4
        %v7826 = vshll.u32 %v7592, 16
        %v7828 = vrot.slane %v7826, 5
        %v7829 = vsel %vm306, %v7824, %v7828
        %v7831 = vshrl.u32 %v7593, 16
        %v7833 = vrot.slane %v7831, 4
        %v7834 = vshll.u32 %v7593, 16
        %v7836 = vrot.slane %v7834, 5
        %v7837 = vor.u32 %v7833, %v7836
        %v7838 = vrot.slane %v7837, 4
        %v7840 = vshll.u32 %v7594, 16
        %v7842 = vrot.slane %v7840, 5
        %v7843 = vsel %vm306, %v7838, %v7842
        %v7844 = vshrl.u32 %v7594, 16
        %v7846 = vrot.slane %v7844, 4
        %v7847 = vor.u32 %v7846, %v7842
        %v7848 = vrot.slane %v7847, 4
        %v7850 = vshll.u32 %v7595, 16
        %v7852 = vrot.slane %v7850, 5
        %v7853 = vsel %vm306, %v7848, %v7852
        %v7855 = vshrl.u32 %v7596, 16
        %v7857 = vrot.slane %v7855, 4
        %v7858 = vshll.u32 %v7596, 16
        %v7860 = vrot.slane %v7858, 5
        %v7861 = vor.u32 %v7857, %v7860
        %v7862 = vrot.slane %v7861, 4
        %v7864 = vshll.u32 %v7597, 16
        %v7866 = vrot.slane %v7864, 5
        %v7867 = vsel %vm306, %v7862, %v7866
        %v7868 = vshrl.u32 %v7597, 16
        %v7870 = vrot.slane %v7868, 4
        %v7871 = vor.u32 %v7870, %v7866
        %v7872 = vrot.slane %v7871, 4
        %v7874 = vshll.u32 %v7598, 16
        %v7876 = vrot.slane %v7874, 5
        %v7877 = vsel %vm306, %v7872, %v7876
        %v7879 = vshrl.u32 %v7599, 16
        %v7881 = vrot.slane %v7879, 4
        %v7882 = vshll.u32 %v7599, 16
        %v7884 = vrot.slane %v7882, 5
        %v7885 = vor.u32 %v7881, %v7884
        %v7886 = vrot.slane %v7885, 4
        %v7888 = vshll.u32 %v7600, 16
        %v7890 = vrot.slane %v7888, 5
        %v7891 = vsel %vm306, %v7886, %v7890
        %v7892 = vshrl.u32 %v7600, 16
        %v7894 = vrot.slane %v7892, 4
        %v7895 = vor.u32 %v7894, %v7890
        %v7896 = vrot.slane %v7895, 4
        %v7898 = vshll.u32 %v7601, 16
        %v7900 = vrot.slane %v7898, 5
        %v7901 = vsel %vm306, %v7896, %v7900
        %v7903 = vshrl.u32 %v7602, 16
        %v7905 = vrot.slane %v7903, 4
        %v7906 = vshll.u32 %v7602, 16
        %v7908 = vrot.slane %v7906, 5
        %v7909 = vor.u32 %v7905, %v7908
        %v7910 = vrot.slane %v7909, 4
        %v7912 = vshll.u32 %v7603, 16
        %v7914 = vrot.slane %v7912, 5
        %v7915 = vsel %vm306, %v7910, %v7914
        %v7916 = vshrl.u32 %v7603, 16
        %v7918 = vrot.slane %v7916, 4
        %v7919 = vor.u32 %v7918, %v7914
        %v7920 = vrot.slane %v7919, 4
        %v7922 = vshll.u32 %v7604, 16
        %v7924 = vrot.slane %v7922, 5
        %v7925 = vsel %vm306, %v7920, %v7924
        %v7927 = vshrl.u32 %v7605, 16
        %v7929 = vrot.slane %v7927, 4
        %v7930 = vshll.u32 %v7605, 16
        %v7932 = vrot.slane %v7930, 5
        %v7933 = vor.u32 %v7929, %v7932
        %v7934 = vrot.slane %v7933, 4
        %v7936 = vshll.u32 %v7606, 16
        %v7938 = vrot.slane %v7936, 5
        %v7939 = vsel %vm306, %v7934, %v7938
        %v7940 = vshrl.u32 %v7606, 16
        %v7942 = vrot.slane %v7940, 4
        %v7943 = vor.u32 %v7942, %v7938
        %v7944 = vrot.slane %v7943, 4
        %v7946 = vshll.u32 %v7607, 16
        %v7948 = vrot.slane %v7946, 5
        %v7949 = vsel %vm306, %v7944, %v7948
        %v7951 = vshrl.u32 %v7608, 16
        %v7953 = vrot.slane %v7951, 4
        %v7954 = vshll.u32 %v7608, 16
        %v7956 = vrot.slane %v7954, 5
        %v7957 = vor.u32 %v7953, %v7956
        %v7958 = vrot.slane %v7957, 4
        %v7960 = vshll.u32 %v7609, 16
        %v7962 = vrot.slane %v7960, 5
        %v7963 = vsel %vm306, %v7958, %v7962
        %v7964 = vshrl.u32 %v7609, 16
        %v7966 = vrot.slane %v7964, 4
        %v7967 = vor.u32 %v7966, %v7962
        %v7968 = vrot.slane %v7967, 4
        %v7970 = vshll.u32 %v7610, 16
        %v7972 = vrot.slane %v7970, 5
        %v7973 = vsel %vm306, %v7968, %v7972
        %v7975 = vshrl.u32 %v7611, 16
        %v7977 = vrot.slane %v7975, 4
        %v7978 = vshll.u32 %v7611, 16
        %v7980 = vrot.slane %v7978, 5
        %v7981 = vor.u32 %v7977, %v7980
        %v7982 = vrot.slane %v7981, 4
        %v7984 = vshll.u32 %v7612, 16
        %v7986 = vrot.slane %v7984, 5
        %v7987 = vsel %vm306, %v7982, %v7986
        %v7988 = vshrl.u32 %v7612, 16
        %v7990 = vrot.slane %v7988, 4
        %v7991 = vor.u32 %v7990, %v7986
        %v7992 = vrot.slane %v7991, 4
        %v7994 = vshll.u32 %v7613, 16
        %v7996 = vrot.slane %v7994, 5
        %v7997 = vsel %vm306, %v7992, %v7996
        %s7998 = scalar_lea.vmem [#allocation3], 832
        %v7999 = vld [vmem:[%s7998] sm:$0xf]
        %v8000 = vld [vmem:[%s7998 + $0x4] sm:$0xf]
        %v8001 = vld [vmem:[%s7998 + $0x8] sm:$0xf]
        %v8002 = vld [vmem:[%s7998 + $0xc] sm:$0xf]
        %v8003 = vld [vmem:[%s7998 + $0x10] sm:$0xf]
        %v8004 = vld [vmem:[%s7998 + $0x14] sm:$0xf]
        %v8005 = vld [vmem:[%s7998 + $0x18] sm:$0xf]
        %v8006 = vld [vmem:[%s7998 + $0x1c] sm:$0xf]
        %v8007 = vld [vmem:[%s7998 + $0x20] sm:$0xf]
        %v8008 = vld [vmem:[%s7998 + $0x24] sm:$0xf]
        %v8009 = vld [vmem:[%s7998 + $0x28] sm:$0xf]
        %v8010 = vld [vmem:[%s7998 + $0x2c] sm:$0xf]
        %v8011 = vld [vmem:[%s7998 + $0x30] sm:$0xf]
        %v8012 = vld [vmem:[%s7998 + $0x34] sm:$0xf]
        %v8013 = vld [vmem:[%s7998 + $0x38] sm:$0xf]
        %v8014 = vld [vmem:[%s7998 + $0x3c] sm:$0xf]
        %v8015 = vunpack.c.l.b16 %v7627
        %v8016 = vunpack.c.l.b16 %v7637
        %v8017 = vunpack.c.l.b16 %v7651
        %v8018 = vunpack.c.l.b16 %v7661
        %v8019 = vunpack.c.l.b16 %v7675
        %v8020 = vunpack.c.l.b16 %v7685
        %v8021 = vunpack.c.l.b16 %v7699
        %v8022 = vunpack.c.l.b16 %v7709
        %v8023 = vunpack.c.l.b16 %v7723
        %v8024 = vunpack.c.l.b16 %v7733
        %v8025 = vunpack.c.l.b16 %v7747
        %v8026 = vunpack.c.l.b16 %v7757
        %v8027 = vunpack.c.l.b16 %v7771
        %v8028 = vunpack.c.l.b16 %v7781
        %v8029 = vunpack.c.l.b16 %v7795
        %v8030 = vunpack.c.l.b16 %v7805
        %v8031 = vunpack.c.l.b16 %v7819
        %v8032 = vunpack.c.l.b16 %v7829
        %v8033 = vunpack.c.l.b16 %v7843
        %v8034 = vunpack.c.l.b16 %v7853
        %v8035 = vunpack.c.l.b16 %v7867
        %v8036 = vunpack.c.l.b16 %v7877
        %v8037 = vunpack.c.l.b16 %v7891
        %v8038 = vunpack.c.l.b16 %v7901
        %v8039 = vunpack.c.l.b16 %v7915
        %v8040 = vunpack.c.l.b16 %v7925
        %v8041 = vunpack.c.l.b16 %v7939
        %v8042 = vunpack.c.l.b16 %v7949
        %v8043 = vunpack.c.l.b16 %v7963
        %v8044 = vunpack.c.l.b16 %v7973
        %v8045 = vunpack.c.l.b16 %v7987
        %v8046 = vunpack.c.l.b16 %v7997
        %v8047 = vpack.c.b16 %v8016, %v8015
        %v8048 = vpack.c.b16 %v8018, %v8017
        %v8049 = vpack.c.b16 %v8020, %v8019
        %v8050 = vpack.c.b16 %v8022, %v8021
        %v8051 = vpack.c.b16 %v8024, %v8023
        %v8052 = vpack.c.b16 %v8026, %v8025
        %v8053 = vpack.c.b16 %v8028, %v8027
        %v8054 = vpack.c.b16 %v8030, %v8029
        %v8055 = vpack.c.b16 %v8032, %v8031
        %v8056 = vpack.c.b16 %v8034, %v8033
        %v8057 = vpack.c.b16 %v8036, %v8035
        %v8058 = vpack.c.b16 %v8038, %v8037
        %v8059 = vpack.c.b16 %v8040, %v8039
        %v8060 = vpack.c.b16 %v8042, %v8041
        %v8061 = vpack.c.b16 %v8044, %v8043
        %v8062 = vpack.c.b16 %v8046, %v8045
        %v8095 = vunpack.c.l.b16 %v7999
        %v8096 = vunpack.c.l.b16 %v8000
        %v8097 = vunpack.c.l.b16 %v8001
        %v8098 = vunpack.c.l.b16 %v8002
        %v8099 = vunpack.c.l.b16 %v8003
        %v8100 = vunpack.c.l.b16 %v8004
        %v8101 = vunpack.c.l.b16 %v8005
        %v8102 = vunpack.c.l.b16 %v8006
        %v8103 = vunpack.c.l.b16 %v8007
        %v8104 = vunpack.c.l.b16 %v8008
        %v8105 = vunpack.c.l.b16 %v8009
        %v8106 = vunpack.c.l.b16 %v8010
        %v8107 = vunpack.c.l.b16 %v8011
        %v8108 = vunpack.c.l.b16 %v8012
        %v8109 = vunpack.c.l.b16 %v8013
        %v8110 = vunpack.c.l.b16 %v8014
        %v8111 = vpack.c.b16 %v8096, %v8095
        %v8112 = vpack.c.b16 %v8098, %v8097
        %v8113 = vpack.c.b16 %v8100, %v8099
        %v8114 = vpack.c.b16 %v8102, %v8101
        %v8115 = vpack.c.b16 %v8104, %v8103
        %v8116 = vpack.c.b16 %v8106, %v8105
        %v8117 = vpack.c.b16 %v8108, %v8107
        %v8118 = vpack.c.b16 %v8110, %v8109
        %8127 = vmatprep.subr.bf16.mxu0 0
        %8128 = vmatpush1.bf16.msra.mxu0 %v8111
        %8129 = vmatprep.subr.bf16.mxu0 0
        %8130 = vmatpush1.bf16.msra.mxu0 %v8112
        %8131 = vmatprep.subr.bf16.mxu0 0
        %8132 = vmatpush1.bf16.msra.mxu0 %v8113
        %8133 = vmatprep.subr.bf16.mxu0 0
        %8134 = vmatpush1.bf16.msra.mxu0 %v8114
        %8135 = vmatprep.subr.bf16.mxu0 0
        %8136 = vmatpush1.bf16.msra.mxu0 %v8115
        %8137 = vmatprep.subr.bf16.mxu0 0
        %8138 = vmatpush1.bf16.msra.mxu0 %v8116
        %8139 = vmatprep.subr.bf16.mxu0 0
        %8140 = vmatpush1.bf16.msra.mxu0 %v8117
        %8141 = vmatprep.subr.bf16.mxu0 0
        %8142 = vmatpush1.bf16.msra.mxu0 %v8118
        %8143 = vmatprep.subr.bf16.mxu0 0
        %8144 = vmatpush1.bf16.msra.mxu0 0
        %8145 = vmatprep.subr.bf16.mxu0 0
        %8146 = vmatpush1.bf16.msra.mxu0 0
        %8147 = vmatprep.subr.bf16.mxu0 0
        %8148 = vmatpush1.bf16.msra.mxu0 0
        %8149 = vmatprep.subr.bf16.mxu0 0
        %8150 = vmatpush1.bf16.msra.mxu0 0
        %8151 = vmatprep.subr.bf16.mxu0 0
        %8152 = vmatpush1.bf16.msra.mxu0 0
        %8153 = vmatprep.subr.bf16.mxu0 0
        %8154 = vmatpush1.bf16.msra.mxu0 0
        %8155 = vmatprep.subr.bf16.mxu0 0
        %8156 = vmatpush1.bf16.msra.mxu0 0
        %8157 = vmatprep.subr.bf16.mxu0 0
        %8158 = vmatpush1.bf16.msra.mxu0 0
        %8159 = vmatprep.mubr.bf16.mxu0 0
        %8160 = vmatmul.mubr.bf16.gmra.mrb[0].mxu0 %v8047
        %v8161 = vpop.f32.mrb[0].mxu0
        %v8162 = vadd.f32 0.0, %v8161
        %v8163 = vpop.f32.mrb[0].mxu0
        %v8164 = vpop.f32.mrb[0].mxu0
        %v8165 = vadd.f32 0.0, %v8164
        %v8166 = vpop.f32.mrb[0].mxu0
        %8167 = vmatprep.mubr.bf16.mxu0 0
        %8168 = vmatmul.mubr.bf16.gmra.mrb[0].mxu0 %v8048
        %v8169 = vpop.f32.mrb[0].mxu0
        %v8170 = vadd.f32 0.0, %v8169
        %v8171 = vpop.f32.mrb[0].mxu0
        %v8172 = vpop.f32.mrb[0].mxu0
        %v8173 = vadd.f32 0.0, %v8172
        %v8174 = vpop.f32.mrb[0].mxu0
        %8175 = vmatprep.mubr.bf16.mxu0 0
        %8176 = vmatmul.mubr.bf16.gmra.mrb[0].mxu0 %v8049
        %v8177 = vpop.f32.mrb[0].mxu0
        %v8178 = vadd.f32 0.0, %v8177
        %v8179 = vpop.f32.mrb[0].mxu0
        %v8180 = vpop.f32.mrb[0].mxu0
        %v8181 = vadd.f32 0.0, %v8180
        %v8182 = vpop.f32.mrb[0].mxu0
        %8183 = vmatprep.mubr.bf16.mxu0 0
        %8184 = vmatmul.mubr.bf16.gmra.mrb[0].mxu0 %v8050
        %v8185 = vpop.f32.mrb[0].mxu0
        %v8186 = vadd.f32 0.0, %v8185
        %v8187 = vpop.f32.mrb[0].mxu0
        %v8188 = vpop.f32.mrb[0].mxu0
        %v8189 = vadd.f32 0.0, %v8188
        %v8190 = vpop.f32.mrb[0].mxu0
        %8191 = vmatprep.mubr.bf16.mxu0 0
        %8192 = vmatmul.mubr.bf16.gmra.mrb[0].mxu0 %v8051
        %v8193 = vpop.f32.mrb[0].mxu0
        %v8194 = vadd.f32 0.0, %v8193
        %v8195 = vpop.f32.mrb[0].mxu0
        %v8196 = vpop.f32.mrb[0].mxu0
        %v8197 = vadd.f32 0.0, %v8196
        %v8198 = vpop.f32.mrb[0].mxu0
        %8199 = vmatprep.mubr.bf16.mxu0 0
        %8200 = vmatmul.mubr.bf16.gmra.mrb[0].mxu0 %v8052
        %v8201 = vpop.f32.mrb[0].mxu0
        %v8202 = vadd.f32 0.0, %v8201
        %v8203 = vpop.f32.mrb[0].mxu0
        %v8204 = vpop.f32.mrb[0].mxu0
        %v8205 = vadd.f32 0.0, %v8204
        %v8206 = vpop.f32.mrb[0].mxu0
        %8207 = vmatprep.mubr.bf16.mxu0 0
        %8208 = vmatmul.mubr.bf16.gmra.mrb[0].mxu0 %v8053
        %v8209 = vpop.f32.mrb[0].mxu0
        %v8210 = vadd.f32 0.0, %v8209
        %v8211 = vpop.f32.mrb[0].mxu0
        %v8212 = vpop.f32.mrb[0].mxu0
        %v8213 = vadd.f32 0.0, %v8212
        %v8214 = vpop.f32.mrb[0].mxu0
        %8215 = vmatprep.mubr.bf16.mxu0 0
        %8216 = vmatmul.mubr.bf16.gmra.mrb[0].mxu0 %v8054
        %v8217 = vpop.f32.mrb[0].mxu0
        %v8218 = vadd.f32 0.0, %v8217
        %v8219 = vpop.f32.mrb[0].mxu0
        %v8220 = vpop.f32.mrb[0].mxu0
        %v8221 = vadd.f32 0.0, %v8220
        %v8222 = vpop.f32.mrb[0].mxu0
        %8223 = vmatprep.mubr.bf16.mxu0 0
        %8224 = vmatmul.mubr.bf16.gmra.mrb[0].mxu0 %v8055
        %v8225 = vpop.f32.mrb[0].mxu0
        %v8226 = vadd.f32 0.0, %v8225
        %v8227 = vpop.f32.mrb[0].mxu0
        %v8228 = vpop.f32.mrb[0].mxu0
        %v8229 = vadd.f32 0.0, %v8228
        %v8230 = vpop.f32.mrb[0].mxu0
        %8231 = vmatprep.mubr.bf16.mxu0 0
        %8232 = vmatmul.mubr.bf16.gmra.mrb[0].mxu0 %v8056
        %v8233 = vpop.f32.mrb[0].mxu0
        %v8234 = vadd.f32 0.0, %v8233
        %v8235 = vpop.f32.mrb[0].mxu0
        %v8236 = vpop.f32.mrb[0].mxu0
        %v8237 = vadd.f32 0.0, %v8236
        %v8238 = vpop.f32.mrb[0].mxu0
        %8239 = vmatprep.mubr.bf16.mxu0 0
        %8240 = vmatmul.mubr.bf16.gmra.mrb[0].mxu0 %v8057
        %v8241 = vpop.f32.mrb[0].mxu0
        %v8242 = vadd.f32 0.0, %v8241
        %v8243 = vpop.f32.mrb[0].mxu0
        %v8244 = vpop.f32.mrb[0].mxu0
        %v8245 = vadd.f32 0.0, %v8244
        %v8246 = vpop.f32.mrb[0].mxu0
        %8247 = vmatprep.mubr.bf16.mxu0 0
        %8248 = vmatmul.mubr.bf16.gmra.mrb[0].mxu0 %v8058
        %v8249 = vpop.f32.mrb[0].mxu0
        %v8250 = vadd.f32 0.0, %v8249
        %v8251 = vpop.f32.mrb[0].mxu0
        %v8252 = vpop.f32.mrb[0].mxu0
        %v8253 = vadd.f32 0.0, %v8252
        %v8254 = vpop.f32.mrb[0].mxu0
        %8255 = vmatprep.mubr.bf16.mxu0 0
        %8256 = vmatmul.mubr.bf16.gmra.mrb[0].mxu0 %v8059
        %v8257 = vpop.f32.mrb[0].mxu0
        %v8258 = vadd.f32 0.0, %v8257
        %v8259 = vpop.f32.mrb[0].mxu0
        %v8260 = vpop.f32.mrb[0].mxu0
        %v8261 = vadd.f32 0.0, %v8260
        %v8262 = vpop.f32.mrb[0].mxu0
        %8263 = vmatprep.mubr.bf16.mxu0 0
        %8264 = vmatmul.mubr.bf16.gmra.mrb[0].mxu0 %v8060
        %v8265 = vpop.f32.mrb[0].mxu0
        %v8266 = vadd.f32 0.0, %v8265
        %v8267 = vpop.f32.mrb[0].mxu0
        %v8268 = vpop.f32.mrb[0].mxu0
        %v8269 = vadd.f32 0.0, %v8268
        %v8270 = vpop.f32.mrb[0].mxu0
        %8271 = vmatprep.mubr.bf16.mxu0 0
        %8272 = vmatmul.mubr.bf16.gmra.mrb[0].mxu0 %v8061
        %v8273 = vpop.f32.mrb[0].mxu0
        %v8274 = vadd.f32 0.0, %v8273
        %v8275 = vpop.f32.mrb[0].mxu0
        %v8276 = vpop.f32.mrb[0].mxu0
        %v8277 = vadd.f32 0.0, %v8276
        %v8278 = vpop.f32.mrb[0].mxu0
        %8279 = vmatprep.mubr.bf16.mxu0 0
        %8280 = vmatmul.mubr.bf16.gmra.mrb[0].mxu0 %v8062
        %v8281 = vpop.f32.mrb[0].mxu0
        %v8282 = vadd.f32 0.0, %v8281
        %v8283 = vpop.f32.mrb[0].mxu0
        %v8284 = vpop.f32.mrb[0].mxu0
        %v8285 = vadd.f32 0.0, %v8284
        %v8286 = vpop.f32.mrb[0].mxu0
        %8287 = vdwg.mxu0
        %v8288 = vadd.f32 %v7534, %v8162
        %v8289 = vadd.f32 %v7535, %v8165
        %v8290 = vadd.f32 %v7536, %v8170
        %v8291 = vadd.f32 %v7537, %v8173
        %v8292 = vadd.f32 %v7538, %v8178
        %v8293 = vadd.f32 %v7539, %v8181
        %v8294 = vadd.f32 %v7540, %v8186
        %v8295 = vadd.f32 %v7541, %v8189
        %v8296 = vadd.f32 %v7542, %v8194
        %v8297 = vadd.f32 %v7543, %v8197
        %v8298 = vadd.f32 %v7544, %v8202
        %v8299 = vadd.f32 %v7545, %v8205
        %v8300 = vadd.f32 %v7546, %v8210
        %v8301 = vadd.f32 %v7547, %v8213
        %v8302 = vadd.f32 %v7548, %v8218
        %v8303 = vadd.f32 %v7549, %v8221
        %v8304 = vadd.f32 %v7550, %v8226
        %v8305 = vadd.f32 %v7551, %v8229
        %v8306 = vadd.f32 %v7552, %v8234
        %v8307 = vadd.f32 %v7553, %v8237
        %v8308 = vadd.f32 %v7554, %v8242
        %v8309 = vadd.f32 %v7555, %v8245
        %v8310 = vadd.f32 %v7556, %v8250
        %v8311 = vadd.f32 %v7557, %v8253
        %v8312 = vadd.f32 %v7558, %v8258
        %v8313 = vadd.f32 %v7559, %v8261
        %v8314 = vadd.f32 %v7560, %v8266
        %v8315 = vadd.f32 %v7561, %v8269
        %v8316 = vadd.f32 %v7562, %v8274
        %v8317 = vadd.f32 %v7563, %v8277
        %v8318 = vadd.f32 %v7564, %v8282
        %v8319 = vadd.f32 %v7565, %v8285
        %v8320 = vld [vmem:[%s5536] sm:$0xe]
        %v8321 = vld [vmem:[%s5536 + $0xc] sm:$0xe]
        %v8322 = vld [vmem:[%s5536 + $0x18] sm:$0xe]
        %v8323 = vld [vmem:[%s5536 + $0x24] sm:$0xe]
        %v8324 = vld [vmem:[%s5536 + $0x30] sm:$0xe]
        %v8325 = vld [vmem:[%s5536 + $0x3c] sm:$0xe]
        %v8326 = vld [vmem:[%s5536 + $0x48] sm:$0xe]
        %v8327 = vld [vmem:[%s5536 + $0x54] sm:$0xe]
        %v8328 = vld [vmem:[%s5536 + $0x60] sm:$0xe]
        %v8329 = vld [vmem:[%s5536 + $0x6c] sm:$0xe]
        %v8330 = vld [vmem:[%s5536 + $0x78] sm:$0xe]
        %v8331 = vld [vmem:[%s5536 + $0x84] sm:$0xe]
        %v8332 = vld [vmem:[%s5536 + $0x90] sm:$0xe]
        %v8333 = vld [vmem:[%s5536 + $0x9c] sm:$0xe]
        %v8334 = vld [vmem:[%s5536 + $0xa8] sm:$0xe]
        %v8335 = vld [vmem:[%s5536 + $0xb4] sm:$0xe]
        %v8384 = vrot.slane %v8320, 5
        %v8385 = vrot.slane %v8384, 4
        %v8386 = vrot.slane %v7567, 5
        %v8387 = vsel %vm1336, %v8385, %v8386
        %v8388 = vrot.slane %v8386, 4
        %v8389 = vrot.slane %v7568, 5
        %v8390 = vsel %vm1336, %v8388, %v8389
        %v8391 = vrot.slane %v8321, 5
        %v8392 = vrot.slane %v8391, 4
        %v8393 = vrot.slane %v7570, 5
        %v8394 = vsel %vm1336, %v8392, %v8393
        %v8395 = vrot.slane %v8393, 4
        %v8396 = vrot.slane %v7571, 5
        %v8397 = vsel %vm1336, %v8395, %v8396
        %v8398 = vrot.slane %v8322, 5
        %v8399 = vrot.slane %v8398, 4
        %v8400 = vrot.slane %v7573, 5
        %v8401 = vsel %vm1336, %v8399, %v8400
        %v8402 = vrot.slane %v8400, 4
        %v8403 = vrot.slane %v7574, 5
        %v8404 = vsel %vm1336, %v8402, %v8403
        %v8405 = vrot.slane %v8323, 5
        %v8406 = vrot.slane %v8405, 4
        %v8407 = vrot.slane %v7576, 5
        %v8408 = vsel %vm1336, %v8406, %v8407
        %v8409 = vrot.slane %v8407, 4
        %v8410 = vrot.slane %v7577, 5
        %v8411 = vsel %vm1336, %v8409, %v8410
        %v8412 = vrot.slane %v8324, 5
        %v8413 = vrot.slane %v8412, 4
        %v8414 = vrot.slane %v7579, 5
        %v8415 = vsel %vm1336, %v8413, %v8414
        %v8416 = vrot.slane %v8414, 4
        %v8417 = vrot.slane %v7580, 5
        %v8418 = vsel %vm1336, %v8416, %v8417
        %v8419 = vrot.slane %v8325, 5
        %v8420 = vrot.slane %v8419, 4
        %v8421 = vrot.slane %v7582, 5
        %v8422 = vsel %vm1336, %v8420, %v8421
        %v8423 = vrot.slane %v8421, 4
        %v8424 = vrot.slane %v7583, 5
        %v8425 = vsel %vm1336, %v8423, %v8424
        %v8426 = vrot.slane %v8326, 5
        %v8427 = vrot.slane %v8426, 4
        %v8428 = vrot.slane %v7585, 5
        %v8429 = vsel %vm1336, %v8427, %v8428
        %v8430 = vrot.slane %v8428, 4
        %v8431 = vrot.slane %v7586, 5
        %v8432 = vsel %vm1336, %v8430, %v8431
        %v8433 = vrot.slane %v8327, 5
        %v8434 = vrot.slane %v8433, 4
        %v8435 = vrot.slane %v7588, 5
        %v8436 = vsel %vm1336, %v8434, %v8435
        %v8437 = vrot.slane %v8435, 4
        %v8438 = vrot.slane %v7589, 5
        %v8439 = vsel %vm1336, %v8437, %v8438
        %v8440 = vrot.slane %v8328, 5
        %v8441 = vrot.slane %v8440, 4
        %v8442 = vrot.slane %v7591, 5
        %v8443 = vsel %vm1336, %v8441, %v8442
        %v8444 = vrot.slane %v8442, 4
        %v8445 = vrot.slane %v7592, 5
        %v8446 = vsel %vm1336, %v8444, %v8445
        %v8447 = vrot.slane %v8329, 5
        %v8448 = vrot.slane %v8447, 4
        %v8449 = vrot.slane %v7594, 5
        %v8450 = vsel %vm1336, %v8448, %v8449
        %v8451 = vrot.slane %v8449, 4
        %v8452 = vrot.slane %v7595, 5
        %v8453 = vsel %vm1336, %v8451, %v8452
        %v8454 = vrot.slane %v8330, 5
        %v8455 = vrot.slane %v8454, 4
        %v8456 = vrot.slane %v7597, 5
        %v8457 = vsel %vm1336, %v8455, %v8456
        %v8458 = vrot.slane %v8456, 4
        %v8459 = vrot.slane %v7598, 5
        %v8460 = vsel %vm1336, %v8458, %v8459
        %v8461 = vrot.slane %v8331, 5
        %v8462 = vrot.slane %v8461, 4
        %v8463 = vrot.slane %v7600, 5
        %v8464 = vsel %vm1336, %v8462, %v8463
        %v8465 = vrot.slane %v8463, 4
        %v8466 = vrot.slane %v7601, 5
        %v8467 = vsel %vm1336, %v8465, %v8466
        %v8468 = vrot.slane %v8332, 5
        %v8469 = vrot.slane %v8468, 4
        %v8470 = vrot.slane %v7603, 5
        %v8471 = vsel %vm1336, %v8469, %v8470
        %v8472 = vrot.slane %v8470, 4
        %v8473 = vrot.slane %v7604, 5
        %v8474 = vsel %vm1336, %v8472, %v8473
        %v8475 = vrot.slane %v8333, 5
        %v8476 = vrot.slane %v8475, 4
        %v8477 = vrot.slane %v7606, 5
        %v8478 = vsel %vm1336, %v8476, %v8477
        %v8479 = vrot.slane %v8477, 4
        %v8480 = vrot.slane %v7607, 5
        %v8481 = vsel %vm1336, %v8479, %v8480
        %v8482 = vrot.slane %v8334, 5
        %v8483 = vrot.slane %v8482, 4
        %v8484 = vrot.slane %v7609, 5
        %v8485 = vsel %vm1336, %v8483, %v8484
        %v8486 = vrot.slane %v8484, 4
        %v8487 = vrot.slane %v7610, 5
        %v8488 = vsel %vm1336, %v8486, %v8487
        %v8489 = vrot.slane %v8335, 5
        %v8490 = vrot.slane %v8489, 4
        %v8491 = vrot.slane %v7612, 5
        %v8492 = vsel %vm1336, %v8490, %v8491
        %v8493 = vrot.slane %v8491, 4
        %v8494 = vrot.slane %v7613, 5
        %v8495 = vsel %vm1336, %v8493, %v8494
        %s8496 = scalar_lea.vmem [#allocation3], 896
        %v8497 = vld [vmem:[%s8496] sm:$0xf]
        %v8498 = vld [vmem:[%s8496 + $0x4] sm:$0xf]
        %v8499 = vld [vmem:[%s8496 + $0x8] sm:$0xf]
        %v8500 = vld [vmem:[%s8496 + $0xc] sm:$0xf]
        %v8501 = vld [vmem:[%s8496 + $0x10] sm:$0xf]
        %v8502 = vld [vmem:[%s8496 + $0x14] sm:$0xf]
        %v8503 = vld [vmem:[%s8496 + $0x18] sm:$0xf]
        %v8504 = vld [vmem:[%s8496 + $0x1c] sm:$0xf]
        %v8505 = vld [vmem:[%s8496 + $0x20] sm:$0xf]
        %v8506 = vld [vmem:[%s8496 + $0x24] sm:$0xf]
        %v8507 = vld [vmem:[%s8496 + $0x28] sm:$0xf]
        %v8508 = vld [vmem:[%s8496 + $0x2c] sm:$0xf]
        %v8509 = vld [vmem:[%s8496 + $0x30] sm:$0xf]
        %v8510 = vld [vmem:[%s8496 + $0x34] sm:$0xf]
        %v8511 = vld [vmem:[%s8496 + $0x38] sm:$0xf]
        %v8512 = vld [vmem:[%s8496 + $0x3c] sm:$0xf]
        %v8513 = vunpack.c.l.b16 %v8387
        %v8514 = vunpack.c.l.b16 %v8390
        %v8515 = vunpack.c.l.b16 %v8394
        %v8516 = vunpack.c.l.b16 %v8397
        %v8517 = vunpack.c.l.b16 %v8401
        %v8518 = vunpack.c.l.b16 %v8404
        %v8519 = vunpack.c.l.b16 %v8408
        %v8520 = vunpack.c.l.b16 %v8411
        %v8521 = vunpack.c.l.b16 %v8415
        %v8522 = vunpack.c.l.b16 %v8418
        %v8523 = vunpack.c.l.b16 %v8422
        %v8524 = vunpack.c.l.b16 %v8425
        %v8525 = vunpack.c.l.b16 %v8429
        %v8526 = vunpack.c.l.b16 %v8432
        %v8527 = vunpack.c.l.b16 %v8436
        %v8528 = vunpack.c.l.b16 %v8439
        %v8529 = vunpack.c.l.b16 %v8443
        %v8530 = vunpack.c.l.b16 %v8446
        %v8531 = vunpack.c.l.b16 %v8450
        %v8532 = vunpack.c.l.b16 %v8453
        %v8533 = vunpack.c.l.b16 %v8457
        %v8534 = vunpack.c.l.b16 %v8460
        %v8535 = vunpack.c.l.b16 %v8464
        %v8536 = vunpack.c.l.b16 %v8467
        %v8537 = vunpack.c.l.b16 %v8471
        %v8538 = vunpack.c.l.b16 %v8474
        %v8539 = vunpack.c.l.b16 %v8478
        %v8540 = vunpack.c.l.b16 %v8481
        %v8541 = vunpack.c.l.b16 %v8485
        %v8542 = vunpack.c.l.b16 %v8488
        %v8543 = vunpack.c.l.b16 %v8492
        %v8544 = vunpack.c.l.b16 %v8495
        %v8545 = vpack.c.b16 %v8514, %v8513
        %v8546 = vpack.c.b16 %v8516, %v8515
        %v8547 = vpack.c.b16 %v8518, %v8517
        %v8548 = vpack.c.b16 %v8520, %v8519
        %v8549 = vpack.c.b16 %v8522, %v8521
        %v8550 = vpack.c.b16 %v8524, %v8523
        %v8551 = vpack.c.b16 %v8526, %v8525
        %v8552 = vpack.c.b16 %v8528, %v8527
        %v8553 = vpack.c.b16 %v8530, %v8529
        %v8554 = vpack.c.b16 %v8532, %v8531
        %v8555 = vpack.c.b16 %v8534, %v8533
        %v8556 = vpack.c.b16 %v8536, %v8535
        %v8557 = vpack.c.b16 %v8538, %v8537
        %v8558 = vpack.c.b16 %v8540, %v8539
        %v8559 = vpack.c.b16 %v8542, %v8541
        %v8560 = vpack.c.b16 %v8544, %v8543
        %v8593 = vunpack.c.l.b16 %v8497
        %v8594 = vunpack.c.l.b16 %v8498
        %v8595 = vunpack.c.l.b16 %v8499
        %v8596 = vunpack.c.l.b16 %v8500
        %v8597 = vunpack.c.l.b16 %v8501
        %v8598 = vunpack.c.l.b16 %v8502
        %v8599 = vunpack.c.l.b16 %v8503
        %v8600 = vunpack.c.l.b16 %v8504
        %v8601 = vunpack.c.l.b16 %v8505
        %v8602 = vunpack.c.l.b16 %v8506
        %v8603 = vunpack.c.l.b16 %v8507
        %v8604 = vunpack.c.l.b16 %v8508
        %v8605 = vunpack.c.l.b16 %v8509
        %v8606 = vunpack.c.l.b16 %v8510
        %v8607 = vunpack.c.l.b16 %v8511
        %v8608 = vunpack.c.l.b16 %v8512
        %v8609 = vpack.c.b16 %v8594, %v8593
        %v8610 = vpack.c.b16 %v8596, %v8595
        %v8611 = vpack.c.b16 %v8598, %v8597
        %v8612 = vpack.c.b16 %v8600, %v8599
        %v8613 = vpack.c.b16 %v8602, %v8601
        %v8614 = vpack.c.b16 %v8604, %v8603
        %v8615 = vpack.c.b16 %v8606, %v8605
        %v8616 = vpack.c.b16 %v8608, %v8607
        %8625 = vmatprep.subr.bf16.mxu0 0
        %8626 = vmatpush1.bf16.msra.mxu0 %v8609
        %8627 = vmatprep.subr.bf16.mxu0 0
        %8628 = vmatpush1.bf16.msra.mxu0 %v8610
        %8629 = vmatprep.subr.bf16.mxu0 0
        %8630 = vmatpush1.bf16.msra.mxu0 %v8611
        %8631 = vmatprep.subr.bf16.mxu0 0
        %8632 = vmatpush1.bf16.msra.mxu0 %v8612
        %8633 = vmatprep.subr.bf16.mxu0 0
        %8634 = vmatpush1.bf16.msra.mxu0 %v8613
        %8635 = vmatprep.subr.bf16.mxu0 0
        %8636 = vmatpush1.bf16.msra.mxu0 %v8614
        %8637 = vmatprep.subr.bf16.mxu0 0
        %8638 = vmatpush1.bf16.msra.mxu0 %v8615
        %8639 = vmatprep.subr.bf16.mxu0 0
        %8640 = vmatpush1.bf16.msra.mxu0 %v8616
        %8641 = vmatprep.subr.bf16.mxu0 0
        %8642 = vmatpush1.bf16.msra.mxu0 0
        %8643 = vmatprep.subr.bf16.mxu0 0
        %8644 = vmatpush1.bf16.msra.mxu0 0
        %8645 = vmatprep.subr.bf16.mxu0 0
        %8646 = vmatpush1.bf16.msra.mxu0 0
        %8647 = vmatprep.subr.bf16.mxu0 0
        %8648 = vmatpush1.bf16.msra.mxu0 0
        %8649 = vmatprep.subr.bf16.mxu0 0
        %8650 = vmatpush1.bf16.msra.mxu0 0
        %8651 = vmatprep.subr.bf16.mxu0 0
        %8652 = vmatpush1.bf16.msra.mxu0 0
        %8653 = vmatprep.subr.bf16.mxu0 0
        %8654 = vmatpush1.bf16.msra.mxu0 0
        %8655 = vmatprep.subr.bf16.mxu0 0
        %8656 = vmatpush1.bf16.msra.mxu0 0
        %8657 = vmatprep.mubr.bf16.mxu0 0
        %8658 = vmatmul.mubr.bf16.gmra.mrb[0].mxu0 %v8545
        %v8659 = vpop.f32.mrb[0].mxu0
        %v8660 = vadd.f32 0.0, %v8659
        %v8661 = vpop.f32.mrb[0].mxu0
        %v8662 = vpop.f32.mrb[0].mxu0
        %v8663 = vadd.f32 0.0, %v8662
        %v8664 = vpop.f32.mrb[0].mxu0
        %8665 = vmatprep.mubr.bf16.mxu0 0
        %8666 = vmatmul.mubr.bf16.gmra.mrb[0].mxu0 %v8546
        %v8667 = vpop.f32.mrb[0].mxu0
        %v8668 = vadd.f32 0.0, %v8667
        %v8669 = vpop.f32.mrb[0].mxu0
        %v8670 = vpop.f32.mrb[0].mxu0
        %v8671 = vadd.f32 0.0, %v8670
        %v8672 = vpop.f32.mrb[0].mxu0
        %8673 = vmatprep.mubr.bf16.mxu0 0
        %8674 = vmatmul.mubr.bf16.gmra.mrb[0].mxu0 %v8547
        %v8675 = vpop.f32.mrb[0].mxu0
        %v8676 = vadd.f32 0.0, %v8675
        %v8677 = vpop.f32.mrb[0].mxu0
        %v8678 = vpop.f32.mrb[0].mxu0
        %v8679 = vadd.f32 0.0, %v8678
        %v8680 = vpop.f32.mrb[0].mxu0
        %8681 = vmatprep.mubr.bf16.mxu0 0
        %8682 = vmatmul.mubr.bf16.gmra.mrb[0].mxu0 %v8548
        %v8683 = vpop.f32.mrb[0].mxu0
        %v8684 = vadd.f32 0.0, %v8683
        %v8685 = vpop.f32.mrb[0].mxu0
        %v8686 = vpop.f32.mrb[0].mxu0
        %v8687 = vadd.f32 0.0, %v8686
        %v8688 = vpop.f32.mrb[0].mxu0
        %8689 = vmatprep.mubr.bf16.mxu0 0
        %8690 = vmatmul.mubr.bf16.gmra.mrb[0].mxu0 %v8549
        %v8691 = vpop.f32.mrb[0].mxu0
        %v8692 = vadd.f32 0.0, %v8691
        %v8693 = vpop.f32.mrb[0].mxu0
        %v8694 = vpop.f32.mrb[0].mxu0
        %v8695 = vadd.f32 0.0, %v8694
        %v8696 = vpop.f32.mrb[0].mxu0
        %8697 = vmatprep.mubr.bf16.mxu0 0
        %8698 = vmatmul.mubr.bf16.gmra.mrb[0].mxu0 %v8550
        %v8699 = vpop.f32.mrb[0].mxu0
        %v8700 = vadd.f32 0.0, %v8699
        %v8701 = vpop.f32.mrb[0].mxu0
        %v8702 = vpop.f32.mrb[0].mxu0
        %v8703 = vadd.f32 0.0, %v8702
        %v8704 = vpop.f32.mrb[0].mxu0
        %8705 = vmatprep.mubr.bf16.mxu0 0
        %8706 = vmatmul.mubr.bf16.gmra.mrb[0].mxu0 %v8551
        %v8707 = vpop.f32.mrb[0].mxu0
        %v8708 = vadd.f32 0.0, %v8707
        %v8709 = vpop.f32.mrb[0].mxu0
        %v8710 = vpop.f32.mrb[0].mxu0
        %v8711 = vadd.f32 0.0, %v8710
        %v8712 = vpop.f32.mrb[0].mxu0
        %8713 = vmatprep.mubr.bf16.mxu0 0
        %8714 = vmatmul.mubr.bf16.gmra.mrb[0].mxu0 %v8552
        %v8715 = vpop.f32.mrb[0].mxu0
        %v8716 = vadd.f32 0.0, %v8715
        %v8717 = vpop.f32.mrb[0].mxu0
        %v8718 = vpop.f32.mrb[0].mxu0
        %v8719 = vadd.f32 0.0, %v8718
        %v8720 = vpop.f32.mrb[0].mxu0
        %8721 = vmatprep.mubr.bf16.mxu0 0
        %8722 = vmatmul.mubr.bf16.gmra.mrb[0].mxu0 %v8553
        %v8723 = vpop.f32.mrb[0].mxu0
        %v8724 = vadd.f32 0.0, %v8723
        %v8725 = vpop.f32.mrb[0].mxu0
        %v8726 = vpop.f32.mrb[0].mxu0
        %v8727 = vadd.f32 0.0, %v8726
        %v8728 = vpop.f32.mrb[0].mxu0
        %8729 = vmatprep.mubr.bf16.mxu0 0
        %8730 = vmatmul.mubr.bf16.gmra.mrb[0].mxu0 %v8554
        %v8731 = vpop.f32.mrb[0].mxu0
        %v8732 = vadd.f32 0.0, %v8731
        %v8733 = vpop.f32.mrb[0].mxu0
        %v8734 = vpop.f32.mrb[0].mxu0
        %v8735 = vadd.f32 0.0, %v8734
        %v8736 = vpop.f32.mrb[0].mxu0
        %8737 = vmatprep.mubr.bf16.mxu0 0
        %8738 = vmatmul.mubr.bf16.gmra.mrb[0].mxu0 %v8555
        %v8739 = vpop.f32.mrb[0].mxu0
        %v8740 = vadd.f32 0.0, %v8739
        %v8741 = vpop.f32.mrb[0].mxu0
        %v8742 = vpop.f32.mrb[0].mxu0
        %v8743 = vadd.f32 0.0, %v8742
        %v8744 = vpop.f32.mrb[0].mxu0
        %8745 = vmatprep.mubr.bf16.mxu0 0
        %8746 = vmatmul.mubr.bf16.gmra.mrb[0].mxu0 %v8556
        %v8747 = vpop.f32.mrb[0].mxu0
        %v8748 = vadd.f32 0.0, %v8747
        %v8749 = vpop.f32.mrb[0].mxu0
        %v8750 = vpop.f32.mrb[0].mxu0
        %v8751 = vadd.f32 0.0, %v8750
        %v8752 = vpop.f32.mrb[0].mxu0
        %8753 = vmatprep.mubr.bf16.mxu0 0
        %8754 = vmatmul.mubr.bf16.gmra.mrb[0].mxu0 %v8557
        %v8755 = vpop.f32.mrb[0].mxu0
        %v8756 = vadd.f32 0.0, %v8755
        %v8757 = vpop.f32.mrb[0].mxu0
        %v8758 = vpop.f32.mrb[0].mxu0
        %v8759 = vadd.f32 0.0, %v8758
        %v8760 = vpop.f32.mrb[0].mxu0
        %8761 = vmatprep.mubr.bf16.mxu0 0
        %8762 = vmatmul.mubr.bf16.gmra.mrb[0].mxu0 %v8558
        %v8763 = vpop.f32.mrb[0].mxu0
        %v8764 = vadd.f32 0.0, %v8763
        %v8765 = vpop.f32.mrb[0].mxu0
        %v8766 = vpop.f32.mrb[0].mxu0
        %v8767 = vadd.f32 0.0, %v8766
        %v8768 = vpop.f32.mrb[0].mxu0
        %8769 = vmatprep.mubr.bf16.mxu0 0
        %8770 = vmatmul.mubr.bf16.gmra.mrb[0].mxu0 %v8559
        %v8771 = vpop.f32.mrb[0].mxu0
        %v8772 = vadd.f32 0.0, %v8771
        %v8773 = vpop.f32.mrb[0].mxu0
        %v8774 = vpop.f32.mrb[0].mxu0
        %v8775 = vadd.f32 0.0, %v8774
        %v8776 = vpop.f32.mrb[0].mxu0
        %8777 = vmatprep.mubr.bf16.mxu0 0
        %8778 = vmatmul.mubr.bf16.gmra.mrb[0].mxu0 %v8560
        %v8779 = vpop.f32.mrb[0].mxu0
        %v8780 = vadd.f32 0.0, %v8779
        %v8781 = vpop.f32.mrb[0].mxu0
        %v8782 = vpop.f32.mrb[0].mxu0
        %v8783 = vadd.f32 0.0, %v8782
        %v8784 = vpop.f32.mrb[0].mxu0
        %8785 = vdwg.mxu0
        %v8786 = vadd.f32 %v8288, %v8660
        %v8787 = vadd.f32 %v8289, %v8663
        %v8788 = vadd.f32 %v8290, %v8668
        %v8789 = vadd.f32 %v8291, %v8671
        %v8790 = vadd.f32 %v8292, %v8676
        %v8791 = vadd.f32 %v8293, %v8679
        %v8792 = vadd.f32 %v8294, %v8684
        %v8793 = vadd.f32 %v8295, %v8687
        %v8794 = vadd.f32 %v8296, %v8692
        %v8795 = vadd.f32 %v8297, %v8695
        %v8796 = vadd.f32 %v8298, %v8700
        %v8797 = vadd.f32 %v8299, %v8703
        %v8798 = vadd.f32 %v8300, %v8708
        %v8799 = vadd.f32 %v8301, %v8711
        %v8800 = vadd.f32 %v8302, %v8716
        %v8801 = vadd.f32 %v8303, %v8719
        %v8802 = vadd.f32 %v8304, %v8724
        %v8803 = vadd.f32 %v8305, %v8727
        %v8804 = vadd.f32 %v8306, %v8732
        %v8805 = vadd.f32 %v8307, %v8735
        %v8806 = vadd.f32 %v8308, %v8740
        %v8807 = vadd.f32 %v8309, %v8743
        %v8808 = vadd.f32 %v8310, %v8748
        %v8809 = vadd.f32 %v8311, %v8751
        %v8810 = vadd.f32 %v8312, %v8756
        %v8811 = vadd.f32 %v8313, %v8759
        %v8812 = vadd.f32 %v8314, %v8764
        %v8813 = vadd.f32 %v8315, %v8767
        %v8814 = vadd.f32 %v8316, %v8772
        %v8815 = vadd.f32 %v8317, %v8775
        %v8816 = vadd.f32 %v8318, %v8780
        %v8817 = vadd.f32 %v8319, %v8783
        %s8818 = scalar_lea.vmem [#allocation2], 24
        %v8819 = vld [vmem:[%s8818] sm:$0xf]
        %v8820 = vld [vmem:[%s8818 + $0x4] sm:$0xf]
        %v8821 = vld [vmem:[%s8818 + $0xc] sm:$0xf]
        %v8822 = vld [vmem:[%s8818 + $0x10] sm:$0xf]
        %v8823 = vld [vmem:[%s8818 + $0x18] sm:$0xf]
        %v8824 = vld [vmem:[%s8818 + $0x1c] sm:$0xf]
        %v8825 = vld [vmem:[%s8818 + $0x24] sm:$0xf]
        %v8826 = vld [vmem:[%s8818 + $0x28] sm:$0xf]
        %v8827 = vld [vmem:[%s8818 + $0x30] sm:$0xf]
        %v8828 = vld [vmem:[%s8818 + $0x34] sm:$0xf]
        %v8829 = vld [vmem:[%s8818 + $0x3c] sm:$0xf]
        %v8830 = vld [vmem:[%s8818 + $0x40] sm:$0xf]
        %v8831 = vld [vmem:[%s8818 + $0x48] sm:$0xf]
        %v8832 = vld [vmem:[%s8818 + $0x4c] sm:$0xf]
        %v8833 = vld [vmem:[%s8818 + $0x54] sm:$0xf]
        %v8834 = vld [vmem:[%s8818 + $0x58] sm:$0xf]
        %v8835 = vld [vmem:[%s8818 + $0x60] sm:$0xf]
        %v8836 = vld [vmem:[%s8818 + $0x64] sm:$0xf]
        %v8837 = vld [vmem:[%s8818 + $0x6c] sm:$0xf]
        %v8838 = vld [vmem:[%s8818 + $0x70] sm:$0xf]
        %v8839 = vld [vmem:[%s8818 + $0x78] sm:$0xf]
        %v8840 = vld [vmem:[%s8818 + $0x7c] sm:$0xf]
        %v8841 = vld [vmem:[%s8818 + $0x84] sm:$0xf]
        %v8842 = vld [vmem:[%s8818 + $0x88] sm:$0xf]
        %v8843 = vld [vmem:[%s8818 + $0x90] sm:$0xf]
        %v8844 = vld [vmem:[%s8818 + $0x94] sm:$0xf]
        %v8845 = vld [vmem:[%s8818 + $0x9c] sm:$0xf]
        %v8846 = vld [vmem:[%s8818 + $0xa0] sm:$0xf]
        %v8847 = vld [vmem:[%s8818 + $0xa8] sm:$0xf]
        %v8848 = vld [vmem:[%s8818 + $0xac] sm:$0xf]
        %v8849 = vld [vmem:[%s8818 + $0xb4] sm:$0xf]
        %v8850 = vld [vmem:[%s8818 + $0xb8] sm:$0xf]
        %s8851 = scalar_lea.vmem [#allocation3], 960
        %v8852 = vld [vmem:[%s8851] sm:$0xf]
        %v8853 = vld [vmem:[%s8851 + $0x4] sm:$0xf]
        %v8854 = vld [vmem:[%s8851 + $0x8] sm:$0xf]
        %v8855 = vld [vmem:[%s8851 + $0xc] sm:$0xf]
        %v8856 = vld [vmem:[%s8851 + $0x10] sm:$0xf]
        %v8857 = vld [vmem:[%s8851 + $0x14] sm:$0xf]
        %v8858 = vld [vmem:[%s8851 + $0x18] sm:$0xf]
        %v8859 = vld [vmem:[%s8851 + $0x1c] sm:$0xf]
        %v8860 = vld [vmem:[%s8851 + $0x20] sm:$0xf]
        %v8861 = vld [vmem:[%s8851 + $0x24] sm:$0xf]
        %v8862 = vld [vmem:[%s8851 + $0x28] sm:$0xf]
        %v8863 = vld [vmem:[%s8851 + $0x2c] sm:$0xf]
        %v8864 = vld [vmem:[%s8851 + $0x30] sm:$0xf]
        %v8865 = vld [vmem:[%s8851 + $0x34] sm:$0xf]
        %v8866 = vld [vmem:[%s8851 + $0x38] sm:$0xf]
        %v8867 = vld [vmem:[%s8851 + $0x3c] sm:$0xf]
        %v8900 = vunpack.c.l.b16 %v8819
        %v8901 = vunpack.c.l.b16 %v8820
        %v8902 = vunpack.c.l.b16 %v8821
        %v8903 = vunpack.c.l.b16 %v8822
        %v8904 = vunpack.c.l.b16 %v8823
        %v8905 = vunpack.c.l.b16 %v8824
        %v8906 = vunpack.c.l.b16 %v8825
        %v8907 = vunpack.c.l.b16 %v8826
        %v8908 = vunpack.c.l.b16 %v8827
        %v8909 = vunpack.c.l.b16 %v8828
        %v8910 = vunpack.c.l.b16 %v8829
        %v8911 = vunpack.c.l.b16 %v8830
        %v8912 = vunpack.c.l.b16 %v8831
        %v8913 = vunpack.c.l.b16 %v8832
        %v8914 = vunpack.c.l.b16 %v8833
        %v8915 = vunpack.c.l.b16 %v8834
        %v8916 = vunpack.c.l.b16 %v8835
        %v8917 = vunpack.c.l.b16 %v8836
        %v8918 = vunpack.c.l.b16 %v8837
        %v8919 = vunpack.c.l.b16 %v8838
        %v8920 = vunpack.c.l.b16 %v8839
        %v8921 = vunpack.c.l.b16 %v8840
        %v8922 = vunpack.c.l.b16 %v8841
        %v8923 = vunpack.c.l.b16 %v8842
        %v8924 = vunpack.c.l.b16 %v8843
        %v8925 = vunpack.c.l.b16 %v8844
        %v8926 = vunpack.c.l.b16 %v8845
        %v8927 = vunpack.c.l.b16 %v8846
        %v8928 = vunpack.c.l.b16 %v8847
        %v8929 = vunpack.c.l.b16 %v8848
        %v8930 = vunpack.c.l.b16 %v8849
        %v8931 = vunpack.c.l.b16 %v8850
        %v8932 = vpack.c.b16 %v8901, %v8900
        %v8933 = vpack.c.b16 %v8903, %v8902
        %v8934 = vpack.c.b16 %v8905, %v8904
        %v8935 = vpack.c.b16 %v8907, %v8906
        %v8936 = vpack.c.b16 %v8909, %v8908
        %v8937 = vpack.c.b16 %v8911, %v8910
        %v8938 = vpack.c.b16 %v8913, %v8912
        %v8939 = vpack.c.b16 %v8915, %v8914
        %v8940 = vpack.c.b16 %v8917, %v8916
        %v8941 = vpack.c.b16 %v8919, %v8918
        %v8942 = vpack.c.b16 %v8921, %v8920
        %v8943 = vpack.c.b16 %v8923, %v8922
        %v8944 = vpack.c.b16 %v8925, %v8924
        %v8945 = vpack.c.b16 %v8927, %v8926
        %v8946 = vpack.c.b16 %v8929, %v8928
        %v8947 = vpack.c.b16 %v8931, %v8930
        %v8980 = vunpack.c.l.b16 %v8852
        %v8981 = vunpack.c.l.b16 %v8853
        %v8982 = vunpack.c.l.b16 %v8854
        %v8983 = vunpack.c.l.b16 %v8855
        %v8984 = vunpack.c.l.b16 %v8856
        %v8985 = vunpack.c.l.b16 %v8857
        %v8986 = vunpack.c.l.b16 %v8858
        %v8987 = vunpack.c.l.b16 %v8859
        %v8988 = vunpack.c.l.b16 %v8860
        %v8989 = vunpack.c.l.b16 %v8861
        %v8990 = vunpack.c.l.b16 %v8862
        %v8991 = vunpack.c.l.b16 %v8863
        %v8992 = vunpack.c.l.b16 %v8864
        %v8993 = vunpack.c.l.b16 %v8865
        %v8994 = vunpack.c.l.b16 %v8866
        %v8995 = vunpack.c.l.b16 %v8867
        %v8996 = vpack.c.b16 %v8981, %v8980
        %v8997 = vpack.c.b16 %v8983, %v8982
        %v8998 = vpack.c.b16 %v8985, %v8984
        %v8999 = vpack.c.b16 %v8987, %v8986
        %v9000 = vpack.c.b16 %v8989, %v8988
        %v9001 = vpack.c.b16 %v8991, %v8990
        %v9002 = vpack.c.b16 %v8993, %v8992
        %v9003 = vpack.c.b16 %v8995, %v8994
        %9012 = vmatprep.subr.bf16.mxu0 0
        %9013 = vmatpush1.bf16.msra.mxu0 %v8996
        %9014 = vmatprep.subr.bf16.mxu0 0
        %9015 = vmatpush1.bf16.msra.mxu0 %v8997
        %9016 = vmatprep.subr.bf16.mxu0 0
        %9017 = vmatpush1.bf16.msra.mxu0 %v8998
        %9018 = vmatprep.subr.bf16.mxu0 0
        %9019 = vmatpush1.bf16.msra.mxu0 %v8999
        %9020 = vmatprep.subr.bf16.mxu0 0
        %9021 = vmatpush1.bf16.msra.mxu0 %v9000
        %9022 = vmatprep.subr.bf16.mxu0 0
        %9023 = vmatpush1.bf16.msra.mxu0 %v9001
        %9024 = vmatprep.subr.bf16.mxu0 0
        %9025 = vmatpush1.bf16.msra.mxu0 %v9002
        %9026 = vmatprep.subr.bf16.mxu0 0
        %9027 = vmatpush1.bf16.msra.mxu0 %v9003
        %9028 = vmatprep.subr.bf16.mxu0 0
        %9029 = vmatpush1.bf16.msra.mxu0 0
        %9030 = vmatprep.subr.bf16.mxu0 0
        %9031 = vmatpush1.bf16.msra.mxu0 0
        %9032 = vmatprep.subr.bf16.mxu0 0
        %9033 = vmatpush1.bf16.msra.mxu0 0
        %9034 = vmatprep.subr.bf16.mxu0 0
        %9035 = vmatpush1.bf16.msra.mxu0 0
        %9036 = vmatprep.subr.bf16.mxu0 0
        %9037 = vmatpush1.bf16.msra.mxu0 0
        %9038 = vmatprep.subr.bf16.mxu0 0
        %9039 = vmatpush1.bf16.msra.mxu0 0
        %9040 = vmatprep.subr.bf16.mxu0 0
        %9041 = vmatpush1.bf16.msra.mxu0 0
        %9042 = vmatprep.subr.bf16.mxu0 0
        %9043 = vmatpush1.bf16.msra.mxu0 0
        %9044 = vmatprep.mubr.bf16.mxu0 0
        %9045 = vmatmul.mubr.bf16.gmra.mrb[0].mxu0 %v8932
        %v9046 = vpop.f32.mrb[0].mxu0
        %v9047 = vadd.f32 0.0, %v9046
        %v9048 = vpop.f32.mrb[0].mxu0
        %v9049 = vpop.f32.mrb[0].mxu0
        %v9050 = vadd.f32 0.0, %v9049
        %v9051 = vpop.f32.mrb[0].mxu0
        %9052 = vmatprep.mubr.bf16.mxu0 0
        %9053 = vmatmul.mubr.bf16.gmra.mrb[0].mxu0 %v8933
        %v9054 = vpop.f32.mrb[0].mxu0
        %v9055 = vadd.f32 0.0, %v9054
        %v9056 = vpop.f32.mrb[0].mxu0
        %v9057 = vpop.f32.mrb[0].mxu0
        %v9058 = vadd.f32 0.0, %v9057
        %v9059 = vpop.f32.mrb[0].mxu0
        %9060 = vmatprep.mubr.bf16.mxu0 0
        %9061 = vmatmul.mubr.bf16.gmra.mrb[0].mxu0 %v8934
        %v9062 = vpop.f32.mrb[0].mxu0
        %v9063 = vadd.f32 0.0, %v9062
        %v9064 = vpop.f32.mrb[0].mxu0
        %v9065 = vpop.f32.mrb[0].mxu0
        %v9066 = vadd.f32 0.0, %v9065
        %v9067 = vpop.f32.mrb[0].mxu0
        %9068 = vmatprep.mubr.bf16.mxu0 0
        %9069 = vmatmul.mubr.bf16.gmra.mrb[0].mxu0 %v8935
        %v9070 = vpop.f32.mrb[0].mxu0
        %v9071 = vadd.f32 0.0, %v9070
        %v9072 = vpop.f32.mrb[0].mxu0
        %v9073 = vpop.f32.mrb[0].mxu0
        %v9074 = vadd.f32 0.0, %v9073
        %v9075 = vpop.f32.mrb[0].mxu0
        %9076 = vmatprep.mubr.bf16.mxu0 0
        %9077 = vmatmul.mubr.bf16.gmra.mrb[0].mxu0 %v8936
        %v9078 = vpop.f32.mrb[0].mxu0
        %v9079 = vadd.f32 0.0, %v9078
        %v9080 = vpop.f32.mrb[0].mxu0
        %v9081 = vpop.f32.mrb[0].mxu0
        %v9082 = vadd.f32 0.0, %v9081
        %v9083 = vpop.f32.mrb[0].mxu0
        %9084 = vmatprep.mubr.bf16.mxu0 0
        %9085 = vmatmul.mubr.bf16.gmra.mrb[0].mxu0 %v8937
        %v9086 = vpop.f32.mrb[0].mxu0
        %v9087 = vadd.f32 0.0, %v9086
        %v9088 = vpop.f32.mrb[0].mxu0
        %v9089 = vpop.f32.mrb[0].mxu0
        %v9090 = vadd.f32 0.0, %v9089
        %v9091 = vpop.f32.mrb[0].mxu0
        %9092 = vmatprep.mubr.bf16.mxu0 0
        %9093 = vmatmul.mubr.bf16.gmra.mrb[0].mxu0 %v8938
        %v9094 = vpop.f32.mrb[0].mxu0
        %v9095 = vadd.f32 0.0, %v9094
        %v9096 = vpop.f32.mrb[0].mxu0
        %v9097 = vpop.f32.mrb[0].mxu0
        %v9098 = vadd.f32 0.0, %v9097
        %v9099 = vpop.f32.mrb[0].mxu0
        %9100 = vmatprep.mubr.bf16.mxu0 0
        %9101 = vmatmul.mubr.bf16.gmra.mrb[0].mxu0 %v8939
        %v9102 = vpop.f32.mrb[0].mxu0
        %v9103 = vadd.f32 0.0, %v9102
        %v9104 = vpop.f32.mrb[0].mxu0
        %v9105 = vpop.f32.mrb[0].mxu0
        %v9106 = vadd.f32 0.0, %v9105
        %v9107 = vpop.f32.mrb[0].mxu0
        %9108 = vmatprep.mubr.bf16.mxu0 0
        %9109 = vmatmul.mubr.bf16.gmra.mrb[0].mxu0 %v8940
        %v9110 = vpop.f32.mrb[0].mxu0
        %v9111 = vadd.f32 0.0, %v9110
        %v9112 = vpop.f32.mrb[0].mxu0
        %v9113 = vpop.f32.mrb[0].mxu0
        %v9114 = vadd.f32 0.0, %v9113
        %v9115 = vpop.f32.mrb[0].mxu0
        %9116 = vmatprep.mubr.bf16.mxu0 0
        %9117 = vmatmul.mubr.bf16.gmra.mrb[0].mxu0 %v8941
        %v9118 = vpop.f32.mrb[0].mxu0
        %v9119 = vadd.f32 0.0, %v9118
        %v9120 = vpop.f32.mrb[0].mxu0
        %v9121 = vpop.f32.mrb[0].mxu0
        %v9122 = vadd.f32 0.0, %v9121
        %v9123 = vpop.f32.mrb[0].mxu0
        %9124 = vmatprep.mubr.bf16.mxu0 0
        %9125 = vmatmul.mubr.bf16.gmra.mrb[0].mxu0 %v8942
        %v9126 = vpop.f32.mrb[0].mxu0
        %v9127 = vadd.f32 0.0, %v9126
        %v9128 = vpop.f32.mrb[0].mxu0
        %v9129 = vpop.f32.mrb[0].mxu0
        %v9130 = vadd.f32 0.0, %v9129
        %v9131 = vpop.f32.mrb[0].mxu0
        %9132 = vmatprep.mubr.bf16.mxu0 0
        %9133 = vmatmul.mubr.bf16.gmra.mrb[0].mxu0 %v8943
        %v9134 = vpop.f32.mrb[0].mxu0
        %v9135 = vadd.f32 0.0, %v9134
        %v9136 = vpop.f32.mrb[0].mxu0
        %v9137 = vpop.f32.mrb[0].mxu0
        %v9138 = vadd.f32 0.0, %v9137
        %v9139 = vpop.f32.mrb[0].mxu0
        %9140 = vmatprep.mubr.bf16.mxu0 0
        %9141 = vmatmul.mubr.bf16.gmra.mrb[0].mxu0 %v8944
        %v9142 = vpop.f32.mrb[0].mxu0
        %v9143 = vadd.f32 0.0, %v9142
        %v9144 = vpop.f32.mrb[0].mxu0
        %v9145 = vpop.f32.mrb[0].mxu0
        %v9146 = vadd.f32 0.0, %v9145
        %v9147 = vpop.f32.mrb[0].mxu0
        %9148 = vmatprep.mubr.bf16.mxu0 0
        %9149 = vmatmul.mubr.bf16.gmra.mrb[0].mxu0 %v8945
        %v9150 = vpop.f32.mrb[0].mxu0
        %v9151 = vadd.f32 0.0, %v9150
        %v9152 = vpop.f32.mrb[0].mxu0
        %v9153 = vpop.f32.mrb[0].mxu0
        %v9154 = vadd.f32 0.0, %v9153
        %v9155 = vpop.f32.mrb[0].mxu0
        %9156 = vmatprep.mubr.bf16.mxu0 0
        %9157 = vmatmul.mubr.bf16.gmra.mrb[0].mxu0 %v8946
        %v9158 = vpop.f32.mrb[0].mxu0
        %v9159 = vadd.f32 0.0, %v9158
        %v9160 = vpop.f32.mrb[0].mxu0
        %v9161 = vpop.f32.mrb[0].mxu0
        %v9162 = vadd.f32 0.0, %v9161
        %v9163 = vpop.f32.mrb[0].mxu0
        %9164 = vmatprep.mubr.bf16.mxu0 0
        %9165 = vmatmul.mubr.bf16.gmra.mrb[0].mxu0 %v8947
        %v9166 = vpop.f32.mrb[0].mxu0
        %v9167 = vadd.f32 0.0, %v9166
        %v9168 = vpop.f32.mrb[0].mxu0
        %v9169 = vpop.f32.mrb[0].mxu0
        %v9170 = vadd.f32 0.0, %v9169
        %v9171 = vpop.f32.mrb[0].mxu0
        %9172 = vdwg.mxu0
        %v9173 = vadd.f32 %v8786, %v9047
        %v9174 = vadd.f32 %v8787, %v9050
        %v9175 = vadd.f32 %v8788, %v9055
        %v9176 = vadd.f32 %v8789, %v9058
        %v9177 = vadd.f32 %v8790, %v9063
        %v9178 = vadd.f32 %v8791, %v9066
        %v9179 = vadd.f32 %v8792, %v9071
        %v9180 = vadd.f32 %v8793, %v9074
        %v9181 = vadd.f32 %v8794, %v9079
        %v9182 = vadd.f32 %v8795, %v9082
        %v9183 = vadd.f32 %v8796, %v9087
        %v9184 = vadd.f32 %v8797, %v9090
        %v9185 = vadd.f32 %v8798, %v9095
        %v9186 = vadd.f32 %v8799, %v9098
        %v9187 = vadd.f32 %v8800, %v9103
        %v9188 = vadd.f32 %v8801, %v9106
        %v9189 = vadd.f32 %v8802, %v9111
        %v9190 = vadd.f32 %v8803, %v9114
        %v9191 = vadd.f32 %v8804, %v9119
        %v9192 = vadd.f32 %v8805, %v9122
        %v9193 = vadd.f32 %v8806, %v9127
        %v9194 = vadd.f32 %v8807, %v9130
        %v9195 = vadd.f32 %v8808, %v9135
        %v9196 = vadd.f32 %v8809, %v9138
        %v9197 = vadd.f32 %v8810, %v9143
        %v9198 = vadd.f32 %v8811, %v9146
        %v9199 = vadd.f32 %v8812, %v9151
        %v9200 = vadd.f32 %v8813, %v9154
        %v9201 = vadd.f32 %v8814, %v9159
        %v9202 = vadd.f32 %v8815, %v9162
        %v9203 = vadd.f32 %v8816, %v9167
        %v9204 = vadd.f32 %v8817, %v9170
        %v9205 = vld [vmem:[%s8818] sm:$0xf]
        %v9206 = vld [vmem:[%s8818 + $0x4] sm:$0xf]
        %v9207 = vld [vmem:[%s8818 + $0x8] sm:$0x1]
        %v9208 = vld [vmem:[%s8818 + $0xc] sm:$0xf]
        %v9209 = vld [vmem:[%s8818 + $0x10] sm:$0xf]
        %v9210 = vld [vmem:[%s8818 + $0x14] sm:$0x1]
        %v9211 = vld [vmem:[%s8818 + $0x18] sm:$0xf]
        %v9212 = vld [vmem:[%s8818 + $0x1c] sm:$0xf]
        %v9213 = vld [vmem:[%s8818 + $0x20] sm:$0x1]
        %v9214 = vld [vmem:[%s8818 + $0x24] sm:$0xf]
        %v9215 = vld [vmem:[%s8818 + $0x28] sm:$0xf]
        %v9216 = vld [vmem:[%s8818 + $0x2c] sm:$0x1]
        %v9217 = vld [vmem:[%s8818 + $0x30] sm:$0xf]
        %v9218 = vld [vmem:[%s8818 + $0x34] sm:$0xf]
        %v9219 = vld [vmem:[%s8818 + $0x38] sm:$0x1]
        %v9220 = vld [vmem:[%s8818 + $0x3c] sm:$0xf]
        %v9221 = vld [vmem:[%s8818 + $0x40] sm:$0xf]
        %v9222 = vld [vmem:[%s8818 + $0x44] sm:$0x1]
        %v9223 = vld [vmem:[%s8818 + $0x48] sm:$0xf]
        %v9224 = vld [vmem:[%s8818 + $0x4c] sm:$0xf]
        %v9225 = vld [vmem:[%s8818 + $0x50] sm:$0x1]
        %v9226 = vld [vmem:[%s8818 + $0x54] sm:$0xf]
        %v9227 = vld [vmem:[%s8818 + $0x58] sm:$0xf]
        %v9228 = vld [vmem:[%s8818 + $0x5c] sm:$0x1]
        %v9229 = vld [vmem:[%s8818 + $0x60] sm:$0xf]
        %v9230 = vld [vmem:[%s8818 + $0x64] sm:$0xf]
        %v9231 = vld [vmem:[%s8818 + $0x68] sm:$0x1]
        %v9232 = vld [vmem:[%s8818 + $0x6c] sm:$0xf]
        %v9233 = vld [vmem:[%s8818 + $0x70] sm:$0xf]
        %v9234 = vld [vmem:[%s8818 + $0x74] sm:$0x1]
        %v9235 = vld [vmem:[%s8818 + $0x78] sm:$0xf]
        %v9236 = vld [vmem:[%s8818 + $0x7c] sm:$0xf]
        %v9237 = vld [vmem:[%s8818 + $0x80] sm:$0x1]
        %v9238 = vld [vmem:[%s8818 + $0x84] sm:$0xf]
        %v9239 = vld [vmem:[%s8818 + $0x88] sm:$0xf]
        %v9240 = vld [vmem:[%s8818 + $0x8c] sm:$0x1]
        %v9241 = vld [vmem:[%s8818 + $0x90] sm:$0xf]
        %v9242 = vld [vmem:[%s8818 + $0x94] sm:$0xf]
        %v9243 = vld [vmem:[%s8818 + $0x98] sm:$0x1]
        %v9244 = vld [vmem:[%s8818 + $0x9c] sm:$0xf]
        %v9245 = vld [vmem:[%s8818 + $0xa0] sm:$0xf]
        %v9246 = vld [vmem:[%s8818 + $0xa4] sm:$0x1]
        %v9247 = vld [vmem:[%s8818 + $0xa8] sm:$0xf]
        %v9248 = vld [vmem:[%s8818 + $0xac] sm:$0xf]
        %v9249 = vld [vmem:[%s8818 + $0xb0] sm:$0x1]
        %v9250 = vld [vmem:[%s8818 + $0xb4] sm:$0xf]
        %v9251 = vld [vmem:[%s8818 + $0xb8] sm:$0xf]
        %v9252 = vld [vmem:[%s8818 + $0xbc] sm:$0x1]
        %v9254 = vshrl.u32 %v9205, 16
        %v9256 = vrot.slane %v9254, 4
        %v9257 = vshll.u32 %v9205, 16
        %v9259 = vrot.slane %v9257, 5
        %v9260 = vor.u32 %v9256, %v9259
        %v9261 = vrot.slane %v9260, 4
        %v9263 = vshll.u32 %v9206, 16
        %v9265 = vrot.slane %v9263, 5
        %v9266 = vsel %vm306, %v9261, %v9265
        %v9267 = vshrl.u32 %v9206, 16
        %v9269 = vrot.slane %v9267, 4
        %v9270 = vor.u32 %v9269, %v9265
        %v9271 = vrot.slane %v9270, 4
        %v9273 = vshll.u32 %v9207, 16
        %v9275 = vrot.slane %v9273, 5
        %v9276 = vsel %vm306, %v9271, %v9275
        %v9278 = vshrl.u32 %v9208, 16
        %v9280 = vrot.slane %v9278, 4
        %v9281 = vshll.u32 %v9208, 16
        %v9283 = vrot.slane %v9281, 5
        %v9284 = vor.u32 %v9280, %v9283
        %v9285 = vrot.slane %v9284, 4
        %v9287 = vshll.u32 %v9209, 16
        %v9289 = vrot.slane %v9287, 5
        %v9290 = vsel %vm306, %v9285, %v9289
        %v9291 = vshrl.u32 %v9209, 16
        %v9293 = vrot.slane %v9291, 4
        %v9294 = vor.u32 %v9293, %v9289
        %v9295 = vrot.slane %v9294, 4
        %v9297 = vshll.u32 %v9210, 16
        %v9299 = vrot.slane %v9297, 5
        %v9300 = vsel %vm306, %v9295, %v9299
        %v9302 = vshrl.u32 %v9211, 16
        %v9304 = vrot.slane %v9302, 4
        %v9305 = vshll.u32 %v9211, 16
        %v9307 = vrot.slane %v9305, 5
        %v9308 = vor.u32 %v9304, %v9307
        %v9309 = vrot.slane %v9308, 4
        %v9311 = vshll.u32 %v9212, 16
        %v9313 = vrot.slane %v9311, 5
        %v9314 = vsel %vm306, %v9309, %v9313
        %v9315 = vshrl.u32 %v9212, 16
        %v9317 = vrot.slane %v9315, 4
        %v9318 = vor.u32 %v9317, %v9313
        %v9319 = vrot.slane %v9318, 4
        %v9321 = vshll.u32 %v9213, 16
        %v9323 = vrot.slane %v9321, 5
        %v9324 = vsel %vm306, %v9319, %v9323
        %v9326 = vshrl.u32 %v9214, 16
        %v9328 = vrot.slane %v9326, 4
        %v9329 = vshll.u32 %v9214, 16
        %v9331 = vrot.slane %v9329, 5
        %v9332 = vor.u32 %v9328, %v9331
        %v9333 = vrot.slane %v9332, 4
        %v9335 = vshll.u32 %v9215, 16
        %v9337 = vrot.slane %v9335, 5
        %v9338 = vsel %vm306, %v9333, %v9337
        %v9339 = vshrl.u32 %v9215, 16
        %v9341 = vrot.slane %v9339, 4
        %v9342 = vor.u32 %v9341, %v9337
        %v9343 = vrot.slane %v9342, 4
        %v9345 = vshll.u32 %v9216, 16
        %v9347 = vrot.slane %v9345, 5
        %v9348 = vsel %vm306, %v9343, %v9347
        %v9350 = vshrl.u32 %v9217, 16
        %v9352 = vrot.slane %v9350, 4
        %v9353 = vshll.u32 %v9217, 16
        %v9355 = vrot.slane %v9353, 5
        %v9356 = vor.u32 %v9352, %v9355
        %v9357 = vrot.slane %v9356, 4
        %v9359 = vshll.u32 %v9218, 16
        %v9361 = vrot.slane %v9359, 5
        %v9362 = vsel %vm306, %v9357, %v9361
        %v9363 = vshrl.u32 %v9218, 16
        %v9365 = vrot.slane %v9363, 4
        %v9366 = vor.u32 %v9365, %v9361
        %v9367 = vrot.slane %v9366, 4
        %v9369 = vshll.u32 %v9219, 16
        %v9371 = vrot.slane %v9369, 5
        %v9372 = vsel %vm306, %v9367, %v9371
        %v9374 = vshrl.u32 %v9220, 16
        %v9376 = vrot.slane %v9374, 4
        %v9377 = vshll.u32 %v9220, 16
        %v9379 = vrot.slane %v9377, 5
        %v9380 = vor.u32 %v9376, %v9379
        %v9381 = vrot.slane %v9380, 4
        %v9383 = vshll.u32 %v9221, 16
        %v9385 = vrot.slane %v9383, 5
        %v9386 = vsel %vm306, %v9381, %v9385
        %v9387 = vshrl.u32 %v9221, 16
        %v9389 = vrot.slane %v9387, 4
        %v9390 = vor.u32 %v9389, %v9385
        %v9391 = vrot.slane %v9390, 4
        %v9393 = vshll.u32 %v9222, 16
        %v9395 = vrot.slane %v9393, 5
        %v9396 = vsel %vm306, %v9391, %v9395
        %v9398 = vshrl.u32 %v9223, 16
        %v9400 = vrot.slane %v9398, 4
        %v9401 = vshll.u32 %v9223, 16
        %v9403 = vrot.slane %v9401, 5
        %v9404 = vor.u32 %v9400, %v9403
        %v9405 = vrot.slane %v9404, 4
        %v9407 = vshll.u32 %v9224, 16
        %v9409 = vrot.slane %v9407, 5
        %v9410 = vsel %vm306, %v9405, %v9409
        %v9411 = vshrl.u32 %v9224, 16
        %v9413 = vrot.slane %v9411, 4
        %v9414 = vor.u32 %v9413, %v9409
        %v9415 = vrot.slane %v9414, 4
        %v9417 = vshll.u32 %v9225, 16
        %v9419 = vrot.slane %v9417, 5
        %v9420 = vsel %vm306, %v9415, %v9419
        %v9422 = vshrl.u32 %v9226, 16
        %v9424 = vrot.slane %v9422, 4
        %v9425 = vshll.u32 %v9226, 16
        %v9427 = vrot.slane %v9425, 5
        %v9428 = vor.u32 %v9424, %v9427
        %v9429 = vrot.slane %v9428, 4
        %v9431 = vshll.u32 %v9227, 16
        %v9433 = vrot.slane %v9431, 5
        %v9434 = vsel %vm306, %v9429, %v9433
        %v9435 = vshrl.u32 %v9227, 16
        %v9437 = vrot.slane %v9435, 4
        %v9438 = vor.u32 %v9437, %v9433
        %v9439 = vrot.slane %v9438, 4
        %v9441 = vshll.u32 %v9228, 16
        %v9443 = vrot.slane %v9441, 5
        %v9444 = vsel %vm306, %v9439, %v9443
        %v9446 = vshrl.u32 %v9229, 16
        %v9448 = vrot.slane %v9446, 4
        %v9449 = vshll.u32 %v9229, 16
        %v9451 = vrot.slane %v9449, 5
        %v9452 = vor.u32 %v9448, %v9451
        %v9453 = vrot.slane %v9452, 4
        %v9455 = vshll.u32 %v9230, 16
        %v9457 = vrot.slane %v9455, 5
        %v9458 = vsel %vm306, %v9453, %v9457
        %v9459 = vshrl.u32 %v9230, 16
        %v9461 = vrot.slane %v9459, 4
        %v9462 = vor.u32 %v9461, %v9457
        %v9463 = vrot.slane %v9462, 4
        %v9465 = vshll.u32 %v9231, 16
        %v9467 = vrot.slane %v9465, 5
        %v9468 = vsel %vm306, %v9463, %v9467
        %v9470 = vshrl.u32 %v9232, 16
        %v9472 = vrot.slane %v9470, 4
        %v9473 = vshll.u32 %v9232, 16
        %v9475 = vrot.slane %v9473, 5
        %v9476 = vor.u32 %v9472, %v9475
        %v9477 = vrot.slane %v9476, 4
        %v9479 = vshll.u32 %v9233, 16
        %v9481 = vrot.slane %v9479, 5
        %v9482 = vsel %vm306, %v9477, %v9481
        %v9483 = vshrl.u32 %v9233, 16
        %v9485 = vrot.slane %v9483, 4
        %v9486 = vor.u32 %v9485, %v9481
        %v9487 = vrot.slane %v9486, 4
        %v9489 = vshll.u32 %v9234, 16
        %v9491 = vrot.slane %v9489, 5
        %v9492 = vsel %vm306, %v9487, %v9491
        %v9494 = vshrl.u32 %v9235, 16
        %v9496 = vrot.slane %v9494, 4
        %v9497 = vshll.u32 %v9235, 16
        %v9499 = vrot.slane %v9497, 5
        %v9500 = vor.u32 %v9496, %v9499
        %v9501 = vrot.slane %v9500, 4
        %v9503 = vshll.u32 %v9236, 16
        %v9505 = vrot.slane %v9503, 5
        %v9506 = vsel %vm306, %v9501, %v9505
        %v9507 = vshrl.u32 %v9236, 16
        %v9509 = vrot.slane %v9507, 4
        %v9510 = vor.u32 %v9509, %v9505
        %v9511 = vrot.slane %v9510, 4
        %v9513 = vshll.u32 %v9237, 16
        %v9515 = vrot.slane %v9513, 5
        %v9516 = vsel %vm306, %v9511, %v9515
        %v9518 = vshrl.u32 %v9238, 16
        %v9520 = vrot.slane %v9518, 4
        %v9521 = vshll.u32 %v9238, 16
        %v9523 = vrot.slane %v9521, 5
        %v9524 = vor.u32 %v9520, %v9523
        %v9525 = vrot.slane %v9524, 4
        %v9527 = vshll.u32 %v9239, 16
        %v9529 = vrot.slane %v9527, 5
        %v9530 = vsel %vm306, %v9525, %v9529
        %v9531 = vshrl.u32 %v9239, 16
        %v9533 = vrot.slane %v9531, 4
        %v9534 = vor.u32 %v9533, %v9529
        %v9535 = vrot.slane %v9534, 4
        %v9537 = vshll.u32 %v9240, 16
        %v9539 = vrot.slane %v9537, 5
        %v9540 = vsel %vm306, %v9535, %v9539
        %v9542 = vshrl.u32 %v9241, 16
        %v9544 = vrot.slane %v9542, 4
        %v9545 = vshll.u32 %v9241, 16
        %v9547 = vrot.slane %v9545, 5
        %v9548 = vor.u32 %v9544, %v9547
        %v9549 = vrot.slane %v9548, 4
        %v9551 = vshll.u32 %v9242, 16
        %v9553 = vrot.slane %v9551, 5
        %v9554 = vsel %vm306, %v9549, %v9553
        %v9555 = vshrl.u32 %v9242, 16
        %v9557 = vrot.slane %v9555, 4
        %v9558 = vor.u32 %v9557, %v9553
        %v9559 = vrot.slane %v9558, 4
        %v9561 = vshll.u32 %v9243, 16
        %v9563 = vrot.slane %v9561, 5
        %v9564 = vsel %vm306, %v9559, %v9563
        %v9566 = vshrl.u32 %v9244, 16
        %v9568 = vrot.slane %v9566, 4
        %v9569 = vshll.u32 %v9244, 16
        %v9571 = vrot.slane %v9569, 5
        %v9572 = vor.u32 %v9568, %v9571
        %v9573 = vrot.slane %v9572, 4
        %v9575 = vshll.u32 %v9245, 16
        %v9577 = vrot.slane %v9575, 5
        %v9578 = vsel %vm306, %v9573, %v9577
        %v9579 = vshrl.u32 %v9245, 16
        %v9581 = vrot.slane %v9579, 4
        %v9582 = vor.u32 %v9581, %v9577
        %v9583 = vrot.slane %v9582, 4
        %v9585 = vshll.u32 %v9246, 16
        %v9587 = vrot.slane %v9585, 5
        %v9588 = vsel %vm306, %v9583, %v9587
        %v9590 = vshrl.u32 %v9247, 16
        %v9592 = vrot.slane %v9590, 4
        %v9593 = vshll.u32 %v9247, 16
        %v9595 = vrot.slane %v9593, 5
        %v9596 = vor.u32 %v9592, %v9595
        %v9597 = vrot.slane %v9596, 4
        %v9599 = vshll.u32 %v9248, 16
        %v9601 = vrot.slane %v9599, 5
        %v9602 = vsel %vm306, %v9597, %v9601
        %v9603 = vshrl.u32 %v9248, 16
        %v9605 = vrot.slane %v9603, 4
        %v9606 = vor.u32 %v9605, %v9601
        %v9607 = vrot.slane %v9606, 4
        %v9609 = vshll.u32 %v9249, 16
        %v9611 = vrot.slane %v9609, 5
        %v9612 = vsel %vm306, %v9607, %v9611
        %v9614 = vshrl.u32 %v9250, 16
        %v9616 = vrot.slane %v9614, 4
        %v9617 = vshll.u32 %v9250, 16
        %v9619 = vrot.slane %v9617, 5
        %v9620 = vor.u32 %v9616, %v9619
        %v9621 = vrot.slane %v9620, 4
        %v9623 = vshll.u32 %v9251, 16
        %v9625 = vrot.slane %v9623, 5
        %v9626 = vsel %vm306, %v9621, %v9625
        %v9627 = vshrl.u32 %v9251, 16
        %v9629 = vrot.slane %v9627, 4
        %v9630 = vor.u32 %v9629, %v9625
        %v9631 = vrot.slane %v9630, 4
        %v9633 = vshll.u32 %v9252, 16
        %v9635 = vrot.slane %v9633, 5
        %v9636 = vsel %vm306, %v9631, %v9635
        %s9637 = scalar_lea.vmem [#allocation3], 1024
        %v9638 = vld [vmem:[%s9637] sm:$0xf]
        %v9639 = vld [vmem:[%s9637 + $0x4] sm:$0xf]
        %v9640 = vld [vmem:[%s9637 + $0x8] sm:$0xf]
        %v9641 = vld [vmem:[%s9637 + $0xc] sm:$0xf]
        %v9642 = vld [vmem:[%s9637 + $0x10] sm:$0xf]
        %v9643 = vld [vmem:[%s9637 + $0x14] sm:$0xf]
        %v9644 = vld [vmem:[%s9637 + $0x18] sm:$0xf]
        %v9645 = vld [vmem:[%s9637 + $0x1c] sm:$0xf]
        %v9646 = vld [vmem:[%s9637 + $0x20] sm:$0xf]
        %v9647 = vld [vmem:[%s9637 + $0x24] sm:$0xf]
        %v9648 = vld [vmem:[%s9637 + $0x28] sm:$0xf]
        %v9649 = vld [vmem:[%s9637 + $0x2c] sm:$0xf]
        %v9650 = vld [vmem:[%s9637 + $0x30] sm:$0xf]
        %v9651 = vld [vmem:[%s9637 + $0x34] sm:$0xf]
        %v9652 = vld [vmem:[%s9637 + $0x38] sm:$0xf]
        %v9653 = vld [vmem:[%s9637 + $0x3c] sm:$0xf]
        %v9654 = vunpack.c.l.b16 %v9266
        %v9655 = vunpack.c.l.b16 %v9276
        %v9656 = vunpack.c.l.b16 %v9290
        %v9657 = vunpack.c.l.b16 %v9300
        %v9658 = vunpack.c.l.b16 %v9314
        %v9659 = vunpack.c.l.b16 %v9324
        %v9660 = vunpack.c.l.b16 %v9338
        %v9661 = vunpack.c.l.b16 %v9348
        %v9662 = vunpack.c.l.b16 %v9362
        %v9663 = vunpack.c.l.b16 %v9372
        %v9664 = vunpack.c.l.b16 %v9386
        %v9665 = vunpack.c.l.b16 %v9396
        %v9666 = vunpack.c.l.b16 %v9410
        %v9667 = vunpack.c.l.b16 %v9420
        %v9668 = vunpack.c.l.b16 %v9434
        %v9669 = vunpack.c.l.b16 %v9444
        %v9670 = vunpack.c.l.b16 %v9458
        %v9671 = vunpack.c.l.b16 %v9468
        %v9672 = vunpack.c.l.b16 %v9482
        %v9673 = vunpack.c.l.b16 %v9492
        %v9674 = vunpack.c.l.b16 %v9506
        %v9675 = vunpack.c.l.b16 %v9516
        %v9676 = vunpack.c.l.b16 %v9530
        %v9677 = vunpack.c.l.b16 %v9540
        %v9678 = vunpack.c.l.b16 %v9554
        %v9679 = vunpack.c.l.b16 %v9564
        %v9680 = vunpack.c.l.b16 %v9578
        %v9681 = vunpack.c.l.b16 %v9588
        %v9682 = vunpack.c.l.b16 %v9602
        %v9683 = vunpack.c.l.b16 %v9612
        %v9684 = vunpack.c.l.b16 %v9626
        %v9685 = vunpack.c.l.b16 %v9636
        %v9686 = vpack.c.b16 %v9655, %v9654
        %v9687 = vpack.c.b16 %v9657, %v9656
        %v9688 = vpack.c.b16 %v9659, %v9658
        %v9689 = vpack.c.b16 %v9661, %v9660
        %v9690 = vpack.c.b16 %v9663, %v9662
        %v9691 = vpack.c.b16 %v9665, %v9664
        %v9692 = vpack.c.b16 %v9667, %v9666
        %v9693 = vpack.c.b16 %v9669, %v9668
        %v9694 = vpack.c.b16 %v9671, %v9670
        %v9695 = vpack.c.b16 %v9673, %v9672
        %v9696 = vpack.c.b16 %v9675, %v9674
        %v9697 = vpack.c.b16 %v9677, %v9676
        %v9698 = vpack.c.b16 %v9679, %v9678
        %v9699 = vpack.c.b16 %v9681, %v9680
        %v9700 = vpack.c.b16 %v9683, %v9682
        %v9701 = vpack.c.b16 %v9685, %v9684
        %v9734 = vunpack.c.l.b16 %v9638
        %v9735 = vunpack.c.l.b16 %v9639
        %v9736 = vunpack.c.l.b16 %v9640
        %v9737 = vunpack.c.l.b16 %v9641
        %v9738 = vunpack.c.l.b16 %v9642
        %v9739 = vunpack.c.l.b16 %v9643
        %v9740 = vunpack.c.l.b16 %v9644
        %v9741 = vunpack.c.l.b16 %v9645
        %v9742 = vunpack.c.l.b16 %v9646
        %v9743 = vunpack.c.l.b16 %v9647
        %v9744 = vunpack.c.l.b16 %v9648
        %v9745 = vunpack.c.l.b16 %v9649
        %v9746 = vunpack.c.l.b16 %v9650
        %v9747 = vunpack.c.l.b16 %v9651
        %v9748 = vunpack.c.l.b16 %v9652
        %v9749 = vunpack.c.l.b16 %v9653
        %v9750 = vpack.c.b16 %v9735, %v9734
        %v9751 = vpack.c.b16 %v9737, %v9736
        %v9752 = vpack.c.b16 %v9739, %v9738
        %v9753 = vpack.c.b16 %v9741, %v9740
        %v9754 = vpack.c.b16 %v9743, %v9742
        %v9755 = vpack.c.b16 %v9745, %v9744
        %v9756 = vpack.c.b16 %v9747, %v9746
        %v9757 = vpack.c.b16 %v9749, %v9748
        %9766 = vmatprep.subr.bf16.mxu0 0
        %9767 = vmatpush1.bf16.msra.mxu0 %v9750
        %9768 = vmatprep.subr.bf16.mxu0 0
        %9769 = vmatpush1.bf16.msra.mxu0 %v9751
        %9770 = vmatprep.subr.bf16.mxu0 0
        %9771 = vmatpush1.bf16.msra.mxu0 %v9752
        %9772 = vmatprep.subr.bf16.mxu0 0
        %9773 = vmatpush1.bf16.msra.mxu0 %v9753
        %9774 = vmatprep.subr.bf16.mxu0 0
        %9775 = vmatpush1.bf16.msra.mxu0 %v9754
        %9776 = vmatprep.subr.bf16.mxu0 0
        %9777 = vmatpush1.bf16.msra.mxu0 %v9755
        %9778 = vmatprep.subr.bf16.mxu0 0
        %9779 = vmatpush1.bf16.msra.mxu0 %v9756
        %9780 = vmatprep.subr.bf16.mxu0 0
        %9781 = vmatpush1.bf16.msra.mxu0 %v9757
        %9782 = vmatprep.subr.bf16.mxu0 0
        %9783 = vmatpush1.bf16.msra.mxu0 0
        %9784 = vmatprep.subr.bf16.mxu0 0
        %9785 = vmatpush1.bf16.msra.mxu0 0
        %9786 = vmatprep.subr.bf16.mxu0 0
        %9787 = vmatpush1.bf16.msra.mxu0 0
        %9788 = vmatprep.subr.bf16.mxu0 0
        %9789 = vmatpush1.bf16.msra.mxu0 0
        %9790 = vmatprep.subr.bf16.mxu0 0
        %9791 = vmatpush1.bf16.msra.mxu0 0
        %9792 = vmatprep.subr.bf16.mxu0 0
        %9793 = vmatpush1.bf16.msra.mxu0 0
        %9794 = vmatprep.subr.bf16.mxu0 0
        %9795 = vmatpush1.bf16.msra.mxu0 0
        %9796 = vmatprep.subr.bf16.mxu0 0
        %9797 = vmatpush1.bf16.msra.mxu0 0
        %9798 = vmatprep.mubr.bf16.mxu0 0
        %9799 = vmatmul.mubr.bf16.gmra.mrb[0].mxu0 %v9686
        %v9800 = vpop.f32.mrb[0].mxu0
        %v9801 = vadd.f32 0.0, %v9800
        %v9802 = vpop.f32.mrb[0].mxu0
        %v9803 = vpop.f32.mrb[0].mxu0
        %v9804 = vadd.f32 0.0, %v9803
        %v9805 = vpop.f32.mrb[0].mxu0
        %9806 = vmatprep.mubr.bf16.mxu0 0
        %9807 = vmatmul.mubr.bf16.gmra.mrb[0].mxu0 %v9687
        %v9808 = vpop.f32.mrb[0].mxu0
        %v9809 = vadd.f32 0.0, %v9808
        %v9810 = vpop.f32.mrb[0].mxu0
        %v9811 = vpop.f32.mrb[0].mxu0
        %v9812 = vadd.f32 0.0, %v9811
        %v9813 = vpop.f32.mrb[0].mxu0
        %9814 = vmatprep.mubr.bf16.mxu0 0
        %9815 = vmatmul.mubr.bf16.gmra.mrb[0].mxu0 %v9688
        %v9816 = vpop.f32.mrb[0].mxu0
        %v9817 = vadd.f32 0.0, %v9816
        %v9818 = vpop.f32.mrb[0].mxu0
        %v9819 = vpop.f32.mrb[0].mxu0
        %v9820 = vadd.f32 0.0, %v9819
        %v9821 = vpop.f32.mrb[0].mxu0
        %9822 = vmatprep.mubr.bf16.mxu0 0
        %9823 = vmatmul.mubr.bf16.gmra.mrb[0].mxu0 %v9689
        %v9824 = vpop.f32.mrb[0].mxu0
        %v9825 = vadd.f32 0.0, %v9824
        %v9826 = vpop.f32.mrb[0].mxu0
        %v9827 = vpop.f32.mrb[0].mxu0
        %v9828 = vadd.f32 0.0, %v9827
        %v9829 = vpop.f32.mrb[0].mxu0
        %9830 = vmatprep.mubr.bf16.mxu0 0
        %9831 = vmatmul.mubr.bf16.gmra.mrb[0].mxu0 %v9690
        %v9832 = vpop.f32.mrb[0].mxu0
        %v9833 = vadd.f32 0.0, %v9832
        %v9834 = vpop.f32.mrb[0].mxu0
        %v9835 = vpop.f32.mrb[0].mxu0
        %v9836 = vadd.f32 0.0, %v9835
        %v9837 = vpop.f32.mrb[0].mxu0
        %9838 = vmatprep.mubr.bf16.mxu0 0
        %9839 = vmatmul.mubr.bf16.gmra.mrb[0].mxu0 %v9691
        %v9840 = vpop.f32.mrb[0].mxu0
        %v9841 = vadd.f32 0.0, %v9840
        %v9842 = vpop.f32.mrb[0].mxu0
        %v9843 = vpop.f32.mrb[0].mxu0
        %v9844 = vadd.f32 0.0, %v9843
        %v9845 = vpop.f32.mrb[0].mxu0
        %9846 = vmatprep.mubr.bf16.mxu0 0
        %9847 = vmatmul.mubr.bf16.gmra.mrb[0].mxu0 %v9692
        %v9848 = vpop.f32.mrb[0].mxu0
        %v9849 = vadd.f32 0.0, %v9848
        %v9850 = vpop.f32.mrb[0].mxu0
        %v9851 = vpop.f32.mrb[0].mxu0
        %v9852 = vadd.f32 0.0, %v9851
        %v9853 = vpop.f32.mrb[0].mxu0
        %9854 = vmatprep.mubr.bf16.mxu0 0
        %9855 = vmatmul.mubr.bf16.gmra.mrb[0].mxu0 %v9693
        %v9856 = vpop.f32.mrb[0].mxu0
        %v9857 = vadd.f32 0.0, %v9856
        %v9858 = vpop.f32.mrb[0].mxu0
        %v9859 = vpop.f32.mrb[0].mxu0
        %v9860 = vadd.f32 0.0, %v9859
        %v9861 = vpop.f32.mrb[0].mxu0
        %9862 = vmatprep.mubr.bf16.mxu0 0
        %9863 = vmatmul.mubr.bf16.gmra.mrb[0].mxu0 %v9694
        %v9864 = vpop.f32.mrb[0].mxu0
        %v9865 = vadd.f32 0.0, %v9864
        %v9866 = vpop.f32.mrb[0].mxu0
        %v9867 = vpop.f32.mrb[0].mxu0
        %v9868 = vadd.f32 0.0, %v9867
        %v9869 = vpop.f32.mrb[0].mxu0
        %9870 = vmatprep.mubr.bf16.mxu0 0
        %9871 = vmatmul.mubr.bf16.gmra.mrb[0].mxu0 %v9695
        %v9872 = vpop.f32.mrb[0].mxu0
        %v9873 = vadd.f32 0.0, %v9872
        %v9874 = vpop.f32.mrb[0].mxu0
        %v9875 = vpop.f32.mrb[0].mxu0
        %v9876 = vadd.f32 0.0, %v9875
        %v9877 = vpop.f32.mrb[0].mxu0
        %9878 = vmatprep.mubr.bf16.mxu0 0
        %9879 = vmatmul.mubr.bf16.gmra.mrb[0].mxu0 %v9696
        %v9880 = vpop.f32.mrb[0].mxu0
        %v9881 = vadd.f32 0.0, %v9880
        %v9882 = vpop.f32.mrb[0].mxu0
        %v9883 = vpop.f32.mrb[0].mxu0
        %v9884 = vadd.f32 0.0, %v9883
        %v9885 = vpop.f32.mrb[0].mxu0
        %9886 = vmatprep.mubr.bf16.mxu0 0
        %9887 = vmatmul.mubr.bf16.gmra.mrb[0].mxu0 %v9697
        %v9888 = vpop.f32.mrb[0].mxu0
        %v9889 = vadd.f32 0.0, %v9888
        %v9890 = vpop.f32.mrb[0].mxu0
        %v9891 = vpop.f32.mrb[0].mxu0
        %v9892 = vadd.f32 0.0, %v9891
        %v9893 = vpop.f32.mrb[0].mxu0
        %9894 = vmatprep.mubr.bf16.mxu0 0
        %9895 = vmatmul.mubr.bf16.gmra.mrb[0].mxu0 %v9698
        %v9896 = vpop.f32.mrb[0].mxu0
        %v9897 = vadd.f32 0.0, %v9896
        %v9898 = vpop.f32.mrb[0].mxu0
        %v9899 = vpop.f32.mrb[0].mxu0
        %v9900 = vadd.f32 0.0, %v9899
        %v9901 = vpop.f32.mrb[0].mxu0
        %9902 = vmatprep.mubr.bf16.mxu0 0
        %9903 = vmatmul.mubr.bf16.gmra.mrb[0].mxu0 %v9699
        %v9904 = vpop.f32.mrb[0].mxu0
        %v9905 = vadd.f32 0.0, %v9904
        %v9906 = vpop.f32.mrb[0].mxu0
        %v9907 = vpop.f32.mrb[0].mxu0
        %v9908 = vadd.f32 0.0, %v9907
        %v9909 = vpop.f32.mrb[0].mxu0
        %9910 = vmatprep.mubr.bf16.mxu0 0
        %9911 = vmatmul.mubr.bf16.gmra.mrb[0].mxu0 %v9700
        %v9912 = vpop.f32.mrb[0].mxu0
        %v9913 = vadd.f32 0.0, %v9912
        %v9914 = vpop.f32.mrb[0].mxu0
        %v9915 = vpop.f32.mrb[0].mxu0
        %v9916 = vadd.f32 0.0, %v9915
        %v9917 = vpop.f32.mrb[0].mxu0
        %9918 = vmatprep.mubr.bf16.mxu0 0
        %9919 = vmatmul.mubr.bf16.gmra.mrb[0].mxu0 %v9701
        %v9920 = vpop.f32.mrb[0].mxu0
        %v9921 = vadd.f32 0.0, %v9920
        %v9922 = vpop.f32.mrb[0].mxu0
        %v9923 = vpop.f32.mrb[0].mxu0
        %v9924 = vadd.f32 0.0, %v9923
        %v9925 = vpop.f32.mrb[0].mxu0
        %9926 = vdwg.mxu0
        %v9927 = vadd.f32 %v9173, %v9801
        %v9928 = vadd.f32 %v9174, %v9804
        %v9929 = vadd.f32 %v9175, %v9809
        %v9930 = vadd.f32 %v9176, %v9812
        %v9931 = vadd.f32 %v9177, %v9817
        %v9932 = vadd.f32 %v9178, %v9820
        %v9933 = vadd.f32 %v9179, %v9825
        %v9934 = vadd.f32 %v9180, %v9828
        %v9935 = vadd.f32 %v9181, %v9833
        %v9936 = vadd.f32 %v9182, %v9836
        %v9937 = vadd.f32 %v9183, %v9841
        %v9938 = vadd.f32 %v9184, %v9844
        %v9939 = vadd.f32 %v9185, %v9849
        %v9940 = vadd.f32 %v9186, %v9852
        %v9941 = vadd.f32 %v9187, %v9857
        %v9942 = vadd.f32 %v9188, %v9860
        %v9943 = vadd.f32 %v9189, %v9865
        %v9944 = vadd.f32 %v9190, %v9868
        %v9945 = vadd.f32 %v9191, %v9873
        %v9946 = vadd.f32 %v9192, %v9876
        %v9947 = vadd.f32 %v9193, %v9881
        %v9948 = vadd.f32 %v9194, %v9884
        %v9949 = vadd.f32 %v9195, %v9889
        %v9950 = vadd.f32 %v9196, %v9892
        %v9951 = vadd.f32 %v9197, %v9897
        %v9952 = vadd.f32 %v9198, %v9900
        %v9953 = vadd.f32 %v9199, %v9905
        %v9954 = vadd.f32 %v9200, %v9908
        %v9955 = vadd.f32 %v9201, %v9913
        %v9956 = vadd.f32 %v9202, %v9916
        %v9957 = vadd.f32 %v9203, %v9921
        %v9958 = vadd.f32 %v9204, %v9924
        %v9959 = vld [vmem:[%s8818] sm:$0xe]
        %v9960 = vld [vmem:[%s8818 + $0xc] sm:$0xe]
        %v9961 = vld [vmem:[%s8818 + $0x18] sm:$0xe]
        %v9962 = vld [vmem:[%s8818 + $0x24] sm:$0xe]
        %v9963 = vld [vmem:[%s8818 + $0x30] sm:$0xe]
        %v9964 = vld [vmem:[%s8818 + $0x3c] sm:$0xe]
        %v9965 = vld [vmem:[%s8818 + $0x48] sm:$0xe]
        %v9966 = vld [vmem:[%s8818 + $0x54] sm:$0xe]
        %v9967 = vld [vmem:[%s8818 + $0x60] sm:$0xe]
        %v9968 = vld [vmem:[%s8818 + $0x6c] sm:$0xe]
        %v9969 = vld [vmem:[%s8818 + $0x78] sm:$0xe]
        %v9970 = vld [vmem:[%s8818 + $0x84] sm:$0xe]
        %v9971 = vld [vmem:[%s8818 + $0x90] sm:$0xe]
        %v9972 = vld [vmem:[%s8818 + $0x9c] sm:$0xe]
        %v9973 = vld [vmem:[%s8818 + $0xa8] sm:$0xe]
        %v9974 = vld [vmem:[%s8818 + $0xb4] sm:$0xe]
        %v10023 = vrot.slane %v9959, 5
        %v10024 = vrot.slane %v10023, 4
        %v10025 = vrot.slane %v9206, 5
        %v10026 = vsel %vm1336, %v10024, %v10025
        %v10027 = vrot.slane %v10025, 4
        %v10028 = vrot.slane %v9207, 5
        %v10029 = vsel %vm1336, %v10027, %v10028
        %v10030 = vrot.slane %v9960, 5
        %v10031 = vrot.slane %v10030, 4
        %v10032 = vrot.slane %v9209, 5
        %v10033 = vsel %vm1336, %v10031, %v10032
        %v10034 = vrot.slane %v10032, 4
        %v10035 = vrot.slane %v9210, 5
        %v10036 = vsel %vm1336, %v10034, %v10035
        %v10037 = vrot.slane %v9961, 5
        %v10038 = vrot.slane %v10037, 4
        %v10039 = vrot.slane %v9212, 5
        %v10040 = vsel %vm1336, %v10038, %v10039
        %v10041 = vrot.slane %v10039, 4
        %v10042 = vrot.slane %v9213, 5
        %v10043 = vsel %vm1336, %v10041, %v10042
        %v10044 = vrot.slane %v9962, 5
        %v10045 = vrot.slane %v10044, 4
        %v10046 = vrot.slane %v9215, 5
        %v10047 = vsel %vm1336, %v10045, %v10046
        %v10048 = vrot.slane %v10046, 4
        %v10049 = vrot.slane %v9216, 5
        %v10050 = vsel %vm1336, %v10048, %v10049
        %v10051 = vrot.slane %v9963, 5
        %v10052 = vrot.slane %v10051, 4
        %v10053 = vrot.slane %v9218, 5
        %v10054 = vsel %vm1336, %v10052, %v10053
        %v10055 = vrot.slane %v10053, 4
        %v10056 = vrot.slane %v9219, 5
        %v10057 = vsel %vm1336, %v10055, %v10056
        %v10058 = vrot.slane %v9964, 5
        %v10059 = vrot.slane %v10058, 4
        %v10060 = vrot.slane %v9221, 5
        %v10061 = vsel %vm1336, %v10059, %v10060
        %v10062 = vrot.slane %v10060, 4
        %v10063 = vrot.slane %v9222, 5
        %v10064 = vsel %vm1336, %v10062, %v10063
        %v10065 = vrot.slane %v9965, 5
        %v10066 = vrot.slane %v10065, 4
        %v10067 = vrot.slane %v9224, 5
        %v10068 = vsel %vm1336, %v10066, %v10067
        %v10069 = vrot.slane %v10067, 4
        %v10070 = vrot.slane %v9225, 5
        %v10071 = vsel %vm1336, %v10069, %v10070
        %v10072 = vrot.slane %v9966, 5
        %v10073 = vrot.slane %v10072, 4
        %v10074 = vrot.slane %v9227, 5
        %v10075 = vsel %vm1336, %v10073, %v10074
        %v10076 = vrot.slane %v10074, 4
        %v10077 = vrot.slane %v9228, 5
        %v10078 = vsel %vm1336, %v10076, %v10077
        %v10079 = vrot.slane %v9967, 5
        %v10080 = vrot.slane %v10079, 4
        %v10081 = vrot.slane %v9230, 5
        %v10082 = vsel %vm1336, %v10080, %v10081
        %v10083 = vrot.slane %v10081, 4
        %v10084 = vrot.slane %v9231, 5
        %v10085 = vsel %vm1336, %v10083, %v10084
        %v10086 = vrot.slane %v9968, 5
        %v10087 = vrot.slane %v10086, 4
        %v10088 = vrot.slane %v9233, 5
        %v10089 = vsel %vm1336, %v10087, %v10088
        %v10090 = vrot.slane %v10088, 4
        %v10091 = vrot.slane %v9234, 5
        %v10092 = vsel %vm1336, %v10090, %v10091
        %v10093 = vrot.slane %v9969, 5
        %v10094 = vrot.slane %v10093, 4
        %v10095 = vrot.slane %v9236, 5
        %v10096 = vsel %vm1336, %v10094, %v10095
        %v10097 = vrot.slane %v10095, 4
        %v10098 = vrot.slane %v9237, 5
        %v10099 = vsel %vm1336, %v10097, %v10098
        %v10100 = vrot.slane %v9970, 5
        %v10101 = vrot.slane %v10100, 4
        %v10102 = vrot.slane %v9239, 5
        %v10103 = vsel %vm1336, %v10101, %v10102
        %v10104 = vrot.slane %v10102, 4
        %v10105 = vrot.slane %v9240, 5
        %v10106 = vsel %vm1336, %v10104, %v10105
        %v10107 = vrot.slane %v9971, 5
        %v10108 = vrot.slane %v10107, 4
        %v10109 = vrot.slane %v9242, 5
        %v10110 = vsel %vm1336, %v10108, %v10109
        %v10111 = vrot.slane %v10109, 4
        %v10112 = vrot.slane %v9243, 5
        %v10113 = vsel %vm1336, %v10111, %v10112
        %v10114 = vrot.slane %v9972, 5
        %v10115 = vrot.slane %v10114, 4
        %v10116 = vrot.slane %v9245, 5
        %v10117 = vsel %vm1336, %v10115, %v10116
        %v10118 = vrot.slane %v10116, 4
        %v10119 = vrot.slane %v9246, 5
        %v10120 = vsel %vm1336, %v10118, %v10119
        %v10121 = vrot.slane %v9973, 5
        %v10122 = vrot.slane %v10121, 4
        %v10123 = vrot.slane %v9248, 5
        %v10124 = vsel %vm1336, %v10122, %v10123
        %v10125 = vrot.slane %v10123, 4
        %v10126 = vrot.slane %v9249, 5
        %v10127 = vsel %vm1336, %v10125, %v10126
        %v10128 = vrot.slane %v9974, 5
        %v10129 = vrot.slane %v10128, 4
        %v10130 = vrot.slane %v9251, 5
        %v10131 = vsel %vm1336, %v10129, %v10130
        %v10132 = vrot.slane %v10130, 4
        %v10133 = vrot.slane %v9252, 5
        %v10134 = vsel %vm1336, %v10132, %v10133
        %s10135 = scalar_lea.vmem [#allocation3], 1088
        %v10136 = vld [vmem:[%s10135] sm:$0xf]
        %v10137 = vld [vmem:[%s10135 + $0x4] sm:$0xf]
        %v10138 = vld [vmem:[%s10135 + $0x8] sm:$0xf]
        %v10139 = vld [vmem:[%s10135 + $0xc] sm:$0xf]
        %v10140 = vld [vmem:[%s10135 + $0x10] sm:$0xf]
        %v10141 = vld [vmem:[%s10135 + $0x14] sm:$0xf]
        %v10142 = vld [vmem:[%s10135 + $0x18] sm:$0xf]
        %v10143 = vld [vmem:[%s10135 + $0x1c] sm:$0xf]
        %v10144 = vld [vmem:[%s10135 + $0x20] sm:$0xf]
        %v10145 = vld [vmem:[%s10135 + $0x24] sm:$0xf]
        %v10146 = vld [vmem:[%s10135 + $0x28] sm:$0xf]
        %v10147 = vld [vmem:[%s10135 + $0x2c] sm:$0xf]
        %v10148 = vld [vmem:[%s10135 + $0x30] sm:$0xf]
        %v10149 = vld [vmem:[%s10135 + $0x34] sm:$0xf]
        %v10150 = vld [vmem:[%s10135 + $0x38] sm:$0xf]
        %v10151 = vld [vmem:[%s10135 + $0x3c] sm:$0xf]
        %v10152 = vunpack.c.l.b16 %v10026
        %v10153 = vunpack.c.l.b16 %v10029
        %v10154 = vunpack.c.l.b16 %v10033
        %v10155 = vunpack.c.l.b16 %v10036
        %v10156 = vunpack.c.l.b16 %v10040
        %v10157 = vunpack.c.l.b16 %v10043
        %v10158 = vunpack.c.l.b16 %v10047
        %v10159 = vunpack.c.l.b16 %v10050
        %v10160 = vunpack.c.l.b16 %v10054
        %v10161 = vunpack.c.l.b16 %v10057
        %v10162 = vunpack.c.l.b16 %v10061
        %v10163 = vunpack.c.l.b16 %v10064
        %v10164 = vunpack.c.l.b16 %v10068
        %v10165 = vunpack.c.l.b16 %v10071
        %v10166 = vunpack.c.l.b16 %v10075
        %v10167 = vunpack.c.l.b16 %v10078
        %v10168 = vunpack.c.l.b16 %v10082
        %v10169 = vunpack.c.l.b16 %v10085
        %v10170 = vunpack.c.l.b16 %v10089
        %v10171 = vunpack.c.l.b16 %v10092
        %v10172 = vunpack.c.l.b16 %v10096
        %v10173 = vunpack.c.l.b16 %v10099
        %v10174 = vunpack.c.l.b16 %v10103
        %v10175 = vunpack.c.l.b16 %v10106
        %v10176 = vunpack.c.l.b16 %v10110
        %v10177 = vunpack.c.l.b16 %v10113
        %v10178 = vunpack.c.l.b16 %v10117
        %v10179 = vunpack.c.l.b16 %v10120
        %v10180 = vunpack.c.l.b16 %v10124
        %v10181 = vunpack.c.l.b16 %v10127
        %v10182 = vunpack.c.l.b16 %v10131
        %v10183 = vunpack.c.l.b16 %v10134
        %v10184 = vpack.c.b16 %v10153, %v10152
        %v10185 = vpack.c.b16 %v10155, %v10154
        %v10186 = vpack.c.b16 %v10157, %v10156
        %v10187 = vpack.c.b16 %v10159, %v10158
        %v10188 = vpack.c.b16 %v10161, %v10160
        %v10189 = vpack.c.b16 %v10163, %v10162
        %v10190 = vpack.c.b16 %v10165, %v10164
        %v10191 = vpack.c.b16 %v10167, %v10166
        %v10192 = vpack.c.b16 %v10169, %v10168
        %v10193 = vpack.c.b16 %v10171, %v10170
        %v10194 = vpack.c.b16 %v10173, %v10172
        %v10195 = vpack.c.b16 %v10175, %v10174
        %v10196 = vpack.c.b16 %v10177, %v10176
        %v10197 = vpack.c.b16 %v10179, %v10178
        %v10198 = vpack.c.b16 %v10181, %v10180
        %v10199 = vpack.c.b16 %v10183, %v10182
        %v10232 = vunpack.c.l.b16 %v10136
        %v10233 = vunpack.c.l.b16 %v10137
        %v10234 = vunpack.c.l.b16 %v10138
        %v10235 = vunpack.c.l.b16 %v10139
        %v10236 = vunpack.c.l.b16 %v10140
        %v10237 = vunpack.c.l.b16 %v10141
        %v10238 = vunpack.c.l.b16 %v10142
        %v10239 = vunpack.c.l.b16 %v10143
        %v10240 = vunpack.c.l.b16 %v10144
        %v10241 = vunpack.c.l.b16 %v10145
        %v10242 = vunpack.c.l.b16 %v10146
        %v10243 = vunpack.c.l.b16 %v10147
        %v10244 = vunpack.c.l.b16 %v10148
        %v10245 = vunpack.c.l.b16 %v10149
        %v10246 = vunpack.c.l.b16 %v10150
        %v10247 = vunpack.c.l.b16 %v10151
        %v10248 = vpack.c.b16 %v10233, %v10232
        %v10249 = vpack.c.b16 %v10235, %v10234
        %v10250 = vpack.c.b16 %v10237, %v10236
        %v10251 = vpack.c.b16 %v10239, %v10238
        %v10252 = vpack.c.b16 %v10241, %v10240
        %v10253 = vpack.c.b16 %v10243, %v10242
        %v10254 = vpack.c.b16 %v10245, %v10244
        %v10255 = vpack.c.b16 %v10247, %v10246
        %10264 = vmatprep.subr.bf16.mxu0 0
        %10265 = vmatpush1.bf16.msra.mxu0 %v10248
        %10266 = vmatprep.subr.bf16.mxu0 0
        %10267 = vmatpush1.bf16.msra.mxu0 %v10249
        %10268 = vmatprep.subr.bf16.mxu0 0
        %10269 = vmatpush1.bf16.msra.mxu0 %v10250
        %10270 = vmatprep.subr.bf16.mxu0 0
        %10271 = vmatpush1.bf16.msra.mxu0 %v10251
        %10272 = vmatprep.subr.bf16.mxu0 0
        %10273 = vmatpush1.bf16.msra.mxu0 %v10252
        %10274 = vmatprep.subr.bf16.mxu0 0
        %10275 = vmatpush1.bf16.msra.mxu0 %v10253
        %10276 = vmatprep.subr.bf16.mxu0 0
        %10277 = vmatpush1.bf16.msra.mxu0 %v10254
        %10278 = vmatprep.subr.bf16.mxu0 0
        %10279 = vmatpush1.bf16.msra.mxu0 %v10255
        %10280 = vmatprep.subr.bf16.mxu0 0
        %10281 = vmatpush1.bf16.msra.mxu0 0
        %10282 = vmatprep.subr.bf16.mxu0 0
        %10283 = vmatpush1.bf16.msra.mxu0 0
        %10284 = vmatprep.subr.bf16.mxu0 0
        %10285 = vmatpush1.bf16.msra.mxu0 0
        %10286 = vmatprep.subr.bf16.mxu0 0
        %10287 = vmatpush1.bf16.msra.mxu0 0
        %10288 = vmatprep.subr.bf16.mxu0 0
        %10289 = vmatpush1.bf16.msra.mxu0 0
        %10290 = vmatprep.subr.bf16.mxu0 0
        %10291 = vmatpush1.bf16.msra.mxu0 0
        %10292 = vmatprep.subr.bf16.mxu0 0
        %10293 = vmatpush1.bf16.msra.mxu0 0
        %10294 = vmatprep.subr.bf16.mxu0 0
        %10295 = vmatpush1.bf16.msra.mxu0 0
        %10296 = vmatprep.mubr.bf16.mxu0 0
        %10297 = vmatmul.mubr.bf16.gmra.mrb[0].mxu0 %v10184
        %v10298 = vpop.f32.mrb[0].mxu0
        %v10299 = vadd.f32 0.0, %v10298
        %v10300 = vpop.f32.mrb[0].mxu0
        %v10301 = vpop.f32.mrb[0].mxu0
        %v10302 = vadd.f32 0.0, %v10301
        %v10303 = vpop.f32.mrb[0].mxu0
        %10304 = vmatprep.mubr.bf16.mxu0 0
        %10305 = vmatmul.mubr.bf16.gmra.mrb[0].mxu0 %v10185
        %v10306 = vpop.f32.mrb[0].mxu0
        %v10307 = vadd.f32 0.0, %v10306
        %v10308 = vpop.f32.mrb[0].mxu0
        %v10309 = vpop.f32.mrb[0].mxu0
        %v10310 = vadd.f32 0.0, %v10309
        %v10311 = vpop.f32.mrb[0].mxu0
        %10312 = vmatprep.mubr.bf16.mxu0 0
        %10313 = vmatmul.mubr.bf16.gmra.mrb[0].mxu0 %v10186
        %v10314 = vpop.f32.mrb[0].mxu0
        %v10315 = vadd.f32 0.0, %v10314
        %v10316 = vpop.f32.mrb[0].mxu0
        %v10317 = vpop.f32.mrb[0].mxu0
        %v10318 = vadd.f32 0.0, %v10317
        %v10319 = vpop.f32.mrb[0].mxu0
        %10320 = vmatprep.mubr.bf16.mxu0 0
        %10321 = vmatmul.mubr.bf16.gmra.mrb[0].mxu0 %v10187
        %v10322 = vpop.f32.mrb[0].mxu0
        %v10323 = vadd.f32 0.0, %v10322
        %v10324 = vpop.f32.mrb[0].mxu0
        %v10325 = vpop.f32.mrb[0].mxu0
        %v10326 = vadd.f32 0.0, %v10325
        %v10327 = vpop.f32.mrb[0].mxu0
        %10328 = vmatprep.mubr.bf16.mxu0 0
        %10329 = vmatmul.mubr.bf16.gmra.mrb[0].mxu0 %v10188
        %v10330 = vpop.f32.mrb[0].mxu0
        %v10331 = vadd.f32 0.0, %v10330
        %v10332 = vpop.f32.mrb[0].mxu0
        %v10333 = vpop.f32.mrb[0].mxu0
        %v10334 = vadd.f32 0.0, %v10333
        %v10335 = vpop.f32.mrb[0].mxu0
        %10336 = vmatprep.mubr.bf16.mxu0 0
        %10337 = vmatmul.mubr.bf16.gmra.mrb[0].mxu0 %v10189
        %v10338 = vpop.f32.mrb[0].mxu0
        %v10339 = vadd.f32 0.0, %v10338
        %v10340 = vpop.f32.mrb[0].mxu0
        %v10341 = vpop.f32.mrb[0].mxu0
        %v10342 = vadd.f32 0.0, %v10341
        %v10343 = vpop.f32.mrb[0].mxu0
        %10344 = vmatprep.mubr.bf16.mxu0 0
        %10345 = vmatmul.mubr.bf16.gmra.mrb[0].mxu0 %v10190
        %v10346 = vpop.f32.mrb[0].mxu0
        %v10347 = vadd.f32 0.0, %v10346
        %v10348 = vpop.f32.mrb[0].mxu0
        %v10349 = vpop.f32.mrb[0].mxu0
        %v10350 = vadd.f32 0.0, %v10349
        %v10351 = vpop.f32.mrb[0].mxu0
        %10352 = vmatprep.mubr.bf16.mxu0 0
        %10353 = vmatmul.mubr.bf16.gmra.mrb[0].mxu0 %v10191
        %v10354 = vpop.f32.mrb[0].mxu0
        %v10355 = vadd.f32 0.0, %v10354
        %v10356 = vpop.f32.mrb[0].mxu0
        %v10357 = vpop.f32.mrb[0].mxu0
        %v10358 = vadd.f32 0.0, %v10357
        %v10359 = vpop.f32.mrb[0].mxu0
        %10360 = vmatprep.mubr.bf16.mxu0 0
        %10361 = vmatmul.mubr.bf16.gmra.mrb[0].mxu0 %v10192
        %v10362 = vpop.f32.mrb[0].mxu0
        %v10363 = vadd.f32 0.0, %v10362
        %v10364 = vpop.f32.mrb[0].mxu0
        %v10365 = vpop.f32.mrb[0].mxu0
        %v10366 = vadd.f32 0.0, %v10365
        %v10367 = vpop.f32.mrb[0].mxu0
        %10368 = vmatprep.mubr.bf16.mxu0 0
        %10369 = vmatmul.mubr.bf16.gmra.mrb[0].mxu0 %v10193
        %v10370 = vpop.f32.mrb[0].mxu0
        %v10371 = vadd.f32 0.0, %v10370
        %v10372 = vpop.f32.mrb[0].mxu0
        %v10373 = vpop.f32.mrb[0].mxu0
        %v10374 = vadd.f32 0.0, %v10373
        %v10375 = vpop.f32.mrb[0].mxu0
        %10376 = vmatprep.mubr.bf16.mxu0 0
        %10377 = vmatmul.mubr.bf16.gmra.mrb[0].mxu0 %v10194
        %v10378 = vpop.f32.mrb[0].mxu0
        %v10379 = vadd.f32 0.0, %v10378
        %v10380 = vpop.f32.mrb[0].mxu0
        %v10381 = vpop.f32.mrb[0].mxu0
        %v10382 = vadd.f32 0.0, %v10381
        %v10383 = vpop.f32.mrb[0].mxu0
        %10384 = vmatprep.mubr.bf16.mxu0 0
        %10385 = vmatmul.mubr.bf16.gmra.mrb[0].mxu0 %v10195
        %v10386 = vpop.f32.mrb[0].mxu0
        %v10387 = vadd.f32 0.0, %v10386
        %v10388 = vpop.f32.mrb[0].mxu0
        %v10389 = vpop.f32.mrb[0].mxu0
        %v10390 = vadd.f32 0.0, %v10389
        %v10391 = vpop.f32.mrb[0].mxu0
        %10392 = vmatprep.mubr.bf16.mxu0 0
        %10393 = vmatmul.mubr.bf16.gmra.mrb[0].mxu0 %v10196
        %v10394 = vpop.f32.mrb[0].mxu0
        %v10395 = vadd.f32 0.0, %v10394
        %v10396 = vpop.f32.mrb[0].mxu0
        %v10397 = vpop.f32.mrb[0].mxu0
        %v10398 = vadd.f32 0.0, %v10397
        %v10399 = vpop.f32.mrb[0].mxu0
        %10400 = vmatprep.mubr.bf16.mxu0 0
        %10401 = vmatmul.mubr.bf16.gmra.mrb[0].mxu0 %v10197
        %v10402 = vpop.f32.mrb[0].mxu0
        %v10403 = vadd.f32 0.0, %v10402
        %v10404 = vpop.f32.mrb[0].mxu0
        %v10405 = vpop.f32.mrb[0].mxu0
        %v10406 = vadd.f32 0.0, %v10405
        %v10407 = vpop.f32.mrb[0].mxu0
        %10408 = vmatprep.mubr.bf16.mxu0 0
        %10409 = vmatmul.mubr.bf16.gmra.mrb[0].mxu0 %v10198
        %v10410 = vpop.f32.mrb[0].mxu0
        %v10411 = vadd.f32 0.0, %v10410
        %v10412 = vpop.f32.mrb[0].mxu0
        %v10413 = vpop.f32.mrb[0].mxu0
        %v10414 = vadd.f32 0.0, %v10413
        %v10415 = vpop.f32.mrb[0].mxu0
        %10416 = vmatprep.mubr.bf16.mxu0 0
        %10417 = vmatmul.mubr.bf16.gmra.mrb[0].mxu0 %v10199
        %v10418 = vpop.f32.mrb[0].mxu0
        %v10419 = vadd.f32 0.0, %v10418
        %v10420 = vpop.f32.mrb[0].mxu0
        %v10421 = vpop.f32.mrb[0].mxu0
        %v10422 = vadd.f32 0.0, %v10421
        %v10423 = vpop.f32.mrb[0].mxu0
        %10424 = vdwg.mxu0
        %v10425 = vadd.f32 %v9927, %v10299
        %v10426 = vadd.f32 %v9928, %v10302
        %v10427 = vadd.f32 %v9929, %v10307
        %v10428 = vadd.f32 %v9930, %v10310
        %v10429 = vadd.f32 %v9931, %v10315
        %v10430 = vadd.f32 %v9932, %v10318
        %v10431 = vadd.f32 %v9933, %v10323
        %v10432 = vadd.f32 %v9934, %v10326
        %v10433 = vadd.f32 %v9935, %v10331
        %v10434 = vadd.f32 %v9936, %v10334
        %v10435 = vadd.f32 %v9937, %v10339
        %v10436 = vadd.f32 %v9938, %v10342
        %v10437 = vadd.f32 %v9939, %v10347
        %v10438 = vadd.f32 %v9940, %v10350
        %v10439 = vadd.f32 %v9941, %v10355
        %v10440 = vadd.f32 %v9942, %v10358
        %v10441 = vadd.f32 %v9943, %v10363
        %v10442 = vadd.f32 %v9944, %v10366
        %v10443 = vadd.f32 %v9945, %v10371
        %v10444 = vadd.f32 %v9946, %v10374
        %v10445 = vadd.f32 %v9947, %v10379
        %v10446 = vadd.f32 %v9948, %v10382
        %v10447 = vadd.f32 %v9949, %v10387
        %v10448 = vadd.f32 %v9950, %v10390
        %v10449 = vadd.f32 %v9951, %v10395
        %v10450 = vadd.f32 %v9952, %v10398
        %v10451 = vadd.f32 %v9953, %v10403
        %v10452 = vadd.f32 %v9954, %v10406
        %v10453 = vadd.f32 %v9955, %v10411
        %v10454 = vadd.f32 %v9956, %v10414
        %v10455 = vadd.f32 %v9957, %v10419
        %v10456 = vadd.f32 %v9958, %v10422
        %v10457 = vlaneseq
        %v10458 = vshrl.u32 %v10457, 7
        %v10459 = vsub.s32 1, %v10458
        %v10460 = vrot.slane %v239, %v10459
        %v10461 = vadd.f32 %v10425, %v10460
        %v10462 = vadd.f32 %v10426, %v10460
        %v10463 = vadd.f32 %v10427, %v10460
        %v10464 = vadd.f32 %v10428, %v10460
        %v10465 = vadd.f32 %v10429, %v10460
        %v10466 = vadd.f32 %v10430, %v10460
        %v10467 = vadd.f32 %v10431, %v10460
        %v10468 = vadd.f32 %v10432, %v10460
        %v10469 = vadd.f32 %v10433, %v10460
        %v10470 = vadd.f32 %v10434, %v10460
        %v10471 = vadd.f32 %v10435, %v10460
        %v10472 = vadd.f32 %v10436, %v10460
        %v10473 = vadd.f32 %v10437, %v10460
        %v10474 = vadd.f32 %v10438, %v10460
        %v10475 = vadd.f32 %v10439, %v10460
        %v10476 = vadd.f32 %v10440, %v10460
        %v10477 = vadd.f32 %v10441, %v10460
        %v10478 = vadd.f32 %v10442, %v10460
        %v10479 = vadd.f32 %v10443, %v10460
        %v10480 = vadd.f32 %v10444, %v10460
        %v10481 = vadd.f32 %v10445, %v10460
        %v10482 = vadd.f32 %v10446, %v10460
        %v10483 = vadd.f32 %v10447, %v10460
        %v10484 = vadd.f32 %v10448, %v10460
        %v10485 = vadd.f32 %v10449, %v10460
        %v10486 = vadd.f32 %v10450, %v10460
        %v10487 = vadd.f32 %v10451, %v10460
        %v10488 = vadd.f32 %v10452, %v10460
        %v10489 = vadd.f32 %v10453, %v10460
        %v10490 = vadd.f32 %v10454, %v10460
        %v10491 = vadd.f32 %v10455, %v10460
        %v10492 = vadd.f32 %v10456, %v10460
        %v10493 = vmax.f32 %v10461, 0.0
        %v10494 = vmax.f32 %v10462, 0.0
        %v10495 = vmax.f32 %v10463, 0.0
        %v10496 = vmax.f32 %v10464, 0.0
        %v10497 = vmax.f32 %v10465, 0.0
        %v10498 = vmax.f32 %v10466, 0.0
        %v10499 = vmax.f32 %v10467, 0.0
        %v10500 = vmax.f32 %v10468, 0.0
        %v10501 = vmax.f32 %v10469, 0.0
        %v10502 = vmax.f32 %v10470, 0.0
        %v10503 = vmax.f32 %v10471, 0.0
        %v10504 = vmax.f32 %v10472, 0.0
        %v10505 = vmax.f32 %v10473, 0.0
        %v10506 = vmax.f32 %v10474, 0.0
        %v10507 = vmax.f32 %v10475, 0.0
        %v10508 = vmax.f32 %v10476, 0.0
        %v10509 = vmax.f32 %v10477, 0.0
        %v10510 = vmax.f32 %v10478, 0.0
        %v10511 = vmax.f32 %v10479, 0.0
        %v10512 = vmax.f32 %v10480, 0.0
        %v10513 = vmax.f32 %v10481, 0.0
        %v10514 = vmax.f32 %v10482, 0.0
        %v10515 = vmax.f32 %v10483, 0.0
        %v10516 = vmax.f32 %v10484, 0.0
        %v10517 = vmax.f32 %v10485, 0.0
        %v10518 = vmax.f32 %v10486, 0.0
        %v10519 = vmax.f32 %v10487, 0.0
        %v10520 = vmax.f32 %v10488, 0.0
        %v10521 = vmax.f32 %v10489, 0.0
        %v10522 = vmax.f32 %v10490, 0.0
        %v10523 = vmax.f32 %v10491, 0.0
        %v10524 = vmax.f32 %v10492, 0.0
        %10525 = vst [vmem:[%s178] sm:$0xff] %v10493
        %10526 = vst [vmem:[%s178 + $0x8] sm:$0xff] %v10494
        %10527 = vst [vmem:[%s178 + $0x10] sm:$0xff] %v10495
        %10528 = vst [vmem:[%s178 + $0x18] sm:$0xff] %v10496
        %10529 = vst [vmem:[%s178 + $0x20] sm:$0xff] %v10497
        %10530 = vst [vmem:[%s178 + $0x28] sm:$0xff] %v10498
        %10531 = vst [vmem:[%s178 + $0x30] sm:$0xff] %v10499
        %10532 = vst [vmem:[%s178 + $0x38] sm:$0xff] %v10500
        %10533 = vst [vmem:[%s178 + $0x40] sm:$0xff] %v10501
        %10534 = vst [vmem:[%s178 + $0x48] sm:$0xff] %v10502
        %10535 = vst [vmem:[%s178 + $0x50] sm:$0xff] %v10503
        %10536 = vst [vmem:[%s178 + $0x58] sm:$0xff] %v10504
        %10537 = vst [vmem:[%s178 + $0x60] sm:$0xff] %v10505
        %10538 = vst [vmem:[%s178 + $0x68] sm:$0xff] %v10506
        %10539 = vst [vmem:[%s178 + $0x70] sm:$0xff] %v10507
        %10540 = vst [vmem:[%s178 + $0x78] sm:$0xff] %v10508
        %10541 = vst [vmem:[%s178 + $0x80] sm:$0xff] %v10509
        %10542 = vst [vmem:[%s178 + $0x88] sm:$0xff] %v10510
        %10543 = vst [vmem:[%s178 + $0x90] sm:$0xff] %v10511
        %10544 = vst [vmem:[%s178 + $0x98] sm:$0xff] %v10512
        %10545 = vst [vmem:[%s178 + $0xa0] sm:$0xff] %v10513
        %10546 = vst [vmem:[%s178 + $0xa8] sm:$0xff] %v10514
        %10547 = vst [vmem:[%s178 + $0xb0] sm:$0xff] %v10515
        %10548 = vst [vmem:[%s178 + $0xb8] sm:$0xff] %v10516
        %10549 = vst [vmem:[%s178 + $0xc0] sm:$0xff] %v10517
        %10550 = vst [vmem:[%s178 + $0xc8] sm:$0xff] %v10518
        %10551 = vst [vmem:[%s178 + $0xd0] sm:$0xff] %v10519
        %10552 = vst [vmem:[%s178 + $0xd8] sm:$0xff] %v10520
        %10553 = vst [vmem:[%s178 + $0xe0] sm:$0xff] %v10521
        %10554 = vst [vmem:[%s178 + $0xe8] sm:$0xff] %v10522
        %10555 = vst [vmem:[%s178 + $0xf0] sm:$0xff] %v10523
        %10556 = vst [vmem:[%s178 + $0xf8] sm:$0xff] %v10524
        %s10557 = sand.u32 %s94, 1
        %s10558 = scalar_lea.sflag [#allocation5], %s10557
        %s10559 = sand.u32 %s94, 1
        %s10560 = smul.addr %s10559, 256
        %s10561 = scalar_lea.vmem [#allocation6], %s10560
        // Predicated region
        $region37: #{tpu_custom_call.1} parent=31 // pred_check
          %p10562 = pneg %p104
        $region38: #{tpu_custom_call.1} parent=31 // pred_check_branch
          %10564 = sbr.rel (%p10562) target = $region40
        $region39: #{tpu_custom_call.1} parent=31 // pred_region
          %s10566 = ssub.s32 4096, 4096
          %10567 = vsyncadd %s10558, %s10566
          %s10568 = smul.addr %s18, 32
          %s10569 = smul.addr %s10568, 128
          %s10570 = scalar_lea.hbm %s3, %s10569
          %s10571 = sshll.u32 %s10561, 4
          %s10572 = int_to_ptr.vmem [resolvable:$true] %s10571
          %10577 = dma.vmem_to_hbm [thread:$0]  %s10572, 4096, %s10570, %s10558, 128, 128, 8
        $region40: #{tpu_custom_call.1} parent=31 // pred_fallthru
          _
      $region32: #{tpu_custom_call.1} parent=5 // pred_fallthru
        _
      %p10578 = scmp.le.s32.totalorder 2, %s13
      // Predicated region
      $region41: #{tpu_custom_call.1} parent=5 // pred_check
        %p10579 = pneg %p10578
      $region42: #{tpu_custom_call.1} parent=5 // pred_check_branch
        %10581 = sbr.rel (%p10579) target = $region44
      $region43: #{tpu_custom_call.1} parent=5 // pred_region
        %s10582 = ssub.s32 %s13, 2
        // Predicated region
        $region45: #{tpu_custom_call.1} parent=43 // pred_check
          %p10583 = pneg %p110
        $region46: #{tpu_custom_call.1} parent=43 // pred_check_branch
          %10585 = sbr.rel (%p10583) target = $region48
        $region47: #{tpu_custom_call.1} parent=43 // pred_region
          %s10586 = sand.u32 %s95, 1
          %s10587 = scalar_lea.sflag [#allocation5], %s10586
          %s10588 = sand.u32 %s95, 1
          %s10589 = smul.addr %s10588, 256
          %s10590 = scalar_lea.vmem [#allocation6], %s10589
          %10591 = dma.done %s10587, 4096
        $region48: #{tpu_custom_call.1} parent=43 // pred_fallthru
          _
      $region44: #{tpu_custom_call.1} parent=5 // pred_fallthru
        _
    $region6: #{tpu_custom_call.1} parent=1 // loop_footer
      %s17 = sadd.s32 1, %s13
    $region7: #{tpu_custom_call.1} parent=1 // loop_footer_branch
      %12 = sbr.rel target = $region3
    $region8: #{tpu_custom_call.1} parent=1 // loop_exit
      _
    %10592 = vsyncpa [#allocation4], 1
    %s10593 = scalar_lea.sflag [#allocation4], 1
    %10594 = vsyncpa %s10593, 1
    %10595 = vsyncpa [#allocation5], 1
    %s10596 = scalar_lea.sflag [#allocation5], 1
    %10597 = vsyncpa %s10596, 1

</llo_original>
